<compile_context>
chip_gen: v5e
topology: v5e:2x2
jax: 0.10.0
libtpu: 0.0.40
codegen_flags: <defaults>
</compile_context>

<pallas_src>
import math
from functools import partial

import jax
import jax.numpy as jnp
from jax import lax
from jax.experimental import pallas as pl
from jax.experimental.pallas import tpu as pltpu

# ---- hyper-parameters (consistent with the module constructor) ----
D_MODEL = 64            # d_model_encoder
EMBED = 32              # encoder_embedding_dim
SEQ_LEN = 8             # encoder_length
N_LAYERS = 2            # num_encoder_layers
N_HEADS = 4             # num_heads
HEAD_DIM = D_MODEL // N_HEADS
FFN_DIM = 4 * D_MODEL
DEC_HIDDEN = 1024       # fixed by the module: nn.Linear(d_model, 1024)
MASK_THRESHOLD = 0.3    # torch.rand(x.shape) > 0.3
LN_EPS = 1e-5
NEG_INF = -1e30

MAX_TB = 128            # batch-tile cap (sequences); safe on v5e/v6e/v7x
VMEM_LIMIT = 48 * 1024 * 1024   # explicit scoped-VMEM limit (v5e default 16 MiB is too small)


def _layernorm(x, g, b):
    mu = jnp.mean(x, axis=-1, keepdims=True)
    xc = x - mu
    var = jnp.mean(xc * xc, axis=-1, keepdims=True)
    return xc * lax.rsqrt(var + LN_EPS) * g + b


def mae_kernel(tb, gsz,
               x_ref, mask_ref, bias_ref,
               win_ref, bin_ref, pos_ref,
               wqkv_ref, bqkv_ref, wo_ref, bo_ref,
               g1_ref, b1n_ref, w1_ref, b1_ref, w2_ref, b2_ref,
               g2_ref, b2n_ref,
               wd1_ref, bd1_ref, wd2_ref, bd2_ref,
               out_ref):
    m = tb * SEQ_LEN                 # flattened rows in this tile
    ng = tb // gsz                   # attention groups per tile
    rows = gsz * SEQ_LEN             # rows per attention group
    bf16 = jnp.bfloat16

    # --- random-mask application + input projection + positional embedding ---
    xm = (x_ref[...] * mask_ref[...].astype(jnp.float32)).reshape(m, EMBED)
    h = jnp.dot(xm.astype(bf16), win_ref[...],
                preferred_element_type=jnp.float32) + bin_ref[...]
    h = (h.reshape(tb, SEQ_LEN, D_MODEL) + pos_ref[...]).reshape(m, D_MODEL)

    attn_bias = bias_ref[...]        # (rows, rows): 0 inside a sequence, -1e30 across
    scale = 1.0 / math.sqrt(HEAD_DIM)

    for l in range(N_LAYERS):
        # --- fused QKV projection: one (D_MODEL, 3*D_MODEL) matmul per layer ---
        qkv = jnp.dot(h.astype(bf16), wqkv_ref[l],
                      preferred_element_type=jnp.float32) + bqkv_ref[l]

        heads = []
        for hh in range(N_HEADS):
            o = hh * HEAD_DIM
            qh = (qkv[:, o:o + HEAD_DIM] * scale).astype(bf16)
            kh = qkv[:, D_MODEL + o:D_MODEL + o + HEAD_DIM].astype(bf16)
            vh = qkv[:, 2 * D_MODEL + o:2 * D_MODEL + o + HEAD_DIM].astype(bf16)
            qg = qh.reshape(ng, rows, HEAD_DIM)
            kg = kh.reshape(ng, rows, HEAD_DIM)
            vg = vh.reshape(ng, rows, HEAD_DIM)
            # Grouped block-diagonal attention: one (rows x rows) matmul per
            # group replaces `gsz` tiny 8x16x8 matmuls; cross-sequence
            # entries are masked to -1e30 so the softmax/PV results are exact.
            sc = jnp.einsum('gqe,gke->gqk', qg, kg,
                            preferred_element_type=jnp.float32) + attn_bias
            sc = sc - jnp.max(sc, axis=-1, keepdims=True)
            ex = jnp.exp(sc)
            p = ex * pl.reciprocal(jnp.sum(ex, axis=-1, keepdims=True),
                                   approx=True)
            hv = jnp.einsum('gqk,gke->gqe', p.astype(bf16), vg,
                            preferred_element_type=jnp.float32)
            heads.append(hv.reshape(m, HEAD_DIM))

        # --- fused output projection: concat heads, one (64, 64) matmul ---
        attn = jnp.dot(jnp.concatenate(heads, axis=-1).astype(bf16), wo_ref[l],
                       preferred_element_type=jnp.float32) + bo_ref[l]
        h = _layernorm(h + attn, g1_ref[l], b1n_ref[l])

        # --- feed-forward ---
        ff = jnp.maximum(
            jnp.dot(h.astype(bf16), w1_ref[l],
                    preferred_element_type=jnp.float32) + b1_ref[l], 0.0)
        ff = jnp.dot(ff.astype(bf16), w2_ref[l],
                     preferred_element_type=jnp.float32) + b2_ref[l]
        h = _layernorm(h + ff, g2_ref[l], b2n_ref[l])

    # --- decoder: Linear(D, 1024) -> ReLU -> Linear(1024, E) ---
    d1 = jnp.maximum(
        jnp.dot(h.astype(bf16), wd1_ref[...],
                preferred_element_type=jnp.float32) + bd1_ref[...], 0.0)
    rec = jnp.dot(d1.astype(bf16), wd2_ref[...],
                  preferred_element_type=jnp.float32) + bd2_ref[...]

    # lane-dense store: (m, 32) -> (tb, 256) so the output vst is unmasked
    rec3 = rec.reshape(tb, SEQ_LEN, EMBED)
    out_ref[...] = jnp.concatenate(
        [rec3[:, sidx, :] for sidx in range(SEQ_LEN)], axis=-1
    ).astype(out_ref.dtype)


# ---------------------------- parameter setup ----------------------------
_PARAM_ORDER = ["win", "bin", "pos",
                "wqkv", "bqkv", "wo", "bo",
                "g1", "b1n", "w1", "b1", "w2", "b2", "g2", "b2n",
                "wd1", "bd1", "wd2", "bd2"]


def make_params(key):
    def dense(k, shape, scale=0.02):
        # weights stored in bf16 (MXU operands); accumulation stays f32
        return (jax.random.normal(k, shape, jnp.float32) * scale).astype(jnp.bfloat16)

    ks = jax.random.split(key, 8)
    p = {}
    p["win"] = dense(ks[0], (EMBED, D_MODEL))
    p["bin"] = jnp.zeros((1, D_MODEL), jnp.float32)
    p["pos"] = jax.random.normal(ks[1], (SEQ_LEN, D_MODEL), jnp.float32) * 0.02
    # fused QKV: columns packed [Q(head-major) | K | V]
    p["wqkv"] = dense(ks[2], (N_LAYERS, D_MODEL, 3 * D_MODEL))
    p["bqkv"] = jnp.zeros((N_LAYERS, 1, 3 * D_MODEL), jnp.float32)
    p["wo"] = dense(ks[3], (N_LAYERS, D_MODEL, D_MODEL))
    p["bo"] = jnp.zeros((N_LAYERS, 1, D_MODEL), jnp.float32)
    p["g1"] = jnp.ones((N_LAYERS, 1, D_MODEL), jnp.float32)
    p["b1n"] = jnp.zeros((N_LAYERS, 1, D_MODEL), jnp.float32)
    p["w1"] = dense(ks[4], (N_LAYERS, D_MODEL, FFN_DIM))
    p["b1"] = jnp.zeros((N_LAYERS, 1, FFN_DIM), jnp.float32)
    p["w2"] = dense(ks[5], (N_LAYERS, FFN_DIM, D_MODEL))
    p["b2"] = jnp.zeros((N_LAYERS, 1, D_MODEL), jnp.float32)
    p["g2"] = jnp.ones((N_LAYERS, 1, D_MODEL), jnp.float32)
    p["b2n"] = jnp.zeros((N_LAYERS, 1, D_MODEL), jnp.float32)
    p["wd1"] = dense(ks[6], (D_MODEL, DEC_HIDDEN))
    p["bd1"] = jnp.zeros((1, DEC_HIDDEN), jnp.float32)
    p["wd2"] = dense(ks[7], (DEC_HIDDEN, EMBED))
    p["bd2"] = jnp.zeros((1, EMBED), jnp.float32)
    return p


# ------------------------------- wrapper ---------------------------------
def _round_up(x, mult):
    return -(-x // mult) * mult


def _pick_batch_tile(B):
    # tile is a multiple of 8 sequences (sublane-aligned blocks / matmul M);
    # aim for ~B/2 per tile so the grid has >= 2 steps (both v7x TCs busy).
    half = -(-B // 2) if B > 1 else 1
    return min(MAX_TB, max(8, _round_up(half, 8)))


def masked_autoencoder_forward(x, params, mask):
    B = x.shape[0]
    tb = _pick_batch_tile(B)
    gsz = 16 if tb % 16 == 0 else 8          # sequences per attention group
    rows = gsz * SEQ_LEN

    # pad batch so (a) it divides the tile and (b) the grid has >= 2 steps
    Bp = pl.cdiv(B, tb) * tb
    if B > 1:
        Bp = max(Bp, 2 * tb)
    if Bp != B:
        pad = ((0, Bp - B), (0, 0), (0, 0))
        x = jnp.pad(x, pad)
        mask = jnp.pad(mask, pad)
    mask = mask.astype(jnp.bfloat16)          # halves mask DMA / VMEM

    # block-diagonal attention bias for the grouped score matrices
    seq_id = jnp.arange(rows, dtype=jnp.int32) // SEQ_LEN
    attn_bias = jnp.where(seq_id[:, None] == seq_id[None, :],
                          0.0, NEG_INF).astype(jnp.float32)

    arrs = [params[n] for n in _PARAM_ORDER]

    def tile_spec():
        return pl.BlockSpec((tb, SEQ_LEN, EMBED), lambda b: (b, 0, 0))

    def full_spec(a):
        n = a.ndim
        return pl.BlockSpec(a.shape, lambda b, n=n: (0,) * n)

    in_specs = ([tile_spec(), tile_spec(), full_spec(attn_bias)]
                + [full_spec(a) for a in arrs])
    out_specs = pl.BlockSpec((tb, SEQ_LEN * EMBED), lambda b: (b, 0))

    out = pl.pallas_call(
        partial(mae_kernel, tb, gsz),
        out_shape=jax.ShapeDtypeStruct((Bp, SEQ_LEN * EMBED), jnp.float32),
        grid=(Bp // tb,),
        in_specs=in_specs,
        out_specs=out_specs,
        compiler_params=pltpu.CompilerParams(
            dimension_semantics=("parallel",),
            vmem_limit_bytes=VMEM_LIMIT),
    )(x, mask, attn_bias, *arrs)

    return out[:B].reshape(B, SEQ_LEN, EMBED)


if __name__ == "__main__":
    key = jax.random.PRNGKey(0)
    pkey, xkey, mkey = jax.random.split(key, 3)
    params = make_params(pkey)

    # input: (batch, encoder_length, encoder_embedding_dim)
    B = 2
    x = jax.random.normal(xkey, (B, SEQ_LEN, EMBED), jnp.float32)

    # random mask: torch.rand(x.shape) > 0.3, generated on host
    mask = (jax.random.uniform(mkey, x.shape) > MASK_THRESHOLD).astype(jnp.float32)

    out = masked_autoencoder_forward(x, params, mask)
    out = jax.block_until_ready(out)

    assert out.shape == (B, SEQ_LEN, EMBED), out.shape
    assert bool(jnp.all(jnp.isfinite(out)))
    print("KERNEL_OK")
</pallas_src>

<mosaic_0001>
module attributes {stable_mosaic.version = 11 : i64} {
  func.func @mae_kernel(%arg0: i32, %arg1: memref<8x8x32xf32, #tpu.memory_space<vmem>>, %arg2: memref<8x8x32xbf16, #tpu.memory_space<vmem>>, %arg3: memref<64x64xf32, #tpu.memory_space<vmem>>, %arg4: memref<32x64xbf16, #tpu.memory_space<vmem>>, %arg5: memref<1x64xf32, #tpu.memory_space<vmem>>, %arg6: memref<8x64xf32, #tpu.memory_space<vmem>>, %arg7: memref<2x64x192xbf16, #tpu.memory_space<vmem>>, %arg8: memref<2x1x192xf32, #tpu.memory_space<vmem>>, %arg9: memref<2x64x64xbf16, #tpu.memory_space<vmem>>, %arg10: memref<2x1x64xf32, #tpu.memory_space<vmem>>, %arg11: memref<2x1x64xf32, #tpu.memory_space<vmem>>, %arg12: memref<2x1x64xf32, #tpu.memory_space<vmem>>, %arg13: memref<2x64x256xbf16, #tpu.memory_space<vmem>>, %arg14: memref<2x1x256xf32, #tpu.memory_space<vmem>>, %arg15: memref<2x256x64xbf16, #tpu.memory_space<vmem>>, %arg16: memref<2x1x64xf32, #tpu.memory_space<vmem>>, %arg17: memref<2x1x64xf32, #tpu.memory_space<vmem>>, %arg18: memref<2x1x64xf32, #tpu.memory_space<vmem>>, %arg19: memref<64x1024xbf16, #tpu.memory_space<vmem>>, %arg20: memref<1x1024xf32, #tpu.memory_space<vmem>>, %arg21: memref<1024x32xbf16, #tpu.memory_space<vmem>>, %arg22: memref<1x32xf32, #tpu.memory_space<vmem>>, %arg23: memref<8x256xf32, #tpu.memory_space<vmem>>) attributes {dimension_semantics = [#tpu.dimension_semantics<parallel>], iteration_bounds = array<i64: 2>, scalar_prefetch = 0 : i64, scratch_operands = 0 : i64, tpu.core_type = #tpu.core_type<tc>, window_params = [{transform_indices = @transform_0, window_bounds = array<i64: 8, 8, 32>}, {transform_indices = @transform_1, window_bounds = array<i64: 8, 8, 32>}, {pipeline_mode = #tpu.pipeline_mode<synchronous>, transform_indices = @transform_2, window_bounds = array<i64: 64, 64>}, {pipeline_mode = #tpu.pipeline_mode<synchronous>, transform_indices = @transform_3, window_bounds = array<i64: 32, 64>}, {pipeline_mode = #tpu.pipeline_mode<synchronous>, transform_indices = @transform_4, window_bounds = array<i64: 1, 64>}, {pipeline_mode = #tpu.pipeline_mode<synchronous>, transform_indices = @transform_5, window_bounds = array<i64: 8, 64>}, {pipeline_mode = #tpu.pipeline_mode<synchronous>, transform_indices = @transform_6, window_bounds = array<i64: 2, 64, 192>}, {pipeline_mode = #tpu.pipeline_mode<synchronous>, transform_indices = @transform_7, window_bounds = array<i64: 2, 1, 192>}, {pipeline_mode = #tpu.pipeline_mode<synchronous>, transform_indices = @transform_8, window_bounds = array<i64: 2, 64, 64>}, {pipeline_mode = #tpu.pipeline_mode<synchronous>, transform_indices = @transform_9, window_bounds = array<i64: 2, 1, 64>}, {pipeline_mode = #tpu.pipeline_mode<synchronous>, transform_indices = @transform_10, window_bounds = array<i64: 2, 1, 64>}, {pipeline_mode = #tpu.pipeline_mode<synchronous>, transform_indices = @transform_11, window_bounds = array<i64: 2, 1, 64>}, {pipeline_mode = #tpu.pipeline_mode<synchronous>, transform_indices = @transform_12, window_bounds = array<i64: 2, 64, 256>}, {pipeline_mode = #tpu.pipeline_mode<synchronous>, transform_indices = @transform_13, window_bounds = array<i64: 2, 1, 256>}, {pipeline_mode = #tpu.pipeline_mode<synchronous>, transform_indices = @transform_14, window_bounds = array<i64: 2, 256, 64>}, {pipeline_mode = #tpu.pipeline_mode<synchronous>, transform_indices = @transform_15, window_bounds = array<i64: 2, 1, 64>}, {pipeline_mode = #tpu.pipeline_mode<synchronous>, transform_indices = @transform_16, window_bounds = array<i64: 2, 1, 64>}, {pipeline_mode = #tpu.pipeline_mode<synchronous>, transform_indices = @transform_17, window_bounds = array<i64: 2, 1, 64>}, {pipeline_mode = #tpu.pipeline_mode<synchronous>, transform_indices = @transform_18, window_bounds = array<i64: 64, 1024>}, {pipeline_mode = #tpu.pipeline_mode<synchronous>, transform_indices = @transform_19, window_bounds = array<i64: 1, 1024>}, {pipeline_mode = #tpu.pipeline_mode<synchronous>, transform_indices = @transform_20, window_bounds = array<i64: 1024, 32>}, {pipeline_mode = #tpu.pipeline_mode<synchronous>, transform_indices = @transform_21, window_bounds = array<i64: 1, 32>}, {transform_indices = @transform_22, window_bounds = array<i64: 8, 256>}]} {
    %c0 = arith.constant 0 : index
    %c0_0 = arith.constant 0 : index
    %c0_1 = arith.constant 0 : index
    %0 = vector.load %arg1[%c0, %c0_0, %c0_1] : memref<8x8x32xf32, #tpu.memory_space<vmem>>, vector<8x8x32xf32>
    %c0_2 = arith.constant 0 : index
    %c0_3 = arith.constant 0 : index
    %c0_4 = arith.constant 0 : index
    %1 = vector.load %arg2[%c0_2, %c0_3, %c0_4] : memref<8x8x32xbf16, #tpu.memory_space<vmem>>, vector<8x8x32xbf16>
    %2 = arith.extf %1 : vector<8x8x32xbf16> to vector<8x8x32xf32>
    %3 = arith.mulf %0, %2 : vector<8x8x32xf32>
    %4 = vector.shape_cast %3 : vector<8x8x32xf32> to vector<64x32xf32>
    %5 = arith.truncf %4 : vector<64x32xf32> to vector<64x32xbf16>
    %c0_5 = arith.constant 0 : index
    %c0_6 = arith.constant 0 : index
    %6 = vector.load %arg4[%c0_5, %c0_6] : memref<32x64xbf16, #tpu.memory_space<vmem>>, vector<32x64xbf16>
    %cst = arith.constant dense<0.000000e+00> : vector<64x64xf32>
    %7 = tpu.matmul %5, %6, %cst {dimension_numbers = #tpu.dot_dimension_numbers<[1], [0], [0], [1], [0, 0, 1, 1], [], []>} : vector<64x32xbf16>, vector<32x64xbf16>, vector<64x64xf32> -> vector<64x64xf32>
    %c0_7 = arith.constant 0 : index
    %c0_8 = arith.constant 0 : index
    %8 = vector.load %arg5[%c0_7, %c0_8] : memref<1x64xf32, #tpu.memory_space<vmem>>, vector<1x64xf32>
    %9 = vector.broadcast %8 : vector<1x64xf32> to vector<64x64xf32>
    %10 = arith.addf %7, %9 : vector<64x64xf32>
    %11 = vector.shape_cast %10 : vector<64x64xf32> to vector<8x8x64xf32>
    %c0_9 = arith.constant 0 : index
    %c0_10 = arith.constant 0 : index
    %12 = vector.load %arg6[%c0_9, %c0_10] : memref<8x64xf32, #tpu.memory_space<vmem>>, vector<8x64xf32>
    %13 = vector.shape_cast %12 : vector<8x64xf32> to vector<1x8x64xf32>
    %14 = vector.broadcast %13 : vector<1x8x64xf32> to vector<8x8x64xf32>
    %15 = arith.addf %11, %14 : vector<8x8x64xf32>
    %16 = vector.shape_cast %15 : vector<8x8x64xf32> to vector<64x64xf32>
    %c0_11 = arith.constant 0 : index
    %c0_12 = arith.constant 0 : index
    %17 = vector.load %arg3[%c0_11, %c0_12] : memref<64x64xf32, #tpu.memory_space<vmem>>, vector<64x64xf32>
    %18 = arith.truncf %16 : vector<64x64xf32> to vector<64x64xbf16>
    %c0_13 = arith.constant 0 : index
    %c0_14 = arith.constant 0 : index
    %c0_15 = arith.constant 0 : index
    %19 = vector.load %arg7[%c0_13, %c0_14, %c0_15] : memref<2x64x192xbf16, #tpu.memory_space<vmem>>, vector<1x64x192xbf16>
    %20 = vector.shape_cast %19 : vector<1x64x192xbf16> to vector<64x192xbf16>
    %cst_16 = arith.constant dense<0.000000e+00> : vector<64x192xf32>
    %21 = tpu.matmul %18, %20, %cst_16 {dimension_numbers = #tpu.dot_dimension_numbers<[1], [0], [0], [1], [0, 0, 1, 1], [], []>} : vector<64x64xbf16>, vector<64x192xbf16>, vector<64x192xf32> -> vector<64x192xf32>
    %c0_17 = arith.constant 0 : index
    %c0_18 = arith.constant 0 : index
    %c0_19 = arith.constant 0 : index
    %22 = vector.load %arg8[%c0_17, %c0_18, %c0_19] : memref<2x1x192xf32, #tpu.memory_space<vmem>>, vector<1x1x192xf32>
    %23 = vector.shape_cast %22 : vector<1x1x192xf32> to vector<1x192xf32>
    %24 = vector.broadcast %23 : vector<1x192xf32> to vector<64x192xf32>
    %25 = arith.addf %21, %24 : vector<64x192xf32>
    %26 = vector.extract_strided_slice %25 {offsets = [0, 0], sizes = [64, 16], strides = [1, 1]} : vector<64x192xf32> to vector<64x16xf32>
    %cst_20 = arith.constant 2.500000e-01 : f32
    %27 = vector.broadcast %cst_20 : f32 to vector<64x16xf32>
    %28 = arith.mulf %26, %27 : vector<64x16xf32>
    %29 = arith.truncf %28 : vector<64x16xf32> to vector<64x16xbf16>
    %30 = vector.extract_strided_slice %25 {offsets = [0, 64], sizes = [64, 16], strides = [1, 1]} : vector<64x192xf32> to vector<64x16xf32>
    %31 = arith.truncf %30 : vector<64x16xf32> to vector<64x16xbf16>
    %32 = vector.extract_strided_slice %25 {offsets = [0, 128], sizes = [64, 16], strides = [1, 1]} : vector<64x192xf32> to vector<64x16xf32>
    %33 = arith.truncf %32 : vector<64x16xf32> to vector<64x16xbf16>
    %34 = vector.shape_cast %29 : vector<64x16xbf16> to vector<1x64x16xbf16>
    %35 = vector.shape_cast %31 : vector<64x16xbf16> to vector<1x64x16xbf16>
    %36 = vector.shape_cast %33 : vector<64x16xbf16> to vector<1x64x16xbf16>
    "tpu.trace_start"() <{level = 10 : i32, message = "gqe,gke->gqk"}> : () -> ()
    %cst_21 = arith.constant dense<0.000000e+00> : vector<1x64x64xf32>
    %37 = tpu.matmul %34, %35, %cst_21 {dimension_numbers = #tpu.dot_dimension_numbers<[2], [2], [1], [1], [0, 0, 0, 1, 1, 1], [0], [0]>} : vector<1x64x16xbf16>, vector<1x64x16xbf16>, vector<1x64x64xf32> -> vector<1x64x64xf32>
    "tpu.trace_stop"() : () -> ()
    %38 = vector.shape_cast %17 : vector<64x64xf32> to vector<1x64x64xf32>
    %39 = arith.addf %37, %38 : vector<1x64x64xf32>
    %cst_22 = arith.constant dense<0xFF800000> : vector<1x64xf32>
    %40 = vector.multi_reduction <maximumf>, %39, %cst_22 [2] : vector<1x64x64xf32> to vector<1x64xf32>
    %41 = vector.shape_cast %40 : vector<1x64xf32> to vector<1x64x1xf32>
    %42 = vector.broadcast %41 : vector<1x64x1xf32> to vector<1x64x64xf32>
    %43 = arith.subf %39, %42 : vector<1x64x64xf32>
    %44 = math.exp %43 : vector<1x64x64xf32>
    %cst_23 = arith.constant dense<0.000000e+00> : vector<1x64xf32>
    %45 = vector.multi_reduction <add>, %44, %cst_23 [2] : vector<1x64x64xf32> to vector<1x64xf32>
    %46 = vector.shape_cast %45 : vector<1x64xf32> to vector<1x64x1xf32>
    %47 = tpu.reciprocal %46 {approx = true} : vector<1x64x1xf32> -> vector<1x64x1xf32>
    %48 = vector.broadcast %47 : vector<1x64x1xf32> to vector<1x64x64xf32>
    %49 = arith.mulf %44, %48 : vector<1x64x64xf32>
    %50 = arith.truncf %49 : vector<1x64x64xf32> to vector<1x64x64xbf16>
    "tpu.trace_start"() <{level = 10 : i32, message = "gqk,gke->gqe"}> : () -> ()
    %cst_24 = arith.constant dense<0.000000e+00> : vector<1x64x16xf32>
    %51 = tpu.matmul %50, %36, %cst_24 {dimension_numbers = #tpu.dot_dimension_numbers<[2], [1], [1], [2], [0, 0, 0, 1, 1, 2], [0], [0]>} : vector<1x64x64xbf16>, vector<1x64x16xbf16>, vector<1x64x16xf32> -> vector<1x64x16xf32>
    "tpu.trace_stop"() : () -> ()
    %52 = vector.shape_cast %51 : vector<1x64x16xf32> to vector<64x16xf32>
    %53 = vector.extract_strided_slice %25 {offsets = [0, 16], sizes = [64, 16], strides = [1, 1]} : vector<64x192xf32> to vector<64x16xf32>
    %cst_25 = arith.constant 2.500000e-01 : f32
    %54 = vector.broadcast %cst_25 : f32 to vector<64x16xf32>
    %55 = arith.mulf %53, %54 : vector<64x16xf32>
    %56 = arith.truncf %55 : vector<64x16xf32> to vector<64x16xbf16>
    %57 = vector.extract_strided_slice %25 {offsets = [0, 80], sizes = [64, 16], strides = [1, 1]} : vector<64x192xf32> to vector<64x16xf32>
    %58 = arith.truncf %57 : vector<64x16xf32> to vector<64x16xbf16>
    %59 = vector.extract_strided_slice %25 {offsets = [0, 144], sizes = [64, 16], strides = [1, 1]} : vector<64x192xf32> to vector<64x16xf32>
    %60 = arith.truncf %59 : vector<64x16xf32> to vector<64x16xbf16>
    %61 = vector.shape_cast %56 : vector<64x16xbf16> to vector<1x64x16xbf16>
    %62 = vector.shape_cast %58 : vector<64x16xbf16> to vector<1x64x16xbf16>
    %63 = vector.shape_cast %60 : vector<64x16xbf16> to vector<1x64x16xbf16>
    "tpu.trace_start"() <{level = 10 : i32, message = "gqe,gke->gqk"}> : () -> ()
    %cst_26 = arith.constant dense<0.000000e+00> : vector<1x64x64xf32>
    %64 = tpu.matmul %61, %62, %cst_26 {dimension_numbers = #tpu.dot_dimension_numbers<[2], [2], [1], [1], [0, 0, 0, 1, 1, 1], [0], [0]>} : vector<1x64x16xbf16>, vector<1x64x16xbf16>, vector<1x64x64xf32> -> vector<1x64x64xf32>
    "tpu.trace_stop"() : () -> ()
    %65 = vector.shape_cast %17 : vector<64x64xf32> to vector<1x64x64xf32>
    %66 = arith.addf %64, %65 : vector<1x64x64xf32>
    %cst_27 = arith.constant dense<0xFF800000> : vector<1x64xf32>
    %67 = vector.multi_reduction <maximumf>, %66, %cst_27 [2] : vector<1x64x64xf32> to vector<1x64xf32>
    %68 = vector.shape_cast %67 : vector<1x64xf32> to vector<1x64x1xf32>
    %69 = vector.broadcast %68 : vector<1x64x1xf32> to vector<1x64x64xf32>
    %70 = arith.subf %66, %69 : vector<1x64x64xf32>
    %71 = math.exp %70 : vector<1x64x64xf32>
    %cst_28 = arith.constant dense<0.000000e+00> : vector<1x64xf32>
    %72 = vector.multi_reduction <add>, %71, %cst_28 [2] : vector<1x64x64xf32> to vector<1x64xf32>
    %73 = vector.shape_cast %72 : vector<1x64xf32> to vector<1x64x1xf32>
    %74 = tpu.reciprocal %73 {approx = true} : vector<1x64x1xf32> -> vector<1x64x1xf32>
    %75 = vector.broadcast %74 : vector<1x64x1xf32> to vector<1x64x64xf32>
    %76 = arith.mulf %71, %75 : vector<1x64x64xf32>
    %77 = arith.truncf %76 : vector<1x64x64xf32> to vector<1x64x64xbf16>
    "tpu.trace_start"() <{level = 10 : i32, message = "gqk,gke->gqe"}> : () -> ()
    %cst_29 = arith.constant dense<0.000000e+00> : vector<1x64x16xf32>
    %78 = tpu.matmul %77, %63, %cst_29 {dimension_numbers = #tpu.dot_dimension_numbers<[2], [1], [1], [2], [0, 0, 0, 1, 1, 2], [0], [0]>} : vector<1x64x64xbf16>, vector<1x64x16xbf16>, vector<1x64x16xf32> -> vector<1x64x16xf32>
    "tpu.trace_stop"() : () -> ()
    %79 = vector.shape_cast %78 : vector<1x64x16xf32> to vector<64x16xf32>
    %80 = vector.extract_strided_slice %25 {offsets = [0, 32], sizes = [64, 16], strides = [1, 1]} : vector<64x192xf32> to vector<64x16xf32>
    %cst_30 = arith.constant 2.500000e-01 : f32
    %81 = vector.broadcast %cst_30 : f32 to vector<64x16xf32>
    %82 = arith.mulf %80, %81 : vector<64x16xf32>
    %83 = arith.truncf %82 : vector<64x16xf32> to vector<64x16xbf16>
    %84 = vector.extract_strided_slice %25 {offsets = [0, 96], sizes = [64, 16], strides = [1, 1]} : vector<64x192xf32> to vector<64x16xf32>
    %85 = arith.truncf %84 : vector<64x16xf32> to vector<64x16xbf16>
    %86 = vector.extract_strided_slice %25 {offsets = [0, 160], sizes = [64, 16], strides = [1, 1]} : vector<64x192xf32> to vector<64x16xf32>
    %87 = arith.truncf %86 : vector<64x16xf32> to vector<64x16xbf16>
    %88 = vector.shape_cast %83 : vector<64x16xbf16> to vector<1x64x16xbf16>
    %89 = vector.shape_cast %85 : vector<64x16xbf16> to vector<1x64x16xbf16>
    %90 = vector.shape_cast %87 : vector<64x16xbf16> to vector<1x64x16xbf16>
    "tpu.trace_start"() <{level = 10 : i32, message = "gqe,gke->gqk"}> : () -> ()
    %cst_31 = arith.constant dense<0.000000e+00> : vector<1x64x64xf32>
    %91 = tpu.matmul %88, %89, %cst_31 {dimension_numbers = #tpu.dot_dimension_numbers<[2], [2], [1], [1], [0, 0, 0, 1, 1, 1], [0], [0]>} : vector<1x64x16xbf16>, vector<1x64x16xbf16>, vector<1x64x64xf32> -> vector<1x64x64xf32>
    "tpu.trace_stop"() : () -> ()
    %92 = vector.shape_cast %17 : vector<64x64xf32> to vector<1x64x64xf32>
    %93 = arith.addf %91, %92 : vector<1x64x64xf32>
    %cst_32 = arith.constant dense<0xFF800000> : vector<1x64xf32>
    %94 = vector.multi_reduction <maximumf>, %93, %cst_32 [2] : vector<1x64x64xf32> to vector<1x64xf32>
    %95 = vector.shape_cast %94 : vector<1x64xf32> to vector<1x64x1xf32>
    %96 = vector.broadcast %95 : vector<1x64x1xf32> to vector<1x64x64xf32>
    %97 = arith.subf %93, %96 : vector<1x64x64xf32>
    %98 = math.exp %97 : vector<1x64x64xf32>
    %cst_33 = arith.constant dense<0.000000e+00> : vector<1x64xf32>
    %99 = vector.multi_reduction <add>, %98, %cst_33 [2] : vector<1x64x64xf32> to vector<1x64xf32>
    %100 = vector.shape_cast %99 : vector<1x64xf32> to vector<1x64x1xf32>
    %101 = tpu.reciprocal %100 {approx = true} : vector<1x64x1xf32> -> vector<1x64x1xf32>
    %102 = vector.broadcast %101 : vector<1x64x1xf32> to vector<1x64x64xf32>
    %103 = arith.mulf %98, %102 : vector<1x64x64xf32>
    %104 = arith.truncf %103 : vector<1x64x64xf32> to vector<1x64x64xbf16>
    "tpu.trace_start"() <{level = 10 : i32, message = "gqk,gke->gqe"}> : () -> ()
    %cst_34 = arith.constant dense<0.000000e+00> : vector<1x64x16xf32>
    %105 = tpu.matmul %104, %90, %cst_34 {dimension_numbers = #tpu.dot_dimension_numbers<[2], [1], [1], [2], [0, 0, 0, 1, 1, 2], [0], [0]>} : vector<1x64x64xbf16>, vector<1x64x16xbf16>, vector<1x64x16xf32> -> vector<1x64x16xf32>
    "tpu.trace_stop"() : () -> ()
    %106 = vector.shape_cast %105 : vector<1x64x16xf32> to vector<64x16xf32>
    %107 = vector.extract_strided_slice %25 {offsets = [0, 48], sizes = [64, 16], strides = [1, 1]} : vector<64x192xf32> to vector<64x16xf32>
    %cst_35 = arith.constant 2.500000e-01 : f32
    %108 = vector.broadcast %cst_35 : f32 to vector<64x16xf32>
    %109 = arith.mulf %107, %108 : vector<64x16xf32>
    %110 = arith.truncf %109 : vector<64x16xf32> to vector<64x16xbf16>
    %111 = vector.extract_strided_slice %25 {offsets = [0, 112], sizes = [64, 16], strides = [1, 1]} : vector<64x192xf32> to vector<64x16xf32>
    %112 = arith.truncf %111 : vector<64x16xf32> to vector<64x16xbf16>
    %113 = vector.extract_strided_slice %25 {offsets = [0, 176], sizes = [64, 16], strides = [1, 1]} : vector<64x192xf32> to vector<64x16xf32>
    %114 = arith.truncf %113 : vector<64x16xf32> to vector<64x16xbf16>
    %115 = vector.shape_cast %110 : vector<64x16xbf16> to vector<1x64x16xbf16>
    %116 = vector.shape_cast %112 : vector<64x16xbf16> to vector<1x64x16xbf16>
    %117 = vector.shape_cast %114 : vector<64x16xbf16> to vector<1x64x16xbf16>
    "tpu.trace_start"() <{level = 10 : i32, message = "gqe,gke->gqk"}> : () -> ()
    %cst_36 = arith.constant dense<0.000000e+00> : vector<1x64x64xf32>
    %118 = tpu.matmul %115, %116, %cst_36 {dimension_numbers = #tpu.dot_dimension_numbers<[2], [2], [1], [1], [0, 0, 0, 1, 1, 1], [0], [0]>} : vector<1x64x16xbf16>, vector<1x64x16xbf16>, vector<1x64x64xf32> -> vector<1x64x64xf32>
    "tpu.trace_stop"() : () -> ()
    %119 = vector.shape_cast %17 : vector<64x64xf32> to vector<1x64x64xf32>
    %120 = arith.addf %118, %119 : vector<1x64x64xf32>
    %cst_37 = arith.constant dense<0xFF800000> : vector<1x64xf32>
    %121 = vector.multi_reduction <maximumf>, %120, %cst_37 [2] : vector<1x64x64xf32> to vector<1x64xf32>
    %122 = vector.shape_cast %121 : vector<1x64xf32> to vector<1x64x1xf32>
    %123 = vector.broadcast %122 : vector<1x64x1xf32> to vector<1x64x64xf32>
    %124 = arith.subf %120, %123 : vector<1x64x64xf32>
    %125 = math.exp %124 : vector<1x64x64xf32>
    %cst_38 = arith.constant dense<0.000000e+00> : vector<1x64xf32>
    %126 = vector.multi_reduction <add>, %125, %cst_38 [2] : vector<1x64x64xf32> to vector<1x64xf32>
    %127 = vector.shape_cast %126 : vector<1x64xf32> to vector<1x64x1xf32>
    %128 = tpu.reciprocal %127 {approx = true} : vector<1x64x1xf32> -> vector<1x64x1xf32>
    %129 = vector.broadcast %128 : vector<1x64x1xf32> to vector<1x64x64xf32>
    %130 = arith.mulf %125, %129 : vector<1x64x64xf32>
    %131 = arith.truncf %130 : vector<1x64x64xf32> to vector<1x64x64xbf16>
    "tpu.trace_start"() <{level = 10 : i32, message = "gqk,gke->gqe"}> : () -> ()
    %cst_39 = arith.constant dense<0.000000e+00> : vector<1x64x16xf32>
    %132 = tpu.matmul %131, %117, %cst_39 {dimension_numbers = #tpu.dot_dimension_numbers<[2], [1], [1], [2], [0, 0, 0, 1, 1, 2], [0], [0]>} : vector<1x64x64xbf16>, vector<1x64x16xbf16>, vector<1x64x16xf32> -> vector<1x64x16xf32>
    "tpu.trace_stop"() : () -> ()
    %133 = vector.shape_cast %132 : vector<1x64x16xf32> to vector<64x16xf32>
    %134 = tpu.concatenate %52, %79, %106, %133 in 1 : vector<64x16xf32>, vector<64x16xf32>, vector<64x16xf32>, vector<64x16xf32> -> vector<64x64xf32>
    %135 = arith.truncf %134 : vector<64x64xf32> to vector<64x64xbf16>
    %c0_40 = arith.constant 0 : index
    %c0_41 = arith.constant 0 : index
    %c0_42 = arith.constant 0 : index
    %136 = vector.load %arg9[%c0_40, %c0_41, %c0_42] : memref<2x64x64xbf16, #tpu.memory_space<vmem>>, vector<1x64x64xbf16>
    %137 = vector.shape_cast %136 : vector<1x64x64xbf16> to vector<64x64xbf16>
    %cst_43 = arith.constant dense<0.000000e+00> : vector<64x64xf32>
    %138 = tpu.matmul %135, %137, %cst_43 {dimension_numbers = #tpu.dot_dimension_numbers<[1], [0], [0], [1], [0, 0, 1, 1], [], []>} : vector<64x64xbf16>, vector<64x64xbf16>, vector<64x64xf32> -> vector<64x64xf32>
    %c0_44 = arith.constant 0 : index
    %c0_45 = arith.constant 0 : index
    %c0_46 = arith.constant 0 : index
    %139 = vector.load %arg10[%c0_44, %c0_45, %c0_46] : memref<2x1x64xf32, #tpu.memory_space<vmem>>, vector<1x1x64xf32>
    %140 = vector.shape_cast %139 : vector<1x1x64xf32> to vector<1x64xf32>
    %141 = vector.broadcast %140 : vector<1x64xf32> to vector<64x64xf32>
    %142 = arith.addf %138, %141 : vector<64x64xf32>
    %143 = arith.addf %16, %142 : vector<64x64xf32>
    %c0_47 = arith.constant 0 : index
    %c0_48 = arith.constant 0 : index
    %c0_49 = arith.constant 0 : index
    %144 = vector.load %arg11[%c0_47, %c0_48, %c0_49] : memref<2x1x64xf32, #tpu.memory_space<vmem>>, vector<1x1x64xf32>
    %145 = vector.shape_cast %144 : vector<1x1x64xf32> to vector<1x64xf32>
    %c0_50 = arith.constant 0 : index
    %c0_51 = arith.constant 0 : index
    %c0_52 = arith.constant 0 : index
    %146 = vector.load %arg12[%c0_50, %c0_51, %c0_52] : memref<2x1x64xf32, #tpu.memory_space<vmem>>, vector<1x1x64xf32>
    %147 = vector.shape_cast %146 : vector<1x1x64xf32> to vector<1x64xf32>
    %cst_53 = arith.constant dense<0.000000e+00> : vector<64xf32>
    %148 = vector.multi_reduction <add>, %143, %cst_53 [1] : vector<64x64xf32> to vector<64xf32>
    %149 = vector.shape_cast %148 : vector<64xf32> to vector<64x1xf32>
    %cst_54 = arith.constant 6.400000e+01 : f32
    %150 = vector.broadcast %cst_54 : f32 to vector<64x1xf32>
    %151 = arith.divf %149, %150 : vector<64x1xf32>
    %152 = vector.broadcast %151 : vector<64x1xf32> to vector<64x64xf32>
    %153 = arith.subf %143, %152 : vector<64x64xf32>
    %154 = arith.mulf %153, %153 : vector<64x64xf32>
    %cst_55 = arith.constant dense<0.000000e+00> : vector<64xf32>
    %155 = vector.multi_reduction <add>, %154, %cst_55 [1] : vector<64x64xf32> to vector<64xf32>
    %156 = vector.shape_cast %155 : vector<64xf32> to vector<64x1xf32>
    %cst_56 = arith.constant 6.400000e+01 : f32
    %157 = vector.broadcast %cst_56 : f32 to vector<64x1xf32>
    %158 = arith.divf %156, %157 : vector<64x1xf32>
    %cst_57 = arith.constant 9.99999974E-6 : f32
    %159 = vector.broadcast %cst_57 : f32 to vector<64x1xf32>
    %160 = arith.addf %158, %159 : vector<64x1xf32>
    %161 = math.rsqrt %160 : vector<64x1xf32>
    %162 = vector.broadcast %161 : vector<64x1xf32> to vector<64x64xf32>
    %163 = arith.mulf %153, %162 : vector<64x64xf32>
    %164 = vector.broadcast %145 : vector<1x64xf32> to vector<64x64xf32>
    %165 = arith.mulf %163, %164 : vector<64x64xf32>
    %166 = vector.broadcast %147 : vector<1x64xf32> to vector<64x64xf32>
    %167 = arith.addf %165, %166 : vector<64x64xf32>
    %168 = arith.truncf %167 : vector<64x64xf32> to vector<64x64xbf16>
    %c0_58 = arith.constant 0 : index
    %c0_59 = arith.constant 0 : index
    %c0_60 = arith.constant 0 : index
    %169 = vector.load %arg13[%c0_58, %c0_59, %c0_60] : memref<2x64x256xbf16, #tpu.memory_space<vmem>>, vector<1x64x256xbf16>
    %170 = vector.shape_cast %169 : vector<1x64x256xbf16> to vector<64x256xbf16>
    %cst_61 = arith.constant dense<0.000000e+00> : vector<64x256xf32>
    %171 = tpu.matmul %168, %170, %cst_61 {dimension_numbers = #tpu.dot_dimension_numbers<[1], [0], [0], [1], [0, 0, 1, 1], [], []>} : vector<64x64xbf16>, vector<64x256xbf16>, vector<64x256xf32> -> vector<64x256xf32>
    %c0_62 = arith.constant 0 : index
    %c0_63 = arith.constant 0 : index
    %c0_64 = arith.constant 0 : index
    %172 = vector.load %arg14[%c0_62, %c0_63, %c0_64] : memref<2x1x256xf32, #tpu.memory_space<vmem>>, vector<1x1x256xf32>
    %173 = vector.shape_cast %172 : vector<1x1x256xf32> to vector<1x256xf32>
    %174 = vector.broadcast %173 : vector<1x256xf32> to vector<64x256xf32>
    %175 = arith.addf %171, %174 : vector<64x256xf32>
    %cst_65 = arith.constant 0.000000e+00 : f32
    %176 = vector.broadcast %cst_65 : f32 to vector<64x256xf32>
    %177 = arith.maximumf %175, %176 : vector<64x256xf32>
    %178 = arith.truncf %177 : vector<64x256xf32> to vector<64x256xbf16>
    %c0_66 = arith.constant 0 : index
    %c0_67 = arith.constant 0 : index
    %c0_68 = arith.constant 0 : index
    %179 = vector.load %arg15[%c0_66, %c0_67, %c0_68] : memref<2x256x64xbf16, #tpu.memory_space<vmem>>, vector<1x256x64xbf16>
    %180 = vector.shape_cast %179 : vector<1x256x64xbf16> to vector<256x64xbf16>
    %cst_69 = arith.constant dense<0.000000e+00> : vector<64x64xf32>
    %181 = tpu.matmul %178, %180, %cst_69 {dimension_numbers = #tpu.dot_dimension_numbers<[1], [0], [0], [1], [0, 0, 1, 1], [], []>} : vector<64x256xbf16>, vector<256x64xbf16>, vector<64x64xf32> -> vector<64x64xf32>
    %c0_70 = arith.constant 0 : index
    %c0_71 = arith.constant 0 : index
    %c0_72 = arith.constant 0 : index
    %182 = vector.load %arg16[%c0_70, %c0_71, %c0_72] : memref<2x1x64xf32, #tpu.memory_space<vmem>>, vector<1x1x64xf32>
    %183 = vector.shape_cast %182 : vector<1x1x64xf32> to vector<1x64xf32>
    %184 = vector.broadcast %183 : vector<1x64xf32> to vector<64x64xf32>
    %185 = arith.addf %181, %184 : vector<64x64xf32>
    %186 = arith.addf %167, %185 : vector<64x64xf32>
    %c0_73 = arith.constant 0 : index
    %c0_74 = arith.constant 0 : index
    %c0_75 = arith.constant 0 : index
    %187 = vector.load %arg17[%c0_73, %c0_74, %c0_75] : memref<2x1x64xf32, #tpu.memory_space<vmem>>, vector<1x1x64xf32>
    %188 = vector.shape_cast %187 : vector<1x1x64xf32> to vector<1x64xf32>
    %c0_76 = arith.constant 0 : index
    %c0_77 = arith.constant 0 : index
    %c0_78 = arith.constant 0 : index
    %189 = vector.load %arg18[%c0_76, %c0_77, %c0_78] : memref<2x1x64xf32, #tpu.memory_space<vmem>>, vector<1x1x64xf32>
    %190 = vector.shape_cast %189 : vector<1x1x64xf32> to vector<1x64xf32>
    %cst_79 = arith.constant dense<0.000000e+00> : vector<64xf32>
    %191 = vector.multi_reduction <add>, %186, %cst_79 [1] : vector<64x64xf32> to vector<64xf32>
    %192 = vector.shape_cast %191 : vector<64xf32> to vector<64x1xf32>
    %cst_80 = arith.constant 6.400000e+01 : f32
    %193 = vector.broadcast %cst_80 : f32 to vector<64x1xf32>
    %194 = arith.divf %192, %193 : vector<64x1xf32>
    %195 = vector.broadcast %194 : vector<64x1xf32> to vector<64x64xf32>
    %196 = arith.subf %186, %195 : vector<64x64xf32>
    %197 = arith.mulf %196, %196 : vector<64x64xf32>
    %cst_81 = arith.constant dense<0.000000e+00> : vector<64xf32>
    %198 = vector.multi_reduction <add>, %197, %cst_81 [1] : vector<64x64xf32> to vector<64xf32>
    %199 = vector.shape_cast %198 : vector<64xf32> to vector<64x1xf32>
    %cst_82 = arith.constant 6.400000e+01 : f32
    %200 = vector.broadcast %cst_82 : f32 to vector<64x1xf32>
    %201 = arith.divf %199, %200 : vector<64x1xf32>
    %cst_83 = arith.constant 9.99999974E-6 : f32
    %202 = vector.broadcast %cst_83 : f32 to vector<64x1xf32>
    %203 = arith.addf %201, %202 : vector<64x1xf32>
    %204 = math.rsqrt %203 : vector<64x1xf32>
    %205 = vector.broadcast %204 : vector<64x1xf32> to vector<64x64xf32>
    %206 = arith.mulf %196, %205 : vector<64x64xf32>
    %207 = vector.broadcast %188 : vector<1x64xf32> to vector<64x64xf32>
    %208 = arith.mulf %206, %207 : vector<64x64xf32>
    %209 = vector.broadcast %190 : vector<1x64xf32> to vector<64x64xf32>
    %210 = arith.addf %208, %209 : vector<64x64xf32>
    %211 = arith.truncf %210 : vector<64x64xf32> to vector<64x64xbf16>
    %c1 = arith.constant 1 : index
    %c0_84 = arith.constant 0 : index
    %c0_85 = arith.constant 0 : index
    %212 = vector.load %arg7[%c1, %c0_84, %c0_85] : memref<2x64x192xbf16, #tpu.memory_space<vmem>>, vector<1x64x192xbf16>
    %213 = vector.shape_cast %212 : vector<1x64x192xbf16> to vector<64x192xbf16>
    %cst_86 = arith.constant dense<0.000000e+00> : vector<64x192xf32>
    %214 = tpu.matmul %211, %213, %cst_86 {dimension_numbers = #tpu.dot_dimension_numbers<[1], [0], [0], [1], [0, 0, 1, 1], [], []>} : vector<64x64xbf16>, vector<64x192xbf16>, vector<64x192xf32> -> vector<64x192xf32>
    %c1_87 = arith.constant 1 : index
    %c0_88 = arith.constant 0 : index
    %c0_89 = arith.constant 0 : index
    %215 = vector.load %arg8[%c1_87, %c0_88, %c0_89] : memref<2x1x192xf32, #tpu.memory_space<vmem>>, vector<1x1x192xf32>
    %216 = vector.shape_cast %215 : vector<1x1x192xf32> to vector<1x192xf32>
    %217 = vector.broadcast %216 : vector<1x192xf32> to vector<64x192xf32>
    %218 = arith.addf %214, %217 : vector<64x192xf32>
    %219 = vector.extract_strided_slice %218 {offsets = [0, 0], sizes = [64, 16], strides = [1, 1]} : vector<64x192xf32> to vector<64x16xf32>
    %cst_90 = arith.constant 2.500000e-01 : f32
    %220 = vector.broadcast %cst_90 : f32 to vector<64x16xf32>
    %221 = arith.mulf %219, %220 : vector<64x16xf32>
    %222 = arith.truncf %221 : vector<64x16xf32> to vector<64x16xbf16>
    %223 = vector.extract_strided_slice %218 {offsets = [0, 64], sizes = [64, 16], strides = [1, 1]} : vector<64x192xf32> to vector<64x16xf32>
    %224 = arith.truncf %223 : vector<64x16xf32> to vector<64x16xbf16>
    %225 = vector.extract_strided_slice %218 {offsets = [0, 128], sizes = [64, 16], strides = [1, 1]} : vector<64x192xf32> to vector<64x16xf32>
    %226 = arith.truncf %225 : vector<64x16xf32> to vector<64x16xbf16>
    %227 = vector.shape_cast %222 : vector<64x16xbf16> to vector<1x64x16xbf16>
    %228 = vector.shape_cast %224 : vector<64x16xbf16> to vector<1x64x16xbf16>
    %229 = vector.shape_cast %226 : vector<64x16xbf16> to vector<1x64x16xbf16>
    "tpu.trace_start"() <{level = 10 : i32, message = "gqe,gke->gqk"}> : () -> ()
    %cst_91 = arith.constant dense<0.000000e+00> : vector<1x64x64xf32>
    %230 = tpu.matmul %227, %228, %cst_91 {dimension_numbers = #tpu.dot_dimension_numbers<[2], [2], [1], [1], [0, 0, 0, 1, 1, 1], [0], [0]>} : vector<1x64x16xbf16>, vector<1x64x16xbf16>, vector<1x64x64xf32> -> vector<1x64x64xf32>
    "tpu.trace_stop"() : () -> ()
    %231 = vector.shape_cast %17 : vector<64x64xf32> to vector<1x64x64xf32>
    %232 = arith.addf %230, %231 : vector<1x64x64xf32>
    %cst_92 = arith.constant dense<0xFF800000> : vector<1x64xf32>
    %233 = vector.multi_reduction <maximumf>, %232, %cst_92 [2] : vector<1x64x64xf32> to vector<1x64xf32>
    %234 = vector.shape_cast %233 : vector<1x64xf32> to vector<1x64x1xf32>
    %235 = vector.broadcast %234 : vector<1x64x1xf32> to vector<1x64x64xf32>
    %236 = arith.subf %232, %235 : vector<1x64x64xf32>
    %237 = math.exp %236 : vector<1x64x64xf32>
    %cst_93 = arith.constant dense<0.000000e+00> : vector<1x64xf32>
    %238 = vector.multi_reduction <add>, %237, %cst_93 [2] : vector<1x64x64xf32> to vector<1x64xf32>
    %239 = vector.shape_cast %238 : vector<1x64xf32> to vector<1x64x1xf32>
    %240 = tpu.reciprocal %239 {approx = true} : vector<1x64x1xf32> -> vector<1x64x1xf32>
    %241 = vector.broadcast %240 : vector<1x64x1xf32> to vector<1x64x64xf32>
    %242 = arith.mulf %237, %241 : vector<1x64x64xf32>
    %243 = arith.truncf %242 : vector<1x64x64xf32> to vector<1x64x64xbf16>
    "tpu.trace_start"() <{level = 10 : i32, message = "gqk,gke->gqe"}> : () -> ()
    %cst_94 = arith.constant dense<0.000000e+00> : vector<1x64x16xf32>
    %244 = tpu.matmul %243, %229, %cst_94 {dimension_numbers = #tpu.dot_dimension_numbers<[2], [1], [1], [2], [0, 0, 0, 1, 1, 2], [0], [0]>} : vector<1x64x64xbf16>, vector<1x64x16xbf16>, vector<1x64x16xf32> -> vector<1x64x16xf32>
    "tpu.trace_stop"() : () -> ()
    %245 = vector.shape_cast %244 : vector<1x64x16xf32> to vector<64x16xf32>
    %246 = vector.extract_strided_slice %218 {offsets = [0, 16], sizes = [64, 16], strides = [1, 1]} : vector<64x192xf32> to vector<64x16xf32>
    %cst_95 = arith.constant 2.500000e-01 : f32
    %247 = vector.broadcast %cst_95 : f32 to vector<64x16xf32>
    %248 = arith.mulf %246, %247 : vector<64x16xf32>
    %249 = arith.truncf %248 : vector<64x16xf32> to vector<64x16xbf16>
    %250 = vector.extract_strided_slice %218 {offsets = [0, 80], sizes = [64, 16], strides = [1, 1]} : vector<64x192xf32> to vector<64x16xf32>
    %251 = arith.truncf %250 : vector<64x16xf32> to vector<64x16xbf16>
    %252 = vector.extract_strided_slice %218 {offsets = [0, 144], sizes = [64, 16], strides = [1, 1]} : vector<64x192xf32> to vector<64x16xf32>
    %253 = arith.truncf %252 : vector<64x16xf32> to vector<64x16xbf16>
    %254 = vector.shape_cast %249 : vector<64x16xbf16> to vector<1x64x16xbf16>
    %255 = vector.shape_cast %251 : vector<64x16xbf16> to vector<1x64x16xbf16>
    %256 = vector.shape_cast %253 : vector<64x16xbf16> to vector<1x64x16xbf16>
    "tpu.trace_start"() <{level = 10 : i32, message = "gqe,gke->gqk"}> : () -> ()
    %cst_96 = arith.constant dense<0.000000e+00> : vector<1x64x64xf32>
    %257 = tpu.matmul %254, %255, %cst_96 {dimension_numbers = #tpu.dot_dimension_numbers<[2], [2], [1], [1], [0, 0, 0, 1, 1, 1], [0], [0]>} : vector<1x64x16xbf16>, vector<1x64x16xbf16>, vector<1x64x64xf32> -> vector<1x64x64xf32>
    "tpu.trace_stop"() : () -> ()
    %258 = vector.shape_cast %17 : vector<64x64xf32> to vector<1x64x64xf32>
    %259 = arith.addf %257, %258 : vector<1x64x64xf32>
    %cst_97 = arith.constant dense<0xFF800000> : vector<1x64xf32>
    %260 = vector.multi_reduction <maximumf>, %259, %cst_97 [2] : vector<1x64x64xf32> to vector<1x64xf32>
    %261 = vector.shape_cast %260 : vector<1x64xf32> to vector<1x64x1xf32>
    %262 = vector.broadcast %261 : vector<1x64x1xf32> to vector<1x64x64xf32>
    %263 = arith.subf %259, %262 : vector<1x64x64xf32>
    %264 = math.exp %263 : vector<1x64x64xf32>
    %cst_98 = arith.constant dense<0.000000e+00> : vector<1x64xf32>
    %265 = vector.multi_reduction <add>, %264, %cst_98 [2] : vector<1x64x64xf32> to vector<1x64xf32>
    %266 = vector.shape_cast %265 : vector<1x64xf32> to vector<1x64x1xf32>
    %267 = tpu.reciprocal %266 {approx = true} : vector<1x64x1xf32> -> vector<1x64x1xf32>
    %268 = vector.broadcast %267 : vector<1x64x1xf32> to vector<1x64x64xf32>
    %269 = arith.mulf %264, %268 : vector<1x64x64xf32>
    %270 = arith.truncf %269 : vector<1x64x64xf32> to vector<1x64x64xbf16>
    "tpu.trace_start"() <{level = 10 : i32, message = "gqk,gke->gqe"}> : () -> ()
    %cst_99 = arith.constant dense<0.000000e+00> : vector<1x64x16xf32>
    %271 = tpu.matmul %270, %256, %cst_99 {dimension_numbers = #tpu.dot_dimension_numbers<[2], [1], [1], [2], [0, 0, 0, 1, 1, 2], [0], [0]>} : vector<1x64x64xbf16>, vector<1x64x16xbf16>, vector<1x64x16xf32> -> vector<1x64x16xf32>
    "tpu.trace_stop"() : () -> ()
    %272 = vector.shape_cast %271 : vector<1x64x16xf32> to vector<64x16xf32>
    %273 = vector.extract_strided_slice %218 {offsets = [0, 32], sizes = [64, 16], strides = [1, 1]} : vector<64x192xf32> to vector<64x16xf32>
    %cst_100 = arith.constant 2.500000e-01 : f32
    %274 = vector.broadcast %cst_100 : f32 to vector<64x16xf32>
    %275 = arith.mulf %273, %274 : vector<64x16xf32>
    %276 = arith.truncf %275 : vector<64x16xf32> to vector<64x16xbf16>
    %277 = vector.extract_strided_slice %218 {offsets = [0, 96], sizes = [64, 16], strides = [1, 1]} : vector<64x192xf32> to vector<64x16xf32>
    %278 = arith.truncf %277 : vector<64x16xf32> to vector<64x16xbf16>
    %279 = vector.extract_strided_slice %218 {offsets = [0, 160], sizes = [64, 16], strides = [1, 1]} : vector<64x192xf32> to vector<64x16xf32>
    %280 = arith.truncf %279 : vector<64x16xf32> to vector<64x16xbf16>
    %281 = vector.shape_cast %276 : vector<64x16xbf16> to vector<1x64x16xbf16>
    %282 = vector.shape_cast %278 : vector<64x16xbf16> to vector<1x64x16xbf16>
    %283 = vector.shape_cast %280 : vector<64x16xbf16> to vector<1x64x16xbf16>
    "tpu.trace_start"() <{level = 10 : i32, message = "gqe,gke->gqk"}> : () -> ()
    %cst_101 = arith.constant dense<0.000000e+00> : vector<1x64x64xf32>
    %284 = tpu.matmul %281, %282, %cst_101 {dimension_numbers = #tpu.dot_dimension_numbers<[2], [2], [1], [1], [0, 0, 0, 1, 1, 1], [0], [0]>} : vector<1x64x16xbf16>, vector<1x64x16xbf16>, vector<1x64x64xf32> -> vector<1x64x64xf32>
    "tpu.trace_stop"() : () -> ()
    %285 = vector.shape_cast %17 : vector<64x64xf32> to vector<1x64x64xf32>
    %286 = arith.addf %284, %285 : vector<1x64x64xf32>
    %cst_102 = arith.constant dense<0xFF800000> : vector<1x64xf32>
    %287 = vector.multi_reduction <maximumf>, %286, %cst_102 [2] : vector<1x64x64xf32> to vector<1x64xf32>
    %288 = vector.shape_cast %287 : vector<1x64xf32> to vector<1x64x1xf32>
    %289 = vector.broadcast %288 : vector<1x64x1xf32> to vector<1x64x64xf32>
    %290 = arith.subf %286, %289 : vector<1x64x64xf32>
    %291 = math.exp %290 : vector<1x64x64xf32>
    %cst_103 = arith.constant dense<0.000000e+00> : vector<1x64xf32>
    %292 = vector.multi_reduction <add>, %291, %cst_103 [2] : vector<1x64x64xf32> to vector<1x64xf32>
    %293 = vector.shape_cast %292 : vector<1x64xf32> to vector<1x64x1xf32>
    %294 = tpu.reciprocal %293 {approx = true} : vector<1x64x1xf32> -> vector<1x64x1xf32>
    %295 = vector.broadcast %294 : vector<1x64x1xf32> to vector<1x64x64xf32>
    %296 = arith.mulf %291, %295 : vector<1x64x64xf32>
    %297 = arith.truncf %296 : vector<1x64x64xf32> to vector<1x64x64xbf16>
    "tpu.trace_start"() <{level = 10 : i32, message = "gqk,gke->gqe"}> : () -> ()
    %cst_104 = arith.constant dense<0.000000e+00> : vector<1x64x16xf32>
    %298 = tpu.matmul %297, %283, %cst_104 {dimension_numbers = #tpu.dot_dimension_numbers<[2], [1], [1], [2], [0, 0, 0, 1, 1, 2], [0], [0]>} : vector<1x64x64xbf16>, vector<1x64x16xbf16>, vector<1x64x16xf32> -> vector<1x64x16xf32>
    "tpu.trace_stop"() : () -> ()
    %299 = vector.shape_cast %298 : vector<1x64x16xf32> to vector<64x16xf32>
    %300 = vector.extract_strided_slice %218 {offsets = [0, 48], sizes = [64, 16], strides = [1, 1]} : vector<64x192xf32> to vector<64x16xf32>
    %cst_105 = arith.constant 2.500000e-01 : f32
    %301 = vector.broadcast %cst_105 : f32 to vector<64x16xf32>
    %302 = arith.mulf %300, %301 : vector<64x16xf32>
    %303 = arith.truncf %302 : vector<64x16xf32> to vector<64x16xbf16>
    %304 = vector.extract_strided_slice %218 {offsets = [0, 112], sizes = [64, 16], strides = [1, 1]} : vector<64x192xf32> to vector<64x16xf32>
    %305 = arith.truncf %304 : vector<64x16xf32> to vector<64x16xbf16>
    %306 = vector.extract_strided_slice %218 {offsets = [0, 176], sizes = [64, 16], strides = [1, 1]} : vector<64x192xf32> to vector<64x16xf32>
    %307 = arith.truncf %306 : vector<64x16xf32> to vector<64x16xbf16>
    %308 = vector.shape_cast %303 : vector<64x16xbf16> to vector<1x64x16xbf16>
    %309 = vector.shape_cast %305 : vector<64x16xbf16> to vector<1x64x16xbf16>
    %310 = vector.shape_cast %307 : vector<64x16xbf16> to vector<1x64x16xbf16>
    "tpu.trace_start"() <{level = 10 : i32, message = "gqe,gke->gqk"}> : () -> ()
    %cst_106 = arith.constant dense<0.000000e+00> : vector<1x64x64xf32>
    %311 = tpu.matmul %308, %309, %cst_106 {dimension_numbers = #tpu.dot_dimension_numbers<[2], [2], [1], [1], [0, 0, 0, 1, 1, 1], [0], [0]>} : vector<1x64x16xbf16>, vector<1x64x16xbf16>, vector<1x64x64xf32> -> vector<1x64x64xf32>
    "tpu.trace_stop"() : () -> ()
    %312 = vector.shape_cast %17 : vector<64x64xf32> to vector<1x64x64xf32>
    %313 = arith.addf %311, %312 : vector<1x64x64xf32>
    %cst_107 = arith.constant dense<0xFF800000> : vector<1x64xf32>
    %314 = vector.multi_reduction <maximumf>, %313, %cst_107 [2] : vector<1x64x64xf32> to vector<1x64xf32>
    %315 = vector.shape_cast %314 : vector<1x64xf32> to vector<1x64x1xf32>
    %316 = vector.broadcast %315 : vector<1x64x1xf32> to vector<1x64x64xf32>
    %317 = arith.subf %313, %316 : vector<1x64x64xf32>
    %318 = math.exp %317 : vector<1x64x64xf32>
    %cst_108 = arith.constant dense<0.000000e+00> : vector<1x64xf32>
    %319 = vector.multi_reduction <add>, %318, %cst_108 [2] : vector<1x64x64xf32> to vector<1x64xf32>
    %320 = vector.shape_cast %319 : vector<1x64xf32> to vector<1x64x1xf32>
    %321 = tpu.reciprocal %320 {approx = true} : vector<1x64x1xf32> -> vector<1x64x1xf32>
    %322 = vector.broadcast %321 : vector<1x64x1xf32> to vector<1x64x64xf32>
    %323 = arith.mulf %318, %322 : vector<1x64x64xf32>
    %324 = arith.truncf %323 : vector<1x64x64xf32> to vector<1x64x64xbf16>
    "tpu.trace_start"() <{level = 10 : i32, message = "gqk,gke->gqe"}> : () -> ()
    %cst_109 = arith.constant dense<0.000000e+00> : vector<1x64x16xf32>
    %325 = tpu.matmul %324, %310, %cst_109 {dimension_numbers = #tpu.dot_dimension_numbers<[2], [1], [1], [2], [0, 0, 0, 1, 1, 2], [0], [0]>} : vector<1x64x64xbf16>, vector<1x64x16xbf16>, vector<1x64x16xf32> -> vector<1x64x16xf32>
    "tpu.trace_stop"() : () -> ()
    %326 = vector.shape_cast %325 : vector<1x64x16xf32> to vector<64x16xf32>
    %327 = tpu.concatenate %245, %272, %299, %326 in 1 : vector<64x16xf32>, vector<64x16xf32>, vector<64x16xf32>, vector<64x16xf32> -> vector<64x64xf32>
    %328 = arith.truncf %327 : vector<64x64xf32> to vector<64x64xbf16>
    %c1_110 = arith.constant 1 : index
    %c0_111 = arith.constant 0 : index
    %c0_112 = arith.constant 0 : index
    %329 = vector.load %arg9[%c1_110, %c0_111, %c0_112] : memref<2x64x64xbf16, #tpu.memory_space<vmem>>, vector<1x64x64xbf16>
    %330 = vector.shape_cast %329 : vector<1x64x64xbf16> to vector<64x64xbf16>
    %cst_113 = arith.constant dense<0.000000e+00> : vector<64x64xf32>
    %331 = tpu.matmul %328, %330, %cst_113 {dimension_numbers = #tpu.dot_dimension_numbers<[1], [0], [0], [1], [0, 0, 1, 1], [], []>} : vector<64x64xbf16>, vector<64x64xbf16>, vector<64x64xf32> -> vector<64x64xf32>
    %c1_114 = arith.constant 1 : index
    %c0_115 = arith.constant 0 : index
    %c0_116 = arith.constant 0 : index
    %332 = vector.load %arg10[%c1_114, %c0_115, %c0_116] : memref<2x1x64xf32, #tpu.memory_space<vmem>>, vector<1x1x64xf32>
    %333 = vector.shape_cast %332 : vector<1x1x64xf32> to vector<1x64xf32>
    %334 = vector.broadcast %333 : vector<1x64xf32> to vector<64x64xf32>
    %335 = arith.addf %331, %334 : vector<64x64xf32>
    %336 = arith.addf %210, %335 : vector<64x64xf32>
    %c1_117 = arith.constant 1 : index
    %c0_118 = arith.constant 0 : index
    %c0_119 = arith.constant 0 : index
    %337 = vector.load %arg11[%c1_117, %c0_118, %c0_119] : memref<2x1x64xf32, #tpu.memory_space<vmem>>, vector<1x1x64xf32>
    %338 = vector.shape_cast %337 : vector<1x1x64xf32> to vector<1x64xf32>
    %c1_120 = arith.constant 1 : index
    %c0_121 = arith.constant 0 : index
    %c0_122 = arith.constant 0 : index
    %339 = vector.load %arg12[%c1_120, %c0_121, %c0_122] : memref<2x1x64xf32, #tpu.memory_space<vmem>>, vector<1x1x64xf32>
    %340 = vector.shape_cast %339 : vector<1x1x64xf32> to vector<1x64xf32>
    %cst_123 = arith.constant dense<0.000000e+00> : vector<64xf32>
    %341 = vector.multi_reduction <add>, %336, %cst_123 [1] : vector<64x64xf32> to vector<64xf32>
    %342 = vector.shape_cast %341 : vector<64xf32> to vector<64x1xf32>
    %cst_124 = arith.constant 6.400000e+01 : f32
    %343 = vector.broadcast %cst_124 : f32 to vector<64x1xf32>
    %344 = arith.divf %342, %343 : vector<64x1xf32>
    %345 = vector.broadcast %344 : vector<64x1xf32> to vector<64x64xf32>
    %346 = arith.subf %336, %345 : vector<64x64xf32>
    %347 = arith.mulf %346, %346 : vector<64x64xf32>
    %cst_125 = arith.constant dense<0.000000e+00> : vector<64xf32>
    %348 = vector.multi_reduction <add>, %347, %cst_125 [1] : vector<64x64xf32> to vector<64xf32>
    %349 = vector.shape_cast %348 : vector<64xf32> to vector<64x1xf32>
    %cst_126 = arith.constant 6.400000e+01 : f32
    %350 = vector.broadcast %cst_126 : f32 to vector<64x1xf32>
    %351 = arith.divf %349, %350 : vector<64x1xf32>
    %cst_127 = arith.constant 9.99999974E-6 : f32
    %352 = vector.broadcast %cst_127 : f32 to vector<64x1xf32>
    %353 = arith.addf %351, %352 : vector<64x1xf32>
    %354 = math.rsqrt %353 : vector<64x1xf32>
    %355 = vector.broadcast %354 : vector<64x1xf32> to vector<64x64xf32>
    %356 = arith.mulf %346, %355 : vector<64x64xf32>
    %357 = vector.broadcast %338 : vector<1x64xf32> to vector<64x64xf32>
    %358 = arith.mulf %356, %357 : vector<64x64xf32>
    %359 = vector.broadcast %340 : vector<1x64xf32> to vector<64x64xf32>
    %360 = arith.addf %358, %359 : vector<64x64xf32>
    %361 = arith.truncf %360 : vector<64x64xf32> to vector<64x64xbf16>
    %c1_128 = arith.constant 1 : index
    %c0_129 = arith.constant 0 : index
    %c0_130 = arith.constant 0 : index
    %362 = vector.load %arg13[%c1_128, %c0_129, %c0_130] : memref<2x64x256xbf16, #tpu.memory_space<vmem>>, vector<1x64x256xbf16>
    %363 = vector.shape_cast %362 : vector<1x64x256xbf16> to vector<64x256xbf16>
    %cst_131 = arith.constant dense<0.000000e+00> : vector<64x256xf32>
    %364 = tpu.matmul %361, %363, %cst_131 {dimension_numbers = #tpu.dot_dimension_numbers<[1], [0], [0], [1], [0, 0, 1, 1], [], []>} : vector<64x64xbf16>, vector<64x256xbf16>, vector<64x256xf32> -> vector<64x256xf32>
    %c1_132 = arith.constant 1 : index
    %c0_133 = arith.constant 0 : index
    %c0_134 = arith.constant 0 : index
    %365 = vector.load %arg14[%c1_132, %c0_133, %c0_134] : memref<2x1x256xf32, #tpu.memory_space<vmem>>, vector<1x1x256xf32>
    %366 = vector.shape_cast %365 : vector<1x1x256xf32> to vector<1x256xf32>
    %367 = vector.broadcast %366 : vector<1x256xf32> to vector<64x256xf32>
    %368 = arith.addf %364, %367 : vector<64x256xf32>
    %cst_135 = arith.constant 0.000000e+00 : f32
    %369 = vector.broadcast %cst_135 : f32 to vector<64x256xf32>
    %370 = arith.maximumf %368, %369 : vector<64x256xf32>
    %371 = arith.truncf %370 : vector<64x256xf32> to vector<64x256xbf16>
    %c1_136 = arith.constant 1 : index
    %c0_137 = arith.constant 0 : index
    %c0_138 = arith.constant 0 : index
    %372 = vector.load %arg15[%c1_136, %c0_137, %c0_138] : memref<2x256x64xbf16, #tpu.memory_space<vmem>>, vector<1x256x64xbf16>
    %373 = vector.shape_cast %372 : vector<1x256x64xbf16> to vector<256x64xbf16>
    %cst_139 = arith.constant dense<0.000000e+00> : vector<64x64xf32>
    %374 = tpu.matmul %371, %373, %cst_139 {dimension_numbers = #tpu.dot_dimension_numbers<[1], [0], [0], [1], [0, 0, 1, 1], [], []>} : vector<64x256xbf16>, vector<256x64xbf16>, vector<64x64xf32> -> vector<64x64xf32>
    %c1_140 = arith.constant 1 : index
    %c0_141 = arith.constant 0 : index
    %c0_142 = arith.constant 0 : index
    %375 = vector.load %arg16[%c1_140, %c0_141, %c0_142] : memref<2x1x64xf32, #tpu.memory_space<vmem>>, vector<1x1x64xf32>
    %376 = vector.shape_cast %375 : vector<1x1x64xf32> to vector<1x64xf32>
    %377 = vector.broadcast %376 : vector<1x64xf32> to vector<64x64xf32>
    %378 = arith.addf %374, %377 : vector<64x64xf32>
    %379 = arith.addf %360, %378 : vector<64x64xf32>
    %c1_143 = arith.constant 1 : index
    %c0_144 = arith.constant 0 : index
    %c0_145 = arith.constant 0 : index
    %380 = vector.load %arg17[%c1_143, %c0_144, %c0_145] : memref<2x1x64xf32, #tpu.memory_space<vmem>>, vector<1x1x64xf32>
    %381 = vector.shape_cast %380 : vector<1x1x64xf32> to vector<1x64xf32>
    %c1_146 = arith.constant 1 : index
    %c0_147 = arith.constant 0 : index
    %c0_148 = arith.constant 0 : index
    %382 = vector.load %arg18[%c1_146, %c0_147, %c0_148] : memref<2x1x64xf32, #tpu.memory_space<vmem>>, vector<1x1x64xf32>
    %383 = vector.shape_cast %382 : vector<1x1x64xf32> to vector<1x64xf32>
    %cst_149 = arith.constant dense<0.000000e+00> : vector<64xf32>
    %384 = vector.multi_reduction <add>, %379, %cst_149 [1] : vector<64x64xf32> to vector<64xf32>
    %385 = vector.shape_cast %384 : vector<64xf32> to vector<64x1xf32>
    %cst_150 = arith.constant 6.400000e+01 : f32
    %386 = vector.broadcast %cst_150 : f32 to vector<64x1xf32>
    %387 = arith.divf %385, %386 : vector<64x1xf32>
    %388 = vector.broadcast %387 : vector<64x1xf32> to vector<64x64xf32>
    %389 = arith.subf %379, %388 : vector<64x64xf32>
    %390 = arith.mulf %389, %389 : vector<64x64xf32>
    %cst_151 = arith.constant dense<0.000000e+00> : vector<64xf32>
    %391 = vector.multi_reduction <add>, %390, %cst_151 [1] : vector<64x64xf32> to vector<64xf32>
    %392 = vector.shape_cast %391 : vector<64xf32> to vector<64x1xf32>
    %cst_152 = arith.constant 6.400000e+01 : f32
    %393 = vector.broadcast %cst_152 : f32 to vector<64x1xf32>
    %394 = arith.divf %392, %393 : vector<64x1xf32>
    %cst_153 = arith.constant 9.99999974E-6 : f32
    %395 = vector.broadcast %cst_153 : f32 to vector<64x1xf32>
    %396 = arith.addf %394, %395 : vector<64x1xf32>
    %397 = math.rsqrt %396 : vector<64x1xf32>
    %398 = vector.broadcast %397 : vector<64x1xf32> to vector<64x64xf32>
    %399 = arith.mulf %389, %398 : vector<64x64xf32>
    %400 = vector.broadcast %381 : vector<1x64xf32> to vector<64x64xf32>
    %401 = arith.mulf %399, %400 : vector<64x64xf32>
    %402 = vector.broadcast %383 : vector<1x64xf32> to vector<64x64xf32>
    %403 = arith.addf %401, %402 : vector<64x64xf32>
    %404 = arith.truncf %403 : vector<64x64xf32> to vector<64x64xbf16>
    %c0_154 = arith.constant 0 : index
    %c0_155 = arith.constant 0 : index
    %405 = vector.load %arg19[%c0_154, %c0_155] : memref<64x1024xbf16, #tpu.memory_space<vmem>>, vector<64x1024xbf16>
    %cst_156 = arith.constant dense<0.000000e+00> : vector<64x1024xf32>
    %406 = tpu.matmul %404, %405, %cst_156 {dimension_numbers = #tpu.dot_dimension_numbers<[1], [0], [0], [1], [0, 0, 1, 1], [], []>} : vector<64x64xbf16>, vector<64x1024xbf16>, vector<64x1024xf32> -> vector<64x1024xf32>
    %c0_157 = arith.constant 0 : index
    %c0_158 = arith.constant 0 : index
    %407 = vector.load %arg20[%c0_157, %c0_158] : memref<1x1024xf32, #tpu.memory_space<vmem>>, vector<1x1024xf32>
    %408 = vector.broadcast %407 : vector<1x1024xf32> to vector<64x1024xf32>
    %409 = arith.addf %406, %408 : vector<64x1024xf32>
    %cst_159 = arith.constant 0.000000e+00 : f32
    %410 = vector.broadcast %cst_159 : f32 to vector<64x1024xf32>
    %411 = arith.maximumf %409, %410 : vector<64x1024xf32>
    %412 = arith.truncf %411 : vector<64x1024xf32> to vector<64x1024xbf16>
    %c0_160 = arith.constant 0 : index
    %c0_161 = arith.constant 0 : index
    %413 = vector.load %arg21[%c0_160, %c0_161] : memref<1024x32xbf16, #tpu.memory_space<vmem>>, vector<1024x32xbf16>
    %cst_162 = arith.constant dense<0.000000e+00> : vector<64x32xf32>
    %414 = tpu.matmul %412, %413, %cst_162 {dimension_numbers = #tpu.dot_dimension_numbers<[1], [0], [0], [1], [0, 0, 1, 1], [], []>} : vector<64x1024xbf16>, vector<1024x32xbf16>, vector<64x32xf32> -> vector<64x32xf32>
    %c0_163 = arith.constant 0 : index
    %c0_164 = arith.constant 0 : index
    %415 = vector.load %arg22[%c0_163, %c0_164] : memref<1x32xf32, #tpu.memory_space<vmem>>, vector<1x32xf32>
    %416 = vector.broadcast %415 : vector<1x32xf32> to vector<64x32xf32>
    %417 = arith.addf %414, %416 : vector<64x32xf32>
    %418 = vector.shape_cast %417 : vector<64x32xf32> to vector<8x8x32xf32>
    %419 = vector.extract_strided_slice %418 {offsets = [0, 0, 0], sizes = [8, 1, 32], strides = [1, 1, 1]} : vector<8x8x32xf32> to vector<8x1x32xf32>
    %420 = vector.shape_cast %419 : vector<8x1x32xf32> to vector<8x32xf32>
    %421 = vector.extract_strided_slice %418 {offsets = [0, 1, 0], sizes = [8, 1, 32], strides = [1, 1, 1]} : vector<8x8x32xf32> to vector<8x1x32xf32>
    %422 = vector.shape_cast %421 : vector<8x1x32xf32> to vector<8x32xf32>
    %423 = vector.extract_strided_slice %418 {offsets = [0, 2, 0], sizes = [8, 1, 32], strides = [1, 1, 1]} : vector<8x8x32xf32> to vector<8x1x32xf32>
    %424 = vector.shape_cast %423 : vector<8x1x32xf32> to vector<8x32xf32>
    %425 = vector.extract_strided_slice %418 {offsets = [0, 3, 0], sizes = [8, 1, 32], strides = [1, 1, 1]} : vector<8x8x32xf32> to vector<8x1x32xf32>
    %426 = vector.shape_cast %425 : vector<8x1x32xf32> to vector<8x32xf32>
    %427 = vector.extract_strided_slice %418 {offsets = [0, 4, 0], sizes = [8, 1, 32], strides = [1, 1, 1]} : vector<8x8x32xf32> to vector<8x1x32xf32>
    %428 = vector.shape_cast %427 : vector<8x1x32xf32> to vector<8x32xf32>
    %429 = vector.extract_strided_slice %418 {offsets = [0, 5, 0], sizes = [8, 1, 32], strides = [1, 1, 1]} : vector<8x8x32xf32> to vector<8x1x32xf32>
    %430 = vector.shape_cast %429 : vector<8x1x32xf32> to vector<8x32xf32>
    %431 = vector.extract_strided_slice %418 {offsets = [0, 6, 0], sizes = [8, 1, 32], strides = [1, 1, 1]} : vector<8x8x32xf32> to vector<8x1x32xf32>
    %432 = vector.shape_cast %431 : vector<8x1x32xf32> to vector<8x32xf32>
    %433 = vector.extract_strided_slice %418 {offsets = [0, 7, 0], sizes = [8, 1, 32], strides = [1, 1, 1]} : vector<8x8x32xf32> to vector<8x1x32xf32>
    %434 = vector.shape_cast %433 : vector<8x1x32xf32> to vector<8x32xf32>
    %435 = tpu.concatenate %420, %422, %424, %426, %428, %430, %432, %434 in 1 : vector<8x32xf32>, vector<8x32xf32>, vector<8x32xf32>, vector<8x32xf32>, vector<8x32xf32>, vector<8x32xf32>, vector<8x32xf32>, vector<8x32xf32> -> vector<8x256xf32>
    %c0_165 = arith.constant 0 : index
    %c0_166 = arith.constant 0 : index
    %436 = vector.load %arg23[%c0_165, %c0_166] : memref<8x256xf32, #tpu.memory_space<vmem>>, vector<8x256xf32>
    tpu.vector_store %arg23[%c0_165, %c0_166], %435 {strides = array<i32>} : memref<8x256xf32, #tpu.memory_space<vmem>>, vector<8x256xf32>,
    return
  }
  func.func @transform_0(%arg0: i32) -> (i32, i32, i32) {
    %c0_i32 = arith.constant 0 : i32
    %c0_i32_0 = arith.constant 0 : i32
    %c0_i32_1 = arith.constant 0 : i32
    return %arg0, %c0_i32, %c0_i32_0 : i32, i32, i32
  }
  func.func @transform_1(%arg0: i32) -> (i32, i32, i32) {
    %c0_i32 = arith.constant 0 : i32
    %c0_i32_0 = arith.constant 0 : i32
    %c0_i32_1 = arith.constant 0 : i32
    return %arg0, %c0_i32, %c0_i32_0 : i32, i32, i32
  }
  func.func @transform_2(%arg0: i32) -> (i32, i32) {
    %c0_i32 = arith.constant 0 : i32
    %c0_i32_0 = arith.constant 0 : i32
    %c0_i32_1 = arith.constant 0 : i32
    return %c0_i32, %c0_i32_0 : i32, i32
  }
  func.func @transform_3(%arg0: i32) -> (i32, i32) {
    %c0_i32 = arith.constant 0 : i32
    %c0_i32_0 = arith.constant 0 : i32
    %c0_i32_1 = arith.constant 0 : i32
    return %c0_i32, %c0_i32_0 : i32, i32
  }
  func.func @transform_4(%arg0: i32) -> (i32, i32) {
    %c0_i32 = arith.constant 0 : i32
    %c0_i32_0 = arith.constant 0 : i32
    %c0_i32_1 = arith.constant 0 : i32
    return %c0_i32, %c0_i32_0 : i32, i32
  }
  func.func @transform_5(%arg0: i32) -> (i32, i32) {
    %c0_i32 = arith.constant 0 : i32
    %c0_i32_0 = arith.constant 0 : i32
    %c0_i32_1 = arith.constant 0 : i32
    return %c0_i32, %c0_i32_0 : i32, i32
  }
  func.func @transform_6(%arg0: i32) -> (i32, i32, i32) {
    %c0_i32 = arith.constant 0 : i32
    %c0_i32_0 = arith.constant 0 : i32
    %c0_i32_1 = arith.constant 0 : i32
    %c0_i32_2 = arith.constant 0 : i32
    return %c0_i32, %c0_i32_0, %c0_i32_1 : i32, i32, i32
  }
  func.func @transform_7(%arg0: i32) -> (i32, i32, i32) {
    %c0_i32 = arith.constant 0 : i32
    %c0_i32_0 = arith.constant 0 : i32
    %c0_i32_1 = arith.constant 0 : i32
    %c0_i32_2 = arith.constant 0 : i32
    return %c0_i32, %c0_i32_0, %c0_i32_1 : i32, i32, i32
  }
  func.func @transform_8(%arg0: i32) -> (i32, i32, i32) {
    %c0_i32 = arith.constant 0 : i32
    %c0_i32_0 = arith.constant 0 : i32
    %c0_i32_1 = arith.constant 0 : i32
    %c0_i32_2 = arith.constant 0 : i32
    return %c0_i32, %c0_i32_0, %c0_i32_1 : i32, i32, i32
  }
  func.func @transform_9(%arg0: i32) -> (i32, i32, i32) {
    %c0_i32 = arith.constant 0 : i32
    %c0_i32_0 = arith.constant 0 : i32
    %c0_i32_1 = arith.constant 0 : i32
    %c0_i32_2 = arith.constant 0 : i32
    return %c0_i32, %c0_i32_0, %c0_i32_1 : i32, i32, i32
  }
  func.func @transform_10(%arg0: i32) -> (i32, i32, i32) {
    %c0_i32 = arith.constant 0 : i32
    %c0_i32_0 = arith.constant 0 : i32
    %c0_i32_1 = arith.constant 0 : i32
    %c0_i32_2 = arith.constant 0 : i32
    return %c0_i32, %c0_i32_0, %c0_i32_1 : i32, i32, i32
  }
  func.func @transform_11(%arg0: i32) -> (i32, i32, i32) {
    %c0_i32 = arith.constant 0 : i32
    %c0_i32_0 = arith.constant 0 : i32
    %c0_i32_1 = arith.constant 0 : i32
    %c0_i32_2 = arith.constant 0 : i32
    return %c0_i32, %c0_i32_0, %c0_i32_1 : i32, i32, i32
  }
  func.func @transform_12(%arg0: i32) -> (i32, i32, i32) {
    %c0_i32 = arith.constant 0 : i32
    %c0_i32_0 = arith.constant 0 : i32
    %c0_i32_1 = arith.constant 0 : i32
    %c0_i32_2 = arith.constant 0 : i32
    return %c0_i32, %c0_i32_0, %c0_i32_1 : i32, i32, i32
  }
  func.func @transform_13(%arg0: i32) -> (i32, i32, i32) {
    %c0_i32 = arith.constant 0 : i32
    %c0_i32_0 = arith.constant 0 : i32
    %c0_i32_1 = arith.constant 0 : i32
    %c0_i32_2 = arith.constant 0 : i32
    return %c0_i32, %c0_i32_0, %c0_i32_1 : i32, i32, i32
  }
  func.func @transform_14(%arg0: i32) -> (i32, i32, i32) {
    %c0_i32 = arith.constant 0 : i32
    %c0_i32_0 = arith.constant 0 : i32
    %c0_i32_1 = arith.constant 0 : i32
    %c0_i32_2 = arith.constant 0 : i32
    return %c0_i32, %c0_i32_0, %c0_i32_1 : i32, i32, i32
  }
  func.func @transform_15(%arg0: i32) -> (i32, i32, i32) {
    %c0_i32 = arith.constant 0 : i32
    %c0_i32_0 = arith.constant 0 : i32
    %c0_i32_1 = arith.constant 0 : i32
    %c0_i32_2 = arith.constant 0 : i32
    return %c0_i32, %c0_i32_0, %c0_i32_1 : i32, i32, i32
  }
  func.func @transform_16(%arg0: i32) -> (i32, i32, i32) {
    %c0_i32 = arith.constant 0 : i32
    %c0_i32_0 = arith.constant 0 : i32
    %c0_i32_1 = arith.constant 0 : i32
    %c0_i32_2 = arith.constant 0 : i32
    return %c0_i32, %c0_i32_0, %c0_i32_1 : i32, i32, i32
  }
  func.func @transform_17(%arg0: i32) -> (i32, i32, i32) {
    %c0_i32 = arith.constant 0 : i32
    %c0_i32_0 = arith.constant 0 : i32
    %c0_i32_1 = arith.constant 0 : i32
    %c0_i32_2 = arith.constant 0 : i32
    return %c0_i32, %c0_i32_0, %c0_i32_1 : i32, i32, i32
  }
  func.func @transform_18(%arg0: i32) -> (i32, i32) {
    %c0_i32 = arith.constant 0 : i32
    %c0_i32_0 = arith.constant 0 : i32
    %c0_i32_1 = arith.constant 0 : i32
    return %c0_i32, %c0_i32_0 : i32, i32
  }
  func.func @transform_19(%arg0: i32) -> (i32, i32) {
    %c0_i32 = arith.constant 0 : i32
    %c0_i32_0 = arith.constant 0 : i32
    %c0_i32_1 = arith.constant 0 : i32
    return %c0_i32, %c0_i32_0 : i32, i32
  }
  func.func @transform_20(%arg0: i32) -> (i32, i32) {
    %c0_i32 = arith.constant 0 : i32
    %c0_i32_0 = arith.constant 0 : i32
    %c0_i32_1 = arith.constant 0 : i32
    return %c0_i32, %c0_i32_0 : i32, i32
  }
  func.func @transform_21(%arg0: i32) -> (i32, i32) {
    %c0_i32 = arith.constant 0 : i32
    %c0_i32_0 = arith.constant 0 : i32
    %c0_i32_1 = arith.constant 0 : i32
    return %c0_i32, %c0_i32_0 : i32, i32
  }
  func.func @transform_22(%arg0: i32) -> (i32, i32) {
    %c0_i32 = arith.constant 0 : i32
    %c0_i32_0 = arith.constant 0 : i32
    return %arg0, %c0_i32 : i32, i32
  }
}

</mosaic_0001>

<llo_original>
// kernel: tpu_custom_call.1
$region0: #{tpu_custom_call.1}
  #allocation0 [shape = 'u32[]', space=smem, size = 0x4, offset = 0x4, fixed_abs, tag = 'smem constant byte address 0x4 - core index']
  #allocation1 [shape = 'u32[72,128]{1,0:T(1,128)}', space=vmem, size = 0x9000, scoped, tag = 'internal scratch']
  %s0 = inlined_call_operand.vmem [shape: f32[16,8,32], index: 0, kind: input, shape index: {}]
  %s1 = inlined_call_operand.vmem [shape: bf16[16,8,32], index: 1, kind: input, shape index: {}]
  %s2 = inlined_call_operand.vmem [shape: f32[64,64], index: 2, kind: input, shape index: {}]
  %s3 = inlined_call_operand.vmem [shape: bf16[32,64], index: 3, kind: input, shape index: {}]
  %s4 = inlined_call_operand.vmem [shape: f32[1,64], index: 4, kind: input, shape index: {}]
  %s5 = inlined_call_operand.vmem [shape: f32[8,64], index: 5, kind: input, shape index: {}]
  %s6 = inlined_call_operand.vmem [shape: bf16[2,64,192], index: 6, kind: input, shape index: {}]
  %s7 = inlined_call_operand.vmem [shape: f32[2,1,192], index: 7, kind: input, shape index: {}]
  %s8 = inlined_call_operand.vmem [shape: bf16[2,64,64], index: 8, kind: input, shape index: {}]
  %s9 = inlined_call_operand.vmem [shape: f32[2,1,64], index: 9, kind: input, shape index: {}]
  %s10 = inlined_call_operand.vmem [shape: f32[2,1,64], index: 10, kind: input, shape index: {}]
  %s11 = inlined_call_operand.vmem [shape: f32[2,1,64], index: 11, kind: input, shape index: {}]
  %s12 = inlined_call_operand.vmem [shape: bf16[2,64,256], index: 12, kind: input, shape index: {}]
  %s13 = inlined_call_operand.vmem [shape: f32[2,1,256], index: 13, kind: input, shape index: {}]
  %s14 = inlined_call_operand.vmem [shape: bf16[2,256,64], index: 14, kind: input, shape index: {}]
  %s15 = inlined_call_operand.vmem [shape: f32[2,1,64], index: 15, kind: input, shape index: {}]
  %s16 = inlined_call_operand.vmem [shape: f32[2,1,64], index: 16, kind: input, shape index: {}]
  %s17 = inlined_call_operand.vmem [shape: f32[2,1,64], index: 17, kind: input, shape index: {}]
  %s18 = inlined_call_operand.vmem [shape: bf16[64,1024], index: 18, kind: input, shape index: {}]
  %s19 = inlined_call_operand.vmem [shape: f32[1,1024], index: 19, kind: input, shape index: {}]
  %s20 = inlined_call_operand.vmem [shape: bf16[1024,32], index: 20, kind: input, shape index: {}]
  %s21 = inlined_call_operand.vmem [shape: f32[1,32], index: 21, kind: input, shape index: {}]
  %s22 = inlined_call_operand.hbm [shape: f32[16,256], index: 22, kind: output, shape index: {}]
  %s23 = sld [smem:[#allocation0]]
  $region121: #{tpu_custom_call.1} parent=0
    _
  %s25 = ssub.s32 1, %s23
  %s26 = scalar_select 0, %s25, %s23
  $region1: #{tpu_custom_call.1} parent=0
    #allocation2 [shape = 'u8[16384]{0}', space=vmem, size = 0x4000, scoped, tag = 'output window, operand 0']
    #allocation3 [shape = 's32[2]{0}', space=sflag, size = 0x8, scoped, tag = 'scoped memory for tpu_custom_call.1']
    %27 = vsyncpa [#allocation3], 0
    %s28 = scalar_lea.sflag [#allocation3], 1
    %29 = vsyncpa %s28, 0
    loop: start=0, step=1, limit=4
    $region2: #{tpu_custom_call.1} parent=1 // loop_pre_header
      _
    $region3: #{tpu_custom_call.1} parent=1 // loop_header
      %s31 = sphi 0, %s35
      %p32 = scmp.ge.s32.totalorder %s31, 4
      %s41 = sphi 0, %s43
      %s44 = sphi 0, %s41
      %s45 = sphi 0, %s44
      %s61 = sphi 0, %s45
      %s67 = sphi 0, %s69
      %s70 = sphi 0, %s67
      %s71 = sphi 0, %s70
      %s87 = sphi 0, %s71
      %s91 = sphi 0, %s91
      %s93 = sphi 0, %s91
      %s94 = sphi 0, %s93
      %s108 = sphi 0, %s94
      %s112 = sphi 0, %s112
      %s114 = sphi 0, %s112
      %s115 = sphi 0, %s114
      %s129 = sphi 0, %s115
      %s133 = sphi 0, %s133
      %s135 = sphi 0, %s133
      %s136 = sphi 0, %s135
      %s150 = sphi 0, %s136
      %s154 = sphi 0, %s154
      %s156 = sphi 0, %s154
      %s157 = sphi 0, %s156
      %s171 = sphi 0, %s157
      %s175 = sphi 0, %s175
      %s177 = sphi 0, %s175
      %s178 = sphi 0, %s177
      %s192 = sphi 0, %s178
      %s196 = sphi 0, %s196
      %s198 = sphi 0, %s196
      %s199 = sphi 0, %s198
      %s213 = sphi 0, %s199
      %s217 = sphi 0, %s217
      %s219 = sphi 0, %s217
      %s220 = sphi 0, %s219
      %s234 = sphi 0, %s220
      %s238 = sphi 0, %s238
      %s240 = sphi 0, %s238
      %s241 = sphi 0, %s240
      %s255 = sphi 0, %s241
      %s259 = sphi 0, %s259
      %s261 = sphi 0, %s259
      %s262 = sphi 0, %s261
      %s276 = sphi 0, %s262
      %s280 = sphi 0, %s280
      %s282 = sphi 0, %s280
      %s283 = sphi 0, %s282
      %s297 = sphi 0, %s283
      %s301 = sphi 0, %s301
      %s303 = sphi 0, %s301
      %s304 = sphi 0, %s303
      %s318 = sphi 0, %s304
      %s322 = sphi 0, %s322
      %s324 = sphi 0, %s322
      %s325 = sphi 0, %s324
      %s339 = sphi 0, %s325
      %s343 = sphi 0, %s343
      %s345 = sphi 0, %s343
      %s346 = sphi 0, %s345
      %s360 = sphi 0, %s346
      %s364 = sphi 0, %s364
      %s366 = sphi 0, %s364
      %s367 = sphi 0, %s366
      %s381 = sphi 0, %s367
      %s385 = sphi 0, %s385
      %s387 = sphi 0, %s385
      %s388 = sphi 0, %s387
      %s402 = sphi 0, %s388
      %s406 = sphi 0, %s406
      %s408 = sphi 0, %s406
      %s409 = sphi 0, %s408
      %s423 = sphi 0, %s409
      %s427 = sphi 0, %s427
      %s429 = sphi 0, %s427
      %s430 = sphi 0, %s429
      %s444 = sphi 0, %s430
      %s448 = sphi 0, %s448
      %s450 = sphi 0, %s448
      %s451 = sphi 0, %s450
      %s465 = sphi 0, %s451
      %s469 = sphi 0, %s469
      %s471 = sphi 0, %s469
      %s472 = sphi 0, %s471
      %s486 = sphi 0, %s472
      %s490 = sphi 0, %s490
      %s492 = sphi 0, %s490
      %s493 = sphi 0, %s492
      %s507 = sphi 0, %s493
      %s513 = sphi 0, %s515
      %s516 = sphi 0, %s513
      %s517 = sphi 0, %s516
      %s533 = sphi 0, %s517
    $region4: #{tpu_custom_call.1} parent=1 // loop_header_branch
      %34 = sbr.rel (%p32) target = $region8
    $region5: #{tpu_custom_call.1} parent=1 // loop_body
      %s36 = ssub.s32 %s31, 1
      %s37 = ssub.s32 %s31, 2
      %s38 = sadd.s32 %s31, 1
      %s39 = ssub.s32 %s31, %s38
      %p40 = scmp.eq.s32.totalorder %s39, 0
      %s42 = sadd.s32 %s41, 1
      %s43 = scalar_select %p40, %s41, %s42
      %p46 = pneg %p40
      %p47 = scmp.eq.s32.totalorder %s31, 1
      %p48 = por %p46, %p47
      %p49 = scmp.ne.s32.totalorder %s41, %s44
      %p50 = scmp.eq.s32.totalorder %s31, 0
      %p51 = por %p49, %p50
      %p52 = scmp.ne.s32.totalorder %s41, %s44
      %p53 = scmp.eq.s32.totalorder %s36, 1
      %p54 = por %p52, %p53
      %p55 = scmp.ne.s32.totalorder %s44, %s45
      %p56 = scmp.eq.s32.totalorder %s36, 0
      %p57 = por %p55, %p56
      %p58 = scmp.ne.s32.totalorder %s44, %s45
      %p59 = scmp.eq.s32.totalorder %s37, 1
      %p60 = por %p58, %p59
      %p62 = scmp.ne.s32.totalorder %s45, %s61
      %p63 = scmp.eq.s32.totalorder %s37, 0
      %p64 = por %p62, %p63
      %s65 = ssub.s32 %s31, %s38
      %p66 = scmp.eq.s32.totalorder %s65, 0
      %s68 = sadd.s32 %s67, 1
      %s69 = scalar_select %p66, %s67, %s68
      %p72 = pneg %p66
      %p73 = scmp.eq.s32.totalorder %s31, 1
      %p74 = por %p72, %p73
      %p75 = scmp.ne.s32.totalorder %s67, %s70
      %p76 = scmp.eq.s32.totalorder %s31, 0
      %p77 = por %p75, %p76
      %p78 = scmp.ne.s32.totalorder %s67, %s70
      %p79 = scmp.eq.s32.totalorder %s36, 1
      %p80 = por %p78, %p79
      %p81 = scmp.ne.s32.totalorder %s70, %s71
      %p82 = scmp.eq.s32.totalorder %s36, 0
      %p83 = por %p81, %p82
      %p84 = scmp.ne.s32.totalorder %s70, %s71
      %p85 = scmp.eq.s32.totalorder %s37, 1
      %p86 = por %p84, %p85
      %p88 = scmp.ne.s32.totalorder %s71, %s87
      %p89 = scmp.eq.s32.totalorder %s37, 0
      %p90 = por %p88, %p89
      %s92 = sadd.s32 %s91, 1
      %p95 = scmp.eq.s32.totalorder %s31, 1
      %p96 = scmp.ne.s32.totalorder %s91, %s93
      %p97 = scmp.eq.s32.totalorder %s31, 0
      %p98 = por %p96, %p97
      %p99 = scmp.ne.s32.totalorder %s91, %s93
      %p100 = scmp.eq.s32.totalorder %s36, 1
      %p101 = por %p99, %p100
      %p102 = scmp.ne.s32.totalorder %s93, %s94
      %p103 = scmp.eq.s32.totalorder %s36, 0
      %p104 = por %p102, %p103
      %p105 = scmp.ne.s32.totalorder %s93, %s94
      %p106 = scmp.eq.s32.totalorder %s37, 1
      %p107 = por %p105, %p106
      %p109 = scmp.ne.s32.totalorder %s94, %s108
      %p110 = scmp.eq.s32.totalorder %s37, 0
      %p111 = por %p109, %p110
      %s113 = sadd.s32 %s112, 1
      %p116 = scmp.eq.s32.totalorder %s31, 1
      %p117 = scmp.ne.s32.totalorder %s112, %s114
      %p118 = scmp.eq.s32.totalorder %s31, 0
      %p119 = por %p117, %p118
      %p120 = scmp.ne.s32.totalorder %s112, %s114
      %p121 = scmp.eq.s32.totalorder %s36, 1
      %p122 = por %p120, %p121
      %p123 = scmp.ne.s32.totalorder %s114, %s115
      %p124 = scmp.eq.s32.totalorder %s36, 0
      %p125 = por %p123, %p124
      %p126 = scmp.ne.s32.totalorder %s114, %s115
      %p127 = scmp.eq.s32.totalorder %s37, 1
      %p128 = por %p126, %p127
      %p130 = scmp.ne.s32.totalorder %s115, %s129
      %p131 = scmp.eq.s32.totalorder %s37, 0
      %p132 = por %p130, %p131
      %s134 = sadd.s32 %s133, 1
      %p137 = scmp.eq.s32.totalorder %s31, 1
      %p138 = scmp.ne.s32.totalorder %s133, %s135
      %p139 = scmp.eq.s32.totalorder %s31, 0
      %p140 = por %p138, %p139
      %p141 = scmp.ne.s32.totalorder %s133, %s135
      %p142 = scmp.eq.s32.totalorder %s36, 1
      %p143 = por %p141, %p142
      %p144 = scmp.ne.s32.totalorder %s135, %s136
      %p145 = scmp.eq.s32.totalorder %s36, 0
      %p146 = por %p144, %p145
      %p147 = scmp.ne.s32.totalorder %s135, %s136
      %p148 = scmp.eq.s32.totalorder %s37, 1
      %p149 = por %p147, %p148
      %p151 = scmp.ne.s32.totalorder %s136, %s150
      %p152 = scmp.eq.s32.totalorder %s37, 0
      %p153 = por %p151, %p152
      %s155 = sadd.s32 %s154, 1
      %p158 = scmp.eq.s32.totalorder %s31, 1
      %p159 = scmp.ne.s32.totalorder %s154, %s156
      %p160 = scmp.eq.s32.totalorder %s31, 0
      %p161 = por %p159, %p160
      %p162 = scmp.ne.s32.totalorder %s154, %s156
      %p163 = scmp.eq.s32.totalorder %s36, 1
      %p164 = por %p162, %p163
      %p165 = scmp.ne.s32.totalorder %s156, %s157
      %p166 = scmp.eq.s32.totalorder %s36, 0
      %p167 = por %p165, %p166
      %p168 = scmp.ne.s32.totalorder %s156, %s157
      %p169 = scmp.eq.s32.totalorder %s37, 1
      %p170 = por %p168, %p169
      %p172 = scmp.ne.s32.totalorder %s157, %s171
      %p173 = scmp.eq.s32.totalorder %s37, 0
      %p174 = por %p172, %p173
      %s176 = sadd.s32 %s175, 1
      %p179 = scmp.eq.s32.totalorder %s31, 1
      %p180 = scmp.ne.s32.totalorder %s175, %s177
      %p181 = scmp.eq.s32.totalorder %s31, 0
      %p182 = por %p180, %p181
      %p183 = scmp.ne.s32.totalorder %s175, %s177
      %p184 = scmp.eq.s32.totalorder %s36, 1
      %p185 = por %p183, %p184
      %p186 = scmp.ne.s32.totalorder %s177, %s178
      %p187 = scmp.eq.s32.totalorder %s36, 0
      %p188 = por %p186, %p187
      %p189 = scmp.ne.s32.totalorder %s177, %s178
      %p190 = scmp.eq.s32.totalorder %s37, 1
      %p191 = por %p189, %p190
      %p193 = scmp.ne.s32.totalorder %s178, %s192
      %p194 = scmp.eq.s32.totalorder %s37, 0
      %p195 = por %p193, %p194
      %s197 = sadd.s32 %s196, 1
      %p200 = scmp.eq.s32.totalorder %s31, 1
      %p201 = scmp.ne.s32.totalorder %s196, %s198
      %p202 = scmp.eq.s32.totalorder %s31, 0
      %p203 = por %p201, %p202
      %p204 = scmp.ne.s32.totalorder %s196, %s198
      %p205 = scmp.eq.s32.totalorder %s36, 1
      %p206 = por %p204, %p205
      %p207 = scmp.ne.s32.totalorder %s198, %s199
      %p208 = scmp.eq.s32.totalorder %s36, 0
      %p209 = por %p207, %p208
      %p210 = scmp.ne.s32.totalorder %s198, %s199
      %p211 = scmp.eq.s32.totalorder %s37, 1
      %p212 = por %p210, %p211
      %p214 = scmp.ne.s32.totalorder %s199, %s213
      %p215 = scmp.eq.s32.totalorder %s37, 0
      %p216 = por %p214, %p215
      %s218 = sadd.s32 %s217, 1
      %p221 = scmp.eq.s32.totalorder %s31, 1
      %p222 = scmp.ne.s32.totalorder %s217, %s219
      %p223 = scmp.eq.s32.totalorder %s31, 0
      %p224 = por %p222, %p223
      %p225 = scmp.ne.s32.totalorder %s217, %s219
      %p226 = scmp.eq.s32.totalorder %s36, 1
      %p227 = por %p225, %p226
      %p228 = scmp.ne.s32.totalorder %s219, %s220
      %p229 = scmp.eq.s32.totalorder %s36, 0
      %p230 = por %p228, %p229
      %p231 = scmp.ne.s32.totalorder %s219, %s220
      %p232 = scmp.eq.s32.totalorder %s37, 1
      %p233 = por %p231, %p232
      %p235 = scmp.ne.s32.totalorder %s220, %s234
      %p236 = scmp.eq.s32.totalorder %s37, 0
      %p237 = por %p235, %p236
      %s239 = sadd.s32 %s238, 1
      %p242 = scmp.eq.s32.totalorder %s31, 1
      %p243 = scmp.ne.s32.totalorder %s238, %s240
      %p244 = scmp.eq.s32.totalorder %s31, 0
      %p245 = por %p243, %p244
      %p246 = scmp.ne.s32.totalorder %s238, %s240
      %p247 = scmp.eq.s32.totalorder %s36, 1
      %p248 = por %p246, %p247
      %p249 = scmp.ne.s32.totalorder %s240, %s241
      %p250 = scmp.eq.s32.totalorder %s36, 0
      %p251 = por %p249, %p250
      %p252 = scmp.ne.s32.totalorder %s240, %s241
      %p253 = scmp.eq.s32.totalorder %s37, 1
      %p254 = por %p252, %p253
      %p256 = scmp.ne.s32.totalorder %s241, %s255
      %p257 = scmp.eq.s32.totalorder %s37, 0
      %p258 = por %p256, %p257
      %s260 = sadd.s32 %s259, 1
      %p263 = scmp.eq.s32.totalorder %s31, 1
      %p264 = scmp.ne.s32.totalorder %s259, %s261
      %p265 = scmp.eq.s32.totalorder %s31, 0
      %p266 = por %p264, %p265
      %p267 = scmp.ne.s32.totalorder %s259, %s261
      %p268 = scmp.eq.s32.totalorder %s36, 1
      %p269 = por %p267, %p268
      %p270 = scmp.ne.s32.totalorder %s261, %s262
      %p271 = scmp.eq.s32.totalorder %s36, 0
      %p272 = por %p270, %p271
      %p273 = scmp.ne.s32.totalorder %s261, %s262
      %p274 = scmp.eq.s32.totalorder %s37, 1
      %p275 = por %p273, %p274
      %p277 = scmp.ne.s32.totalorder %s262, %s276
      %p278 = scmp.eq.s32.totalorder %s37, 0
      %p279 = por %p277, %p278
      %s281 = sadd.s32 %s280, 1
      %p284 = scmp.eq.s32.totalorder %s31, 1
      %p285 = scmp.ne.s32.totalorder %s280, %s282
      %p286 = scmp.eq.s32.totalorder %s31, 0
      %p287 = por %p285, %p286
      %p288 = scmp.ne.s32.totalorder %s280, %s282
      %p289 = scmp.eq.s32.totalorder %s36, 1
      %p290 = por %p288, %p289
      %p291 = scmp.ne.s32.totalorder %s282, %s283
      %p292 = scmp.eq.s32.totalorder %s36, 0
      %p293 = por %p291, %p292
      %p294 = scmp.ne.s32.totalorder %s282, %s283
      %p295 = scmp.eq.s32.totalorder %s37, 1
      %p296 = por %p294, %p295
      %p298 = scmp.ne.s32.totalorder %s283, %s297
      %p299 = scmp.eq.s32.totalorder %s37, 0
      %p300 = por %p298, %p299
      %s302 = sadd.s32 %s301, 1
      %p305 = scmp.eq.s32.totalorder %s31, 1
      %p306 = scmp.ne.s32.totalorder %s301, %s303
      %p307 = scmp.eq.s32.totalorder %s31, 0
      %p308 = por %p306, %p307
      %p309 = scmp.ne.s32.totalorder %s301, %s303
      %p310 = scmp.eq.s32.totalorder %s36, 1
      %p311 = por %p309, %p310
      %p312 = scmp.ne.s32.totalorder %s303, %s304
      %p313 = scmp.eq.s32.totalorder %s36, 0
      %p314 = por %p312, %p313
      %p315 = scmp.ne.s32.totalorder %s303, %s304
      %p316 = scmp.eq.s32.totalorder %s37, 1
      %p317 = por %p315, %p316
      %p319 = scmp.ne.s32.totalorder %s304, %s318
      %p320 = scmp.eq.s32.totalorder %s37, 0
      %p321 = por %p319, %p320
      %s323 = sadd.s32 %s322, 1
      %p326 = scmp.eq.s32.totalorder %s31, 1
      %p327 = scmp.ne.s32.totalorder %s322, %s324
      %p328 = scmp.eq.s32.totalorder %s31, 0
      %p329 = por %p327, %p328
      %p330 = scmp.ne.s32.totalorder %s322, %s324
      %p331 = scmp.eq.s32.totalorder %s36, 1
      %p332 = por %p330, %p331
      %p333 = scmp.ne.s32.totalorder %s324, %s325
      %p334 = scmp.eq.s32.totalorder %s36, 0
      %p335 = por %p333, %p334
      %p336 = scmp.ne.s32.totalorder %s324, %s325
      %p337 = scmp.eq.s32.totalorder %s37, 1
      %p338 = por %p336, %p337
      %p340 = scmp.ne.s32.totalorder %s325, %s339
      %p341 = scmp.eq.s32.totalorder %s37, 0
      %p342 = por %p340, %p341
      %s344 = sadd.s32 %s343, 1
      %p347 = scmp.eq.s32.totalorder %s31, 1
      %p348 = scmp.ne.s32.totalorder %s343, %s345
      %p349 = scmp.eq.s32.totalorder %s31, 0
      %p350 = por %p348, %p349
      %p351 = scmp.ne.s32.totalorder %s343, %s345
      %p352 = scmp.eq.s32.totalorder %s36, 1
      %p353 = por %p351, %p352
      %p354 = scmp.ne.s32.totalorder %s345, %s346
      %p355 = scmp.eq.s32.totalorder %s36, 0
      %p356 = por %p354, %p355
      %p357 = scmp.ne.s32.totalorder %s345, %s346
      %p358 = scmp.eq.s32.totalorder %s37, 1
      %p359 = por %p357, %p358
      %p361 = scmp.ne.s32.totalorder %s346, %s360
      %p362 = scmp.eq.s32.totalorder %s37, 0
      %p363 = por %p361, %p362
      %s365 = sadd.s32 %s364, 1
      %p368 = scmp.eq.s32.totalorder %s31, 1
      %p369 = scmp.ne.s32.totalorder %s364, %s366
      %p370 = scmp.eq.s32.totalorder %s31, 0
      %p371 = por %p369, %p370
      %p372 = scmp.ne.s32.totalorder %s364, %s366
      %p373 = scmp.eq.s32.totalorder %s36, 1
      %p374 = por %p372, %p373
      %p375 = scmp.ne.s32.totalorder %s366, %s367
      %p376 = scmp.eq.s32.totalorder %s36, 0
      %p377 = por %p375, %p376
      %p378 = scmp.ne.s32.totalorder %s366, %s367
      %p379 = scmp.eq.s32.totalorder %s37, 1
      %p380 = por %p378, %p379
      %p382 = scmp.ne.s32.totalorder %s367, %s381
      %p383 = scmp.eq.s32.totalorder %s37, 0
      %p384 = por %p382, %p383
      %s386 = sadd.s32 %s385, 1
      %p389 = scmp.eq.s32.totalorder %s31, 1
      %p390 = scmp.ne.s32.totalorder %s385, %s387
      %p391 = scmp.eq.s32.totalorder %s31, 0
      %p392 = por %p390, %p391
      %p393 = scmp.ne.s32.totalorder %s385, %s387
      %p394 = scmp.eq.s32.totalorder %s36, 1
      %p395 = por %p393, %p394
      %p396 = scmp.ne.s32.totalorder %s387, %s388
      %p397 = scmp.eq.s32.totalorder %s36, 0
      %p398 = por %p396, %p397
      %p399 = scmp.ne.s32.totalorder %s387, %s388
      %p400 = scmp.eq.s32.totalorder %s37, 1
      %p401 = por %p399, %p400
      %p403 = scmp.ne.s32.totalorder %s388, %s402
      %p404 = scmp.eq.s32.totalorder %s37, 0
      %p405 = por %p403, %p404
      %s407 = sadd.s32 %s406, 1
      %p410 = scmp.eq.s32.totalorder %s31, 1
      %p411 = scmp.ne.s32.totalorder %s406, %s408
      %p412 = scmp.eq.s32.totalorder %s31, 0
      %p413 = por %p411, %p412
      %p414 = scmp.ne.s32.totalorder %s406, %s408
      %p415 = scmp.eq.s32.totalorder %s36, 1
      %p416 = por %p414, %p415
      %p417 = scmp.ne.s32.totalorder %s408, %s409
      %p418 = scmp.eq.s32.totalorder %s36, 0
      %p419 = por %p417, %p418
      %p420 = scmp.ne.s32.totalorder %s408, %s409
      %p421 = scmp.eq.s32.totalorder %s37, 1
      %p422 = por %p420, %p421
      %p424 = scmp.ne.s32.totalorder %s409, %s423
      %p425 = scmp.eq.s32.totalorder %s37, 0
      %p426 = por %p424, %p425
      %s428 = sadd.s32 %s427, 1
      %p431 = scmp.eq.s32.totalorder %s31, 1
      %p432 = scmp.ne.s32.totalorder %s427, %s429
      %p433 = scmp.eq.s32.totalorder %s31, 0
      %p434 = por %p432, %p433
      %p435 = scmp.ne.s32.totalorder %s427, %s429
      %p436 = scmp.eq.s32.totalorder %s36, 1
      %p437 = por %p435, %p436
      %p438 = scmp.ne.s32.totalorder %s429, %s430
      %p439 = scmp.eq.s32.totalorder %s36, 0
      %p440 = por %p438, %p439
      %p441 = scmp.ne.s32.totalorder %s429, %s430
      %p442 = scmp.eq.s32.totalorder %s37, 1
      %p443 = por %p441, %p442
      %p445 = scmp.ne.s32.totalorder %s430, %s444
      %p446 = scmp.eq.s32.totalorder %s37, 0
      %p447 = por %p445, %p446
      %s449 = sadd.s32 %s448, 1
      %p452 = scmp.eq.s32.totalorder %s31, 1
      %p453 = scmp.ne.s32.totalorder %s448, %s450
      %p454 = scmp.eq.s32.totalorder %s31, 0
      %p455 = por %p453, %p454
      %p456 = scmp.ne.s32.totalorder %s448, %s450
      %p457 = scmp.eq.s32.totalorder %s36, 1
      %p458 = por %p456, %p457
      %p459 = scmp.ne.s32.totalorder %s450, %s451
      %p460 = scmp.eq.s32.totalorder %s36, 0
      %p461 = por %p459, %p460
      %p462 = scmp.ne.s32.totalorder %s450, %s451
      %p463 = scmp.eq.s32.totalorder %s37, 1
      %p464 = por %p462, %p463
      %p466 = scmp.ne.s32.totalorder %s451, %s465
      %p467 = scmp.eq.s32.totalorder %s37, 0
      %p468 = por %p466, %p467
      %s470 = sadd.s32 %s469, 1
      %p473 = scmp.eq.s32.totalorder %s31, 1
      %p474 = scmp.ne.s32.totalorder %s469, %s471
      %p475 = scmp.eq.s32.totalorder %s31, 0
      %p476 = por %p474, %p475
      %p477 = scmp.ne.s32.totalorder %s469, %s471
      %p478 = scmp.eq.s32.totalorder %s36, 1
      %p479 = por %p477, %p478
      %p480 = scmp.ne.s32.totalorder %s471, %s472
      %p481 = scmp.eq.s32.totalorder %s36, 0
      %p482 = por %p480, %p481
      %p483 = scmp.ne.s32.totalorder %s471, %s472
      %p484 = scmp.eq.s32.totalorder %s37, 1
      %p485 = por %p483, %p484
      %p487 = scmp.ne.s32.totalorder %s472, %s486
      %p488 = scmp.eq.s32.totalorder %s37, 0
      %p489 = por %p487, %p488
      %s491 = sadd.s32 %s490, 1
      %p494 = scmp.eq.s32.totalorder %s31, 1
      %p495 = scmp.ne.s32.totalorder %s490, %s492
      %p496 = scmp.eq.s32.totalorder %s31, 0
      %p497 = por %p495, %p496
      %p498 = scmp.ne.s32.totalorder %s490, %s492
      %p499 = scmp.eq.s32.totalorder %s36, 1
      %p500 = por %p498, %p499
      %p501 = scmp.ne.s32.totalorder %s492, %s493
      %p502 = scmp.eq.s32.totalorder %s36, 0
      %p503 = por %p501, %p502
      %p504 = scmp.ne.s32.totalorder %s492, %s493
      %p505 = scmp.eq.s32.totalorder %s37, 1
      %p506 = por %p504, %p505
      %p508 = scmp.ne.s32.totalorder %s493, %s507
      %p509 = scmp.eq.s32.totalorder %s37, 0
      %p510 = por %p508, %p509
      %s511 = ssub.s32 %s31, %s38
      %p512 = scmp.eq.s32.totalorder %s511, 0
      %s514 = sadd.s32 %s513, 1
      %s515 = scalar_select %p512, %s513, %s514
      %p518 = pneg %p512
      %p519 = scmp.eq.s32.totalorder %s31, 1
      %p520 = por %p518, %p519
      %p521 = scmp.ne.s32.totalorder %s513, %s516
      %p522 = scmp.eq.s32.totalorder %s31, 0
      %p523 = por %p521, %p522
      %p524 = scmp.ne.s32.totalorder %s513, %s516
      %p525 = scmp.eq.s32.totalorder %s36, 1
      %p526 = por %p524, %p525
      %p527 = scmp.ne.s32.totalorder %s516, %s517
      %p528 = scmp.eq.s32.totalorder %s36, 0
      %p529 = por %p527, %p528
      %p530 = scmp.ne.s32.totalorder %s516, %s517
      %p531 = scmp.eq.s32.totalorder %s37, 1
      %p532 = por %p530, %p531
      %p534 = scmp.ne.s32.totalorder %s517, %s533
      %p535 = scmp.eq.s32.totalorder %s37, 0
      %p536 = por %p534, %p535
      %p537 = scmp.le.s32.totalorder 1, %s31
      %p538 = scmp.lt.s32.totalorder %s31, 3
      %p539 = pnand %p537, %p538
      %p540 = pneg %p539
      // Predicated region
      $region9: #{tpu_custom_call.1} parent=5 // pred_check
        _
      $region10: #{tpu_custom_call.1} parent=5 // pred_check_branch
        %542 = sbr.rel (%p539) target = $region12
      $region11: #{tpu_custom_call.1} parent=5 // pred_region
        %s543 = ssub.s32 %s31, 1
        // Predicated region
        $region13: #{tpu_custom_call.1} parent=11 // pred_check
          %p544 = pneg %p104
        $region14: #{tpu_custom_call.1} parent=11 // pred_check_branch
          %546 = sbr.rel (%p544) target = $region16
        $region15: #{tpu_custom_call.1} parent=11 // pred_region
          _
        $region16: #{tpu_custom_call.1} parent=11 // pred_fallthru
          _
        // Predicated region
        $region17: #{tpu_custom_call.1} parent=11 // pred_check
          %p547 = pneg %p125
        $region18: #{tpu_custom_call.1} parent=11 // pred_check_branch
          %549 = sbr.rel (%p547) target = $region20
        $region19: #{tpu_custom_call.1} parent=11 // pred_region
          _
        $region20: #{tpu_custom_call.1} parent=11 // pred_fallthru
          _
        // Predicated region
        $region21: #{tpu_custom_call.1} parent=11 // pred_check
          %p550 = pneg %p146
        $region22: #{tpu_custom_call.1} parent=11 // pred_check_branch
          %552 = sbr.rel (%p550) target = $region24
        $region23: #{tpu_custom_call.1} parent=11 // pred_region
          _
        $region24: #{tpu_custom_call.1} parent=11 // pred_fallthru
          _
        // Predicated region
        $region25: #{tpu_custom_call.1} parent=11 // pred_check
          %p553 = pneg %p167
        $region26: #{tpu_custom_call.1} parent=11 // pred_check_branch
          %555 = sbr.rel (%p553) target = $region28
        $region27: #{tpu_custom_call.1} parent=11 // pred_region
          _
        $region28: #{tpu_custom_call.1} parent=11 // pred_fallthru
          _
        // Predicated region
        $region29: #{tpu_custom_call.1} parent=11 // pred_check
          %p556 = pneg %p188
        $region30: #{tpu_custom_call.1} parent=11 // pred_check_branch
          %558 = sbr.rel (%p556) target = $region32
        $region31: #{tpu_custom_call.1} parent=11 // pred_region
          _
        $region32: #{tpu_custom_call.1} parent=11 // pred_fallthru
          _
        // Predicated region
        $region33: #{tpu_custom_call.1} parent=11 // pred_check
          %p559 = pneg %p209
        $region34: #{tpu_custom_call.1} parent=11 // pred_check_branch
          %561 = sbr.rel (%p559) target = $region36
        $region35: #{tpu_custom_call.1} parent=11 // pred_region
          _
        $region36: #{tpu_custom_call.1} parent=11 // pred_fallthru
          _
        // Predicated region
        $region37: #{tpu_custom_call.1} parent=11 // pred_check
          %p562 = pneg %p230
        $region38: #{tpu_custom_call.1} parent=11 // pred_check_branch
          %564 = sbr.rel (%p562) target = $region40
        $region39: #{tpu_custom_call.1} parent=11 // pred_region
          _
        $region40: #{tpu_custom_call.1} parent=11 // pred_fallthru
          _
        // Predicated region
        $region41: #{tpu_custom_call.1} parent=11 // pred_check
          %p565 = pneg %p251
        $region42: #{tpu_custom_call.1} parent=11 // pred_check_branch
          %567 = sbr.rel (%p565) target = $region44
        $region43: #{tpu_custom_call.1} parent=11 // pred_region
          _
        $region44: #{tpu_custom_call.1} parent=11 // pred_fallthru
          _
        // Predicated region
        $region45: #{tpu_custom_call.1} parent=11 // pred_check
          %p568 = pneg %p272
        $region46: #{tpu_custom_call.1} parent=11 // pred_check_branch
          %570 = sbr.rel (%p568) target = $region48
        $region47: #{tpu_custom_call.1} parent=11 // pred_region
          _
        $region48: #{tpu_custom_call.1} parent=11 // pred_fallthru
          _
        // Predicated region
        $region49: #{tpu_custom_call.1} parent=11 // pred_check
          %p571 = pneg %p293
        $region50: #{tpu_custom_call.1} parent=11 // pred_check_branch
          %573 = sbr.rel (%p571) target = $region52
        $region51: #{tpu_custom_call.1} parent=11 // pred_region
          _
        $region52: #{tpu_custom_call.1} parent=11 // pred_fallthru
          _
        // Predicated region
        $region53: #{tpu_custom_call.1} parent=11 // pred_check
          %p574 = pneg %p314
        $region54: #{tpu_custom_call.1} parent=11 // pred_check_branch
          %576 = sbr.rel (%p574) target = $region56
        $region55: #{tpu_custom_call.1} parent=11 // pred_region
          _
        $region56: #{tpu_custom_call.1} parent=11 // pred_fallthru
          _
        // Predicated region
        $region57: #{tpu_custom_call.1} parent=11 // pred_check
          %p577 = pneg %p335
        $region58: #{tpu_custom_call.1} parent=11 // pred_check_branch
          %579 = sbr.rel (%p577) target = $region60
        $region59: #{tpu_custom_call.1} parent=11 // pred_region
          _
        $region60: #{tpu_custom_call.1} parent=11 // pred_fallthru
          _
        // Predicated region
        $region61: #{tpu_custom_call.1} parent=11 // pred_check
          %p580 = pneg %p356
        $region62: #{tpu_custom_call.1} parent=11 // pred_check_branch
          %582 = sbr.rel (%p580) target = $region64
        $region63: #{tpu_custom_call.1} parent=11 // pred_region
          _
        $region64: #{tpu_custom_call.1} parent=11 // pred_fallthru
          _
        // Predicated region
        $region65: #{tpu_custom_call.1} parent=11 // pred_check
          %p583 = pneg %p377
        $region66: #{tpu_custom_call.1} parent=11 // pred_check_branch
          %585 = sbr.rel (%p583) target = $region68
        $region67: #{tpu_custom_call.1} parent=11 // pred_region
          _
        $region68: #{tpu_custom_call.1} parent=11 // pred_fallthru
          _
        // Predicated region
        $region69: #{tpu_custom_call.1} parent=11 // pred_check
          %p586 = pneg %p398
        $region70: #{tpu_custom_call.1} parent=11 // pred_check_branch
          %588 = sbr.rel (%p586) target = $region72
        $region71: #{tpu_custom_call.1} parent=11 // pred_region
          _
        $region72: #{tpu_custom_call.1} parent=11 // pred_fallthru
          _
        // Predicated region
        $region73: #{tpu_custom_call.1} parent=11 // pred_check
          %p589 = pneg %p419
        $region74: #{tpu_custom_call.1} parent=11 // pred_check_branch
          %591 = sbr.rel (%p589) target = $region76
        $region75: #{tpu_custom_call.1} parent=11 // pred_region
          _
        $region76: #{tpu_custom_call.1} parent=11 // pred_fallthru
          _
        // Predicated region
        $region77: #{tpu_custom_call.1} parent=11 // pred_check
          %p592 = pneg %p440
        $region78: #{tpu_custom_call.1} parent=11 // pred_check_branch
          %594 = sbr.rel (%p592) target = $region80
        $region79: #{tpu_custom_call.1} parent=11 // pred_region
          _
        $region80: #{tpu_custom_call.1} parent=11 // pred_fallthru
          _
        // Predicated region
        $region81: #{tpu_custom_call.1} parent=11 // pred_check
          %p595 = pneg %p461
        $region82: #{tpu_custom_call.1} parent=11 // pred_check_branch
          %597 = sbr.rel (%p595) target = $region84
        $region83: #{tpu_custom_call.1} parent=11 // pred_region
          _
        $region84: #{tpu_custom_call.1} parent=11 // pred_fallthru
          _
        // Predicated region
        $region85: #{tpu_custom_call.1} parent=11 // pred_check
          %p598 = pneg %p482
        $region86: #{tpu_custom_call.1} parent=11 // pred_check_branch
          %600 = sbr.rel (%p598) target = $region88
        $region87: #{tpu_custom_call.1} parent=11 // pred_region
          _
        $region88: #{tpu_custom_call.1} parent=11 // pred_fallthru
          _
        // Predicated region
        $region89: #{tpu_custom_call.1} parent=11 // pred_check
          %p601 = pneg %p503
        $region90: #{tpu_custom_call.1} parent=11 // pred_check_branch
          %603 = sbr.rel (%p601) target = $region92
        $region91: #{tpu_custom_call.1} parent=11 // pred_region
          _
        $region92: #{tpu_custom_call.1} parent=11 // pred_fallthru
          _
      $region12: #{tpu_custom_call.1} parent=5 // pred_fallthru
        _
      %p604 = scmp.lt.s32.totalorder %s31, 2
      // Predicated region
      $region93: #{tpu_custom_call.1} parent=5 // pred_check
        %p605 = pneg %p604
      $region94: #{tpu_custom_call.1} parent=5 // pred_check_branch
        %607 = sbr.rel (%p605) target = $region96
      $region95: #{tpu_custom_call.1} parent=5 // pred_region
        // Predicated region
        $region97: #{tpu_custom_call.1} parent=95 // pred_check
          %p608 = pneg %p51
        $region98: #{tpu_custom_call.1} parent=95 // pred_check_branch
          %610 = sbr.rel (%p608) target = $region100
        $region99: #{tpu_custom_call.1} parent=95 // pred_region
          %s611 = smul.u32 8, %s31
          %p612 = scmp.lt.s32.totalorder %s611, 15
          %s613 = scalar_select %p612, %s611, 15
          %s614 = smul.addr %s613, 8
          %s615 = scalar_lea.vmem %s0, %s614
          %s616 = smul.u32 8, %s31
        $region100: #{tpu_custom_call.1} parent=95 // pred_fallthru
          _
        // Predicated region
        $region101: #{tpu_custom_call.1} parent=95 // pred_check
          %p617 = pneg %p77
        $region102: #{tpu_custom_call.1} parent=95 // pred_check_branch
          %619 = sbr.rel (%p617) target = $region104
        $region103: #{tpu_custom_call.1} parent=95 // pred_region
          %s620 = smul.u32 8, %s31
          %p621 = scmp.lt.s32.totalorder %s620, 15
          %s622 = scalar_select %p621, %s620, 15
          %s623 = smul.addr %s622, 4
          %s624 = scalar_lea.vmem %s1, %s623
          %s625 = smul.u32 8, %s31
        $region104: #{tpu_custom_call.1} parent=95 // pred_fallthru
          _
      $region96: #{tpu_custom_call.1} parent=5 // pred_fallthru
        _
      %p626 = scmp.le.s32.totalorder 1, %s31
      %p627 = scmp.lt.s32.totalorder %s31, 3
      %p628 = pnand %p626, %p627
      %p629 = pneg %p628
      // Predicated region
      $region105: #{tpu_custom_call.1} parent=5 // pred_check
        _
      $region106: #{tpu_custom_call.1} parent=5 // pred_check_branch
        %631 = sbr.rel (%p628) target = $region108
      $region107: #{tpu_custom_call.1} parent=5 // pred_region
        %s632 = ssub.s32 %s31, 1
        %s633 = smul.u32 8, %s36
        %p634 = scmp.lt.s32.totalorder %s633, 15
        %s635 = scalar_select %p634, %s633, 15
        %s636 = smul.addr %s635, 8
        %s637 = scalar_lea.vmem %s0, %s636
        %p638 = pneg %p57
        %p639 = pneg %p54
        %s640 = smul.u32 8, %s36
        %p641 = scmp.lt.s32.totalorder %s640, 15
        %s642 = scalar_select %p641, %s640, 15
        %s643 = smul.addr %s642, 4
        %s644 = scalar_lea.vmem %s1, %s643
        %p645 = pneg %p83
        %p646 = pneg %p80
        %p647 = pneg %p104
        %p648 = pneg %p101
        %p649 = pneg %p125
        %p650 = pneg %p122
        %p651 = pneg %p146
        %p652 = pneg %p143
        %p653 = pneg %p167
        %p654 = pneg %p164
        %p655 = pneg %p188
        %p656 = pneg %p185
        %p657 = pneg %p209
        %p658 = pneg %p206
        %p659 = pneg %p230
        %p660 = pneg %p227
        %p661 = pneg %p251
        %p662 = pneg %p248
        %p663 = pneg %p272
        %p664 = pneg %p269
        %p665 = pneg %p293
        %p666 = pneg %p290
        %p667 = pneg %p314
        %p668 = pneg %p311
        %p669 = pneg %p335
        %p670 = pneg %p332
        %p671 = pneg %p356
        %p672 = pneg %p353
        %p673 = pneg %p377
        %p674 = pneg %p374
        %p675 = pneg %p398
        %p676 = pneg %p395
        %p677 = pneg %p419
        %p678 = pneg %p416
        %p679 = pneg %p440
        %p680 = pneg %p437
        %p681 = pneg %p461
        %p682 = pneg %p458
        %p683 = pneg %p482
        %p684 = pneg %p479
        %p685 = pneg %p503
        %p686 = pneg %p500
        %p687 = pneg %p529
        %p688 = pneg %p526
        %s689 = sand.u32 %s516, 1
        %s690 = scalar_lea.sflag [#allocation3], %s689
        %s691 = sand.u32 %s516, 1
        %s692 = smul.addr %s691, 16
        %s693 = scalar_lea.vmem [#allocation2], %s692
        %s694 = smul.u32 8, %s36
        %p695 = scmp.lt.s32.totalorder %s694, 15
        %s696 = scalar_select %p695, %s694, 15
        %s697 = smul.addr %s696, 8
        %s698 = scalar_lea.vmem %s0, %s697
        %s699 = smul.u32 8, %s36
        %s700 = smul.u32 8, %s36
        %p701 = scmp.lt.s32.totalorder %s700, 15
        %s702 = scalar_select %p701, %s700, 15
        %s703 = smul.addr %s702, 4
        %s704 = scalar_lea.vmem %s1, %s703
        %s705 = smul.u32 8, %s36
        %v707 = vld [vmem:[%s698] sm:$0xff]
        %v708 = vld [vmem:[%s698 + $0x8] sm:$0xff]
        %v709 = vld [vmem:[%s698 + $0x10] sm:$0xff]
        %v710 = vld [vmem:[%s698 + $0x18] sm:$0xff]
        %v711 = vld [vmem:[%s698 + $0x20] sm:$0xff]
        %v712 = vld [vmem:[%s698 + $0x28] sm:$0xff]
        %v713 = vld [vmem:[%s698 + $0x30] sm:$0xff]
        %v714 = vld [vmem:[%s698 + $0x38] sm:$0xff]
        %v715 = vld [vmem:[%s704] sm:$0xf]
        %v716 = vld [vmem:[%s704 + $0x4] sm:$0xf]
        %v717 = vld [vmem:[%s704 + $0x8] sm:$0xf]
        %v718 = vld [vmem:[%s704 + $0xc] sm:$0xf]
        %v719 = vld [vmem:[%s704 + $0x10] sm:$0xf]
        %v720 = vld [vmem:[%s704 + $0x14] sm:$0xf]
        %v721 = vld [vmem:[%s704 + $0x18] sm:$0xf]
        %v722 = vld [vmem:[%s704 + $0x1c] sm:$0xf]
        %v723 = vunpack.c.l.bf16 %v715
        %v724 = vunpack.c.l.bf16 %v716
        %v725 = vunpack.c.l.bf16 %v717
        %v726 = vunpack.c.l.bf16 %v718
        %v727 = vunpack.c.l.bf16 %v719
        %v728 = vunpack.c.l.bf16 %v720
        %v729 = vunpack.c.l.bf16 %v721
        %v730 = vunpack.c.l.bf16 %v722
        %v731 = vmul.f32 %v707, %v723
        %v732 = vmul.f32 %v708, %v724
        %v733 = vmul.f32 %v709, %v725
        %v734 = vmul.f32 %v710, %v726
        %v735 = vmul.f32 %v711, %v727
        %v736 = vmul.f32 %v712, %v728
        %v737 = vmul.f32 %v713, %v729
        %v738 = vmul.f32 %v714, %v730
        %v739 = vpack.c.bf16 %v732, %v731
        %v740 = vpack.c.bf16 %v734, %v733
        %v741 = vpack.c.bf16 %v736, %v735
        %v742 = vpack.c.bf16 %v738, %v737
        %v743 = vld [vmem:[%s3] sm:$0xf]
        %v744 = vld [vmem:[%s3 + $0x4] sm:$0xf]
        %v745 = vld [vmem:[%s3 + $0x8] sm:$0xf]
        %v746 = vld [vmem:[%s3 + $0xc] sm:$0xf]
        %v747 = vld [vmem:[%s4] sm:$0x1]
        %v749 = vperm.slane %v747, 0
        %v755 = vunpack.c.l.b16 %v743
        %v756 = vunpack.c.l.b16 %v744
        %v757 = vunpack.c.l.b16 %v745
        %v758 = vunpack.c.l.b16 %v746
        %v759 = vpack.c.b16 %v756, %v755
        %v760 = vpack.c.b16 %v758, %v757
        %vm763 = vcmask 261120
        %v765 = vsel %vm763, %v739, 0
        %v768 = vsel %vm763, %v740, 0
        %v771 = vsel %vm763, %v741, 0
        %v774 = vsel %vm763, %v742, 0
        %776 = vmatpush.bf16.msra.mxu0 0
        %777 = vmatpush.bf16.msra.mxu0 0
        %778 = vmatpush.bf16.msra.mxu0 0
        %779 = vmatpush.bf16.msra.mxu0 0
        %780 = vmatpush.bf16.msra.mxu0 0
        %781 = vmatpush.bf16.msra.mxu0 0
        %782 = vmatpush.bf16.msra.mxu0 %v760
        %783 = vmatpush.bf16.msra.mxu0 %v759
        %784 = vmatmul.bf16.gmra.mxu0 %v765
        %v785 = vpop.f32.mrf.mxu0
        %v786 = vadd.f32 %v749, %v785
        %v787 = vpop.f32.mrf.mxu0
        %v788 = vadd.f32 %v749, %v787
        %789 = vmatmul.bf16.gmra.mxu0 %v768
        %v790 = vpop.f32.mrf.mxu0
        %v791 = vadd.f32 %v749, %v790
        %v792 = vpop.f32.mrf.mxu0
        %v793 = vadd.f32 %v749, %v792
        %794 = vmatmul.bf16.gmra.mxu0 %v771
        %v795 = vpop.f32.mrf.mxu0
        %v796 = vadd.f32 %v749, %v795
        %v797 = vpop.f32.mrf.mxu0
        %v798 = vadd.f32 %v749, %v797
        %799 = vmatmul.bf16.gmra.mxu0 %v774
        %v800 = vpop.f32.mrf.mxu0
        %v801 = vadd.f32 %v749, %v800
        %v802 = vpop.f32.mrf.mxu0
        %v803 = vadd.f32 %v749, %v802
        %804 = vdwg.mxu0
        %v805 = vld [vmem:[%s5] sm:$0xff]
        %v806 = vadd.f32 %v786, %v805
        %v807 = vadd.f32 %v788, %v805
        %v808 = vadd.f32 %v791, %v805
        %v809 = vadd.f32 %v793, %v805
        %v810 = vadd.f32 %v796, %v805
        %v811 = vadd.f32 %v798, %v805
        %v812 = vadd.f32 %v801, %v805
        %v813 = vadd.f32 %v803, %v805
        %v814 = vld [vmem:[%s2] sm:$0xff]
        %v815 = vld [vmem:[%s2 + $0x8] sm:$0xff]
        %v816 = vld [vmem:[%s2 + $0x10] sm:$0xff]
        %v817 = vld [vmem:[%s2 + $0x18] sm:$0xff]
        %v818 = vld [vmem:[%s2 + $0x20] sm:$0xff]
        %v819 = vld [vmem:[%s2 + $0x28] sm:$0xff]
        %v820 = vld [vmem:[%s2 + $0x30] sm:$0xff]
        %v821 = vld [vmem:[%s2 + $0x38] sm:$0xff]
        %v822 = vpack.c.bf16 %v807, %v806
        %v823 = vpack.c.bf16 %v809, %v808
        %v824 = vpack.c.bf16 %v811, %v810
        %v825 = vpack.c.bf16 %v813, %v812
        %v826 = vld [vmem:[%s6] sm:$0xff]
        %v827 = vld [vmem:[%s6 + $0x8] sm:$0xff]
        %v828 = vld [vmem:[%s6 + $0x10] sm:$0xff]
        %v829 = vld [vmem:[%s6 + $0x18] sm:$0xff]
        %v830 = vld [vmem:[%s6 + $0x20] sm:$0xff]
        %v831 = vld [vmem:[%s6 + $0x28] sm:$0xff]
        %v832 = vld [vmem:[%s6 + $0x30] sm:$0xff]
        %v833 = vld [vmem:[%s6 + $0x38] sm:$0xff]
        %v834 = vld [vmem:[%s7] sm:$0x3]
        %v836 = vperm.slane %v834, 0
        %v837 = vperm.slane %v834, 1
        %v848 = vunpack.c.l.b16 %v826
        %v849 = vunpack.c.h.b16 %v826
        %v850 = vunpack.c.l.b16 %v827
        %v851 = vunpack.c.h.b16 %v827
        %v852 = vunpack.c.l.b16 %v828
        %v853 = vunpack.c.h.b16 %v828
        %v854 = vunpack.c.l.b16 %v829
        %v855 = vunpack.c.h.b16 %v829
        %v856 = vunpack.c.l.b16 %v830
        %v857 = vunpack.c.h.b16 %v830
        %v858 = vunpack.c.l.b16 %v831
        %v859 = vunpack.c.h.b16 %v831
        %v860 = vunpack.c.l.b16 %v832
        %v861 = vunpack.c.h.b16 %v832
        %v862 = vunpack.c.l.b16 %v833
        %v863 = vunpack.c.h.b16 %v833
        %v864 = vpack.c.b16 %v850, %v848
        %v865 = vpack.c.b16 %v851, %v849
        %v866 = vpack.c.b16 %v854, %v852
        %v867 = vpack.c.b16 %v855, %v853
        %v868 = vpack.c.b16 %v858, %v856
        %v869 = vpack.c.b16 %v859, %v857
        %v870 = vpack.c.b16 %v862, %v860
        %v871 = vpack.c.b16 %v863, %v861
        %vm880 = vcmask 523264
        %v882 = vsel %vm880, %v822, 0
        %v885 = vsel %vm880, %v823, 0
        %v888 = vsel %vm880, %v824, 0
        %v891 = vsel %vm880, %v825, 0
        %893 = vmatpush.bf16.msra.mxu0 0
        %894 = vmatpush.bf16.msra.mxu0 0
        %895 = vmatpush.bf16.msra.mxu0 0
        %896 = vmatpush.bf16.msra.mxu0 0
        %897 = vmatpush.bf16.msra.mxu0 %v870
        %898 = vmatpush.bf16.msra.mxu0 %v868
        %899 = vmatpush.bf16.msra.mxu0 %v866
        %900 = vmatpush.bf16.msra.mxu0 %v864
        %901 = vmatmul.bf16.gmra.mxu0 %v882
        %v902 = vpop.f32.mrf.mxu0
        %v903 = vadd.f32 %v836, %v902
        %v904 = vpop.f32.mrf.mxu0
        %v905 = vadd.f32 %v836, %v904
        %906 = vmatmul.bf16.gmra.mxu0 %v885
        %v907 = vpop.f32.mrf.mxu0
        %v908 = vadd.f32 %v836, %v907
        %v909 = vpop.f32.mrf.mxu0
        %v910 = vadd.f32 %v836, %v909
        %911 = vmatmul.bf16.gmra.mxu0 %v888
        %v912 = vpop.f32.mrf.mxu0
        %v913 = vadd.f32 %v836, %v912
        %v914 = vpop.f32.mrf.mxu0
        %v915 = vadd.f32 %v836, %v914
        %916 = vmatmul.bf16.gmra.mxu0 %v891
        %v917 = vpop.f32.mrf.mxu0
        %v918 = vadd.f32 %v836, %v917
        %v919 = vpop.f32.mrf.mxu0
        %v920 = vadd.f32 %v836, %v919
        %921 = vdwg.mxu0
        %922 = vmatpush.bf16.msra.mxu0 0
        %923 = vmatpush.bf16.msra.mxu0 0
        %924 = vmatpush.bf16.msra.mxu0 0
        %925 = vmatpush.bf16.msra.mxu0 0
        %926 = vmatpush.bf16.msra.mxu0 %v871
        %927 = vmatpush.bf16.msra.mxu0 %v869
        %928 = vmatpush.bf16.msra.mxu0 %v867
        %929 = vmatpush.bf16.msra.mxu0 %v865
        %930 = vmatmul.bf16.gmra.mxu0 %v882
        %v931 = vpop.f32.mrf.mxu0
        %v932 = vadd.f32 %v837, %v931
        %v933 = vpop.f32.mrf.mxu0
        %v934 = vadd.f32 %v837, %v933
        %935 = vmatmul.bf16.gmra.mxu0 %v885
        %v936 = vpop.f32.mrf.mxu0
        %v937 = vadd.f32 %v837, %v936
        %v938 = vpop.f32.mrf.mxu0
        %v939 = vadd.f32 %v837, %v938
        %940 = vmatmul.bf16.gmra.mxu0 %v888
        %v941 = vpop.f32.mrf.mxu0
        %v942 = vadd.f32 %v837, %v941
        %v943 = vpop.f32.mrf.mxu0
        %v944 = vadd.f32 %v837, %v943
        %945 = vmatmul.bf16.gmra.mxu0 %v891
        %v946 = vpop.f32.mrf.mxu0
        %v947 = vadd.f32 %v837, %v946
        %v948 = vpop.f32.mrf.mxu0
        %v949 = vadd.f32 %v837, %v948
        %950 = vdwg.mxu0
        %v951 = vmul.f32 %v903, 0.25
        %v952 = vmul.f32 %v905, 0.25
        %v953 = vmul.f32 %v908, 0.25
        %v954 = vmul.f32 %v910, 0.25
        %v955 = vmul.f32 %v913, 0.25
        %v956 = vmul.f32 %v915, 0.25
        %v957 = vmul.f32 %v918, 0.25
        %v958 = vmul.f32 %v920, 0.25
        %v959 = vpack.c.bf16 %v951, %v951
        %v960 = vpack.c.bf16 %v952, %v952
        %v961 = vpack.c.bf16 %v953, %v953
        %v962 = vpack.c.bf16 %v954, %v954
        %v963 = vpack.c.bf16 %v955, %v955
        %v964 = vpack.c.bf16 %v956, %v956
        %v965 = vpack.c.bf16 %v957, %v957
        %v966 = vpack.c.bf16 %v958, %v958
        %v967 = vpack.c.bf16 %v903, %v903
        %v968 = vpack.c.bf16 %v905, %v905
        %v969 = vpack.c.bf16 %v908, %v908
        %v970 = vpack.c.bf16 %v910, %v910
        %v971 = vpack.c.bf16 %v913, %v913
        %v972 = vpack.c.bf16 %v915, %v915
        %v973 = vpack.c.bf16 %v918, %v918
        %v974 = vpack.c.bf16 %v920, %v920
        %v975 = vpack.c.bf16 %v932, %v932
        %v976 = vpack.c.bf16 %v934, %v934
        %v977 = vpack.c.bf16 %v937, %v937
        %v978 = vpack.c.bf16 %v939, %v939
        %v979 = vpack.c.bf16 %v942, %v942
        %v980 = vpack.c.bf16 %v944, %v944
        %v981 = vpack.c.bf16 %v947, %v947
        %v982 = vpack.c.bf16 %v949, %v949
        %v991 = vunpack.c.l.b16 %v959
        %v992 = vunpack.c.l.b16 %v960
        %v993 = vunpack.c.l.b16 %v961
        %v994 = vunpack.c.l.b16 %v962
        %v995 = vunpack.c.l.b16 %v963
        %v996 = vunpack.c.l.b16 %v964
        %v997 = vunpack.c.l.b16 %v965
        %v998 = vunpack.c.l.b16 %v966
        %v999 = vpack.c.b16 %v992, %v991
        %v1000 = vpack.c.b16 %v994, %v993
        %v1001 = vpack.c.b16 %v996, %v995
        %v1002 = vpack.c.b16 %v998, %v997
        %v1011 = vunpack.c.l.b16 %v967
        %v1012 = vunpack.c.l.b16 %v968
        %v1013 = vunpack.c.l.b16 %v969
        %v1014 = vunpack.c.l.b16 %v970
        %v1015 = vunpack.c.l.b16 %v971
        %v1016 = vunpack.c.l.b16 %v972
        %v1017 = vunpack.c.l.b16 %v973
        %v1018 = vunpack.c.l.b16 %v974
        %v1019 = vpack.c.b16 %v1012, %v1011
        %v1020 = vpack.c.b16 %v1014, %v1013
        %v1021 = vpack.c.b16 %v1016, %v1015
        %v1022 = vpack.c.b16 %v1018, %v1017
        %1023 = vrot.lane.b32.xlu0 %v1019, 64
        %v1024 = vpop.permute.xlu0 %1023
        %1025 = vrot.lane.b32.xlu0 %v1020, 64
        %v1026 = vpop.permute.xlu0 %1025
        %1027 = vrot.lane.b32.xlu0 %v1021, 64
        %v1028 = vpop.permute.xlu0 %1027
        %1029 = vrot.lane.b32.xlu0 %v1022, 64
        %v1030 = vpop.permute.xlu0 %1029
        %vm1031 = vcmask 130048
        %v1033 = vsel %vm1031, %v999, 0
        %v1036 = vsel %vm1031, %v1000, 0
        %v1039 = vsel %vm1031, %v1001, 0
        %v1042 = vsel %vm1031, %v1002, 0
        %v1045 = vsel %vm1031, %v1024, 0
        %v1048 = vsel %vm1031, %v1026, 0
        %v1051 = vsel %vm1031, %v1028, 0
        %v1054 = vsel %vm1031, %v1030, 0
        %1056 = vmatpush.bf16.xpose.msra.mxu0 0
        %1057 = vmatpush.bf16.xpose.msra.mxu0 0
        %1058 = vmatpush.bf16.xpose.msra.mxu0 0
        %1059 = vmatpush.bf16.xpose.msra.mxu0 0
        %1060 = vmatpush.bf16.xpose.msra.mxu0 %v1054
        %1061 = vmatpush.bf16.xpose.msra.mxu0 %v1051
        %1062 = vmatpush.bf16.xpose.msra.mxu0 %v1048
        %1063 = vmatpush.bf16.xpose.msra.mxu0 %v1045
        %1064 = vmatmul.bf16.gmra.mxu0 %v1033
        %v1065 = vpop.f32.mrf.mxu0
        %v1066 = vadd.f32 %v814, %v1065
        %v1067 = vpop.f32.mrf.mxu0
        %v1068 = vadd.f32 %v815, %v1067
        %1069 = vmatmul.bf16.gmra.mxu0 %v1036
        %v1070 = vpop.f32.mrf.mxu0
        %v1071 = vadd.f32 %v816, %v1070
        %v1072 = vpop.f32.mrf.mxu0
        %v1073 = vadd.f32 %v817, %v1072
        %1074 = vmatmul.bf16.gmra.mxu0 %v1039
        %v1075 = vpop.f32.mrf.mxu0
        %v1076 = vadd.f32 %v818, %v1075
        %v1077 = vpop.f32.mrf.mxu0
        %v1078 = vadd.f32 %v819, %v1077
        %1079 = vmatmul.bf16.gmra.mxu0 %v1042
        %v1080 = vpop.f32.mrf.mxu0
        %v1081 = vadd.f32 %v820, %v1080
        %v1082 = vpop.f32.mrf.mxu0
        %v1083 = vadd.f32 %v821, %v1082
        %1084 = vdwg.mxu0
        %v1085 = vsel %vm880, %v1066, -inf
        %1086 = vmax.xlane.f32.xlu0 %v1085
        %v1087 = vpop.xlane.xlu0 %1086
        %v1088 = vsel %vm880, %v1068, -inf
        %1089 = vmax.xlane.f32.xlu0 %v1088
        %v1090 = vpop.xlane.xlu0 %1089
        %v1091 = vsel %vm880, %v1071, -inf
        %1092 = vmax.xlane.f32.xlu0 %v1091
        %v1093 = vpop.xlane.xlu0 %1092
        %v1094 = vsel %vm880, %v1073, -inf
        %1095 = vmax.xlane.f32.xlu0 %v1094
        %v1096 = vpop.xlane.xlu0 %1095
        %v1097 = vsel %vm880, %v1076, -inf
        %1098 = vmax.xlane.f32.xlu0 %v1097
        %v1099 = vpop.xlane.xlu0 %1098
        %v1100 = vsel %vm880, %v1078, -inf
        %1101 = vmax.xlane.f32.xlu0 %v1100
        %v1102 = vpop.xlane.xlu0 %1101
        %v1103 = vsel %vm880, %v1081, -inf
        %1104 = vmax.xlane.f32.xlu0 %v1103
        %v1105 = vpop.xlane.xlu0 %1104
        %v1106 = vsel %vm880, %v1083, -inf
        %1107 = vmax.xlane.f32.xlu0 %v1106
        %v1108 = vpop.xlane.xlu0 %1107
        %v1109 = vsub.f32 %v1066, %v1087
        %v1110 = vsub.f32 %v1068, %v1090
        %v1111 = vsub.f32 %v1071, %v1093
        %v1112 = vsub.f32 %v1073, %v1096
        %v1113 = vsub.f32 %v1076, %v1099
        %v1114 = vsub.f32 %v1078, %v1102
        %v1115 = vsub.f32 %v1081, %v1105
        %v1116 = vsub.f32 %v1083, %v1108
        %v1117 = vmul.f32 %v1109, 1.442695
        %v1118 = vpow.pop %v1117
        %v1119 = vmul.f32 %v1110, 1.442695
        %v1120 = vpow.pop %v1119
        %v1121 = vmul.f32 %v1111, 1.442695
        %v1122 = vpow.pop %v1121
        %v1123 = vmul.f32 %v1112, 1.442695
        %v1124 = vpow.pop %v1123
        %v1125 = vmul.f32 %v1113, 1.442695
        %v1126 = vpow.pop %v1125
        %v1127 = vmul.f32 %v1114, 1.442695
        %v1128 = vpow.pop %v1127
        %v1129 = vmul.f32 %v1115, 1.442695
        %v1130 = vpow.pop %v1129
        %v1131 = vmul.f32 %v1116, 1.442695
        %v1132 = vpow.pop %v1131
        %v1133 = vsel %vm880, %v1118, 0.0
        %1134 = vadd.xlane.f32.xlu0 %v1133
        %v1135 = vpop.xlane.xlu0 %1134
        %v1136 = vsel %vm880, %v1120, 0.0
        %1137 = vadd.xlane.f32.xlu0 %v1136
        %v1138 = vpop.xlane.xlu0 %1137
        %v1139 = vsel %vm880, %v1122, 0.0
        %1140 = vadd.xlane.f32.xlu0 %v1139
        %v1141 = vpop.xlane.xlu0 %1140
        %v1142 = vsel %vm880, %v1124, 0.0
        %1143 = vadd.xlane.f32.xlu0 %v1142
        %v1144 = vpop.xlane.xlu0 %1143
        %v1145 = vsel %vm880, %v1126, 0.0
        %1146 = vadd.xlane.f32.xlu0 %v1145
        %v1147 = vpop.xlane.xlu0 %1146
        %v1148 = vsel %vm880, %v1128, 0.0
        %1149 = vadd.xlane.f32.xlu0 %v1148
        %v1150 = vpop.xlane.xlu0 %1149
        %v1151 = vsel %vm880, %v1130, 0.0
        %1152 = vadd.xlane.f32.xlu0 %v1151
        %v1153 = vpop.xlane.xlu0 %1152
        %v1154 = vsel %vm880, %v1132, 0.0
        %1155 = vadd.xlane.f32.xlu0 %v1154
        %v1156 = vpop.xlane.xlu0 %1155
        %v1157 = vrcp.pop %v1135
        %v1158 = vrcp.pop %v1138
        %v1159 = vrcp.pop %v1141
        %v1160 = vrcp.pop %v1144
        %v1161 = vrcp.pop %v1147
        %v1162 = vrcp.pop %v1150
        %v1163 = vrcp.pop %v1153
        %v1164 = vrcp.pop %v1156
        %v1165 = vmul.f32 %v1118, %v1157
        %v1166 = vmul.f32 %v1120, %v1158
        %v1167 = vmul.f32 %v1122, %v1159
        %v1168 = vmul.f32 %v1124, %v1160
        %v1169 = vmul.f32 %v1126, %v1161
        %v1170 = vmul.f32 %v1128, %v1162
        %v1171 = vmul.f32 %v1130, %v1163
        %v1172 = vmul.f32 %v1132, %v1164
        %v1173 = vpack.c.bf16 %v1165, %v1165
        %v1174 = vpack.c.bf16 %v1166, %v1166
        %v1175 = vpack.c.bf16 %v1167, %v1167
        %v1176 = vpack.c.bf16 %v1168, %v1168
        %v1177 = vpack.c.bf16 %v1169, %v1169
        %v1178 = vpack.c.bf16 %v1170, %v1170
        %v1179 = vpack.c.bf16 %v1171, %v1171
        %v1180 = vpack.c.bf16 %v1172, %v1172
        %v1189 = vunpack.c.l.b16 %v1173
        %v1190 = vunpack.c.l.b16 %v1174
        %v1191 = vunpack.c.l.b16 %v1175
        %v1192 = vunpack.c.l.b16 %v1176
        %v1193 = vunpack.c.l.b16 %v1177
        %v1194 = vunpack.c.l.b16 %v1178
        %v1195 = vunpack.c.l.b16 %v1179
        %v1196 = vunpack.c.l.b16 %v1180
        %v1197 = vpack.c.b16 %v1190, %v1189
        %v1198 = vpack.c.b16 %v1192, %v1191
        %v1199 = vpack.c.b16 %v1194, %v1193
        %v1200 = vpack.c.b16 %v1196, %v1195
        %v1209 = vunpack.c.l.b16 %v975
        %v1210 = vunpack.c.l.b16 %v976
        %v1211 = vunpack.c.l.b16 %v977
        %v1212 = vunpack.c.l.b16 %v978
        %v1213 = vunpack.c.l.b16 %v979
        %v1214 = vunpack.c.l.b16 %v980
        %v1215 = vunpack.c.l.b16 %v981
        %v1216 = vunpack.c.l.b16 %v982
        %v1217 = vpack.c.b16 %v1210, %v1209
        %v1218 = vpack.c.b16 %v1212, %v1211
        %v1219 = vpack.c.b16 %v1214, %v1213
        %v1220 = vpack.c.b16 %v1216, %v1215
        %v1226 = vsel %vm880, %v1197, 0
        %v1229 = vsel %vm880, %v1198, 0
        %v1232 = vsel %vm880, %v1199, 0
        %v1235 = vsel %vm880, %v1200, 0
        %1237 = vmatpush.bf16.msra.mxu0 0
        %1238 = vmatpush.bf16.msra.mxu0 0
        %1239 = vmatpush.bf16.msra.mxu0 0
        %1240 = vmatpush.bf16.msra.mxu0 0
        %1241 = vmatpush.bf16.msra.mxu0 %v1220
        %1242 = vmatpush.bf16.msra.mxu0 %v1219
        %1243 = vmatpush.bf16.msra.mxu0 %v1218
        %1244 = vmatpush.bf16.msra.mxu0 %v1217
        %1245 = vmatmul.bf16.gmra.mxu0 %v1226
        %v1246 = vpop.f32.mrf.mxu0
        %v1247 = vadd.f32 0.0, %v1246
        %v1248 = vpop.f32.mrf.mxu0
        %v1249 = vadd.f32 0.0, %v1248
        %1250 = vmatmul.bf16.gmra.mxu0 %v1229
        %v1251 = vpop.f32.mrf.mxu0
        %v1252 = vadd.f32 0.0, %v1251
        %v1253 = vpop.f32.mrf.mxu0
        %v1254 = vadd.f32 0.0, %v1253
        %1255 = vmatmul.bf16.gmra.mxu0 %v1232
        %v1256 = vpop.f32.mrf.mxu0
        %v1257 = vadd.f32 0.0, %v1256
        %v1258 = vpop.f32.mrf.mxu0
        %v1259 = vadd.f32 0.0, %v1258
        %1260 = vmatmul.bf16.gmra.mxu0 %v1235
        %v1261 = vpop.f32.mrf.mxu0
        %v1262 = vadd.f32 0.0, %v1261
        %v1263 = vpop.f32.mrf.mxu0
        %v1264 = vadd.f32 0.0, %v1263
        %1265 = vdwg.mxu0
        %1266 = vrot.lane.b32.xlu0 %v999, 112
        %v1267 = vpop.permute.xlu0 %1266
        %1268 = vrot.lane.b32.xlu0 %v1000, 112
        %v1269 = vpop.permute.xlu0 %1268
        %1270 = vrot.lane.b32.xlu0 %v1001, 112
        %v1271 = vpop.permute.xlu0 %1270
        %1272 = vrot.lane.b32.xlu0 %v1002, 112
        %v1273 = vpop.permute.xlu0 %1272
        %1274 = vrot.lane.b32.xlu0 %v1019, 48
        %v1275 = vpop.permute.xlu0 %1274
        %1276 = vrot.lane.b32.xlu0 %v1020, 48
        %v1277 = vpop.permute.xlu0 %1276
        %1278 = vrot.lane.b32.xlu0 %v1021, 48
        %v1279 = vpop.permute.xlu0 %1278
        %1280 = vrot.lane.b32.xlu0 %v1022, 48
        %v1281 = vpop.permute.xlu0 %1280
        %v1283 = vsel %vm1031, %v1267, 0
        %v1286 = vsel %vm1031, %v1269, 0
        %v1289 = vsel %vm1031, %v1271, 0
        %v1292 = vsel %vm1031, %v1273, 0
        %v1295 = vsel %vm1031, %v1275, 0
        %v1298 = vsel %vm1031, %v1277, 0
        %v1301 = vsel %vm1031, %v1279, 0
        %v1304 = vsel %vm1031, %v1281, 0
        %1306 = vmatpush.bf16.xpose.msra.mxu0 0
        %1307 = vmatpush.bf16.xpose.msra.mxu0 0
        %1308 = vmatpush.bf16.xpose.msra.mxu0 0
        %1309 = vmatpush.bf16.xpose.msra.mxu0 0
        %1310 = vmatpush.bf16.xpose.msra.mxu0 %v1304
        %1311 = vmatpush.bf16.xpose.msra.mxu0 %v1301
        %1312 = vmatpush.bf16.xpose.msra.mxu0 %v1298
        %1313 = vmatpush.bf16.xpose.msra.mxu0 %v1295
        %1314 = vmatmul.bf16.gmra.mxu0 %v1283
        %v1315 = vpop.f32.mrf.mxu0
        %v1316 = vadd.f32 %v814, %v1315
        %v1317 = vpop.f32.mrf.mxu0
        %v1318 = vadd.f32 %v815, %v1317
        %1319 = vmatmul.bf16.gmra.mxu0 %v1286
        %v1320 = vpop.f32.mrf.mxu0
        %v1321 = vadd.f32 %v816, %v1320
        %v1322 = vpop.f32.mrf.mxu0
        %v1323 = vadd.f32 %v817, %v1322
        %1324 = vmatmul.bf16.gmra.mxu0 %v1289
        %v1325 = vpop.f32.mrf.mxu0
        %v1326 = vadd.f32 %v818, %v1325
        %v1327 = vpop.f32.mrf.mxu0
        %v1328 = vadd.f32 %v819, %v1327
        %1329 = vmatmul.bf16.gmra.mxu0 %v1292
        %v1330 = vpop.f32.mrf.mxu0
        %v1331 = vadd.f32 %v820, %v1330
        %v1332 = vpop.f32.mrf.mxu0
        %v1333 = vadd.f32 %v821, %v1332
        %1334 = vdwg.mxu0
        %v1335 = vsel %vm880, %v1316, -inf
        %1336 = vmax.xlane.f32.xlu0 %v1335
        %v1337 = vpop.xlane.xlu0 %1336
        %v1338 = vsel %vm880, %v1318, -inf
        %1339 = vmax.xlane.f32.xlu0 %v1338
        %v1340 = vpop.xlane.xlu0 %1339
        %v1341 = vsel %vm880, %v1321, -inf
        %1342 = vmax.xlane.f32.xlu0 %v1341
        %v1343 = vpop.xlane.xlu0 %1342
        %v1344 = vsel %vm880, %v1323, -inf
        %1345 = vmax.xlane.f32.xlu0 %v1344
        %v1346 = vpop.xlane.xlu0 %1345
        %v1347 = vsel %vm880, %v1326, -inf
        %1348 = vmax.xlane.f32.xlu0 %v1347
        %v1349 = vpop.xlane.xlu0 %1348
        %v1350 = vsel %vm880, %v1328, -inf
        %1351 = vmax.xlane.f32.xlu0 %v1350
        %v1352 = vpop.xlane.xlu0 %1351
        %v1353 = vsel %vm880, %v1331, -inf
        %1354 = vmax.xlane.f32.xlu0 %v1353
        %v1355 = vpop.xlane.xlu0 %1354
        %v1356 = vsel %vm880, %v1333, -inf
        %1357 = vmax.xlane.f32.xlu0 %v1356
        %v1358 = vpop.xlane.xlu0 %1357
        %v1359 = vsub.f32 %v1316, %v1337
        %v1360 = vsub.f32 %v1318, %v1340
        %v1361 = vsub.f32 %v1321, %v1343
        %v1362 = vsub.f32 %v1323, %v1346
        %v1363 = vsub.f32 %v1326, %v1349
        %v1364 = vsub.f32 %v1328, %v1352
        %v1365 = vsub.f32 %v1331, %v1355
        %v1366 = vsub.f32 %v1333, %v1358
        %v1367 = vmul.f32 %v1359, 1.442695
        %v1368 = vpow.pop %v1367
        %v1369 = vmul.f32 %v1360, 1.442695
        %v1370 = vpow.pop %v1369
        %v1371 = vmul.f32 %v1361, 1.442695
        %v1372 = vpow.pop %v1371
        %v1373 = vmul.f32 %v1362, 1.442695
        %v1374 = vpow.pop %v1373
        %v1375 = vmul.f32 %v1363, 1.442695
        %v1376 = vpow.pop %v1375
        %v1377 = vmul.f32 %v1364, 1.442695
        %v1378 = vpow.pop %v1377
        %v1379 = vmul.f32 %v1365, 1.442695
        %v1380 = vpow.pop %v1379
        %v1381 = vmul.f32 %v1366, 1.442695
        %v1382 = vpow.pop %v1381
        %v1383 = vsel %vm880, %v1368, 0.0
        %1384 = vadd.xlane.f32.xlu0 %v1383
        %v1385 = vpop.xlane.xlu0 %1384
        %v1386 = vsel %vm880, %v1370, 0.0
        %1387 = vadd.xlane.f32.xlu0 %v1386
        %v1388 = vpop.xlane.xlu0 %1387
        %v1389 = vsel %vm880, %v1372, 0.0
        %1390 = vadd.xlane.f32.xlu0 %v1389
        %v1391 = vpop.xlane.xlu0 %1390
        %v1392 = vsel %vm880, %v1374, 0.0
        %1393 = vadd.xlane.f32.xlu0 %v1392
        %v1394 = vpop.xlane.xlu0 %1393
        %v1395 = vsel %vm880, %v1376, 0.0
        %1396 = vadd.xlane.f32.xlu0 %v1395
        %v1397 = vpop.xlane.xlu0 %1396
        %v1398 = vsel %vm880, %v1378, 0.0
        %1399 = vadd.xlane.f32.xlu0 %v1398
        %v1400 = vpop.xlane.xlu0 %1399
        %v1401 = vsel %vm880, %v1380, 0.0
        %1402 = vadd.xlane.f32.xlu0 %v1401
        %v1403 = vpop.xlane.xlu0 %1402
        %v1404 = vsel %vm880, %v1382, 0.0
        %1405 = vadd.xlane.f32.xlu0 %v1404
        %v1406 = vpop.xlane.xlu0 %1405
        %v1407 = vrcp.pop %v1385
        %v1408 = vrcp.pop %v1388
        %v1409 = vrcp.pop %v1391
        %v1410 = vrcp.pop %v1394
        %v1411 = vrcp.pop %v1397
        %v1412 = vrcp.pop %v1400
        %v1413 = vrcp.pop %v1403
        %v1414 = vrcp.pop %v1406
        %v1415 = vmul.f32 %v1368, %v1407
        %v1416 = vmul.f32 %v1370, %v1408
        %v1417 = vmul.f32 %v1372, %v1409
        %v1418 = vmul.f32 %v1374, %v1410
        %v1419 = vmul.f32 %v1376, %v1411
        %v1420 = vmul.f32 %v1378, %v1412
        %v1421 = vmul.f32 %v1380, %v1413
        %v1422 = vmul.f32 %v1382, %v1414
        %v1423 = vpack.c.bf16 %v1415, %v1415
        %v1424 = vpack.c.bf16 %v1416, %v1416
        %v1425 = vpack.c.bf16 %v1417, %v1417
        %v1426 = vpack.c.bf16 %v1418, %v1418
        %v1427 = vpack.c.bf16 %v1419, %v1419
        %v1428 = vpack.c.bf16 %v1420, %v1420
        %v1429 = vpack.c.bf16 %v1421, %v1421
        %v1430 = vpack.c.bf16 %v1422, %v1422
        %v1439 = vunpack.c.l.b16 %v1423
        %v1440 = vunpack.c.l.b16 %v1424
        %v1441 = vunpack.c.l.b16 %v1425
        %v1442 = vunpack.c.l.b16 %v1426
        %v1443 = vunpack.c.l.b16 %v1427
        %v1444 = vunpack.c.l.b16 %v1428
        %v1445 = vunpack.c.l.b16 %v1429
        %v1446 = vunpack.c.l.b16 %v1430
        %v1447 = vpack.c.b16 %v1440, %v1439
        %v1448 = vpack.c.b16 %v1442, %v1441
        %v1449 = vpack.c.b16 %v1444, %v1443
        %v1450 = vpack.c.b16 %v1446, %v1445
        %1451 = vrot.lane.b32.xlu0 %v1217, 112
        %v1452 = vpop.permute.xlu0 %1451
        %1453 = vrot.lane.b32.xlu0 %v1218, 112
        %v1454 = vpop.permute.xlu0 %1453
        %1455 = vrot.lane.b32.xlu0 %v1219, 112
        %v1456 = vpop.permute.xlu0 %1455
        %1457 = vrot.lane.b32.xlu0 %v1220, 112
        %v1458 = vpop.permute.xlu0 %1457
        %v1464 = vsel %vm880, %v1447, 0
        %v1467 = vsel %vm880, %v1448, 0
        %v1470 = vsel %vm880, %v1449, 0
        %v1473 = vsel %vm880, %v1450, 0
        %1475 = vmatpush.bf16.msra.mxu0 0
        %1476 = vmatpush.bf16.msra.mxu0 0
        %1477 = vmatpush.bf16.msra.mxu0 0
        %1478 = vmatpush.bf16.msra.mxu0 0
        %1479 = vmatpush.bf16.msra.mxu0 %v1458
        %1480 = vmatpush.bf16.msra.mxu0 %v1456
        %1481 = vmatpush.bf16.msra.mxu0 %v1454
        %1482 = vmatpush.bf16.msra.mxu0 %v1452
        %1483 = vmatmul.bf16.gmra.mxu0 %v1464
        %v1484 = vpop.f32.mrf.mxu0
        %v1485 = vadd.f32 0.0, %v1484
        %v1486 = vpop.f32.mrf.mxu0
        %v1487 = vadd.f32 0.0, %v1486
        %1488 = vmatmul.bf16.gmra.mxu0 %v1467
        %v1489 = vpop.f32.mrf.mxu0
        %v1490 = vadd.f32 0.0, %v1489
        %v1491 = vpop.f32.mrf.mxu0
        %v1492 = vadd.f32 0.0, %v1491
        %1493 = vmatmul.bf16.gmra.mxu0 %v1470
        %v1494 = vpop.f32.mrf.mxu0
        %v1495 = vadd.f32 0.0, %v1494
        %v1496 = vpop.f32.mrf.mxu0
        %v1497 = vadd.f32 0.0, %v1496
        %1498 = vmatmul.bf16.gmra.mxu0 %v1473
        %v1499 = vpop.f32.mrf.mxu0
        %v1500 = vadd.f32 0.0, %v1499
        %v1501 = vpop.f32.mrf.mxu0
        %v1502 = vadd.f32 0.0, %v1501
        %1503 = vdwg.mxu0
        %1504 = vrot.lane.b32.xlu0 %v999, 96
        %v1505 = vpop.permute.xlu0 %1504
        %1506 = vrot.lane.b32.xlu0 %v1000, 96
        %v1507 = vpop.permute.xlu0 %1506
        %1508 = vrot.lane.b32.xlu0 %v1001, 96
        %v1509 = vpop.permute.xlu0 %1508
        %1510 = vrot.lane.b32.xlu0 %v1002, 96
        %v1511 = vpop.permute.xlu0 %1510
        %1512 = vrot.lane.b32.xlu0 %v1019, 32
        %v1513 = vpop.permute.xlu0 %1512
        %1514 = vrot.lane.b32.xlu0 %v1020, 32
        %v1515 = vpop.permute.xlu0 %1514
        %1516 = vrot.lane.b32.xlu0 %v1021, 32
        %v1517 = vpop.permute.xlu0 %1516
        %1518 = vrot.lane.b32.xlu0 %v1022, 32
        %v1519 = vpop.permute.xlu0 %1518
        %v1521 = vsel %vm1031, %v1505, 0
        %v1524 = vsel %vm1031, %v1507, 0
        %v1527 = vsel %vm1031, %v1509, 0
        %v1530 = vsel %vm1031, %v1511, 0
        %v1533 = vsel %vm1031, %v1513, 0
        %v1536 = vsel %vm1031, %v1515, 0
        %v1539 = vsel %vm1031, %v1517, 0
        %v1542 = vsel %vm1031, %v1519, 0
        %1544 = vmatpush.bf16.xpose.msra.mxu0 0
        %1545 = vmatpush.bf16.xpose.msra.mxu0 0
        %1546 = vmatpush.bf16.xpose.msra.mxu0 0
        %1547 = vmatpush.bf16.xpose.msra.mxu0 0
        %1548 = vmatpush.bf16.xpose.msra.mxu0 %v1542
        %1549 = vmatpush.bf16.xpose.msra.mxu0 %v1539
        %1550 = vmatpush.bf16.xpose.msra.mxu0 %v1536
        %1551 = vmatpush.bf16.xpose.msra.mxu0 %v1533
        %1552 = vmatmul.bf16.gmra.mxu0 %v1521
        %v1553 = vpop.f32.mrf.mxu0
        %v1554 = vadd.f32 %v814, %v1553
        %v1555 = vpop.f32.mrf.mxu0
        %v1556 = vadd.f32 %v815, %v1555
        %1557 = vmatmul.bf16.gmra.mxu0 %v1524
        %v1558 = vpop.f32.mrf.mxu0
        %v1559 = vadd.f32 %v816, %v1558
        %v1560 = vpop.f32.mrf.mxu0
        %v1561 = vadd.f32 %v817, %v1560
        %1562 = vmatmul.bf16.gmra.mxu0 %v1527
        %v1563 = vpop.f32.mrf.mxu0
        %v1564 = vadd.f32 %v818, %v1563
        %v1565 = vpop.f32.mrf.mxu0
        %v1566 = vadd.f32 %v819, %v1565
        %1567 = vmatmul.bf16.gmra.mxu0 %v1530
        %v1568 = vpop.f32.mrf.mxu0
        %v1569 = vadd.f32 %v820, %v1568
        %v1570 = vpop.f32.mrf.mxu0
        %v1571 = vadd.f32 %v821, %v1570
        %1572 = vdwg.mxu0
        %v1573 = vsel %vm880, %v1554, -inf
        %1574 = vmax.xlane.f32.xlu0 %v1573
        %v1575 = vpop.xlane.xlu0 %1574
        %v1576 = vsel %vm880, %v1556, -inf
        %1577 = vmax.xlane.f32.xlu0 %v1576
        %v1578 = vpop.xlane.xlu0 %1577
        %v1579 = vsel %vm880, %v1559, -inf
        %1580 = vmax.xlane.f32.xlu0 %v1579
        %v1581 = vpop.xlane.xlu0 %1580
        %v1582 = vsel %vm880, %v1561, -inf
        %1583 = vmax.xlane.f32.xlu0 %v1582
        %v1584 = vpop.xlane.xlu0 %1583
        %v1585 = vsel %vm880, %v1564, -inf
        %1586 = vmax.xlane.f32.xlu0 %v1585
        %v1587 = vpop.xlane.xlu0 %1586
        %v1588 = vsel %vm880, %v1566, -inf
        %1589 = vmax.xlane.f32.xlu0 %v1588
        %v1590 = vpop.xlane.xlu0 %1589
        %v1591 = vsel %vm880, %v1569, -inf
        %1592 = vmax.xlane.f32.xlu0 %v1591
        %v1593 = vpop.xlane.xlu0 %1592
        %v1594 = vsel %vm880, %v1571, -inf
        %1595 = vmax.xlane.f32.xlu0 %v1594
        %v1596 = vpop.xlane.xlu0 %1595
        %v1597 = vsub.f32 %v1554, %v1575
        %v1598 = vsub.f32 %v1556, %v1578
        %v1599 = vsub.f32 %v1559, %v1581
        %v1600 = vsub.f32 %v1561, %v1584
        %v1601 = vsub.f32 %v1564, %v1587
        %v1602 = vsub.f32 %v1566, %v1590
        %v1603 = vsub.f32 %v1569, %v1593
        %v1604 = vsub.f32 %v1571, %v1596
        %v1605 = vmul.f32 %v1597, 1.442695
        %v1606 = vpow.pop %v1605
        %v1607 = vmul.f32 %v1598, 1.442695
        %v1608 = vpow.pop %v1607
        %v1609 = vmul.f32 %v1599, 1.442695
        %v1610 = vpow.pop %v1609
        %v1611 = vmul.f32 %v1600, 1.442695
        %v1612 = vpow.pop %v1611
        %v1613 = vmul.f32 %v1601, 1.442695
        %v1614 = vpow.pop %v1613
        %v1615 = vmul.f32 %v1602, 1.442695
        %v1616 = vpow.pop %v1615
        %v1617 = vmul.f32 %v1603, 1.442695
        %v1618 = vpow.pop %v1617
        %v1619 = vmul.f32 %v1604, 1.442695
        %v1620 = vpow.pop %v1619
        %v1621 = vsel %vm880, %v1606, 0.0
        %1622 = vadd.xlane.f32.xlu0 %v1621
        %v1623 = vpop.xlane.xlu0 %1622
        %v1624 = vsel %vm880, %v1608, 0.0
        %1625 = vadd.xlane.f32.xlu0 %v1624
        %v1626 = vpop.xlane.xlu0 %1625
        %v1627 = vsel %vm880, %v1610, 0.0
        %1628 = vadd.xlane.f32.xlu0 %v1627
        %v1629 = vpop.xlane.xlu0 %1628
        %v1630 = vsel %vm880, %v1612, 0.0
        %1631 = vadd.xlane.f32.xlu0 %v1630
        %v1632 = vpop.xlane.xlu0 %1631
        %v1633 = vsel %vm880, %v1614, 0.0
        %1634 = vadd.xlane.f32.xlu0 %v1633
        %v1635 = vpop.xlane.xlu0 %1634
        %v1636 = vsel %vm880, %v1616, 0.0
        %1637 = vadd.xlane.f32.xlu0 %v1636
        %v1638 = vpop.xlane.xlu0 %1637
        %v1639 = vsel %vm880, %v1618, 0.0
        %1640 = vadd.xlane.f32.xlu0 %v1639
        %v1641 = vpop.xlane.xlu0 %1640
        %v1642 = vsel %vm880, %v1620, 0.0
        %1643 = vadd.xlane.f32.xlu0 %v1642
        %v1644 = vpop.xlane.xlu0 %1643
        %v1645 = vrcp.pop %v1623
        %v1646 = vrcp.pop %v1626
        %v1647 = vrcp.pop %v1629
        %v1648 = vrcp.pop %v1632
        %v1649 = vrcp.pop %v1635
        %v1650 = vrcp.pop %v1638
        %v1651 = vrcp.pop %v1641
        %v1652 = vrcp.pop %v1644
        %v1653 = vmul.f32 %v1606, %v1645
        %v1654 = vmul.f32 %v1608, %v1646
        %v1655 = vmul.f32 %v1610, %v1647
        %v1656 = vmul.f32 %v1612, %v1648
        %v1657 = vmul.f32 %v1614, %v1649
        %v1658 = vmul.f32 %v1616, %v1650
        %v1659 = vmul.f32 %v1618, %v1651
        %v1660 = vmul.f32 %v1620, %v1652
        %v1661 = vpack.c.bf16 %v1653, %v1653
        %v1662 = vpack.c.bf16 %v1654, %v1654
        %v1663 = vpack.c.bf16 %v1655, %v1655
        %v1664 = vpack.c.bf16 %v1656, %v1656
        %v1665 = vpack.c.bf16 %v1657, %v1657
        %v1666 = vpack.c.bf16 %v1658, %v1658
        %v1667 = vpack.c.bf16 %v1659, %v1659
        %v1668 = vpack.c.bf16 %v1660, %v1660
        %v1677 = vunpack.c.l.b16 %v1661
        %v1678 = vunpack.c.l.b16 %v1662
        %v1679 = vunpack.c.l.b16 %v1663
        %v1680 = vunpack.c.l.b16 %v1664
        %v1681 = vunpack.c.l.b16 %v1665
        %v1682 = vunpack.c.l.b16 %v1666
        %v1683 = vunpack.c.l.b16 %v1667
        %v1684 = vunpack.c.l.b16 %v1668
        %v1685 = vpack.c.b16 %v1678, %v1677
        %v1686 = vpack.c.b16 %v1680, %v1679
        %v1687 = vpack.c.b16 %v1682, %v1681
        %v1688 = vpack.c.b16 %v1684, %v1683
        %1689 = vrot.lane.b32.xlu0 %v1217, 96
        %v1690 = vpop.permute.xlu0 %1689
        %1691 = vrot.lane.b32.xlu0 %v1218, 96
        %v1692 = vpop.permute.xlu0 %1691
        %1693 = vrot.lane.b32.xlu0 %v1219, 96
        %v1694 = vpop.permute.xlu0 %1693
        %1695 = vrot.lane.b32.xlu0 %v1220, 96
        %v1696 = vpop.permute.xlu0 %1695
        %v1702 = vsel %vm880, %v1685, 0
        %v1705 = vsel %vm880, %v1686, 0
        %v1708 = vsel %vm880, %v1687, 0
        %v1711 = vsel %vm880, %v1688, 0
        %1713 = vmatpush.bf16.msra.mxu0 0
        %1714 = vmatpush.bf16.msra.mxu0 0
        %1715 = vmatpush.bf16.msra.mxu0 0
        %1716 = vmatpush.bf16.msra.mxu0 0
        %1717 = vmatpush.bf16.msra.mxu0 %v1696
        %1718 = vmatpush.bf16.msra.mxu0 %v1694
        %1719 = vmatpush.bf16.msra.mxu0 %v1692
        %1720 = vmatpush.bf16.msra.mxu0 %v1690
        %1721 = vmatmul.bf16.gmra.mxu0 %v1702
        %v1722 = vpop.f32.mrf.mxu0
        %v1723 = vadd.f32 0.0, %v1722
        %v1724 = vpop.f32.mrf.mxu0
        %v1725 = vadd.f32 0.0, %v1724
        %1726 = vmatmul.bf16.gmra.mxu0 %v1705
        %v1727 = vpop.f32.mrf.mxu0
        %v1728 = vadd.f32 0.0, %v1727
        %v1729 = vpop.f32.mrf.mxu0
        %v1730 = vadd.f32 0.0, %v1729
        %1731 = vmatmul.bf16.gmra.mxu0 %v1708
        %v1732 = vpop.f32.mrf.mxu0
        %v1733 = vadd.f32 0.0, %v1732
        %v1734 = vpop.f32.mrf.mxu0
        %v1735 = vadd.f32 0.0, %v1734
        %1736 = vmatmul.bf16.gmra.mxu0 %v1711
        %v1737 = vpop.f32.mrf.mxu0
        %v1738 = vadd.f32 0.0, %v1737
        %v1739 = vpop.f32.mrf.mxu0
        %v1740 = vadd.f32 0.0, %v1739
        %1741 = vdwg.mxu0
        %1742 = vrot.lane.b32.xlu0 %v999, 80
        %v1743 = vpop.permute.xlu0 %1742
        %1744 = vrot.lane.b32.xlu0 %v1000, 80
        %v1745 = vpop.permute.xlu0 %1744
        %1746 = vrot.lane.b32.xlu0 %v1001, 80
        %v1747 = vpop.permute.xlu0 %1746
        %1748 = vrot.lane.b32.xlu0 %v1002, 80
        %v1749 = vpop.permute.xlu0 %1748
        %1750 = vrot.lane.b32.xlu0 %v1019, 16
        %v1751 = vpop.permute.xlu0 %1750
        %1752 = vrot.lane.b32.xlu0 %v1020, 16
        %v1753 = vpop.permute.xlu0 %1752
        %1754 = vrot.lane.b32.xlu0 %v1021, 16
        %v1755 = vpop.permute.xlu0 %1754
        %1756 = vrot.lane.b32.xlu0 %v1022, 16
        %v1757 = vpop.permute.xlu0 %1756
        %v1759 = vsel %vm1031, %v1743, 0
        %v1762 = vsel %vm1031, %v1745, 0
        %v1765 = vsel %vm1031, %v1747, 0
        %v1768 = vsel %vm1031, %v1749, 0
        %v1771 = vsel %vm1031, %v1751, 0
        %v1774 = vsel %vm1031, %v1753, 0
        %v1777 = vsel %vm1031, %v1755, 0
        %v1780 = vsel %vm1031, %v1757, 0
        %1782 = vmatpush.bf16.xpose.msra.mxu0 0
        %1783 = vmatpush.bf16.xpose.msra.mxu0 0
        %1784 = vmatpush.bf16.xpose.msra.mxu0 0
        %1785 = vmatpush.bf16.xpose.msra.mxu0 0
        %1786 = vmatpush.bf16.xpose.msra.mxu0 %v1780
        %1787 = vmatpush.bf16.xpose.msra.mxu0 %v1777
        %1788 = vmatpush.bf16.xpose.msra.mxu0 %v1774
        %1789 = vmatpush.bf16.xpose.msra.mxu0 %v1771
        %1790 = vmatmul.bf16.gmra.mxu0 %v1759
        %v1791 = vpop.f32.mrf.mxu0
        %v1792 = vadd.f32 %v814, %v1791
        %v1793 = vpop.f32.mrf.mxu0
        %v1794 = vadd.f32 %v815, %v1793
        %1795 = vmatmul.bf16.gmra.mxu0 %v1762
        %v1796 = vpop.f32.mrf.mxu0
        %v1797 = vadd.f32 %v816, %v1796
        %v1798 = vpop.f32.mrf.mxu0
        %v1799 = vadd.f32 %v817, %v1798
        %1800 = vmatmul.bf16.gmra.mxu0 %v1765
        %v1801 = vpop.f32.mrf.mxu0
        %v1802 = vadd.f32 %v818, %v1801
        %v1803 = vpop.f32.mrf.mxu0
        %v1804 = vadd.f32 %v819, %v1803
        %1805 = vmatmul.bf16.gmra.mxu0 %v1768
        %v1806 = vpop.f32.mrf.mxu0
        %v1807 = vadd.f32 %v820, %v1806
        %v1808 = vpop.f32.mrf.mxu0
        %v1809 = vadd.f32 %v821, %v1808
        %1810 = vdwg.mxu0
        %v1811 = vsel %vm880, %v1792, -inf
        %1812 = vmax.xlane.f32.xlu0 %v1811
        %v1813 = vpop.xlane.xlu0 %1812
        %v1814 = vsel %vm880, %v1794, -inf
        %1815 = vmax.xlane.f32.xlu0 %v1814
        %v1816 = vpop.xlane.xlu0 %1815
        %v1817 = vsel %vm880, %v1797, -inf
        %1818 = vmax.xlane.f32.xlu0 %v1817
        %v1819 = vpop.xlane.xlu0 %1818
        %v1820 = vsel %vm880, %v1799, -inf
        %1821 = vmax.xlane.f32.xlu0 %v1820
        %v1822 = vpop.xlane.xlu0 %1821
        %v1823 = vsel %vm880, %v1802, -inf
        %1824 = vmax.xlane.f32.xlu0 %v1823
        %v1825 = vpop.xlane.xlu0 %1824
        %v1826 = vsel %vm880, %v1804, -inf
        %1827 = vmax.xlane.f32.xlu0 %v1826
        %v1828 = vpop.xlane.xlu0 %1827
        %v1829 = vsel %vm880, %v1807, -inf
        %1830 = vmax.xlane.f32.xlu0 %v1829
        %v1831 = vpop.xlane.xlu0 %1830
        %v1832 = vsel %vm880, %v1809, -inf
        %1833 = vmax.xlane.f32.xlu0 %v1832
        %v1834 = vpop.xlane.xlu0 %1833
        %v1835 = vsub.f32 %v1792, %v1813
        %v1836 = vsub.f32 %v1794, %v1816
        %v1837 = vsub.f32 %v1797, %v1819
        %v1838 = vsub.f32 %v1799, %v1822
        %v1839 = vsub.f32 %v1802, %v1825
        %v1840 = vsub.f32 %v1804, %v1828
        %v1841 = vsub.f32 %v1807, %v1831
        %v1842 = vsub.f32 %v1809, %v1834
        %v1843 = vmul.f32 %v1835, 1.442695
        %v1844 = vpow.pop %v1843
        %v1845 = vmul.f32 %v1836, 1.442695
        %v1846 = vpow.pop %v1845
        %v1847 = vmul.f32 %v1837, 1.442695
        %v1848 = vpow.pop %v1847
        %v1849 = vmul.f32 %v1838, 1.442695
        %v1850 = vpow.pop %v1849
        %v1851 = vmul.f32 %v1839, 1.442695
        %v1852 = vpow.pop %v1851
        %v1853 = vmul.f32 %v1840, 1.442695
        %v1854 = vpow.pop %v1853
        %v1855 = vmul.f32 %v1841, 1.442695
        %v1856 = vpow.pop %v1855
        %v1857 = vmul.f32 %v1842, 1.442695
        %v1858 = vpow.pop %v1857
        %v1859 = vsel %vm880, %v1844, 0.0
        %1860 = vadd.xlane.f32.xlu0 %v1859
        %v1861 = vpop.xlane.xlu0 %1860
        %v1862 = vsel %vm880, %v1846, 0.0
        %1863 = vadd.xlane.f32.xlu0 %v1862
        %v1864 = vpop.xlane.xlu0 %1863
        %v1865 = vsel %vm880, %v1848, 0.0
        %1866 = vadd.xlane.f32.xlu0 %v1865
        %v1867 = vpop.xlane.xlu0 %1866
        %v1868 = vsel %vm880, %v1850, 0.0
        %1869 = vadd.xlane.f32.xlu0 %v1868
        %v1870 = vpop.xlane.xlu0 %1869
        %v1871 = vsel %vm880, %v1852, 0.0
        %1872 = vadd.xlane.f32.xlu0 %v1871
        %v1873 = vpop.xlane.xlu0 %1872
        %v1874 = vsel %vm880, %v1854, 0.0
        %1875 = vadd.xlane.f32.xlu0 %v1874
        %v1876 = vpop.xlane.xlu0 %1875
        %v1877 = vsel %vm880, %v1856, 0.0
        %1878 = vadd.xlane.f32.xlu0 %v1877
        %v1879 = vpop.xlane.xlu0 %1878
        %v1880 = vsel %vm880, %v1858, 0.0
        %1881 = vadd.xlane.f32.xlu0 %v1880
        %v1882 = vpop.xlane.xlu0 %1881
        %v1883 = vrcp.pop %v1861
        %v1884 = vrcp.pop %v1864
        %v1885 = vrcp.pop %v1867
        %v1886 = vrcp.pop %v1870
        %v1887 = vrcp.pop %v1873
        %v1888 = vrcp.pop %v1876
        %v1889 = vrcp.pop %v1879
        %v1890 = vrcp.pop %v1882
        %v1891 = vmul.f32 %v1844, %v1883
        %v1892 = vmul.f32 %v1846, %v1884
        %v1893 = vmul.f32 %v1848, %v1885
        %v1894 = vmul.f32 %v1850, %v1886
        %v1895 = vmul.f32 %v1852, %v1887
        %v1896 = vmul.f32 %v1854, %v1888
        %v1897 = vmul.f32 %v1856, %v1889
        %v1898 = vmul.f32 %v1858, %v1890
        %v1899 = vpack.c.bf16 %v1891, %v1891
        %v1900 = vpack.c.bf16 %v1892, %v1892
        %v1901 = vpack.c.bf16 %v1893, %v1893
        %v1902 = vpack.c.bf16 %v1894, %v1894
        %v1903 = vpack.c.bf16 %v1895, %v1895
        %v1904 = vpack.c.bf16 %v1896, %v1896
        %v1905 = vpack.c.bf16 %v1897, %v1897
        %v1906 = vpack.c.bf16 %v1898, %v1898
        %v1915 = vunpack.c.l.b16 %v1899
        %v1916 = vunpack.c.l.b16 %v1900
        %v1917 = vunpack.c.l.b16 %v1901
        %v1918 = vunpack.c.l.b16 %v1902
        %v1919 = vunpack.c.l.b16 %v1903
        %v1920 = vunpack.c.l.b16 %v1904
        %v1921 = vunpack.c.l.b16 %v1905
        %v1922 = vunpack.c.l.b16 %v1906
        %v1923 = vpack.c.b16 %v1916, %v1915
        %v1924 = vpack.c.b16 %v1918, %v1917
        %v1925 = vpack.c.b16 %v1920, %v1919
        %v1926 = vpack.c.b16 %v1922, %v1921
        %1927 = vrot.lane.b32.xlu0 %v1217, 80
        %v1928 = vpop.permute.xlu0 %1927
        %1929 = vrot.lane.b32.xlu0 %v1218, 80
        %v1930 = vpop.permute.xlu0 %1929
        %1931 = vrot.lane.b32.xlu0 %v1219, 80
        %v1932 = vpop.permute.xlu0 %1931
        %1933 = vrot.lane.b32.xlu0 %v1220, 80
        %v1934 = vpop.permute.xlu0 %1933
        %v1940 = vsel %vm880, %v1923, 0
        %v1943 = vsel %vm880, %v1924, 0
        %v1946 = vsel %vm880, %v1925, 0
        %v1949 = vsel %vm880, %v1926, 0
        %1951 = vmatpush.bf16.msra.mxu0 0
        %1952 = vmatpush.bf16.msra.mxu0 0
        %1953 = vmatpush.bf16.msra.mxu0 0
        %1954 = vmatpush.bf16.msra.mxu0 0
        %1955 = vmatpush.bf16.msra.mxu0 %v1934
        %1956 = vmatpush.bf16.msra.mxu0 %v1932
        %1957 = vmatpush.bf16.msra.mxu0 %v1930
        %1958 = vmatpush.bf16.msra.mxu0 %v1928
        %1959 = vmatmul.bf16.gmra.mxu0 %v1940
        %v1960 = vpop.f32.mrf.mxu0
        %v1961 = vadd.f32 0.0, %v1960
        %v1962 = vpop.f32.mrf.mxu0
        %v1963 = vadd.f32 0.0, %v1962
        %1964 = vmatmul.bf16.gmra.mxu0 %v1943
        %v1965 = vpop.f32.mrf.mxu0
        %v1966 = vadd.f32 0.0, %v1965
        %v1967 = vpop.f32.mrf.mxu0
        %v1968 = vadd.f32 0.0, %v1967
        %1969 = vmatmul.bf16.gmra.mxu0 %v1946
        %v1970 = vpop.f32.mrf.mxu0
        %v1971 = vadd.f32 0.0, %v1970
        %v1972 = vpop.f32.mrf.mxu0
        %v1973 = vadd.f32 0.0, %v1972
        %1974 = vmatmul.bf16.gmra.mxu0 %v1949
        %v1975 = vpop.f32.mrf.mxu0
        %v1976 = vadd.f32 0.0, %v1975
        %v1977 = vpop.f32.mrf.mxu0
        %v1978 = vadd.f32 0.0, %v1977
        %1979 = vdwg.mxu0
        %1988 = vrot.lane.b32.xlu0 %v1485, 16
        %v1989 = vpop.permute.xlu0 %1988
        %1990 = vrot.lane.b32.xlu0 %v1487, 16
        %v1991 = vpop.permute.xlu0 %1990
        %1992 = vrot.lane.b32.xlu0 %v1490, 16
        %v1993 = vpop.permute.xlu0 %1992
        %1994 = vrot.lane.b32.xlu0 %v1492, 16
        %v1995 = vpop.permute.xlu0 %1994
        %1996 = vrot.lane.b32.xlu0 %v1495, 16
        %v1997 = vpop.permute.xlu0 %1996
        %1998 = vrot.lane.b32.xlu0 %v1497, 16
        %v1999 = vpop.permute.xlu0 %1998
        %2000 = vrot.lane.b32.xlu0 %v1500, 16
        %v2001 = vpop.permute.xlu0 %2000
        %2002 = vrot.lane.b32.xlu0 %v1502, 16
        %v2003 = vpop.permute.xlu0 %2002
        %2020 = vrot.lane.b32.xlu0 %v1723, 32
        %v2021 = vpop.permute.xlu0 %2020
        %2022 = vrot.lane.b32.xlu0 %v1725, 32
        %v2023 = vpop.permute.xlu0 %2022
        %2024 = vrot.lane.b32.xlu0 %v1728, 32
        %v2025 = vpop.permute.xlu0 %2024
        %2026 = vrot.lane.b32.xlu0 %v1730, 32
        %v2027 = vpop.permute.xlu0 %2026
        %2028 = vrot.lane.b32.xlu0 %v1733, 32
        %v2029 = vpop.permute.xlu0 %2028
        %2030 = vrot.lane.b32.xlu0 %v1735, 32
        %v2031 = vpop.permute.xlu0 %2030
        %2032 = vrot.lane.b32.xlu0 %v1738, 32
        %v2033 = vpop.permute.xlu0 %2032
        %2034 = vrot.lane.b32.xlu0 %v1740, 32
        %v2035 = vpop.permute.xlu0 %2034
        %2052 = vrot.lane.b32.xlu0 %v1961, 48
        %v2053 = vpop.permute.xlu0 %2052
        %2054 = vrot.lane.b32.xlu0 %v1963, 48
        %v2055 = vpop.permute.xlu0 %2054
        %2056 = vrot.lane.b32.xlu0 %v1966, 48
        %v2057 = vpop.permute.xlu0 %2056
        %2058 = vrot.lane.b32.xlu0 %v1968, 48
        %v2059 = vpop.permute.xlu0 %2058
        %2060 = vrot.lane.b32.xlu0 %v1971, 48
        %v2061 = vpop.permute.xlu0 %2060
        %2062 = vrot.lane.b32.xlu0 %v1973, 48
        %v2063 = vpop.permute.xlu0 %2062
        %2064 = vrot.lane.b32.xlu0 %v1976, 48
        %v2065 = vpop.permute.xlu0 %2064
        %2066 = vrot.lane.b32.xlu0 %v1978, 48
        %v2067 = vpop.permute.xlu0 %2066
        %v2076 = vsel %vm1031, %v1247, %v1989
        %v2077 = vsel %vm1031, %v1249, %v1991
        %v2078 = vsel %vm1031, %v1252, %v1993
        %v2079 = vsel %vm1031, %v1254, %v1995
        %v2080 = vsel %vm1031, %v1257, %v1997
        %v2081 = vsel %vm1031, %v1259, %v1999
        %v2082 = vsel %vm1031, %v1262, %v2001
        %v2083 = vsel %vm1031, %v1264, %v2003
        %v2084 = vsel %vm763, %v2076, %v2021
        %v2085 = vsel %vm763, %v2077, %v2023
        %v2086 = vsel %vm763, %v2078, %v2025
        %v2087 = vsel %vm763, %v2079, %v2027
        %v2088 = vsel %vm763, %v2080, %v2029
        %v2089 = vsel %vm763, %v2081, %v2031
        %v2090 = vsel %vm763, %v2082, %v2033
        %v2091 = vsel %vm763, %v2083, %v2035
        %vm2092 = vcmask 392192
        %v2093 = vsel %vm2092, %v2084, %v2053
        %v2094 = vsel %vm2092, %v2085, %v2055
        %v2095 = vsel %vm2092, %v2086, %v2057
        %v2096 = vsel %vm2092, %v2087, %v2059
        %v2097 = vsel %vm2092, %v2088, %v2061
        %v2098 = vsel %vm2092, %v2089, %v2063
        %v2099 = vsel %vm2092, %v2090, %v2065
        %v2100 = vsel %vm2092, %v2091, %v2067
        %v2101 = vpack.c.bf16 %v2094, %v2093
        %v2102 = vpack.c.bf16 %v2096, %v2095
        %v2103 = vpack.c.bf16 %v2098, %v2097
        %v2104 = vpack.c.bf16 %v2100, %v2099
        %v2105 = vld [vmem:[%s8] sm:$0xf]
        %v2106 = vld [vmem:[%s8 + $0x4] sm:$0xf]
        %v2107 = vld [vmem:[%s8 + $0x8] sm:$0xf]
        %v2108 = vld [vmem:[%s8 + $0xc] sm:$0xf]
        %v2109 = vld [vmem:[%s8 + $0x10] sm:$0xf]
        %v2110 = vld [vmem:[%s8 + $0x14] sm:$0xf]
        %v2111 = vld [vmem:[%s8 + $0x18] sm:$0xf]
        %v2112 = vld [vmem:[%s8 + $0x1c] sm:$0xf]
        %v2113 = vld [vmem:[%s9] sm:$0x1]
        %v2115 = vperm.slane %v2113, 0
        %v2125 = vunpack.c.l.b16 %v2105
        %v2126 = vunpack.c.l.b16 %v2106
        %v2127 = vunpack.c.l.b16 %v2107
        %v2128 = vunpack.c.l.b16 %v2108
        %v2129 = vunpack.c.l.b16 %v2109
        %v2130 = vunpack.c.l.b16 %v2110
        %v2131 = vunpack.c.l.b16 %v2111
        %v2132 = vunpack.c.l.b16 %v2112
        %v2133 = vpack.c.b16 %v2126, %v2125
        %v2134 = vpack.c.b16 %v2128, %v2127
        %v2135 = vpack.c.b16 %v2130, %v2129
        %v2136 = vpack.c.b16 %v2132, %v2131
        %v2142 = vsel %vm880, %v2101, 0
        %v2145 = vsel %vm880, %v2102, 0
        %v2148 = vsel %vm880, %v2103, 0
        %v2151 = vsel %vm880, %v2104, 0
        %2153 = vmatpush.bf16.msra.mxu0 0
        %2154 = vmatpush.bf16.msra.mxu0 0
        %2155 = vmatpush.bf16.msra.mxu0 0
        %2156 = vmatpush.bf16.msra.mxu0 0
        %2157 = vmatpush.bf16.msra.mxu0 %v2136
        %2158 = vmatpush.bf16.msra.mxu0 %v2135
        %2159 = vmatpush.bf16.msra.mxu0 %v2134
        %2160 = vmatpush.bf16.msra.mxu0 %v2133
        %2161 = vmatmul.bf16.gmra.mxu0 %v2142
        %v2162 = vpop.f32.mrf.mxu0
        %v2163 = vadd.f32 %v2115, %v2162
        %v2164 = vpop.f32.mrf.mxu0
        %v2165 = vadd.f32 %v2115, %v2164
        %2166 = vmatmul.bf16.gmra.mxu0 %v2145
        %v2167 = vpop.f32.mrf.mxu0
        %v2168 = vadd.f32 %v2115, %v2167
        %v2169 = vpop.f32.mrf.mxu0
        %v2170 = vadd.f32 %v2115, %v2169
        %2171 = vmatmul.bf16.gmra.mxu0 %v2148
        %v2172 = vpop.f32.mrf.mxu0
        %v2173 = vadd.f32 %v2115, %v2172
        %v2174 = vpop.f32.mrf.mxu0
        %v2175 = vadd.f32 %v2115, %v2174
        %2176 = vmatmul.bf16.gmra.mxu0 %v2151
        %v2177 = vpop.f32.mrf.mxu0
        %v2178 = vadd.f32 %v2115, %v2177
        %v2179 = vpop.f32.mrf.mxu0
        %v2180 = vadd.f32 %v2115, %v2179
        %2181 = vdwg.mxu0
        %v2182 = vadd.f32 %v806, %v2163
        %v2183 = vadd.f32 %v807, %v2165
        %v2184 = vadd.f32 %v808, %v2168
        %v2185 = vadd.f32 %v809, %v2170
        %v2186 = vadd.f32 %v810, %v2173
        %v2187 = vadd.f32 %v811, %v2175
        %v2188 = vadd.f32 %v812, %v2178
        %v2189 = vadd.f32 %v813, %v2180
        %v2190 = vld [vmem:[%s10] sm:$0x1]
        %v2191 = vld [vmem:[%s11] sm:$0x1]
        %v2192 = vsel %vm880, %v2182, 0.0
        %2193 = vadd.xlane.f32.xlu0 %v2192
        %v2194 = vpop.xlane.xlu0 %2193
        %v2195 = vsel %vm880, %v2183, 0.0
        %2196 = vadd.xlane.f32.xlu0 %v2195
        %v2197 = vpop.xlane.xlu0 %2196
        %v2198 = vsel %vm880, %v2184, 0.0
        %2199 = vadd.xlane.f32.xlu0 %v2198
        %v2200 = vpop.xlane.xlu0 %2199
        %v2201 = vsel %vm880, %v2185, 0.0
        %2202 = vadd.xlane.f32.xlu0 %v2201
        %v2203 = vpop.xlane.xlu0 %2202
        %v2204 = vsel %vm880, %v2186, 0.0
        %2205 = vadd.xlane.f32.xlu0 %v2204
        %v2206 = vpop.xlane.xlu0 %2205
        %v2207 = vsel %vm880, %v2187, 0.0
        %2208 = vadd.xlane.f32.xlu0 %v2207
        %v2209 = vpop.xlane.xlu0 %2208
        %v2210 = vsel %vm880, %v2188, 0.0
        %2211 = vadd.xlane.f32.xlu0 %v2210
        %v2212 = vpop.xlane.xlu0 %2211
        %v2213 = vsel %vm880, %v2189, 0.0
        %2214 = vadd.xlane.f32.xlu0 %v2213
        %v2215 = vpop.xlane.xlu0 %2214
        %v2216 = vrcp.pop 64.0
        %v2217 = vmul.f32 64.0, %v2216
        %v2218 = vsub.f32 1.0, %v2217
        %v2219 = vmul.f32 %v2216, %v2218
        %v2220 = vadd.f32 %v2216, %v2219
        %vm2221 = vweird.f32 %v2216
        %v2222 = vsel %vm2221, %v2216, %v2220
        %v2223 = vmul.f32 %v2194, %v2222
        %v2224 = vmul.f32 %v2197, %v2222
        %v2225 = vmul.f32 %v2200, %v2222
        %v2226 = vmul.f32 %v2203, %v2222
        %v2227 = vmul.f32 %v2206, %v2222
        %v2228 = vmul.f32 %v2209, %v2222
        %v2229 = vmul.f32 %v2212, %v2222
        %v2230 = vmul.f32 %v2215, %v2222
        %v2231 = vsub.f32 %v2182, %v2223
        %v2232 = vsub.f32 %v2183, %v2224
        %v2233 = vsub.f32 %v2184, %v2225
        %v2234 = vsub.f32 %v2185, %v2226
        %v2235 = vsub.f32 %v2186, %v2227
        %v2236 = vsub.f32 %v2187, %v2228
        %v2237 = vsub.f32 %v2188, %v2229
        %v2238 = vsub.f32 %v2189, %v2230
        %v2239 = vmul.f32 %v2231, %v2231
        %v2240 = vmul.f32 %v2232, %v2232
        %v2241 = vmul.f32 %v2233, %v2233
        %v2242 = vmul.f32 %v2234, %v2234
        %v2243 = vmul.f32 %v2235, %v2235
        %v2244 = vmul.f32 %v2236, %v2236
        %v2245 = vmul.f32 %v2237, %v2237
        %v2246 = vmul.f32 %v2238, %v2238
        %v2247 = vsel %vm880, %v2239, 0.0
        %2248 = vadd.xlane.f32.xlu0 %v2247
        %v2249 = vpop.xlane.xlu0 %2248
        %v2250 = vsel %vm880, %v2240, 0.0
        %2251 = vadd.xlane.f32.xlu0 %v2250
        %v2252 = vpop.xlane.xlu0 %2251
        %v2253 = vsel %vm880, %v2241, 0.0
        %2254 = vadd.xlane.f32.xlu0 %v2253
        %v2255 = vpop.xlane.xlu0 %2254
        %v2256 = vsel %vm880, %v2242, 0.0
        %2257 = vadd.xlane.f32.xlu0 %v2256
        %v2258 = vpop.xlane.xlu0 %2257
        %v2259 = vsel %vm880, %v2243, 0.0
        %2260 = vadd.xlane.f32.xlu0 %v2259
        %v2261 = vpop.xlane.xlu0 %2260
        %v2262 = vsel %vm880, %v2244, 0.0
        %2263 = vadd.xlane.f32.xlu0 %v2262
        %v2264 = vpop.xlane.xlu0 %2263
        %v2265 = vsel %vm880, %v2245, 0.0
        %2266 = vadd.xlane.f32.xlu0 %v2265
        %v2267 = vpop.xlane.xlu0 %2266
        %v2268 = vsel %vm880, %v2246, 0.0
        %2269 = vadd.xlane.f32.xlu0 %v2268
        %v2270 = vpop.xlane.xlu0 %2269
        %v2271 = vmul.f32 %v2249, %v2222
        %v2272 = vmul.f32 %v2252, %v2222
        %v2273 = vmul.f32 %v2255, %v2222
        %v2274 = vmul.f32 %v2258, %v2222
        %v2275 = vmul.f32 %v2261, %v2222
        %v2276 = vmul.f32 %v2264, %v2222
        %v2277 = vmul.f32 %v2267, %v2222
        %v2278 = vmul.f32 %v2270, %v2222
        %v2279 = vadd.f32 %v2271, 1e-05
        %v2280 = vadd.f32 %v2272, 1e-05
        %v2281 = vadd.f32 %v2273, 1e-05
        %v2282 = vadd.f32 %v2274, 1e-05
        %v2283 = vadd.f32 %v2275, 1e-05
        %v2284 = vadd.f32 %v2276, 1e-05
        %v2285 = vadd.f32 %v2277, 1e-05
        %v2286 = vadd.f32 %v2278, 1e-05
        %v2287 = vrsqrt.pop %v2279
        %v2288 = vmul.f32 %v2287, %v2279
        %v2289 = vmul.f32 %v2288, %v2287
        %v2290 = vmul.f32 0.5, %v2289
        %v2291 = vsub.f32 1.5, %v2290
        %v2292 = vmul.f32 %v2287, %v2291
        %vm2293 = vweird.f32 %v2279
        %vm2294 = vweird.f32 %v2287
        %vm2295 = vmor %vm2293, %vm2294
        %v2296 = vsel %vm2295, %v2287, %v2292
        %v2297 = vrsqrt.pop %v2280
        %v2298 = vmul.f32 %v2297, %v2280
        %v2299 = vmul.f32 %v2298, %v2297
        %v2300 = vmul.f32 0.5, %v2299
        %v2301 = vsub.f32 1.5, %v2300
        %v2302 = vmul.f32 %v2297, %v2301
        %vm2303 = vweird.f32 %v2280
        %vm2304 = vweird.f32 %v2297
        %vm2305 = vmor %vm2303, %vm2304
        %v2306 = vsel %vm2305, %v2297, %v2302
        %v2307 = vrsqrt.pop %v2281
        %v2308 = vmul.f32 %v2307, %v2281
        %v2309 = vmul.f32 %v2308, %v2307
        %v2310 = vmul.f32 0.5, %v2309
        %v2311 = vsub.f32 1.5, %v2310
        %v2312 = vmul.f32 %v2307, %v2311
        %vm2313 = vweird.f32 %v2281
        %vm2314 = vweird.f32 %v2307
        %vm2315 = vmor %vm2313, %vm2314
        %v2316 = vsel %vm2315, %v2307, %v2312
        %v2317 = vrsqrt.pop %v2282
        %v2318 = vmul.f32 %v2317, %v2282
        %v2319 = vmul.f32 %v2318, %v2317
        %v2320 = vmul.f32 0.5, %v2319
        %v2321 = vsub.f32 1.5, %v2320
        %v2322 = vmul.f32 %v2317, %v2321
        %vm2323 = vweird.f32 %v2282
        %vm2324 = vweird.f32 %v2317
        %vm2325 = vmor %vm2323, %vm2324
        %v2326 = vsel %vm2325, %v2317, %v2322
        %v2327 = vrsqrt.pop %v2283
        %v2328 = vmul.f32 %v2327, %v2283
        %v2329 = vmul.f32 %v2328, %v2327
        %v2330 = vmul.f32 0.5, %v2329
        %v2331 = vsub.f32 1.5, %v2330
        %v2332 = vmul.f32 %v2327, %v2331
        %vm2333 = vweird.f32 %v2283
        %vm2334 = vweird.f32 %v2327
        %vm2335 = vmor %vm2333, %vm2334
        %v2336 = vsel %vm2335, %v2327, %v2332
        %v2337 = vrsqrt.pop %v2284
        %v2338 = vmul.f32 %v2337, %v2284
        %v2339 = vmul.f32 %v2338, %v2337
        %v2340 = vmul.f32 0.5, %v2339
        %v2341 = vsub.f32 1.5, %v2340
        %v2342 = vmul.f32 %v2337, %v2341
        %vm2343 = vweird.f32 %v2284
        %vm2344 = vweird.f32 %v2337
        %vm2345 = vmor %vm2343, %vm2344
        %v2346 = vsel %vm2345, %v2337, %v2342
        %v2347 = vrsqrt.pop %v2285
        %v2348 = vmul.f32 %v2347, %v2285
        %v2349 = vmul.f32 %v2348, %v2347
        %v2350 = vmul.f32 0.5, %v2349
        %v2351 = vsub.f32 1.5, %v2350
        %v2352 = vmul.f32 %v2347, %v2351
        %vm2353 = vweird.f32 %v2285
        %vm2354 = vweird.f32 %v2347
        %vm2355 = vmor %vm2353, %vm2354
        %v2356 = vsel %vm2355, %v2347, %v2352
        %v2357 = vrsqrt.pop %v2286
        %v2358 = vmul.f32 %v2357, %v2286
        %v2359 = vmul.f32 %v2358, %v2357
        %v2360 = vmul.f32 0.5, %v2359
        %v2361 = vsub.f32 1.5, %v2360
        %v2362 = vmul.f32 %v2357, %v2361
        %vm2363 = vweird.f32 %v2286
        %vm2364 = vweird.f32 %v2357
        %vm2365 = vmor %vm2363, %vm2364
        %v2366 = vsel %vm2365, %v2357, %v2362
        %v2367 = vmul.f32 %v2231, %v2296
        %v2368 = vmul.f32 %v2232, %v2306
        %v2369 = vmul.f32 %v2233, %v2316
        %v2370 = vmul.f32 %v2234, %v2326
        %v2371 = vmul.f32 %v2235, %v2336
        %v2372 = vmul.f32 %v2236, %v2346
        %v2373 = vmul.f32 %v2237, %v2356
        %v2374 = vmul.f32 %v2238, %v2366
        %v2376 = vperm.slane %v2190, 0
        %v2378 = vmul.f32 %v2367, %v2376
        %v2379 = vmul.f32 %v2368, %v2376
        %v2380 = vmul.f32 %v2369, %v2376
        %v2381 = vmul.f32 %v2370, %v2376
        %v2382 = vmul.f32 %v2371, %v2376
        %v2383 = vmul.f32 %v2372, %v2376
        %v2384 = vmul.f32 %v2373, %v2376
        %v2385 = vmul.f32 %v2374, %v2376
        %v2387 = vperm.slane %v2191, 0
        %v2389 = vadd.f32 %v2378, %v2387
        %v2390 = vadd.f32 %v2379, %v2387
        %v2391 = vadd.f32 %v2380, %v2387
        %v2392 = vadd.f32 %v2381, %v2387
        %v2393 = vadd.f32 %v2382, %v2387
        %v2394 = vadd.f32 %v2383, %v2387
        %v2395 = vadd.f32 %v2384, %v2387
        %v2396 = vadd.f32 %v2385, %v2387
        %v2397 = vpack.c.bf16 %v2390, %v2389
        %v2398 = vpack.c.bf16 %v2392, %v2391
        %v2399 = vpack.c.bf16 %v2394, %v2393
        %v2400 = vpack.c.bf16 %v2396, %v2395
        %v2401 = vld [vmem:[%s12] sm:$0xff]
        %v2402 = vld [vmem:[%s12 + $0x8] sm:$0xff]
        %v2403 = vld [vmem:[%s12 + $0x10] sm:$0xff]
        %v2404 = vld [vmem:[%s12 + $0x18] sm:$0xff]
        %v2405 = vld [vmem:[%s12 + $0x20] sm:$0xff]
        %v2406 = vld [vmem:[%s12 + $0x28] sm:$0xff]
        %v2407 = vld [vmem:[%s12 + $0x30] sm:$0xff]
        %v2408 = vld [vmem:[%s12 + $0x38] sm:$0xff]
        %v2409 = vld [vmem:[%s13] sm:$0x3]
        %v2411 = vperm.slane %v2409, 0
        %v2412 = vperm.slane %v2409, 1
        %v2423 = vunpack.c.l.b16 %v2401
        %v2424 = vunpack.c.h.b16 %v2401
        %v2425 = vunpack.c.l.b16 %v2402
        %v2426 = vunpack.c.h.b16 %v2402
        %v2427 = vunpack.c.l.b16 %v2403
        %v2428 = vunpack.c.h.b16 %v2403
        %v2429 = vunpack.c.l.b16 %v2404
        %v2430 = vunpack.c.h.b16 %v2404
        %v2431 = vunpack.c.l.b16 %v2405
        %v2432 = vunpack.c.h.b16 %v2405
        %v2433 = vunpack.c.l.b16 %v2406
        %v2434 = vunpack.c.h.b16 %v2406
        %v2435 = vunpack.c.l.b16 %v2407
        %v2436 = vunpack.c.h.b16 %v2407
        %v2437 = vunpack.c.l.b16 %v2408
        %v2438 = vunpack.c.h.b16 %v2408
        %v2439 = vpack.c.b16 %v2425, %v2423
        %v2440 = vpack.c.b16 %v2426, %v2424
        %v2441 = vpack.c.b16 %v2429, %v2427
        %v2442 = vpack.c.b16 %v2430, %v2428
        %v2443 = vpack.c.b16 %v2433, %v2431
        %v2444 = vpack.c.b16 %v2434, %v2432
        %v2445 = vpack.c.b16 %v2437, %v2435
        %v2446 = vpack.c.b16 %v2438, %v2436
        %v2456 = vsel %vm880, %v2397, 0
        %v2459 = vsel %vm880, %v2398, 0
        %v2462 = vsel %vm880, %v2399, 0
        %v2465 = vsel %vm880, %v2400, 0
        %2467 = vmatpush.bf16.msra.mxu0 0
        %2468 = vmatpush.bf16.msra.mxu0 0
        %2469 = vmatpush.bf16.msra.mxu0 0
        %2470 = vmatpush.bf16.msra.mxu0 0
        %2471 = vmatpush.bf16.msra.mxu0 %v2445
        %2472 = vmatpush.bf16.msra.mxu0 %v2443
        %2473 = vmatpush.bf16.msra.mxu0 %v2441
        %2474 = vmatpush.bf16.msra.mxu0 %v2439
        %2475 = vmatmul.bf16.gmra.mxu0 %v2456
        %v2476 = vpop.f32.mrf.mxu0
        %v2477 = vadd.f32 %v2411, %v2476
        %v2478 = vpop.f32.mrf.mxu0
        %v2479 = vadd.f32 %v2411, %v2478
        %2480 = vmatmul.bf16.gmra.mxu0 %v2459
        %v2481 = vpop.f32.mrf.mxu0
        %v2482 = vadd.f32 %v2411, %v2481
        %v2483 = vpop.f32.mrf.mxu0
        %v2484 = vadd.f32 %v2411, %v2483
        %2485 = vmatmul.bf16.gmra.mxu0 %v2462
        %v2486 = vpop.f32.mrf.mxu0
        %v2487 = vadd.f32 %v2411, %v2486
        %v2488 = vpop.f32.mrf.mxu0
        %v2489 = vadd.f32 %v2411, %v2488
        %2490 = vmatmul.bf16.gmra.mxu0 %v2465
        %v2491 = vpop.f32.mrf.mxu0
        %v2492 = vadd.f32 %v2411, %v2491
        %v2493 = vpop.f32.mrf.mxu0
        %v2494 = vadd.f32 %v2411, %v2493
        %2495 = vdwg.mxu0
        %2496 = vmatpush.bf16.msra.mxu0 0
        %2497 = vmatpush.bf16.msra.mxu0 0
        %2498 = vmatpush.bf16.msra.mxu0 0
        %2499 = vmatpush.bf16.msra.mxu0 0
        %2500 = vmatpush.bf16.msra.mxu0 %v2446
        %2501 = vmatpush.bf16.msra.mxu0 %v2444
        %2502 = vmatpush.bf16.msra.mxu0 %v2442
        %2503 = vmatpush.bf16.msra.mxu0 %v2440
        %2504 = vmatmul.bf16.gmra.mxu0 %v2456
        %v2505 = vpop.f32.mrf.mxu0
        %v2506 = vadd.f32 %v2412, %v2505
        %v2507 = vpop.f32.mrf.mxu0
        %v2508 = vadd.f32 %v2412, %v2507
        %2509 = vmatmul.bf16.gmra.mxu0 %v2459
        %v2510 = vpop.f32.mrf.mxu0
        %v2511 = vadd.f32 %v2412, %v2510
        %v2512 = vpop.f32.mrf.mxu0
        %v2513 = vadd.f32 %v2412, %v2512
        %2514 = vmatmul.bf16.gmra.mxu0 %v2462
        %v2515 = vpop.f32.mrf.mxu0
        %v2516 = vadd.f32 %v2412, %v2515
        %v2517 = vpop.f32.mrf.mxu0
        %v2518 = vadd.f32 %v2412, %v2517
        %2519 = vmatmul.bf16.gmra.mxu0 %v2465
        %v2520 = vpop.f32.mrf.mxu0
        %v2521 = vadd.f32 %v2412, %v2520
        %v2522 = vpop.f32.mrf.mxu0
        %v2523 = vadd.f32 %v2412, %v2522
        %2524 = vdwg.mxu0
        %v2525 = vmax.f32 %v2477, 0.0
        %v2526 = vmax.f32 %v2506, 0.0
        %v2527 = vmax.f32 %v2479, 0.0
        %v2528 = vmax.f32 %v2508, 0.0
        %v2529 = vmax.f32 %v2482, 0.0
        %v2530 = vmax.f32 %v2511, 0.0
        %v2531 = vmax.f32 %v2484, 0.0
        %v2532 = vmax.f32 %v2513, 0.0
        %v2533 = vmax.f32 %v2487, 0.0
        %v2534 = vmax.f32 %v2516, 0.0
        %v2535 = vmax.f32 %v2489, 0.0
        %v2536 = vmax.f32 %v2518, 0.0
        %v2537 = vmax.f32 %v2492, 0.0
        %v2538 = vmax.f32 %v2521, 0.0
        %v2539 = vmax.f32 %v2494, 0.0
        %v2540 = vmax.f32 %v2523, 0.0
        %v2541 = vpack.c.bf16 %v2527, %v2525
        %v2542 = vpack.c.bf16 %v2528, %v2526
        %v2543 = vpack.c.bf16 %v2531, %v2529
        %v2544 = vpack.c.bf16 %v2532, %v2530
        %v2545 = vpack.c.bf16 %v2535, %v2533
        %v2546 = vpack.c.bf16 %v2536, %v2534
        %v2547 = vpack.c.bf16 %v2539, %v2537
        %v2548 = vpack.c.bf16 %v2540, %v2538
        %v2549 = vld [vmem:[%s14] sm:$0xf]
        %v2550 = vld [vmem:[%s14 + $0x4] sm:$0xf]
        %v2551 = vld [vmem:[%s14 + $0x8] sm:$0xf]
        %v2552 = vld [vmem:[%s14 + $0xc] sm:$0xf]
        %v2553 = vld [vmem:[%s14 + $0x10] sm:$0xf]
        %v2554 = vld [vmem:[%s14 + $0x14] sm:$0xf]
        %v2555 = vld [vmem:[%s14 + $0x18] sm:$0xf]
        %v2556 = vld [vmem:[%s14 + $0x1c] sm:$0xf]
        %v2557 = vld [vmem:[%s14 + $0x20] sm:$0xf]
        %v2558 = vld [vmem:[%s14 + $0x24] sm:$0xf]
        %v2559 = vld [vmem:[%s14 + $0x28] sm:$0xf]
        %v2560 = vld [vmem:[%s14 + $0x2c] sm:$0xf]
        %v2561 = vld [vmem:[%s14 + $0x30] sm:$0xf]
        %v2562 = vld [vmem:[%s14 + $0x34] sm:$0xf]
        %v2563 = vld [vmem:[%s14 + $0x38] sm:$0xf]
        %v2564 = vld [vmem:[%s14 + $0x3c] sm:$0xf]
        %v2565 = vld [vmem:[%s14 + $0x40] sm:$0xf]
        %v2566 = vld [vmem:[%s14 + $0x44] sm:$0xf]
        %v2567 = vld [vmem:[%s14 + $0x48] sm:$0xf]
        %v2568 = vld [vmem:[%s14 + $0x4c] sm:$0xf]
        %v2569 = vld [vmem:[%s14 + $0x50] sm:$0xf]
        %v2570 = vld [vmem:[%s14 + $0x54] sm:$0xf]
        %v2571 = vld [vmem:[%s14 + $0x58] sm:$0xf]
        %v2572 = vld [vmem:[%s14 + $0x5c] sm:$0xf]
        %v2573 = vld [vmem:[%s14 + $0x60] sm:$0xf]
        %v2574 = vld [vmem:[%s14 + $0x64] sm:$0xf]
        %v2575 = vld [vmem:[%s14 + $0x68] sm:$0xf]
        %v2576 = vld [vmem:[%s14 + $0x6c] sm:$0xf]
        %v2577 = vld [vmem:[%s14 + $0x70] sm:$0xf]
        %v2578 = vld [vmem:[%s14 + $0x74] sm:$0xf]
        %v2579 = vld [vmem:[%s14 + $0x78] sm:$0xf]
        %v2580 = vld [vmem:[%s14 + $0x7c] sm:$0xf]
        %v2581 = vld [vmem:[%s15] sm:$0x1]
        %v2583 = vperm.slane %v2581, 0
        %v2617 = vunpack.c.l.b16 %v2549
        %v2618 = vunpack.c.l.b16 %v2550
        %v2619 = vunpack.c.l.b16 %v2551
        %v2620 = vunpack.c.l.b16 %v2552
        %v2621 = vunpack.c.l.b16 %v2553
        %v2622 = vunpack.c.l.b16 %v2554
        %v2623 = vunpack.c.l.b16 %v2555
        %v2624 = vunpack.c.l.b16 %v2556
        %v2625 = vunpack.c.l.b16 %v2557
        %v2626 = vunpack.c.l.b16 %v2558
        %v2627 = vunpack.c.l.b16 %v2559
        %v2628 = vunpack.c.l.b16 %v2560
        %v2629 = vunpack.c.l.b16 %v2561
        %v2630 = vunpack.c.l.b16 %v2562
        %v2631 = vunpack.c.l.b16 %v2563
        %v2632 = vunpack.c.l.b16 %v2564
        %v2633 = vunpack.c.l.b16 %v2565
        %v2634 = vunpack.c.l.b16 %v2566
        %v2635 = vunpack.c.l.b16 %v2567
        %v2636 = vunpack.c.l.b16 %v2568
        %v2637 = vunpack.c.l.b16 %v2569
        %v2638 = vunpack.c.l.b16 %v2570
        %v2639 = vunpack.c.l.b16 %v2571
        %v2640 = vunpack.c.l.b16 %v2572
        %v2641 = vunpack.c.l.b16 %v2573
        %v2642 = vunpack.c.l.b16 %v2574
        %v2643 = vunpack.c.l.b16 %v2575
        %v2644 = vunpack.c.l.b16 %v2576
        %v2645 = vunpack.c.l.b16 %v2577
        %v2646 = vunpack.c.l.b16 %v2578
        %v2647 = vunpack.c.l.b16 %v2579
        %v2648 = vunpack.c.l.b16 %v2580
        %v2649 = vpack.c.b16 %v2618, %v2617
        %v2650 = vpack.c.b16 %v2620, %v2619
        %v2651 = vpack.c.b16 %v2622, %v2621
        %v2652 = vpack.c.b16 %v2624, %v2623
        %v2653 = vpack.c.b16 %v2626, %v2625
        %v2654 = vpack.c.b16 %v2628, %v2627
        %v2655 = vpack.c.b16 %v2630, %v2629
        %v2656 = vpack.c.b16 %v2632, %v2631
        %v2657 = vpack.c.b16 %v2634, %v2633
        %v2658 = vpack.c.b16 %v2636, %v2635
        %v2659 = vpack.c.b16 %v2638, %v2637
        %v2660 = vpack.c.b16 %v2640, %v2639
        %v2661 = vpack.c.b16 %v2642, %v2641
        %v2662 = vpack.c.b16 %v2644, %v2643
        %v2663 = vpack.c.b16 %v2646, %v2645
        %v2664 = vpack.c.b16 %v2648, %v2647
        %2681 = vmatpush.bf16.msra.mxu0 %v2656
        %2682 = vmatpush.bf16.msra.mxu0 %v2655
        %2683 = vmatpush.bf16.msra.mxu0 %v2654
        %2684 = vmatpush.bf16.msra.mxu0 %v2653
        %2685 = vmatpush.bf16.msra.mxu0 %v2652
        %2686 = vmatpush.bf16.msra.mxu0 %v2651
        %2687 = vmatpush.bf16.msra.mxu0 %v2650
        %2688 = vmatpush.bf16.msra.mxu0 %v2649
        %2689 = vmatmul.bf16.gmra.mxu0 %v2541
        %v2690 = vpop.f32.mrf.mxu0
        %v2691 = vadd.f32 %v2583, %v2690
        %v2692 = vpop.f32.mrf.mxu0
        %v2693 = vadd.f32 %v2583, %v2692
        %2694 = vmatmul.bf16.gmra.mxu0 %v2543
        %v2695 = vpop.f32.mrf.mxu0
        %v2696 = vadd.f32 %v2583, %v2695
        %v2697 = vpop.f32.mrf.mxu0
        %v2698 = vadd.f32 %v2583, %v2697
        %2699 = vmatmul.bf16.gmra.mxu0 %v2545
        %v2700 = vpop.f32.mrf.mxu0
        %v2701 = vadd.f32 %v2583, %v2700
        %v2702 = vpop.f32.mrf.mxu0
        %v2703 = vadd.f32 %v2583, %v2702
        %2704 = vmatmul.bf16.gmra.mxu0 %v2547
        %v2705 = vpop.f32.mrf.mxu0
        %v2706 = vadd.f32 %v2583, %v2705
        %v2707 = vpop.f32.mrf.mxu0
        %v2708 = vadd.f32 %v2583, %v2707
        %2709 = vdwg.mxu0
        %2710 = vmatpush.bf16.msra.mxu0 %v2664
        %2711 = vmatpush.bf16.msra.mxu0 %v2663
        %2712 = vmatpush.bf16.msra.mxu0 %v2662
        %2713 = vmatpush.bf16.msra.mxu0 %v2661
        %2714 = vmatpush.bf16.msra.mxu0 %v2660
        %2715 = vmatpush.bf16.msra.mxu0 %v2659
        %2716 = vmatpush.bf16.msra.mxu0 %v2658
        %2717 = vmatpush.bf16.msra.mxu0 %v2657
        %2718 = vmatmul.bf16.gmra.mxu0 %v2542
        %v2719 = vpop.f32.mrf.mxu0
        %v2720 = vadd.f32 %v2691, %v2719
        %v2721 = vpop.f32.mrf.mxu0
        %v2722 = vadd.f32 %v2693, %v2721
        %2723 = vmatmul.bf16.gmra.mxu0 %v2544
        %v2724 = vpop.f32.mrf.mxu0
        %v2725 = vadd.f32 %v2696, %v2724
        %v2726 = vpop.f32.mrf.mxu0
        %v2727 = vadd.f32 %v2698, %v2726
        %2728 = vmatmul.bf16.gmra.mxu0 %v2546
        %v2729 = vpop.f32.mrf.mxu0
        %v2730 = vadd.f32 %v2701, %v2729
        %v2731 = vpop.f32.mrf.mxu0
        %v2732 = vadd.f32 %v2703, %v2731
        %2733 = vmatmul.bf16.gmra.mxu0 %v2548
        %v2734 = vpop.f32.mrf.mxu0
        %v2735 = vadd.f32 %v2706, %v2734
        %v2736 = vpop.f32.mrf.mxu0
        %v2737 = vadd.f32 %v2708, %v2736
        %2738 = vdwg.mxu0
        %v2739 = vadd.f32 %v2389, %v2720
        %v2740 = vadd.f32 %v2390, %v2722
        %v2741 = vadd.f32 %v2391, %v2725
        %v2742 = vadd.f32 %v2392, %v2727
        %v2743 = vadd.f32 %v2393, %v2730
        %v2744 = vadd.f32 %v2394, %v2732
        %v2745 = vadd.f32 %v2395, %v2735
        %v2746 = vadd.f32 %v2396, %v2737
        %v2747 = vld [vmem:[%s16] sm:$0x1]
        %v2748 = vld [vmem:[%s17] sm:$0x1]
        %v2749 = vsel %vm880, %v2739, 0.0
        %2750 = vadd.xlane.f32.xlu0 %v2749
        %v2751 = vpop.xlane.xlu0 %2750
        %v2752 = vsel %vm880, %v2740, 0.0
        %2753 = vadd.xlane.f32.xlu0 %v2752
        %v2754 = vpop.xlane.xlu0 %2753
        %v2755 = vsel %vm880, %v2741, 0.0
        %2756 = vadd.xlane.f32.xlu0 %v2755
        %v2757 = vpop.xlane.xlu0 %2756
        %v2758 = vsel %vm880, %v2742, 0.0
        %2759 = vadd.xlane.f32.xlu0 %v2758
        %v2760 = vpop.xlane.xlu0 %2759
        %v2761 = vsel %vm880, %v2743, 0.0
        %2762 = vadd.xlane.f32.xlu0 %v2761
        %v2763 = vpop.xlane.xlu0 %2762
        %v2764 = vsel %vm880, %v2744, 0.0
        %2765 = vadd.xlane.f32.xlu0 %v2764
        %v2766 = vpop.xlane.xlu0 %2765
        %v2767 = vsel %vm880, %v2745, 0.0
        %2768 = vadd.xlane.f32.xlu0 %v2767
        %v2769 = vpop.xlane.xlu0 %2768
        %v2770 = vsel %vm880, %v2746, 0.0
        %2771 = vadd.xlane.f32.xlu0 %v2770
        %v2772 = vpop.xlane.xlu0 %2771
        %v2773 = vmul.f32 %v2751, %v2222
        %v2774 = vmul.f32 %v2754, %v2222
        %v2775 = vmul.f32 %v2757, %v2222
        %v2776 = vmul.f32 %v2760, %v2222
        %v2777 = vmul.f32 %v2763, %v2222
        %v2778 = vmul.f32 %v2766, %v2222
        %v2779 = vmul.f32 %v2769, %v2222
        %v2780 = vmul.f32 %v2772, %v2222
        %v2781 = vsub.f32 %v2739, %v2773
        %v2782 = vsub.f32 %v2740, %v2774
        %v2783 = vsub.f32 %v2741, %v2775
        %v2784 = vsub.f32 %v2742, %v2776
        %v2785 = vsub.f32 %v2743, %v2777
        %v2786 = vsub.f32 %v2744, %v2778
        %v2787 = vsub.f32 %v2745, %v2779
        %v2788 = vsub.f32 %v2746, %v2780
        %v2789 = vmul.f32 %v2781, %v2781
        %v2790 = vmul.f32 %v2782, %v2782
        %v2791 = vmul.f32 %v2783, %v2783
        %v2792 = vmul.f32 %v2784, %v2784
        %v2793 = vmul.f32 %v2785, %v2785
        %v2794 = vmul.f32 %v2786, %v2786
        %v2795 = vmul.f32 %v2787, %v2787
        %v2796 = vmul.f32 %v2788, %v2788
        %v2797 = vsel %vm880, %v2789, 0.0
        %2798 = vadd.xlane.f32.xlu0 %v2797
        %v2799 = vpop.xlane.xlu0 %2798
        %v2800 = vsel %vm880, %v2790, 0.0
        %2801 = vadd.xlane.f32.xlu0 %v2800
        %v2802 = vpop.xlane.xlu0 %2801
        %v2803 = vsel %vm880, %v2791, 0.0
        %2804 = vadd.xlane.f32.xlu0 %v2803
        %v2805 = vpop.xlane.xlu0 %2804
        %v2806 = vsel %vm880, %v2792, 0.0
        %2807 = vadd.xlane.f32.xlu0 %v2806
        %v2808 = vpop.xlane.xlu0 %2807
        %v2809 = vsel %vm880, %v2793, 0.0
        %2810 = vadd.xlane.f32.xlu0 %v2809
        %v2811 = vpop.xlane.xlu0 %2810
        %v2812 = vsel %vm880, %v2794, 0.0
        %2813 = vadd.xlane.f32.xlu0 %v2812
        %v2814 = vpop.xlane.xlu0 %2813
        %v2815 = vsel %vm880, %v2795, 0.0
        %2816 = vadd.xlane.f32.xlu0 %v2815
        %v2817 = vpop.xlane.xlu0 %2816
        %v2818 = vsel %vm880, %v2796, 0.0
        %2819 = vadd.xlane.f32.xlu0 %v2818
        %v2820 = vpop.xlane.xlu0 %2819
        %v2821 = vmul.f32 %v2799, %v2222
        %v2822 = vmul.f32 %v2802, %v2222
        %v2823 = vmul.f32 %v2805, %v2222
        %v2824 = vmul.f32 %v2808, %v2222
        %v2825 = vmul.f32 %v2811, %v2222
        %v2826 = vmul.f32 %v2814, %v2222
        %v2827 = vmul.f32 %v2817, %v2222
        %v2828 = vmul.f32 %v2820, %v2222
        %v2829 = vadd.f32 %v2821, 1e-05
        %v2830 = vadd.f32 %v2822, 1e-05
        %v2831 = vadd.f32 %v2823, 1e-05
        %v2832 = vadd.f32 %v2824, 1e-05
        %v2833 = vadd.f32 %v2825, 1e-05
        %v2834 = vadd.f32 %v2826, 1e-05
        %v2835 = vadd.f32 %v2827, 1e-05
        %v2836 = vadd.f32 %v2828, 1e-05
        %v2837 = vrsqrt.pop %v2829
        %v2838 = vmul.f32 %v2837, %v2829
        %v2839 = vmul.f32 %v2838, %v2837
        %v2840 = vmul.f32 0.5, %v2839
        %v2841 = vsub.f32 1.5, %v2840
        %v2842 = vmul.f32 %v2837, %v2841
        %vm2843 = vweird.f32 %v2829
        %vm2844 = vweird.f32 %v2837
        %vm2845 = vmor %vm2843, %vm2844
        %v2846 = vsel %vm2845, %v2837, %v2842
        %v2847 = vrsqrt.pop %v2830
        %v2848 = vmul.f32 %v2847, %v2830
        %v2849 = vmul.f32 %v2848, %v2847
        %v2850 = vmul.f32 0.5, %v2849
        %v2851 = vsub.f32 1.5, %v2850
        %v2852 = vmul.f32 %v2847, %v2851
        %vm2853 = vweird.f32 %v2830
        %vm2854 = vweird.f32 %v2847
        %vm2855 = vmor %vm2853, %vm2854
        %v2856 = vsel %vm2855, %v2847, %v2852
        %v2857 = vrsqrt.pop %v2831
        %v2858 = vmul.f32 %v2857, %v2831
        %v2859 = vmul.f32 %v2858, %v2857
        %v2860 = vmul.f32 0.5, %v2859
        %v2861 = vsub.f32 1.5, %v2860
        %v2862 = vmul.f32 %v2857, %v2861
        %vm2863 = vweird.f32 %v2831
        %vm2864 = vweird.f32 %v2857
        %vm2865 = vmor %vm2863, %vm2864
        %v2866 = vsel %vm2865, %v2857, %v2862
        %v2867 = vrsqrt.pop %v2832
        %v2868 = vmul.f32 %v2867, %v2832
        %v2869 = vmul.f32 %v2868, %v2867
        %v2870 = vmul.f32 0.5, %v2869
        %v2871 = vsub.f32 1.5, %v2870
        %v2872 = vmul.f32 %v2867, %v2871
        %vm2873 = vweird.f32 %v2832
        %vm2874 = vweird.f32 %v2867
        %vm2875 = vmor %vm2873, %vm2874
        %v2876 = vsel %vm2875, %v2867, %v2872
        %v2877 = vrsqrt.pop %v2833
        %v2878 = vmul.f32 %v2877, %v2833
        %v2879 = vmul.f32 %v2878, %v2877
        %v2880 = vmul.f32 0.5, %v2879
        %v2881 = vsub.f32 1.5, %v2880
        %v2882 = vmul.f32 %v2877, %v2881
        %vm2883 = vweird.f32 %v2833
        %vm2884 = vweird.f32 %v2877
        %vm2885 = vmor %vm2883, %vm2884
        %v2886 = vsel %vm2885, %v2877, %v2882
        %v2887 = vrsqrt.pop %v2834
        %v2888 = vmul.f32 %v2887, %v2834
        %v2889 = vmul.f32 %v2888, %v2887
        %v2890 = vmul.f32 0.5, %v2889
        %v2891 = vsub.f32 1.5, %v2890
        %v2892 = vmul.f32 %v2887, %v2891
        %vm2893 = vweird.f32 %v2834
        %vm2894 = vweird.f32 %v2887
        %vm2895 = vmor %vm2893, %vm2894
        %v2896 = vsel %vm2895, %v2887, %v2892
        %v2897 = vrsqrt.pop %v2835
        %v2898 = vmul.f32 %v2897, %v2835
        %v2899 = vmul.f32 %v2898, %v2897
        %v2900 = vmul.f32 0.5, %v2899
        %v2901 = vsub.f32 1.5, %v2900
        %v2902 = vmul.f32 %v2897, %v2901
        %vm2903 = vweird.f32 %v2835
        %vm2904 = vweird.f32 %v2897
        %vm2905 = vmor %vm2903, %vm2904
        %v2906 = vsel %vm2905, %v2897, %v2902
        %v2907 = vrsqrt.pop %v2836
        %v2908 = vmul.f32 %v2907, %v2836
        %v2909 = vmul.f32 %v2908, %v2907
        %v2910 = vmul.f32 0.5, %v2909
        %v2911 = vsub.f32 1.5, %v2910
        %v2912 = vmul.f32 %v2907, %v2911
        %vm2913 = vweird.f32 %v2836
        %vm2914 = vweird.f32 %v2907
        %vm2915 = vmor %vm2913, %vm2914
        %v2916 = vsel %vm2915, %v2907, %v2912
        %v2917 = vmul.f32 %v2781, %v2846
        %v2918 = vmul.f32 %v2782, %v2856
        %v2919 = vmul.f32 %v2783, %v2866
        %v2920 = vmul.f32 %v2784, %v2876
        %v2921 = vmul.f32 %v2785, %v2886
        %v2922 = vmul.f32 %v2786, %v2896
        %v2923 = vmul.f32 %v2787, %v2906
        %v2924 = vmul.f32 %v2788, %v2916
        %v2926 = vperm.slane %v2747, 0
        %v2928 = vmul.f32 %v2917, %v2926
        %v2929 = vmul.f32 %v2918, %v2926
        %v2930 = vmul.f32 %v2919, %v2926
        %v2931 = vmul.f32 %v2920, %v2926
        %v2932 = vmul.f32 %v2921, %v2926
        %v2933 = vmul.f32 %v2922, %v2926
        %v2934 = vmul.f32 %v2923, %v2926
        %v2935 = vmul.f32 %v2924, %v2926
        %v2937 = vperm.slane %v2748, 0
        %v2939 = vadd.f32 %v2928, %v2937
        %v2940 = vadd.f32 %v2929, %v2937
        %v2941 = vadd.f32 %v2930, %v2937
        %v2942 = vadd.f32 %v2931, %v2937
        %v2943 = vadd.f32 %v2932, %v2937
        %v2944 = vadd.f32 %v2933, %v2937
        %v2945 = vadd.f32 %v2934, %v2937
        %v2946 = vadd.f32 %v2935, %v2937
        %v2947 = vpack.c.bf16 %v2940, %v2939
        %v2948 = vpack.c.bf16 %v2942, %v2941
        %v2949 = vpack.c.bf16 %v2944, %v2943
        %v2950 = vpack.c.bf16 %v2946, %v2945
        %s2951 = scalar_lea.vmem %s6, 64
        %v2952 = vld [vmem:[%s2951] sm:$0xff]
        %v2953 = vld [vmem:[%s2951 + $0x8] sm:$0xff]
        %v2954 = vld [vmem:[%s2951 + $0x10] sm:$0xff]
        %v2955 = vld [vmem:[%s2951 + $0x18] sm:$0xff]
        %v2956 = vld [vmem:[%s2951 + $0x20] sm:$0xff]
        %v2957 = vld [vmem:[%s2951 + $0x28] sm:$0xff]
        %v2958 = vld [vmem:[%s2951 + $0x30] sm:$0xff]
        %v2959 = vld [vmem:[%s2951 + $0x38] sm:$0xff]
        %s2960 = scalar_lea.vmem %s7, 2
        %v2961 = vld [vmem:[%s2960] sm:$0x3]
        %v2963 = vperm.slane %v2961, 0
        %v2964 = vperm.slane %v2961, 1
        %v2975 = vunpack.c.l.b16 %v2952
        %v2976 = vunpack.c.h.b16 %v2952
        %v2977 = vunpack.c.l.b16 %v2953
        %v2978 = vunpack.c.h.b16 %v2953
        %v2979 = vunpack.c.l.b16 %v2954
        %v2980 = vunpack.c.h.b16 %v2954
        %v2981 = vunpack.c.l.b16 %v2955
        %v2982 = vunpack.c.h.b16 %v2955
        %v2983 = vunpack.c.l.b16 %v2956
        %v2984 = vunpack.c.h.b16 %v2956
        %v2985 = vunpack.c.l.b16 %v2957
        %v2986 = vunpack.c.h.b16 %v2957
        %v2987 = vunpack.c.l.b16 %v2958
        %v2988 = vunpack.c.h.b16 %v2958
        %v2989 = vunpack.c.l.b16 %v2959
        %v2990 = vunpack.c.h.b16 %v2959
        %v2991 = vpack.c.b16 %v2977, %v2975
        %v2992 = vpack.c.b16 %v2978, %v2976
        %v2993 = vpack.c.b16 %v2981, %v2979
        %v2994 = vpack.c.b16 %v2982, %v2980
        %v2995 = vpack.c.b16 %v2985, %v2983
        %v2996 = vpack.c.b16 %v2986, %v2984
        %v2997 = vpack.c.b16 %v2989, %v2987
        %v2998 = vpack.c.b16 %v2990, %v2988
        %v3008 = vsel %vm880, %v2947, 0
        %v3011 = vsel %vm880, %v2948, 0
        %v3014 = vsel %vm880, %v2949, 0
        %v3017 = vsel %vm880, %v2950, 0
        %3019 = vmatpush.bf16.msra.mxu0 0
        %3020 = vmatpush.bf16.msra.mxu0 0
        %3021 = vmatpush.bf16.msra.mxu0 0
        %3022 = vmatpush.bf16.msra.mxu0 0
        %3023 = vmatpush.bf16.msra.mxu0 %v2997
        %3024 = vmatpush.bf16.msra.mxu0 %v2995
        %3025 = vmatpush.bf16.msra.mxu0 %v2993
        %3026 = vmatpush.bf16.msra.mxu0 %v2991
        %3027 = vmatmul.bf16.gmra.mxu0 %v3008
        %v3028 = vpop.f32.mrf.mxu0
        %v3029 = vadd.f32 %v2963, %v3028
        %v3030 = vpop.f32.mrf.mxu0
        %v3031 = vadd.f32 %v2963, %v3030
        %3032 = vmatmul.bf16.gmra.mxu0 %v3011
        %v3033 = vpop.f32.mrf.mxu0
        %v3034 = vadd.f32 %v2963, %v3033
        %v3035 = vpop.f32.mrf.mxu0
        %v3036 = vadd.f32 %v2963, %v3035
        %3037 = vmatmul.bf16.gmra.mxu0 %v3014
        %v3038 = vpop.f32.mrf.mxu0
        %v3039 = vadd.f32 %v2963, %v3038
        %v3040 = vpop.f32.mrf.mxu0
        %v3041 = vadd.f32 %v2963, %v3040
        %3042 = vmatmul.bf16.gmra.mxu0 %v3017
        %v3043 = vpop.f32.mrf.mxu0
        %v3044 = vadd.f32 %v2963, %v3043
        %v3045 = vpop.f32.mrf.mxu0
        %v3046 = vadd.f32 %v2963, %v3045
        %3047 = vdwg.mxu0
        %3048 = vmatpush.bf16.msra.mxu0 0
        %3049 = vmatpush.bf16.msra.mxu0 0
        %3050 = vmatpush.bf16.msra.mxu0 0
        %3051 = vmatpush.bf16.msra.mxu0 0
        %3052 = vmatpush.bf16.msra.mxu0 %v2998
        %3053 = vmatpush.bf16.msra.mxu0 %v2996
        %3054 = vmatpush.bf16.msra.mxu0 %v2994
        %3055 = vmatpush.bf16.msra.mxu0 %v2992
        %3056 = vmatmul.bf16.gmra.mxu0 %v3008
        %v3057 = vpop.f32.mrf.mxu0
        %v3058 = vadd.f32 %v2964, %v3057
        %v3059 = vpop.f32.mrf.mxu0
        %v3060 = vadd.f32 %v2964, %v3059
        %3061 = vmatmul.bf16.gmra.mxu0 %v3011
        %v3062 = vpop.f32.mrf.mxu0
        %v3063 = vadd.f32 %v2964, %v3062
        %v3064 = vpop.f32.mrf.mxu0
        %v3065 = vadd.f32 %v2964, %v3064
        %3066 = vmatmul.bf16.gmra.mxu0 %v3014
        %v3067 = vpop.f32.mrf.mxu0
        %v3068 = vadd.f32 %v2964, %v3067
        %v3069 = vpop.f32.mrf.mxu0
        %v3070 = vadd.f32 %v2964, %v3069
        %3071 = vmatmul.bf16.gmra.mxu0 %v3017
        %v3072 = vpop.f32.mrf.mxu0
        %v3073 = vadd.f32 %v2964, %v3072
        %v3074 = vpop.f32.mrf.mxu0
        %v3075 = vadd.f32 %v2964, %v3074
        %3076 = vdwg.mxu0
        %v3077 = vmul.f32 %v3029, 0.25
        %v3078 = vmul.f32 %v3031, 0.25
        %v3079 = vmul.f32 %v3034, 0.25
        %v3080 = vmul.f32 %v3036, 0.25
        %v3081 = vmul.f32 %v3039, 0.25
        %v3082 = vmul.f32 %v3041, 0.25
        %v3083 = vmul.f32 %v3044, 0.25
        %v3084 = vmul.f32 %v3046, 0.25
        %v3085 = vpack.c.bf16 %v3077, %v3077
        %v3086 = vpack.c.bf16 %v3078, %v3078
        %v3087 = vpack.c.bf16 %v3079, %v3079
        %v3088 = vpack.c.bf16 %v3080, %v3080
        %v3089 = vpack.c.bf16 %v3081, %v3081
        %v3090 = vpack.c.bf16 %v3082, %v3082
        %v3091 = vpack.c.bf16 %v3083, %v3083
        %v3092 = vpack.c.bf16 %v3084, %v3084
        %v3093 = vpack.c.bf16 %v3029, %v3029
        %v3094 = vpack.c.bf16 %v3031, %v3031
        %v3095 = vpack.c.bf16 %v3034, %v3034
        %v3096 = vpack.c.bf16 %v3036, %v3036
        %v3097 = vpack.c.bf16 %v3039, %v3039
        %v3098 = vpack.c.bf16 %v3041, %v3041
        %v3099 = vpack.c.bf16 %v3044, %v3044
        %v3100 = vpack.c.bf16 %v3046, %v3046
        %v3101 = vpack.c.bf16 %v3058, %v3058
        %v3102 = vpack.c.bf16 %v3060, %v3060
        %v3103 = vpack.c.bf16 %v3063, %v3063
        %v3104 = vpack.c.bf16 %v3065, %v3065
        %v3105 = vpack.c.bf16 %v3068, %v3068
        %v3106 = vpack.c.bf16 %v3070, %v3070
        %v3107 = vpack.c.bf16 %v3073, %v3073
        %v3108 = vpack.c.bf16 %v3075, %v3075
        %v3117 = vunpack.c.l.b16 %v3085
        %v3118 = vunpack.c.l.b16 %v3086
        %v3119 = vunpack.c.l.b16 %v3087
        %v3120 = vunpack.c.l.b16 %v3088
        %v3121 = vunpack.c.l.b16 %v3089
        %v3122 = vunpack.c.l.b16 %v3090
        %v3123 = vunpack.c.l.b16 %v3091
        %v3124 = vunpack.c.l.b16 %v3092
        %v3125 = vpack.c.b16 %v3118, %v3117
        %v3126 = vpack.c.b16 %v3120, %v3119
        %v3127 = vpack.c.b16 %v3122, %v3121
        %v3128 = vpack.c.b16 %v3124, %v3123
        %v3137 = vunpack.c.l.b16 %v3093
        %v3138 = vunpack.c.l.b16 %v3094
        %v3139 = vunpack.c.l.b16 %v3095
        %v3140 = vunpack.c.l.b16 %v3096
        %v3141 = vunpack.c.l.b16 %v3097
        %v3142 = vunpack.c.l.b16 %v3098
        %v3143 = vunpack.c.l.b16 %v3099
        %v3144 = vunpack.c.l.b16 %v3100
        %v3145 = vpack.c.b16 %v3138, %v3137
        %v3146 = vpack.c.b16 %v3140, %v3139
        %v3147 = vpack.c.b16 %v3142, %v3141
        %v3148 = vpack.c.b16 %v3144, %v3143
        %3149 = vrot.lane.b32.xlu0 %v3145, 64
        %v3150 = vpop.permute.xlu0 %3149
        %3151 = vrot.lane.b32.xlu0 %v3146, 64
        %v3152 = vpop.permute.xlu0 %3151
        %3153 = vrot.lane.b32.xlu0 %v3147, 64
        %v3154 = vpop.permute.xlu0 %3153
        %3155 = vrot.lane.b32.xlu0 %v3148, 64
        %v3156 = vpop.permute.xlu0 %3155
        %v3158 = vsel %vm1031, %v3125, 0
        %v3161 = vsel %vm1031, %v3126, 0
        %v3164 = vsel %vm1031, %v3127, 0
        %v3167 = vsel %vm1031, %v3128, 0
        %v3170 = vsel %vm1031, %v3150, 0
        %v3173 = vsel %vm1031, %v3152, 0
        %v3176 = vsel %vm1031, %v3154, 0
        %v3179 = vsel %vm1031, %v3156, 0
        %3181 = vmatpush.bf16.xpose.msra.mxu0 0
        %3182 = vmatpush.bf16.xpose.msra.mxu0 0
        %3183 = vmatpush.bf16.xpose.msra.mxu0 0
        %3184 = vmatpush.bf16.xpose.msra.mxu0 0
        %3185 = vmatpush.bf16.xpose.msra.mxu0 %v3179
        %3186 = vmatpush.bf16.xpose.msra.mxu0 %v3176
        %3187 = vmatpush.bf16.xpose.msra.mxu0 %v3173
        %3188 = vmatpush.bf16.xpose.msra.mxu0 %v3170
        %3189 = vmatmul.bf16.gmra.mxu0 %v3158
        %v3190 = vpop.f32.mrf.mxu0
        %v3191 = vadd.f32 %v814, %v3190
        %v3192 = vpop.f32.mrf.mxu0
        %v3193 = vadd.f32 %v815, %v3192
        %3194 = vmatmul.bf16.gmra.mxu0 %v3161
        %v3195 = vpop.f32.mrf.mxu0
        %v3196 = vadd.f32 %v816, %v3195
        %v3197 = vpop.f32.mrf.mxu0
        %v3198 = vadd.f32 %v817, %v3197
        %3199 = vmatmul.bf16.gmra.mxu0 %v3164
        %v3200 = vpop.f32.mrf.mxu0
        %v3201 = vadd.f32 %v818, %v3200
        %v3202 = vpop.f32.mrf.mxu0
        %v3203 = vadd.f32 %v819, %v3202
        %3204 = vmatmul.bf16.gmra.mxu0 %v3167
        %v3205 = vpop.f32.mrf.mxu0
        %v3206 = vadd.f32 %v820, %v3205
        %v3207 = vpop.f32.mrf.mxu0
        %v3208 = vadd.f32 %v821, %v3207
        %3209 = vdwg.mxu0
        %v3210 = vsel %vm880, %v3191, -inf
        %3211 = vmax.xlane.f32.xlu0 %v3210
        %v3212 = vpop.xlane.xlu0 %3211
        %v3213 = vsel %vm880, %v3193, -inf
        %3214 = vmax.xlane.f32.xlu0 %v3213
        %v3215 = vpop.xlane.xlu0 %3214
        %v3216 = vsel %vm880, %v3196, -inf
        %3217 = vmax.xlane.f32.xlu0 %v3216
        %v3218 = vpop.xlane.xlu0 %3217
        %v3219 = vsel %vm880, %v3198, -inf
        %3220 = vmax.xlane.f32.xlu0 %v3219
        %v3221 = vpop.xlane.xlu0 %3220
        %v3222 = vsel %vm880, %v3201, -inf
        %3223 = vmax.xlane.f32.xlu0 %v3222
        %v3224 = vpop.xlane.xlu0 %3223
        %v3225 = vsel %vm880, %v3203, -inf
        %3226 = vmax.xlane.f32.xlu0 %v3225
        %v3227 = vpop.xlane.xlu0 %3226
        %v3228 = vsel %vm880, %v3206, -inf
        %3229 = vmax.xlane.f32.xlu0 %v3228
        %v3230 = vpop.xlane.xlu0 %3229
        %v3231 = vsel %vm880, %v3208, -inf
        %3232 = vmax.xlane.f32.xlu0 %v3231
        %v3233 = vpop.xlane.xlu0 %3232
        %v3234 = vsub.f32 %v3191, %v3212
        %v3235 = vsub.f32 %v3193, %v3215
        %v3236 = vsub.f32 %v3196, %v3218
        %v3237 = vsub.f32 %v3198, %v3221
        %v3238 = vsub.f32 %v3201, %v3224
        %v3239 = vsub.f32 %v3203, %v3227
        %v3240 = vsub.f32 %v3206, %v3230
        %v3241 = vsub.f32 %v3208, %v3233
        %v3242 = vmul.f32 %v3234, 1.442695
        %v3243 = vpow.pop %v3242
        %v3244 = vmul.f32 %v3235, 1.442695
        %v3245 = vpow.pop %v3244
        %v3246 = vmul.f32 %v3236, 1.442695
        %v3247 = vpow.pop %v3246
        %v3248 = vmul.f32 %v3237, 1.442695
        %v3249 = vpow.pop %v3248
        %v3250 = vmul.f32 %v3238, 1.442695
        %v3251 = vpow.pop %v3250
        %v3252 = vmul.f32 %v3239, 1.442695
        %v3253 = vpow.pop %v3252
        %v3254 = vmul.f32 %v3240, 1.442695
        %v3255 = vpow.pop %v3254
        %v3256 = vmul.f32 %v3241, 1.442695
        %v3257 = vpow.pop %v3256
        %v3258 = vsel %vm880, %v3243, 0.0
        %3259 = vadd.xlane.f32.xlu0 %v3258
        %v3260 = vpop.xlane.xlu0 %3259
        %v3261 = vsel %vm880, %v3245, 0.0
        %3262 = vadd.xlane.f32.xlu0 %v3261
        %v3263 = vpop.xlane.xlu0 %3262
        %v3264 = vsel %vm880, %v3247, 0.0
        %3265 = vadd.xlane.f32.xlu0 %v3264
        %v3266 = vpop.xlane.xlu0 %3265
        %v3267 = vsel %vm880, %v3249, 0.0
        %3268 = vadd.xlane.f32.xlu0 %v3267
        %v3269 = vpop.xlane.xlu0 %3268
        %v3270 = vsel %vm880, %v3251, 0.0
        %3271 = vadd.xlane.f32.xlu0 %v3270
        %v3272 = vpop.xlane.xlu0 %3271
        %v3273 = vsel %vm880, %v3253, 0.0
        %3274 = vadd.xlane.f32.xlu0 %v3273
        %v3275 = vpop.xlane.xlu0 %3274
        %v3276 = vsel %vm880, %v3255, 0.0
        %3277 = vadd.xlane.f32.xlu0 %v3276
        %v3278 = vpop.xlane.xlu0 %3277
        %v3279 = vsel %vm880, %v3257, 0.0
        %3280 = vadd.xlane.f32.xlu0 %v3279
        %v3281 = vpop.xlane.xlu0 %3280
        %v3282 = vrcp.pop %v3260
        %v3283 = vrcp.pop %v3263
        %v3284 = vrcp.pop %v3266
        %v3285 = vrcp.pop %v3269
        %v3286 = vrcp.pop %v3272
        %v3287 = vrcp.pop %v3275
        %v3288 = vrcp.pop %v3278
        %v3289 = vrcp.pop %v3281
        %v3290 = vmul.f32 %v3243, %v3282
        %v3291 = vmul.f32 %v3245, %v3283
        %v3292 = vmul.f32 %v3247, %v3284
        %v3293 = vmul.f32 %v3249, %v3285
        %v3294 = vmul.f32 %v3251, %v3286
        %v3295 = vmul.f32 %v3253, %v3287
        %v3296 = vmul.f32 %v3255, %v3288
        %v3297 = vmul.f32 %v3257, %v3289
        %v3298 = vpack.c.bf16 %v3290, %v3290
        %v3299 = vpack.c.bf16 %v3291, %v3291
        %v3300 = vpack.c.bf16 %v3292, %v3292
        %v3301 = vpack.c.bf16 %v3293, %v3293
        %v3302 = vpack.c.bf16 %v3294, %v3294
        %v3303 = vpack.c.bf16 %v3295, %v3295
        %v3304 = vpack.c.bf16 %v3296, %v3296
        %v3305 = vpack.c.bf16 %v3297, %v3297
        %v3314 = vunpack.c.l.b16 %v3298
        %v3315 = vunpack.c.l.b16 %v3299
        %v3316 = vunpack.c.l.b16 %v3300
        %v3317 = vunpack.c.l.b16 %v3301
        %v3318 = vunpack.c.l.b16 %v3302
        %v3319 = vunpack.c.l.b16 %v3303
        %v3320 = vunpack.c.l.b16 %v3304
        %v3321 = vunpack.c.l.b16 %v3305
        %v3322 = vpack.c.b16 %v3315, %v3314
        %v3323 = vpack.c.b16 %v3317, %v3316
        %v3324 = vpack.c.b16 %v3319, %v3318
        %v3325 = vpack.c.b16 %v3321, %v3320
        %v3334 = vunpack.c.l.b16 %v3101
        %v3335 = vunpack.c.l.b16 %v3102
        %v3336 = vunpack.c.l.b16 %v3103
        %v3337 = vunpack.c.l.b16 %v3104
        %v3338 = vunpack.c.l.b16 %v3105
        %v3339 = vunpack.c.l.b16 %v3106
        %v3340 = vunpack.c.l.b16 %v3107
        %v3341 = vunpack.c.l.b16 %v3108
        %v3342 = vpack.c.b16 %v3335, %v3334
        %v3343 = vpack.c.b16 %v3337, %v3336
        %v3344 = vpack.c.b16 %v3339, %v3338
        %v3345 = vpack.c.b16 %v3341, %v3340
        %v3351 = vsel %vm880, %v3322, 0
        %v3354 = vsel %vm880, %v3323, 0
        %v3357 = vsel %vm880, %v3324, 0
        %v3360 = vsel %vm880, %v3325, 0
        %3362 = vmatpush.bf16.msra.mxu0 0
        %3363 = vmatpush.bf16.msra.mxu0 0
        %3364 = vmatpush.bf16.msra.mxu0 0
        %3365 = vmatpush.bf16.msra.mxu0 0
        %3366 = vmatpush.bf16.msra.mxu0 %v3345
        %3367 = vmatpush.bf16.msra.mxu0 %v3344
        %3368 = vmatpush.bf16.msra.mxu0 %v3343
        %3369 = vmatpush.bf16.msra.mxu0 %v3342
        %3370 = vmatmul.bf16.gmra.mxu0 %v3351
        %v3371 = vpop.f32.mrf.mxu0
        %v3372 = vadd.f32 0.0, %v3371
        %v3373 = vpop.f32.mrf.mxu0
        %v3374 = vadd.f32 0.0, %v3373
        %3375 = vmatmul.bf16.gmra.mxu0 %v3354
        %v3376 = vpop.f32.mrf.mxu0
        %v3377 = vadd.f32 0.0, %v3376
        %v3378 = vpop.f32.mrf.mxu0
        %v3379 = vadd.f32 0.0, %v3378
        %3380 = vmatmul.bf16.gmra.mxu0 %v3357
        %v3381 = vpop.f32.mrf.mxu0
        %v3382 = vadd.f32 0.0, %v3381
        %v3383 = vpop.f32.mrf.mxu0
        %v3384 = vadd.f32 0.0, %v3383
        %3385 = vmatmul.bf16.gmra.mxu0 %v3360
        %v3386 = vpop.f32.mrf.mxu0
        %v3387 = vadd.f32 0.0, %v3386
        %v3388 = vpop.f32.mrf.mxu0
        %v3389 = vadd.f32 0.0, %v3388
        %3390 = vdwg.mxu0
        %3391 = vrot.lane.b32.xlu0 %v3125, 112
        %v3392 = vpop.permute.xlu0 %3391
        %3393 = vrot.lane.b32.xlu0 %v3126, 112
        %v3394 = vpop.permute.xlu0 %3393
        %3395 = vrot.lane.b32.xlu0 %v3127, 112
        %v3396 = vpop.permute.xlu0 %3395
        %3397 = vrot.lane.b32.xlu0 %v3128, 112
        %v3398 = vpop.permute.xlu0 %3397
        %3399 = vrot.lane.b32.xlu0 %v3145, 48
        %v3400 = vpop.permute.xlu0 %3399
        %3401 = vrot.lane.b32.xlu0 %v3146, 48
        %v3402 = vpop.permute.xlu0 %3401
        %3403 = vrot.lane.b32.xlu0 %v3147, 48
        %v3404 = vpop.permute.xlu0 %3403
        %3405 = vrot.lane.b32.xlu0 %v3148, 48
        %v3406 = vpop.permute.xlu0 %3405
        %v3408 = vsel %vm1031, %v3392, 0
        %v3411 = vsel %vm1031, %v3394, 0
        %v3414 = vsel %vm1031, %v3396, 0
        %v3417 = vsel %vm1031, %v3398, 0
        %v3420 = vsel %vm1031, %v3400, 0
        %v3423 = vsel %vm1031, %v3402, 0
        %v3426 = vsel %vm1031, %v3404, 0
        %v3429 = vsel %vm1031, %v3406, 0
        %3431 = vmatpush.bf16.xpose.msra.mxu0 0
        %3432 = vmatpush.bf16.xpose.msra.mxu0 0
        %3433 = vmatpush.bf16.xpose.msra.mxu0 0
        %3434 = vmatpush.bf16.xpose.msra.mxu0 0
        %3435 = vmatpush.bf16.xpose.msra.mxu0 %v3429
        %3436 = vmatpush.bf16.xpose.msra.mxu0 %v3426
        %3437 = vmatpush.bf16.xpose.msra.mxu0 %v3423
        %3438 = vmatpush.bf16.xpose.msra.mxu0 %v3420
        %3439 = vmatmul.bf16.gmra.mxu0 %v3408
        %v3440 = vpop.f32.mrf.mxu0
        %v3441 = vadd.f32 %v814, %v3440
        %v3442 = vpop.f32.mrf.mxu0
        %v3443 = vadd.f32 %v815, %v3442
        %3444 = vmatmul.bf16.gmra.mxu0 %v3411
        %v3445 = vpop.f32.mrf.mxu0
        %v3446 = vadd.f32 %v816, %v3445
        %v3447 = vpop.f32.mrf.mxu0
        %v3448 = vadd.f32 %v817, %v3447
        %3449 = vmatmul.bf16.gmra.mxu0 %v3414
        %v3450 = vpop.f32.mrf.mxu0
        %v3451 = vadd.f32 %v818, %v3450
        %v3452 = vpop.f32.mrf.mxu0
        %v3453 = vadd.f32 %v819, %v3452
        %3454 = vmatmul.bf16.gmra.mxu0 %v3417
        %v3455 = vpop.f32.mrf.mxu0
        %v3456 = vadd.f32 %v820, %v3455
        %v3457 = vpop.f32.mrf.mxu0
        %v3458 = vadd.f32 %v821, %v3457
        %3459 = vdwg.mxu0
        %v3460 = vsel %vm880, %v3441, -inf
        %3461 = vmax.xlane.f32.xlu0 %v3460
        %v3462 = vpop.xlane.xlu0 %3461
        %v3463 = vsel %vm880, %v3443, -inf
        %3464 = vmax.xlane.f32.xlu0 %v3463
        %v3465 = vpop.xlane.xlu0 %3464
        %v3466 = vsel %vm880, %v3446, -inf
        %3467 = vmax.xlane.f32.xlu0 %v3466
        %v3468 = vpop.xlane.xlu0 %3467
        %v3469 = vsel %vm880, %v3448, -inf
        %3470 = vmax.xlane.f32.xlu0 %v3469
        %v3471 = vpop.xlane.xlu0 %3470
        %v3472 = vsel %vm880, %v3451, -inf
        %3473 = vmax.xlane.f32.xlu0 %v3472
        %v3474 = vpop.xlane.xlu0 %3473
        %v3475 = vsel %vm880, %v3453, -inf
        %3476 = vmax.xlane.f32.xlu0 %v3475
        %v3477 = vpop.xlane.xlu0 %3476
        %v3478 = vsel %vm880, %v3456, -inf
        %3479 = vmax.xlane.f32.xlu0 %v3478
        %v3480 = vpop.xlane.xlu0 %3479
        %v3481 = vsel %vm880, %v3458, -inf
        %3482 = vmax.xlane.f32.xlu0 %v3481
        %v3483 = vpop.xlane.xlu0 %3482
        %v3484 = vsub.f32 %v3441, %v3462
        %v3485 = vsub.f32 %v3443, %v3465
        %v3486 = vsub.f32 %v3446, %v3468
        %v3487 = vsub.f32 %v3448, %v3471
        %v3488 = vsub.f32 %v3451, %v3474
        %v3489 = vsub.f32 %v3453, %v3477
        %v3490 = vsub.f32 %v3456, %v3480
        %v3491 = vsub.f32 %v3458, %v3483
        %v3492 = vmul.f32 %v3484, 1.442695
        %v3493 = vpow.pop %v3492
        %v3494 = vmul.f32 %v3485, 1.442695
        %v3495 = vpow.pop %v3494
        %v3496 = vmul.f32 %v3486, 1.442695
        %v3497 = vpow.pop %v3496
        %v3498 = vmul.f32 %v3487, 1.442695
        %v3499 = vpow.pop %v3498
        %v3500 = vmul.f32 %v3488, 1.442695
        %v3501 = vpow.pop %v3500
        %v3502 = vmul.f32 %v3489, 1.442695
        %v3503 = vpow.pop %v3502
        %v3504 = vmul.f32 %v3490, 1.442695
        %v3505 = vpow.pop %v3504
        %v3506 = vmul.f32 %v3491, 1.442695
        %v3507 = vpow.pop %v3506
        %v3508 = vsel %vm880, %v3493, 0.0
        %3509 = vadd.xlane.f32.xlu0 %v3508
        %v3510 = vpop.xlane.xlu0 %3509
        %v3511 = vsel %vm880, %v3495, 0.0
        %3512 = vadd.xlane.f32.xlu0 %v3511
        %v3513 = vpop.xlane.xlu0 %3512
        %v3514 = vsel %vm880, %v3497, 0.0
        %3515 = vadd.xlane.f32.xlu0 %v3514
        %v3516 = vpop.xlane.xlu0 %3515
        %v3517 = vsel %vm880, %v3499, 0.0
        %3518 = vadd.xlane.f32.xlu0 %v3517
        %v3519 = vpop.xlane.xlu0 %3518
        %v3520 = vsel %vm880, %v3501, 0.0
        %3521 = vadd.xlane.f32.xlu0 %v3520
        %v3522 = vpop.xlane.xlu0 %3521
        %v3523 = vsel %vm880, %v3503, 0.0
        %3524 = vadd.xlane.f32.xlu0 %v3523
        %v3525 = vpop.xlane.xlu0 %3524
        %v3526 = vsel %vm880, %v3505, 0.0
        %3527 = vadd.xlane.f32.xlu0 %v3526
        %v3528 = vpop.xlane.xlu0 %3527
        %v3529 = vsel %vm880, %v3507, 0.0
        %3530 = vadd.xlane.f32.xlu0 %v3529
        %v3531 = vpop.xlane.xlu0 %3530
        %v3532 = vrcp.pop %v3510
        %v3533 = vrcp.pop %v3513
        %v3534 = vrcp.pop %v3516
        %v3535 = vrcp.pop %v3519
        %v3536 = vrcp.pop %v3522
        %v3537 = vrcp.pop %v3525
        %v3538 = vrcp.pop %v3528
        %v3539 = vrcp.pop %v3531
        %v3540 = vmul.f32 %v3493, %v3532
        %v3541 = vmul.f32 %v3495, %v3533
        %v3542 = vmul.f32 %v3497, %v3534
        %v3543 = vmul.f32 %v3499, %v3535
        %v3544 = vmul.f32 %v3501, %v3536
        %v3545 = vmul.f32 %v3503, %v3537
        %v3546 = vmul.f32 %v3505, %v3538
        %v3547 = vmul.f32 %v3507, %v3539
        %v3548 = vpack.c.bf16 %v3540, %v3540
        %v3549 = vpack.c.bf16 %v3541, %v3541
        %v3550 = vpack.c.bf16 %v3542, %v3542
        %v3551 = vpack.c.bf16 %v3543, %v3543
        %v3552 = vpack.c.bf16 %v3544, %v3544
        %v3553 = vpack.c.bf16 %v3545, %v3545
        %v3554 = vpack.c.bf16 %v3546, %v3546
        %v3555 = vpack.c.bf16 %v3547, %v3547
        %v3564 = vunpack.c.l.b16 %v3548
        %v3565 = vunpack.c.l.b16 %v3549
        %v3566 = vunpack.c.l.b16 %v3550
        %v3567 = vunpack.c.l.b16 %v3551
        %v3568 = vunpack.c.l.b16 %v3552
        %v3569 = vunpack.c.l.b16 %v3553
        %v3570 = vunpack.c.l.b16 %v3554
        %v3571 = vunpack.c.l.b16 %v3555
        %v3572 = vpack.c.b16 %v3565, %v3564
        %v3573 = vpack.c.b16 %v3567, %v3566
        %v3574 = vpack.c.b16 %v3569, %v3568
        %v3575 = vpack.c.b16 %v3571, %v3570
        %3576 = vrot.lane.b32.xlu0 %v3342, 112
        %v3577 = vpop.permute.xlu0 %3576
        %3578 = vrot.lane.b32.xlu0 %v3343, 112
        %v3579 = vpop.permute.xlu0 %3578
        %3580 = vrot.lane.b32.xlu0 %v3344, 112
        %v3581 = vpop.permute.xlu0 %3580
        %3582 = vrot.lane.b32.xlu0 %v3345, 112
        %v3583 = vpop.permute.xlu0 %3582
        %v3589 = vsel %vm880, %v3572, 0
        %v3592 = vsel %vm880, %v3573, 0
        %v3595 = vsel %vm880, %v3574, 0
        %v3598 = vsel %vm880, %v3575, 0
        %3600 = vmatpush.bf16.msra.mxu0 0
        %3601 = vmatpush.bf16.msra.mxu0 0
        %3602 = vmatpush.bf16.msra.mxu0 0
        %3603 = vmatpush.bf16.msra.mxu0 0
        %3604 = vmatpush.bf16.msra.mxu0 %v3583
        %3605 = vmatpush.bf16.msra.mxu0 %v3581
        %3606 = vmatpush.bf16.msra.mxu0 %v3579
        %3607 = vmatpush.bf16.msra.mxu0 %v3577
        %3608 = vmatmul.bf16.gmra.mxu0 %v3589
        %v3609 = vpop.f32.mrf.mxu0
        %v3610 = vadd.f32 0.0, %v3609
        %v3611 = vpop.f32.mrf.mxu0
        %v3612 = vadd.f32 0.0, %v3611
        %3613 = vmatmul.bf16.gmra.mxu0 %v3592
        %v3614 = vpop.f32.mrf.mxu0
        %v3615 = vadd.f32 0.0, %v3614
        %v3616 = vpop.f32.mrf.mxu0
        %v3617 = vadd.f32 0.0, %v3616
        %3618 = vmatmul.bf16.gmra.mxu0 %v3595
        %v3619 = vpop.f32.mrf.mxu0
        %v3620 = vadd.f32 0.0, %v3619
        %v3621 = vpop.f32.mrf.mxu0
        %v3622 = vadd.f32 0.0, %v3621
        %3623 = vmatmul.bf16.gmra.mxu0 %v3598
        %v3624 = vpop.f32.mrf.mxu0
        %v3625 = vadd.f32 0.0, %v3624
        %v3626 = vpop.f32.mrf.mxu0
        %v3627 = vadd.f32 0.0, %v3626
        %3628 = vdwg.mxu0
        %3629 = vrot.lane.b32.xlu0 %v3125, 96
        %v3630 = vpop.permute.xlu0 %3629
        %3631 = vrot.lane.b32.xlu0 %v3126, 96
        %v3632 = vpop.permute.xlu0 %3631
        %3633 = vrot.lane.b32.xlu0 %v3127, 96
        %v3634 = vpop.permute.xlu0 %3633
        %3635 = vrot.lane.b32.xlu0 %v3128, 96
        %v3636 = vpop.permute.xlu0 %3635
        %3637 = vrot.lane.b32.xlu0 %v3145, 32
        %v3638 = vpop.permute.xlu0 %3637
        %3639 = vrot.lane.b32.xlu0 %v3146, 32
        %v3640 = vpop.permute.xlu0 %3639
        %3641 = vrot.lane.b32.xlu0 %v3147, 32
        %v3642 = vpop.permute.xlu0 %3641
        %3643 = vrot.lane.b32.xlu0 %v3148, 32
        %v3644 = vpop.permute.xlu0 %3643
        %v3646 = vsel %vm1031, %v3630, 0
        %v3649 = vsel %vm1031, %v3632, 0
        %v3652 = vsel %vm1031, %v3634, 0
        %v3655 = vsel %vm1031, %v3636, 0
        %v3658 = vsel %vm1031, %v3638, 0
        %v3661 = vsel %vm1031, %v3640, 0
        %v3664 = vsel %vm1031, %v3642, 0
        %v3667 = vsel %vm1031, %v3644, 0
        %3669 = vmatpush.bf16.xpose.msra.mxu0 0
        %3670 = vmatpush.bf16.xpose.msra.mxu0 0
        %3671 = vmatpush.bf16.xpose.msra.mxu0 0
        %3672 = vmatpush.bf16.xpose.msra.mxu0 0
        %3673 = vmatpush.bf16.xpose.msra.mxu0 %v3667
        %3674 = vmatpush.bf16.xpose.msra.mxu0 %v3664
        %3675 = vmatpush.bf16.xpose.msra.mxu0 %v3661
        %3676 = vmatpush.bf16.xpose.msra.mxu0 %v3658
        %3677 = vmatmul.bf16.gmra.mxu0 %v3646
        %v3678 = vpop.f32.mrf.mxu0
        %v3679 = vadd.f32 %v814, %v3678
        %v3680 = vpop.f32.mrf.mxu0
        %v3681 = vadd.f32 %v815, %v3680
        %3682 = vmatmul.bf16.gmra.mxu0 %v3649
        %v3683 = vpop.f32.mrf.mxu0
        %v3684 = vadd.f32 %v816, %v3683
        %v3685 = vpop.f32.mrf.mxu0
        %v3686 = vadd.f32 %v817, %v3685
        %3687 = vmatmul.bf16.gmra.mxu0 %v3652
        %v3688 = vpop.f32.mrf.mxu0
        %v3689 = vadd.f32 %v818, %v3688
        %v3690 = vpop.f32.mrf.mxu0
        %v3691 = vadd.f32 %v819, %v3690
        %3692 = vmatmul.bf16.gmra.mxu0 %v3655
        %v3693 = vpop.f32.mrf.mxu0
        %v3694 = vadd.f32 %v820, %v3693
        %v3695 = vpop.f32.mrf.mxu0
        %v3696 = vadd.f32 %v821, %v3695
        %3697 = vdwg.mxu0
        %v3698 = vsel %vm880, %v3679, -inf
        %3699 = vmax.xlane.f32.xlu0 %v3698
        %v3700 = vpop.xlane.xlu0 %3699
        %v3701 = vsel %vm880, %v3681, -inf
        %3702 = vmax.xlane.f32.xlu0 %v3701
        %v3703 = vpop.xlane.xlu0 %3702
        %v3704 = vsel %vm880, %v3684, -inf
        %3705 = vmax.xlane.f32.xlu0 %v3704
        %v3706 = vpop.xlane.xlu0 %3705
        %v3707 = vsel %vm880, %v3686, -inf
        %3708 = vmax.xlane.f32.xlu0 %v3707
        %v3709 = vpop.xlane.xlu0 %3708
        %v3710 = vsel %vm880, %v3689, -inf
        %3711 = vmax.xlane.f32.xlu0 %v3710
        %v3712 = vpop.xlane.xlu0 %3711
        %v3713 = vsel %vm880, %v3691, -inf
        %3714 = vmax.xlane.f32.xlu0 %v3713
        %v3715 = vpop.xlane.xlu0 %3714
        %v3716 = vsel %vm880, %v3694, -inf
        %3717 = vmax.xlane.f32.xlu0 %v3716
        %v3718 = vpop.xlane.xlu0 %3717
        %v3719 = vsel %vm880, %v3696, -inf
        %3720 = vmax.xlane.f32.xlu0 %v3719
        %v3721 = vpop.xlane.xlu0 %3720
        %v3722 = vsub.f32 %v3679, %v3700
        %v3723 = vsub.f32 %v3681, %v3703
        %v3724 = vsub.f32 %v3684, %v3706
        %v3725 = vsub.f32 %v3686, %v3709
        %v3726 = vsub.f32 %v3689, %v3712
        %v3727 = vsub.f32 %v3691, %v3715
        %v3728 = vsub.f32 %v3694, %v3718
        %v3729 = vsub.f32 %v3696, %v3721
        %v3730 = vmul.f32 %v3722, 1.442695
        %v3731 = vpow.pop %v3730
        %v3732 = vmul.f32 %v3723, 1.442695
        %v3733 = vpow.pop %v3732
        %v3734 = vmul.f32 %v3724, 1.442695
        %v3735 = vpow.pop %v3734
        %v3736 = vmul.f32 %v3725, 1.442695
        %v3737 = vpow.pop %v3736
        %v3738 = vmul.f32 %v3726, 1.442695
        %v3739 = vpow.pop %v3738
        %v3740 = vmul.f32 %v3727, 1.442695
        %v3741 = vpow.pop %v3740
        %v3742 = vmul.f32 %v3728, 1.442695
        %v3743 = vpow.pop %v3742
        %v3744 = vmul.f32 %v3729, 1.442695
        %v3745 = vpow.pop %v3744
        %v3746 = vsel %vm880, %v3731, 0.0
        %3747 = vadd.xlane.f32.xlu0 %v3746
        %v3748 = vpop.xlane.xlu0 %3747
        %v3749 = vsel %vm880, %v3733, 0.0
        %3750 = vadd.xlane.f32.xlu0 %v3749
        %v3751 = vpop.xlane.xlu0 %3750
        %v3752 = vsel %vm880, %v3735, 0.0
        %3753 = vadd.xlane.f32.xlu0 %v3752
        %v3754 = vpop.xlane.xlu0 %3753
        %v3755 = vsel %vm880, %v3737, 0.0
        %3756 = vadd.xlane.f32.xlu0 %v3755
        %v3757 = vpop.xlane.xlu0 %3756
        %v3758 = vsel %vm880, %v3739, 0.0
        %3759 = vadd.xlane.f32.xlu0 %v3758
        %v3760 = vpop.xlane.xlu0 %3759
        %v3761 = vsel %vm880, %v3741, 0.0
        %3762 = vadd.xlane.f32.xlu0 %v3761
        %v3763 = vpop.xlane.xlu0 %3762
        %v3764 = vsel %vm880, %v3743, 0.0
        %3765 = vadd.xlane.f32.xlu0 %v3764
        %v3766 = vpop.xlane.xlu0 %3765
        %v3767 = vsel %vm880, %v3745, 0.0
        %3768 = vadd.xlane.f32.xlu0 %v3767
        %v3769 = vpop.xlane.xlu0 %3768
        %v3770 = vrcp.pop %v3748
        %v3771 = vrcp.pop %v3751
        %v3772 = vrcp.pop %v3754
        %v3773 = vrcp.pop %v3757
        %v3774 = vrcp.pop %v3760
        %v3775 = vrcp.pop %v3763
        %v3776 = vrcp.pop %v3766
        %v3777 = vrcp.pop %v3769
        %v3778 = vmul.f32 %v3731, %v3770
        %v3779 = vmul.f32 %v3733, %v3771
        %v3780 = vmul.f32 %v3735, %v3772
        %v3781 = vmul.f32 %v3737, %v3773
        %v3782 = vmul.f32 %v3739, %v3774
        %v3783 = vmul.f32 %v3741, %v3775
        %v3784 = vmul.f32 %v3743, %v3776
        %v3785 = vmul.f32 %v3745, %v3777
        %v3786 = vpack.c.bf16 %v3778, %v3778
        %v3787 = vpack.c.bf16 %v3779, %v3779
        %v3788 = vpack.c.bf16 %v3780, %v3780
        %v3789 = vpack.c.bf16 %v3781, %v3781
        %v3790 = vpack.c.bf16 %v3782, %v3782
        %v3791 = vpack.c.bf16 %v3783, %v3783
        %v3792 = vpack.c.bf16 %v3784, %v3784
        %v3793 = vpack.c.bf16 %v3785, %v3785
        %v3802 = vunpack.c.l.b16 %v3786
        %v3803 = vunpack.c.l.b16 %v3787
        %v3804 = vunpack.c.l.b16 %v3788
        %v3805 = vunpack.c.l.b16 %v3789
        %v3806 = vunpack.c.l.b16 %v3790
        %v3807 = vunpack.c.l.b16 %v3791
        %v3808 = vunpack.c.l.b16 %v3792
        %v3809 = vunpack.c.l.b16 %v3793
        %v3810 = vpack.c.b16 %v3803, %v3802
        %v3811 = vpack.c.b16 %v3805, %v3804
        %v3812 = vpack.c.b16 %v3807, %v3806
        %v3813 = vpack.c.b16 %v3809, %v3808
        %3814 = vrot.lane.b32.xlu0 %v3342, 96
        %v3815 = vpop.permute.xlu0 %3814
        %3816 = vrot.lane.b32.xlu0 %v3343, 96
        %v3817 = vpop.permute.xlu0 %3816
        %3818 = vrot.lane.b32.xlu0 %v3344, 96
        %v3819 = vpop.permute.xlu0 %3818
        %3820 = vrot.lane.b32.xlu0 %v3345, 96
        %v3821 = vpop.permute.xlu0 %3820
        %v3827 = vsel %vm880, %v3810, 0
        %v3830 = vsel %vm880, %v3811, 0
        %v3833 = vsel %vm880, %v3812, 0
        %v3836 = vsel %vm880, %v3813, 0
        %3838 = vmatpush.bf16.msra.mxu0 0
        %3839 = vmatpush.bf16.msra.mxu0 0
        %3840 = vmatpush.bf16.msra.mxu0 0
        %3841 = vmatpush.bf16.msra.mxu0 0
        %3842 = vmatpush.bf16.msra.mxu0 %v3821
        %3843 = vmatpush.bf16.msra.mxu0 %v3819
        %3844 = vmatpush.bf16.msra.mxu0 %v3817
        %3845 = vmatpush.bf16.msra.mxu0 %v3815
        %3846 = vmatmul.bf16.gmra.mxu0 %v3827
        %v3847 = vpop.f32.mrf.mxu0
        %v3848 = vadd.f32 0.0, %v3847
        %v3849 = vpop.f32.mrf.mxu0
        %v3850 = vadd.f32 0.0, %v3849
        %3851 = vmatmul.bf16.gmra.mxu0 %v3830
        %v3852 = vpop.f32.mrf.mxu0
        %v3853 = vadd.f32 0.0, %v3852
        %v3854 = vpop.f32.mrf.mxu0
        %v3855 = vadd.f32 0.0, %v3854
        %3856 = vmatmul.bf16.gmra.mxu0 %v3833
        %v3857 = vpop.f32.mrf.mxu0
        %v3858 = vadd.f32 0.0, %v3857
        %v3859 = vpop.f32.mrf.mxu0
        %v3860 = vadd.f32 0.0, %v3859
        %3861 = vmatmul.bf16.gmra.mxu0 %v3836
        %v3862 = vpop.f32.mrf.mxu0
        %v3863 = vadd.f32 0.0, %v3862
        %v3864 = vpop.f32.mrf.mxu0
        %v3865 = vadd.f32 0.0, %v3864
        %3866 = vdwg.mxu0
        %3867 = vrot.lane.b32.xlu0 %v3125, 80
        %v3868 = vpop.permute.xlu0 %3867
        %3869 = vrot.lane.b32.xlu0 %v3126, 80
        %v3870 = vpop.permute.xlu0 %3869
        %3871 = vrot.lane.b32.xlu0 %v3127, 80
        %v3872 = vpop.permute.xlu0 %3871
        %3873 = vrot.lane.b32.xlu0 %v3128, 80
        %v3874 = vpop.permute.xlu0 %3873
        %3875 = vrot.lane.b32.xlu0 %v3145, 16
        %v3876 = vpop.permute.xlu0 %3875
        %3877 = vrot.lane.b32.xlu0 %v3146, 16
        %v3878 = vpop.permute.xlu0 %3877
        %3879 = vrot.lane.b32.xlu0 %v3147, 16
        %v3880 = vpop.permute.xlu0 %3879
        %3881 = vrot.lane.b32.xlu0 %v3148, 16
        %v3882 = vpop.permute.xlu0 %3881
        %v3884 = vsel %vm1031, %v3868, 0
        %v3887 = vsel %vm1031, %v3870, 0
        %v3890 = vsel %vm1031, %v3872, 0
        %v3893 = vsel %vm1031, %v3874, 0
        %v3896 = vsel %vm1031, %v3876, 0
        %v3899 = vsel %vm1031, %v3878, 0
        %v3902 = vsel %vm1031, %v3880, 0
        %v3905 = vsel %vm1031, %v3882, 0
        %3907 = vmatpush.bf16.xpose.msra.mxu0 0
        %3908 = vmatpush.bf16.xpose.msra.mxu0 0
        %3909 = vmatpush.bf16.xpose.msra.mxu0 0
        %3910 = vmatpush.bf16.xpose.msra.mxu0 0
        %3911 = vmatpush.bf16.xpose.msra.mxu0 %v3905
        %3912 = vmatpush.bf16.xpose.msra.mxu0 %v3902
        %3913 = vmatpush.bf16.xpose.msra.mxu0 %v3899
        %3914 = vmatpush.bf16.xpose.msra.mxu0 %v3896
        %3915 = vmatmul.bf16.gmra.mxu0 %v3884
        %v3916 = vpop.f32.mrf.mxu0
        %v3917 = vadd.f32 %v814, %v3916
        %v3918 = vpop.f32.mrf.mxu0
        %v3919 = vadd.f32 %v815, %v3918
        %3920 = vmatmul.bf16.gmra.mxu0 %v3887
        %v3921 = vpop.f32.mrf.mxu0
        %v3922 = vadd.f32 %v816, %v3921
        %v3923 = vpop.f32.mrf.mxu0
        %v3924 = vadd.f32 %v817, %v3923
        %3925 = vmatmul.bf16.gmra.mxu0 %v3890
        %v3926 = vpop.f32.mrf.mxu0
        %v3927 = vadd.f32 %v818, %v3926
        %v3928 = vpop.f32.mrf.mxu0
        %v3929 = vadd.f32 %v819, %v3928
        %3930 = vmatmul.bf16.gmra.mxu0 %v3893
        %v3931 = vpop.f32.mrf.mxu0
        %v3932 = vadd.f32 %v820, %v3931
        %v3933 = vpop.f32.mrf.mxu0
        %v3934 = vadd.f32 %v821, %v3933
        %3935 = vdwg.mxu0
        %v3936 = vsel %vm880, %v3917, -inf
        %3937 = vmax.xlane.f32.xlu0 %v3936
        %v3938 = vpop.xlane.xlu0 %3937
        %v3939 = vsel %vm880, %v3919, -inf
        %3940 = vmax.xlane.f32.xlu0 %v3939
        %v3941 = vpop.xlane.xlu0 %3940
        %v3942 = vsel %vm880, %v3922, -inf
        %3943 = vmax.xlane.f32.xlu0 %v3942
        %v3944 = vpop.xlane.xlu0 %3943
        %v3945 = vsel %vm880, %v3924, -inf
        %3946 = vmax.xlane.f32.xlu0 %v3945
        %v3947 = vpop.xlane.xlu0 %3946
        %v3948 = vsel %vm880, %v3927, -inf
        %3949 = vmax.xlane.f32.xlu0 %v3948
        %v3950 = vpop.xlane.xlu0 %3949
        %v3951 = vsel %vm880, %v3929, -inf
        %3952 = vmax.xlane.f32.xlu0 %v3951
        %v3953 = vpop.xlane.xlu0 %3952
        %v3954 = vsel %vm880, %v3932, -inf
        %3955 = vmax.xlane.f32.xlu0 %v3954
        %v3956 = vpop.xlane.xlu0 %3955
        %v3957 = vsel %vm880, %v3934, -inf
        %3958 = vmax.xlane.f32.xlu0 %v3957
        %v3959 = vpop.xlane.xlu0 %3958
        %v3960 = vsub.f32 %v3917, %v3938
        %v3961 = vsub.f32 %v3919, %v3941
        %v3962 = vsub.f32 %v3922, %v3944
        %v3963 = vsub.f32 %v3924, %v3947
        %v3964 = vsub.f32 %v3927, %v3950
        %v3965 = vsub.f32 %v3929, %v3953
        %v3966 = vsub.f32 %v3932, %v3956
        %v3967 = vsub.f32 %v3934, %v3959
        %v3968 = vmul.f32 %v3960, 1.442695
        %v3969 = vpow.pop %v3968
        %v3970 = vmul.f32 %v3961, 1.442695
        %v3971 = vpow.pop %v3970
        %v3972 = vmul.f32 %v3962, 1.442695
        %v3973 = vpow.pop %v3972
        %v3974 = vmul.f32 %v3963, 1.442695
        %v3975 = vpow.pop %v3974
        %v3976 = vmul.f32 %v3964, 1.442695
        %v3977 = vpow.pop %v3976
        %v3978 = vmul.f32 %v3965, 1.442695
        %v3979 = vpow.pop %v3978
        %v3980 = vmul.f32 %v3966, 1.442695
        %v3981 = vpow.pop %v3980
        %v3982 = vmul.f32 %v3967, 1.442695
        %v3983 = vpow.pop %v3982
        %v3984 = vsel %vm880, %v3969, 0.0
        %3985 = vadd.xlane.f32.xlu0 %v3984
        %v3986 = vpop.xlane.xlu0 %3985
        %v3987 = vsel %vm880, %v3971, 0.0
        %3988 = vadd.xlane.f32.xlu0 %v3987
        %v3989 = vpop.xlane.xlu0 %3988
        %v3990 = vsel %vm880, %v3973, 0.0
        %3991 = vadd.xlane.f32.xlu0 %v3990
        %v3992 = vpop.xlane.xlu0 %3991
        %v3993 = vsel %vm880, %v3975, 0.0
        %3994 = vadd.xlane.f32.xlu0 %v3993
        %v3995 = vpop.xlane.xlu0 %3994
        %v3996 = vsel %vm880, %v3977, 0.0
        %3997 = vadd.xlane.f32.xlu0 %v3996
        %v3998 = vpop.xlane.xlu0 %3997
        %v3999 = vsel %vm880, %v3979, 0.0
        %4000 = vadd.xlane.f32.xlu0 %v3999
        %v4001 = vpop.xlane.xlu0 %4000
        %v4002 = vsel %vm880, %v3981, 0.0
        %4003 = vadd.xlane.f32.xlu0 %v4002
        %v4004 = vpop.xlane.xlu0 %4003
        %v4005 = vsel %vm880, %v3983, 0.0
        %4006 = vadd.xlane.f32.xlu0 %v4005
        %v4007 = vpop.xlane.xlu0 %4006
        %v4008 = vrcp.pop %v3986
        %v4009 = vrcp.pop %v3989
        %v4010 = vrcp.pop %v3992
        %v4011 = vrcp.pop %v3995
        %v4012 = vrcp.pop %v3998
        %v4013 = vrcp.pop %v4001
        %v4014 = vrcp.pop %v4004
        %v4015 = vrcp.pop %v4007
        %v4016 = vmul.f32 %v3969, %v4008
        %v4017 = vmul.f32 %v3971, %v4009
        %v4018 = vmul.f32 %v3973, %v4010
        %v4019 = vmul.f32 %v3975, %v4011
        %v4020 = vmul.f32 %v3977, %v4012
        %v4021 = vmul.f32 %v3979, %v4013
        %v4022 = vmul.f32 %v3981, %v4014
        %v4023 = vmul.f32 %v3983, %v4015
        %v4024 = vpack.c.bf16 %v4016, %v4016
        %v4025 = vpack.c.bf16 %v4017, %v4017
        %v4026 = vpack.c.bf16 %v4018, %v4018
        %v4027 = vpack.c.bf16 %v4019, %v4019
        %v4028 = vpack.c.bf16 %v4020, %v4020
        %v4029 = vpack.c.bf16 %v4021, %v4021
        %v4030 = vpack.c.bf16 %v4022, %v4022
        %v4031 = vpack.c.bf16 %v4023, %v4023
        %v4040 = vunpack.c.l.b16 %v4024
        %v4041 = vunpack.c.l.b16 %v4025
        %v4042 = vunpack.c.l.b16 %v4026
        %v4043 = vunpack.c.l.b16 %v4027
        %v4044 = vunpack.c.l.b16 %v4028
        %v4045 = vunpack.c.l.b16 %v4029
        %v4046 = vunpack.c.l.b16 %v4030
        %v4047 = vunpack.c.l.b16 %v4031
        %v4048 = vpack.c.b16 %v4041, %v4040
        %v4049 = vpack.c.b16 %v4043, %v4042
        %v4050 = vpack.c.b16 %v4045, %v4044
        %v4051 = vpack.c.b16 %v4047, %v4046
        %4052 = vrot.lane.b32.xlu0 %v3342, 80
        %v4053 = vpop.permute.xlu0 %4052
        %4054 = vrot.lane.b32.xlu0 %v3343, 80
        %v4055 = vpop.permute.xlu0 %4054
        %4056 = vrot.lane.b32.xlu0 %v3344, 80
        %v4057 = vpop.permute.xlu0 %4056
        %4058 = vrot.lane.b32.xlu0 %v3345, 80
        %v4059 = vpop.permute.xlu0 %4058
        %v4065 = vsel %vm880, %v4048, 0
        %v4068 = vsel %vm880, %v4049, 0
        %v4071 = vsel %vm880, %v4050, 0
        %v4074 = vsel %vm880, %v4051, 0
        %4076 = vmatpush.bf16.msra.mxu0 0
        %4077 = vmatpush.bf16.msra.mxu0 0
        %4078 = vmatpush.bf16.msra.mxu0 0
        %4079 = vmatpush.bf16.msra.mxu0 0
        %4080 = vmatpush.bf16.msra.mxu0 %v4059
        %4081 = vmatpush.bf16.msra.mxu0 %v4057
        %4082 = vmatpush.bf16.msra.mxu0 %v4055
        %4083 = vmatpush.bf16.msra.mxu0 %v4053
        %4084 = vmatmul.bf16.gmra.mxu0 %v4065
        %v4085 = vpop.f32.mrf.mxu0
        %v4086 = vadd.f32 0.0, %v4085
        %v4087 = vpop.f32.mrf.mxu0
        %v4088 = vadd.f32 0.0, %v4087
        %4089 = vmatmul.bf16.gmra.mxu0 %v4068
        %v4090 = vpop.f32.mrf.mxu0
        %v4091 = vadd.f32 0.0, %v4090
        %v4092 = vpop.f32.mrf.mxu0
        %v4093 = vadd.f32 0.0, %v4092
        %4094 = vmatmul.bf16.gmra.mxu0 %v4071
        %v4095 = vpop.f32.mrf.mxu0
        %v4096 = vadd.f32 0.0, %v4095
        %v4097 = vpop.f32.mrf.mxu0
        %v4098 = vadd.f32 0.0, %v4097
        %4099 = vmatmul.bf16.gmra.mxu0 %v4074
        %v4100 = vpop.f32.mrf.mxu0
        %v4101 = vadd.f32 0.0, %v4100
        %v4102 = vpop.f32.mrf.mxu0
        %v4103 = vadd.f32 0.0, %v4102
        %4104 = vdwg.mxu0
        %4113 = vrot.lane.b32.xlu0 %v3610, 16
        %v4114 = vpop.permute.xlu0 %4113
        %4115 = vrot.lane.b32.xlu0 %v3612, 16
        %v4116 = vpop.permute.xlu0 %4115
        %4117 = vrot.lane.b32.xlu0 %v3615, 16
        %v4118 = vpop.permute.xlu0 %4117
        %4119 = vrot.lane.b32.xlu0 %v3617, 16
        %v4120 = vpop.permute.xlu0 %4119
        %4121 = vrot.lane.b32.xlu0 %v3620, 16
        %v4122 = vpop.permute.xlu0 %4121
        %4123 = vrot.lane.b32.xlu0 %v3622, 16
        %v4124 = vpop.permute.xlu0 %4123
        %4125 = vrot.lane.b32.xlu0 %v3625, 16
        %v4126 = vpop.permute.xlu0 %4125
        %4127 = vrot.lane.b32.xlu0 %v3627, 16
        %v4128 = vpop.permute.xlu0 %4127
        %4145 = vrot.lane.b32.xlu0 %v3848, 32
        %v4146 = vpop.permute.xlu0 %4145
        %4147 = vrot.lane.b32.xlu0 %v3850, 32
        %v4148 = vpop.permute.xlu0 %4147
        %4149 = vrot.lane.b32.xlu0 %v3853, 32
        %v4150 = vpop.permute.xlu0 %4149
        %4151 = vrot.lane.b32.xlu0 %v3855, 32
        %v4152 = vpop.permute.xlu0 %4151
        %4153 = vrot.lane.b32.xlu0 %v3858, 32
        %v4154 = vpop.permute.xlu0 %4153
        %4155 = vrot.lane.b32.xlu0 %v3860, 32
        %v4156 = vpop.permute.xlu0 %4155
        %4157 = vrot.lane.b32.xlu0 %v3863, 32
        %v4158 = vpop.permute.xlu0 %4157
        %4159 = vrot.lane.b32.xlu0 %v3865, 32
        %v4160 = vpop.permute.xlu0 %4159
        %4177 = vrot.lane.b32.xlu0 %v4086, 48
        %v4178 = vpop.permute.xlu0 %4177
        %4179 = vrot.lane.b32.xlu0 %v4088, 48
        %v4180 = vpop.permute.xlu0 %4179
        %4181 = vrot.lane.b32.xlu0 %v4091, 48
        %v4182 = vpop.permute.xlu0 %4181
        %4183 = vrot.lane.b32.xlu0 %v4093, 48
        %v4184 = vpop.permute.xlu0 %4183
        %4185 = vrot.lane.b32.xlu0 %v4096, 48
        %v4186 = vpop.permute.xlu0 %4185
        %4187 = vrot.lane.b32.xlu0 %v4098, 48
        %v4188 = vpop.permute.xlu0 %4187
        %4189 = vrot.lane.b32.xlu0 %v4101, 48
        %v4190 = vpop.permute.xlu0 %4189
        %4191 = vrot.lane.b32.xlu0 %v4103, 48
        %v4192 = vpop.permute.xlu0 %4191
        %v4201 = vsel %vm1031, %v3372, %v4114
        %v4202 = vsel %vm1031, %v3374, %v4116
        %v4203 = vsel %vm1031, %v3377, %v4118
        %v4204 = vsel %vm1031, %v3379, %v4120
        %v4205 = vsel %vm1031, %v3382, %v4122
        %v4206 = vsel %vm1031, %v3384, %v4124
        %v4207 = vsel %vm1031, %v3387, %v4126
        %v4208 = vsel %vm1031, %v3389, %v4128
        %v4209 = vsel %vm763, %v4201, %v4146
        %v4210 = vsel %vm763, %v4202, %v4148
        %v4211 = vsel %vm763, %v4203, %v4150
        %v4212 = vsel %vm763, %v4204, %v4152
        %v4213 = vsel %vm763, %v4205, %v4154
        %v4214 = vsel %vm763, %v4206, %v4156
        %v4215 = vsel %vm763, %v4207, %v4158
        %v4216 = vsel %vm763, %v4208, %v4160
        %v4217 = vsel %vm2092, %v4209, %v4178
        %v4218 = vsel %vm2092, %v4210, %v4180
        %v4219 = vsel %vm2092, %v4211, %v4182
        %v4220 = vsel %vm2092, %v4212, %v4184
        %v4221 = vsel %vm2092, %v4213, %v4186
        %v4222 = vsel %vm2092, %v4214, %v4188
        %v4223 = vsel %vm2092, %v4215, %v4190
        %v4224 = vsel %vm2092, %v4216, %v4192
        %v4225 = vpack.c.bf16 %v4218, %v4217
        %v4226 = vpack.c.bf16 %v4220, %v4219
        %v4227 = vpack.c.bf16 %v4222, %v4221
        %v4228 = vpack.c.bf16 %v4224, %v4223
        %s4229 = scalar_lea.vmem %s8, 32
        %v4230 = vld [vmem:[%s4229] sm:$0xf]
        %v4231 = vld [vmem:[%s4229 + $0x4] sm:$0xf]
        %v4232 = vld [vmem:[%s4229 + $0x8] sm:$0xf]
        %v4233 = vld [vmem:[%s4229 + $0xc] sm:$0xf]
        %v4234 = vld [vmem:[%s4229 + $0x10] sm:$0xf]
        %v4235 = vld [vmem:[%s4229 + $0x14] sm:$0xf]
        %v4236 = vld [vmem:[%s4229 + $0x18] sm:$0xf]
        %v4237 = vld [vmem:[%s4229 + $0x1c] sm:$0xf]
        %s4238 = scalar_lea.vmem %s9, 1
        %v4239 = vld [vmem:[%s4238] sm:$0x1]
        %v4241 = vperm.slane %v4239, 0
        %v4251 = vunpack.c.l.b16 %v4230
        %v4252 = vunpack.c.l.b16 %v4231
        %v4253 = vunpack.c.l.b16 %v4232
        %v4254 = vunpack.c.l.b16 %v4233
        %v4255 = vunpack.c.l.b16 %v4234
        %v4256 = vunpack.c.l.b16 %v4235
        %v4257 = vunpack.c.l.b16 %v4236
        %v4258 = vunpack.c.l.b16 %v4237
        %v4259 = vpack.c.b16 %v4252, %v4251
        %v4260 = vpack.c.b16 %v4254, %v4253
        %v4261 = vpack.c.b16 %v4256, %v4255
        %v4262 = vpack.c.b16 %v4258, %v4257
        %v4268 = vsel %vm880, %v4225, 0
        %v4271 = vsel %vm880, %v4226, 0
        %v4274 = vsel %vm880, %v4227, 0
        %v4277 = vsel %vm880, %v4228, 0
        %4279 = vmatpush.bf16.msra.mxu0 0
        %4280 = vmatpush.bf16.msra.mxu0 0
        %4281 = vmatpush.bf16.msra.mxu0 0
        %4282 = vmatpush.bf16.msra.mxu0 0
        %4283 = vmatpush.bf16.msra.mxu0 %v4262
        %4284 = vmatpush.bf16.msra.mxu0 %v4261
        %4285 = vmatpush.bf16.msra.mxu0 %v4260
        %4286 = vmatpush.bf16.msra.mxu0 %v4259
        %4287 = vmatmul.bf16.gmra.mxu0 %v4268
        %v4288 = vpop.f32.mrf.mxu0
        %v4289 = vadd.f32 %v4241, %v4288
        %v4290 = vpop.f32.mrf.mxu0
        %v4291 = vadd.f32 %v4241, %v4290
        %4292 = vmatmul.bf16.gmra.mxu0 %v4271
        %v4293 = vpop.f32.mrf.mxu0
        %v4294 = vadd.f32 %v4241, %v4293
        %v4295 = vpop.f32.mrf.mxu0
        %v4296 = vadd.f32 %v4241, %v4295
        %4297 = vmatmul.bf16.gmra.mxu0 %v4274
        %v4298 = vpop.f32.mrf.mxu0
        %v4299 = vadd.f32 %v4241, %v4298
        %v4300 = vpop.f32.mrf.mxu0
        %v4301 = vadd.f32 %v4241, %v4300
        %4302 = vmatmul.bf16.gmra.mxu0 %v4277
        %v4303 = vpop.f32.mrf.mxu0
        %v4304 = vadd.f32 %v4241, %v4303
        %v4305 = vpop.f32.mrf.mxu0
        %v4306 = vadd.f32 %v4241, %v4305
        %4307 = vdwg.mxu0
        %v4308 = vadd.f32 %v2939, %v4289
        %v4309 = vadd.f32 %v2940, %v4291
        %v4310 = vadd.f32 %v2941, %v4294
        %v4311 = vadd.f32 %v2942, %v4296
        %v4312 = vadd.f32 %v2943, %v4299
        %v4313 = vadd.f32 %v2944, %v4301
        %v4314 = vadd.f32 %v2945, %v4304
        %v4315 = vadd.f32 %v2946, %v4306
        %s4316 = scalar_lea.vmem %s10, 1
        %v4317 = vld [vmem:[%s4316] sm:$0x1]
        %s4318 = scalar_lea.vmem %s11, 1
        %v4319 = vld [vmem:[%s4318] sm:$0x1]
        %v4320 = vsel %vm880, %v4308, 0.0
        %4321 = vadd.xlane.f32.xlu0 %v4320
        %v4322 = vpop.xlane.xlu0 %4321
        %v4323 = vsel %vm880, %v4309, 0.0
        %4324 = vadd.xlane.f32.xlu0 %v4323
        %v4325 = vpop.xlane.xlu0 %4324
        %v4326 = vsel %vm880, %v4310, 0.0
        %4327 = vadd.xlane.f32.xlu0 %v4326
        %v4328 = vpop.xlane.xlu0 %4327
        %v4329 = vsel %vm880, %v4311, 0.0
        %4330 = vadd.xlane.f32.xlu0 %v4329
        %v4331 = vpop.xlane.xlu0 %4330
        %v4332 = vsel %vm880, %v4312, 0.0
        %4333 = vadd.xlane.f32.xlu0 %v4332
        %v4334 = vpop.xlane.xlu0 %4333
        %v4335 = vsel %vm880, %v4313, 0.0
        %4336 = vadd.xlane.f32.xlu0 %v4335
        %v4337 = vpop.xlane.xlu0 %4336
        %v4338 = vsel %vm880, %v4314, 0.0
        %4339 = vadd.xlane.f32.xlu0 %v4338
        %v4340 = vpop.xlane.xlu0 %4339
        %v4341 = vsel %vm880, %v4315, 0.0
        %4342 = vadd.xlane.f32.xlu0 %v4341
        %v4343 = vpop.xlane.xlu0 %4342
        %v4344 = vmul.f32 %v4322, %v2222
        %v4345 = vmul.f32 %v4325, %v2222
        %v4346 = vmul.f32 %v4328, %v2222
        %v4347 = vmul.f32 %v4331, %v2222
        %v4348 = vmul.f32 %v4334, %v2222
        %v4349 = vmul.f32 %v4337, %v2222
        %v4350 = vmul.f32 %v4340, %v2222
        %v4351 = vmul.f32 %v4343, %v2222
        %v4352 = vsub.f32 %v4308, %v4344
        %v4353 = vsub.f32 %v4309, %v4345
        %v4354 = vsub.f32 %v4310, %v4346
        %v4355 = vsub.f32 %v4311, %v4347
        %v4356 = vsub.f32 %v4312, %v4348
        %v4357 = vsub.f32 %v4313, %v4349
        %v4358 = vsub.f32 %v4314, %v4350
        %v4359 = vsub.f32 %v4315, %v4351
        %v4360 = vmul.f32 %v4352, %v4352
        %v4361 = vmul.f32 %v4353, %v4353
        %v4362 = vmul.f32 %v4354, %v4354
        %v4363 = vmul.f32 %v4355, %v4355
        %v4364 = vmul.f32 %v4356, %v4356
        %v4365 = vmul.f32 %v4357, %v4357
        %v4366 = vmul.f32 %v4358, %v4358
        %v4367 = vmul.f32 %v4359, %v4359
        %v4368 = vsel %vm880, %v4360, 0.0
        %4369 = vadd.xlane.f32.xlu0 %v4368
        %v4370 = vpop.xlane.xlu0 %4369
        %v4371 = vsel %vm880, %v4361, 0.0
        %4372 = vadd.xlane.f32.xlu0 %v4371
        %v4373 = vpop.xlane.xlu0 %4372
        %v4374 = vsel %vm880, %v4362, 0.0
        %4375 = vadd.xlane.f32.xlu0 %v4374
        %v4376 = vpop.xlane.xlu0 %4375
        %v4377 = vsel %vm880, %v4363, 0.0
        %4378 = vadd.xlane.f32.xlu0 %v4377
        %v4379 = vpop.xlane.xlu0 %4378
        %v4380 = vsel %vm880, %v4364, 0.0
        %4381 = vadd.xlane.f32.xlu0 %v4380
        %v4382 = vpop.xlane.xlu0 %4381
        %v4383 = vsel %vm880, %v4365, 0.0
        %4384 = vadd.xlane.f32.xlu0 %v4383
        %v4385 = vpop.xlane.xlu0 %4384
        %v4386 = vsel %vm880, %v4366, 0.0
        %4387 = vadd.xlane.f32.xlu0 %v4386
        %v4388 = vpop.xlane.xlu0 %4387
        %v4389 = vsel %vm880, %v4367, 0.0
        %4390 = vadd.xlane.f32.xlu0 %v4389
        %v4391 = vpop.xlane.xlu0 %4390
        %v4392 = vmul.f32 %v4370, %v2222
        %v4393 = vmul.f32 %v4373, %v2222
        %v4394 = vmul.f32 %v4376, %v2222
        %v4395 = vmul.f32 %v4379, %v2222
        %v4396 = vmul.f32 %v4382, %v2222
        %v4397 = vmul.f32 %v4385, %v2222
        %v4398 = vmul.f32 %v4388, %v2222
        %v4399 = vmul.f32 %v4391, %v2222
        %v4400 = vadd.f32 %v4392, 1e-05
        %v4401 = vadd.f32 %v4393, 1e-05
        %v4402 = vadd.f32 %v4394, 1e-05
        %v4403 = vadd.f32 %v4395, 1e-05
        %v4404 = vadd.f32 %v4396, 1e-05
        %v4405 = vadd.f32 %v4397, 1e-05
        %v4406 = vadd.f32 %v4398, 1e-05
        %v4407 = vadd.f32 %v4399, 1e-05
        %v4408 = vrsqrt.pop %v4400
        %v4409 = vmul.f32 %v4408, %v4400
        %v4410 = vmul.f32 %v4409, %v4408
        %v4411 = vmul.f32 0.5, %v4410
        %v4412 = vsub.f32 1.5, %v4411
        %v4413 = vmul.f32 %v4408, %v4412
        %vm4414 = vweird.f32 %v4400
        %vm4415 = vweird.f32 %v4408
        %vm4416 = vmor %vm4414, %vm4415
        %v4417 = vsel %vm4416, %v4408, %v4413
        %v4418 = vrsqrt.pop %v4401
        %v4419 = vmul.f32 %v4418, %v4401
        %v4420 = vmul.f32 %v4419, %v4418
        %v4421 = vmul.f32 0.5, %v4420
        %v4422 = vsub.f32 1.5, %v4421
        %v4423 = vmul.f32 %v4418, %v4422
        %vm4424 = vweird.f32 %v4401
        %vm4425 = vweird.f32 %v4418
        %vm4426 = vmor %vm4424, %vm4425
        %v4427 = vsel %vm4426, %v4418, %v4423
        %v4428 = vrsqrt.pop %v4402
        %v4429 = vmul.f32 %v4428, %v4402
        %v4430 = vmul.f32 %v4429, %v4428
        %v4431 = vmul.f32 0.5, %v4430
        %v4432 = vsub.f32 1.5, %v4431
        %v4433 = vmul.f32 %v4428, %v4432
        %vm4434 = vweird.f32 %v4402
        %vm4435 = vweird.f32 %v4428
        %vm4436 = vmor %vm4434, %vm4435
        %v4437 = vsel %vm4436, %v4428, %v4433
        %v4438 = vrsqrt.pop %v4403
        %v4439 = vmul.f32 %v4438, %v4403
        %v4440 = vmul.f32 %v4439, %v4438
        %v4441 = vmul.f32 0.5, %v4440
        %v4442 = vsub.f32 1.5, %v4441
        %v4443 = vmul.f32 %v4438, %v4442
        %vm4444 = vweird.f32 %v4403
        %vm4445 = vweird.f32 %v4438
        %vm4446 = vmor %vm4444, %vm4445
        %v4447 = vsel %vm4446, %v4438, %v4443
        %v4448 = vrsqrt.pop %v4404
        %v4449 = vmul.f32 %v4448, %v4404
        %v4450 = vmul.f32 %v4449, %v4448
        %v4451 = vmul.f32 0.5, %v4450
        %v4452 = vsub.f32 1.5, %v4451
        %v4453 = vmul.f32 %v4448, %v4452
        %vm4454 = vweird.f32 %v4404
        %vm4455 = vweird.f32 %v4448
        %vm4456 = vmor %vm4454, %vm4455
        %v4457 = vsel %vm4456, %v4448, %v4453
        %v4458 = vrsqrt.pop %v4405
        %v4459 = vmul.f32 %v4458, %v4405
        %v4460 = vmul.f32 %v4459, %v4458
        %v4461 = vmul.f32 0.5, %v4460
        %v4462 = vsub.f32 1.5, %v4461
        %v4463 = vmul.f32 %v4458, %v4462
        %vm4464 = vweird.f32 %v4405
        %vm4465 = vweird.f32 %v4458
        %vm4466 = vmor %vm4464, %vm4465
        %v4467 = vsel %vm4466, %v4458, %v4463
        %v4468 = vrsqrt.pop %v4406
        %v4469 = vmul.f32 %v4468, %v4406
        %v4470 = vmul.f32 %v4469, %v4468
        %v4471 = vmul.f32 0.5, %v4470
        %v4472 = vsub.f32 1.5, %v4471
        %v4473 = vmul.f32 %v4468, %v4472
        %vm4474 = vweird.f32 %v4406
        %vm4475 = vweird.f32 %v4468
        %vm4476 = vmor %vm4474, %vm4475
        %v4477 = vsel %vm4476, %v4468, %v4473
        %v4478 = vrsqrt.pop %v4407
        %v4479 = vmul.f32 %v4478, %v4407
        %v4480 = vmul.f32 %v4479, %v4478
        %v4481 = vmul.f32 0.5, %v4480
        %v4482 = vsub.f32 1.5, %v4481
        %v4483 = vmul.f32 %v4478, %v4482
        %vm4484 = vweird.f32 %v4407
        %vm4485 = vweird.f32 %v4478
        %vm4486 = vmor %vm4484, %vm4485
        %v4487 = vsel %vm4486, %v4478, %v4483
        %v4488 = vmul.f32 %v4352, %v4417
        %v4489 = vmul.f32 %v4353, %v4427
        %v4490 = vmul.f32 %v4354, %v4437
        %v4491 = vmul.f32 %v4355, %v4447
        %v4492 = vmul.f32 %v4356, %v4457
        %v4493 = vmul.f32 %v4357, %v4467
        %v4494 = vmul.f32 %v4358, %v4477
        %v4495 = vmul.f32 %v4359, %v4487
        %v4497 = vperm.slane %v4317, 0
        %v4499 = vmul.f32 %v4488, %v4497
        %v4500 = vmul.f32 %v4489, %v4497
        %v4501 = vmul.f32 %v4490, %v4497
        %v4502 = vmul.f32 %v4491, %v4497
        %v4503 = vmul.f32 %v4492, %v4497
        %v4504 = vmul.f32 %v4493, %v4497
        %v4505 = vmul.f32 %v4494, %v4497
        %v4506 = vmul.f32 %v4495, %v4497
        %v4508 = vperm.slane %v4319, 0
        %v4510 = vadd.f32 %v4499, %v4508
        %v4511 = vadd.f32 %v4500, %v4508
        %v4512 = vadd.f32 %v4501, %v4508
        %v4513 = vadd.f32 %v4502, %v4508
        %v4514 = vadd.f32 %v4503, %v4508
        %v4515 = vadd.f32 %v4504, %v4508
        %v4516 = vadd.f32 %v4505, %v4508
        %v4517 = vadd.f32 %v4506, %v4508
        %v4518 = vpack.c.bf16 %v4511, %v4510
        %v4519 = vpack.c.bf16 %v4513, %v4512
        %v4520 = vpack.c.bf16 %v4515, %v4514
        %v4521 = vpack.c.bf16 %v4517, %v4516
        %s4522 = scalar_lea.vmem %s12, 64
        %v4523 = vld [vmem:[%s4522] sm:$0xff]
        %v4524 = vld [vmem:[%s4522 + $0x8] sm:$0xff]
        %v4525 = vld [vmem:[%s4522 + $0x10] sm:$0xff]
        %v4526 = vld [vmem:[%s4522 + $0x18] sm:$0xff]
        %v4527 = vld [vmem:[%s4522 + $0x20] sm:$0xff]
        %v4528 = vld [vmem:[%s4522 + $0x28] sm:$0xff]
        %v4529 = vld [vmem:[%s4522 + $0x30] sm:$0xff]
        %v4530 = vld [vmem:[%s4522 + $0x38] sm:$0xff]
        %s4531 = scalar_lea.vmem %s13, 2
        %v4532 = vld [vmem:[%s4531] sm:$0x3]
        %v4534 = vperm.slane %v4532, 0
        %v4535 = vperm.slane %v4532, 1
        %v4546 = vunpack.c.l.b16 %v4523
        %v4547 = vunpack.c.h.b16 %v4523
        %v4548 = vunpack.c.l.b16 %v4524
        %v4549 = vunpack.c.h.b16 %v4524
        %v4550 = vunpack.c.l.b16 %v4525
        %v4551 = vunpack.c.h.b16 %v4525
        %v4552 = vunpack.c.l.b16 %v4526
        %v4553 = vunpack.c.h.b16 %v4526
        %v4554 = vunpack.c.l.b16 %v4527
        %v4555 = vunpack.c.h.b16 %v4527
        %v4556 = vunpack.c.l.b16 %v4528
        %v4557 = vunpack.c.h.b16 %v4528
        %v4558 = vunpack.c.l.b16 %v4529
        %v4559 = vunpack.c.h.b16 %v4529
        %v4560 = vunpack.c.l.b16 %v4530
        %v4561 = vunpack.c.h.b16 %v4530
        %v4562 = vpack.c.b16 %v4548, %v4546
        %v4563 = vpack.c.b16 %v4549, %v4547
        %v4564 = vpack.c.b16 %v4552, %v4550
        %v4565 = vpack.c.b16 %v4553, %v4551
        %v4566 = vpack.c.b16 %v4556, %v4554
        %v4567 = vpack.c.b16 %v4557, %v4555
        %v4568 = vpack.c.b16 %v4560, %v4558
        %v4569 = vpack.c.b16 %v4561, %v4559
        %v4579 = vsel %vm880, %v4518, 0
        %v4582 = vsel %vm880, %v4519, 0
        %v4585 = vsel %vm880, %v4520, 0
        %v4588 = vsel %vm880, %v4521, 0
        %4590 = vmatpush.bf16.msra.mxu0 0
        %4591 = vmatpush.bf16.msra.mxu0 0
        %4592 = vmatpush.bf16.msra.mxu0 0
        %4593 = vmatpush.bf16.msra.mxu0 0
        %4594 = vmatpush.bf16.msra.mxu0 %v4568
        %4595 = vmatpush.bf16.msra.mxu0 %v4566
        %4596 = vmatpush.bf16.msra.mxu0 %v4564
        %4597 = vmatpush.bf16.msra.mxu0 %v4562
        %4598 = vmatmul.bf16.gmra.mxu0 %v4579
        %v4599 = vpop.f32.mrf.mxu0
        %v4600 = vadd.f32 %v4534, %v4599
        %v4601 = vpop.f32.mrf.mxu0
        %v4602 = vadd.f32 %v4534, %v4601
        %4603 = vmatmul.bf16.gmra.mxu0 %v4582
        %v4604 = vpop.f32.mrf.mxu0
        %v4605 = vadd.f32 %v4534, %v4604
        %v4606 = vpop.f32.mrf.mxu0
        %v4607 = vadd.f32 %v4534, %v4606
        %4608 = vmatmul.bf16.gmra.mxu0 %v4585
        %v4609 = vpop.f32.mrf.mxu0
        %v4610 = vadd.f32 %v4534, %v4609
        %v4611 = vpop.f32.mrf.mxu0
        %v4612 = vadd.f32 %v4534, %v4611
        %4613 = vmatmul.bf16.gmra.mxu0 %v4588
        %v4614 = vpop.f32.mrf.mxu0
        %v4615 = vadd.f32 %v4534, %v4614
        %v4616 = vpop.f32.mrf.mxu0
        %v4617 = vadd.f32 %v4534, %v4616
        %4618 = vdwg.mxu0
        %4619 = vmatpush.bf16.msra.mxu0 0
        %4620 = vmatpush.bf16.msra.mxu0 0
        %4621 = vmatpush.bf16.msra.mxu0 0
        %4622 = vmatpush.bf16.msra.mxu0 0
        %4623 = vmatpush.bf16.msra.mxu0 %v4569
        %4624 = vmatpush.bf16.msra.mxu0 %v4567
        %4625 = vmatpush.bf16.msra.mxu0 %v4565
        %4626 = vmatpush.bf16.msra.mxu0 %v4563
        %4627 = vmatmul.bf16.gmra.mxu0 %v4579
        %v4628 = vpop.f32.mrf.mxu0
        %v4629 = vadd.f32 %v4535, %v4628
        %v4630 = vpop.f32.mrf.mxu0
        %v4631 = vadd.f32 %v4535, %v4630
        %4632 = vmatmul.bf16.gmra.mxu0 %v4582
        %v4633 = vpop.f32.mrf.mxu0
        %v4634 = vadd.f32 %v4535, %v4633
        %v4635 = vpop.f32.mrf.mxu0
        %v4636 = vadd.f32 %v4535, %v4635
        %4637 = vmatmul.bf16.gmra.mxu0 %v4585
        %v4638 = vpop.f32.mrf.mxu0
        %v4639 = vadd.f32 %v4535, %v4638
        %v4640 = vpop.f32.mrf.mxu0
        %v4641 = vadd.f32 %v4535, %v4640
        %4642 = vmatmul.bf16.gmra.mxu0 %v4588
        %v4643 = vpop.f32.mrf.mxu0
        %v4644 = vadd.f32 %v4535, %v4643
        %v4645 = vpop.f32.mrf.mxu0
        %v4646 = vadd.f32 %v4535, %v4645
        %4647 = vdwg.mxu0
        %v4648 = vmax.f32 %v4600, 0.0
        %v4649 = vmax.f32 %v4629, 0.0
        %v4650 = vmax.f32 %v4602, 0.0
        %v4651 = vmax.f32 %v4631, 0.0
        %v4652 = vmax.f32 %v4605, 0.0
        %v4653 = vmax.f32 %v4634, 0.0
        %v4654 = vmax.f32 %v4607, 0.0
        %v4655 = vmax.f32 %v4636, 0.0
        %v4656 = vmax.f32 %v4610, 0.0
        %v4657 = vmax.f32 %v4639, 0.0
        %v4658 = vmax.f32 %v4612, 0.0
        %v4659 = vmax.f32 %v4641, 0.0
        %v4660 = vmax.f32 %v4615, 0.0
        %v4661 = vmax.f32 %v4644, 0.0
        %v4662 = vmax.f32 %v4617, 0.0
        %v4663 = vmax.f32 %v4646, 0.0
        %v4664 = vpack.c.bf16 %v4650, %v4648
        %v4665 = vpack.c.bf16 %v4651, %v4649
        %v4666 = vpack.c.bf16 %v4654, %v4652
        %v4667 = vpack.c.bf16 %v4655, %v4653
        %v4668 = vpack.c.bf16 %v4658, %v4656
        %v4669 = vpack.c.bf16 %v4659, %v4657
        %v4670 = vpack.c.bf16 %v4662, %v4660
        %v4671 = vpack.c.bf16 %v4663, %v4661
        %s4672 = scalar_lea.vmem %s14, 128
        %v4673 = vld [vmem:[%s4672] sm:$0xf]
        %v4674 = vld [vmem:[%s4672 + $0x4] sm:$0xf]
        %v4675 = vld [vmem:[%s4672 + $0x8] sm:$0xf]
        %v4676 = vld [vmem:[%s4672 + $0xc] sm:$0xf]
        %v4677 = vld [vmem:[%s4672 + $0x10] sm:$0xf]
        %v4678 = vld [vmem:[%s4672 + $0x14] sm:$0xf]
        %v4679 = vld [vmem:[%s4672 + $0x18] sm:$0xf]
        %v4680 = vld [vmem:[%s4672 + $0x1c] sm:$0xf]
        %v4681 = vld [vmem:[%s4672 + $0x20] sm:$0xf]
        %v4682 = vld [vmem:[%s4672 + $0x24] sm:$0xf]
        %v4683 = vld [vmem:[%s4672 + $0x28] sm:$0xf]
        %v4684 = vld [vmem:[%s4672 + $0x2c] sm:$0xf]
        %v4685 = vld [vmem:[%s4672 + $0x30] sm:$0xf]
        %v4686 = vld [vmem:[%s4672 + $0x34] sm:$0xf]
        %v4687 = vld [vmem:[%s4672 + $0x38] sm:$0xf]
        %v4688 = vld [vmem:[%s4672 + $0x3c] sm:$0xf]
        %v4689 = vld [vmem:[%s4672 + $0x40] sm:$0xf]
        %v4690 = vld [vmem:[%s4672 + $0x44] sm:$0xf]
        %v4691 = vld [vmem:[%s4672 + $0x48] sm:$0xf]
        %v4692 = vld [vmem:[%s4672 + $0x4c] sm:$0xf]
        %v4693 = vld [vmem:[%s4672 + $0x50] sm:$0xf]
        %v4694 = vld [vmem:[%s4672 + $0x54] sm:$0xf]
        %v4695 = vld [vmem:[%s4672 + $0x58] sm:$0xf]
        %v4696 = vld [vmem:[%s4672 + $0x5c] sm:$0xf]
        %v4697 = vld [vmem:[%s4672 + $0x60] sm:$0xf]
        %v4698 = vld [vmem:[%s4672 + $0x64] sm:$0xf]
        %v4699 = vld [vmem:[%s4672 + $0x68] sm:$0xf]
        %v4700 = vld [vmem:[%s4672 + $0x6c] sm:$0xf]
        %v4701 = vld [vmem:[%s4672 + $0x70] sm:$0xf]
        %v4702 = vld [vmem:[%s4672 + $0x74] sm:$0xf]
        %v4703 = vld [vmem:[%s4672 + $0x78] sm:$0xf]
        %v4704 = vld [vmem:[%s4672 + $0x7c] sm:$0xf]
        %s4705 = scalar_lea.vmem %s15, 1
        %v4706 = vld [vmem:[%s4705] sm:$0x1]
        %v4708 = vperm.slane %v4706, 0
        %v4742 = vunpack.c.l.b16 %v4673
        %v4743 = vunpack.c.l.b16 %v4674
        %v4744 = vunpack.c.l.b16 %v4675
        %v4745 = vunpack.c.l.b16 %v4676
        %v4746 = vunpack.c.l.b16 %v4677
        %v4747 = vunpack.c.l.b16 %v4678
        %v4748 = vunpack.c.l.b16 %v4679
        %v4749 = vunpack.c.l.b16 %v4680
        %v4750 = vunpack.c.l.b16 %v4681
        %v4751 = vunpack.c.l.b16 %v4682
        %v4752 = vunpack.c.l.b16 %v4683
        %v4753 = vunpack.c.l.b16 %v4684
        %v4754 = vunpack.c.l.b16 %v4685
        %v4755 = vunpack.c.l.b16 %v4686
        %v4756 = vunpack.c.l.b16 %v4687
        %v4757 = vunpack.c.l.b16 %v4688
        %v4758 = vunpack.c.l.b16 %v4689
        %v4759 = vunpack.c.l.b16 %v4690
        %v4760 = vunpack.c.l.b16 %v4691
        %v4761 = vunpack.c.l.b16 %v4692
        %v4762 = vunpack.c.l.b16 %v4693
        %v4763 = vunpack.c.l.b16 %v4694
        %v4764 = vunpack.c.l.b16 %v4695
        %v4765 = vunpack.c.l.b16 %v4696
        %v4766 = vunpack.c.l.b16 %v4697
        %v4767 = vunpack.c.l.b16 %v4698
        %v4768 = vunpack.c.l.b16 %v4699
        %v4769 = vunpack.c.l.b16 %v4700
        %v4770 = vunpack.c.l.b16 %v4701
        %v4771 = vunpack.c.l.b16 %v4702
        %v4772 = vunpack.c.l.b16 %v4703
        %v4773 = vunpack.c.l.b16 %v4704
        %v4774 = vpack.c.b16 %v4743, %v4742
        %v4775 = vpack.c.b16 %v4745, %v4744
        %v4776 = vpack.c.b16 %v4747, %v4746
        %v4777 = vpack.c.b16 %v4749, %v4748
        %v4778 = vpack.c.b16 %v4751, %v4750
        %v4779 = vpack.c.b16 %v4753, %v4752
        %v4780 = vpack.c.b16 %v4755, %v4754
        %v4781 = vpack.c.b16 %v4757, %v4756
        %v4782 = vpack.c.b16 %v4759, %v4758
        %v4783 = vpack.c.b16 %v4761, %v4760
        %v4784 = vpack.c.b16 %v4763, %v4762
        %v4785 = vpack.c.b16 %v4765, %v4764
        %v4786 = vpack.c.b16 %v4767, %v4766
        %v4787 = vpack.c.b16 %v4769, %v4768
        %v4788 = vpack.c.b16 %v4771, %v4770
        %v4789 = vpack.c.b16 %v4773, %v4772
        %4806 = vmatpush.bf16.msra.mxu0 %v4781
        %4807 = vmatpush.bf16.msra.mxu0 %v4780
        %4808 = vmatpush.bf16.msra.mxu0 %v4779
        %4809 = vmatpush.bf16.msra.mxu0 %v4778
        %4810 = vmatpush.bf16.msra.mxu0 %v4777
        %4811 = vmatpush.bf16.msra.mxu0 %v4776
        %4812 = vmatpush.bf16.msra.mxu0 %v4775
        %4813 = vmatpush.bf16.msra.mxu0 %v4774
        %4814 = vmatmul.bf16.gmra.mxu0 %v4664
        %v4815 = vpop.f32.mrf.mxu0
        %v4816 = vadd.f32 %v4708, %v4815
        %v4817 = vpop.f32.mrf.mxu0
        %v4818 = vadd.f32 %v4708, %v4817
        %4819 = vmatmul.bf16.gmra.mxu0 %v4666
        %v4820 = vpop.f32.mrf.mxu0
        %v4821 = vadd.f32 %v4708, %v4820
        %v4822 = vpop.f32.mrf.mxu0
        %v4823 = vadd.f32 %v4708, %v4822
        %4824 = vmatmul.bf16.gmra.mxu0 %v4668
        %v4825 = vpop.f32.mrf.mxu0
        %v4826 = vadd.f32 %v4708, %v4825
        %v4827 = vpop.f32.mrf.mxu0
        %v4828 = vadd.f32 %v4708, %v4827
        %4829 = vmatmul.bf16.gmra.mxu0 %v4670
        %v4830 = vpop.f32.mrf.mxu0
        %v4831 = vadd.f32 %v4708, %v4830
        %v4832 = vpop.f32.mrf.mxu0
        %v4833 = vadd.f32 %v4708, %v4832
        %4834 = vdwg.mxu0
        %4835 = vmatpush.bf16.msra.mxu0 %v4789
        %4836 = vmatpush.bf16.msra.mxu0 %v4788
        %4837 = vmatpush.bf16.msra.mxu0 %v4787
        %4838 = vmatpush.bf16.msra.mxu0 %v4786
        %4839 = vmatpush.bf16.msra.mxu0 %v4785
        %4840 = vmatpush.bf16.msra.mxu0 %v4784
        %4841 = vmatpush.bf16.msra.mxu0 %v4783
        %4842 = vmatpush.bf16.msra.mxu0 %v4782
        %4843 = vmatmul.bf16.gmra.mxu0 %v4665
        %v4844 = vpop.f32.mrf.mxu0
        %v4845 = vadd.f32 %v4816, %v4844
        %v4846 = vpop.f32.mrf.mxu0
        %v4847 = vadd.f32 %v4818, %v4846
        %4848 = vmatmul.bf16.gmra.mxu0 %v4667
        %v4849 = vpop.f32.mrf.mxu0
        %v4850 = vadd.f32 %v4821, %v4849
        %v4851 = vpop.f32.mrf.mxu0
        %v4852 = vadd.f32 %v4823, %v4851
        %4853 = vmatmul.bf16.gmra.mxu0 %v4669
        %v4854 = vpop.f32.mrf.mxu0
        %v4855 = vadd.f32 %v4826, %v4854
        %v4856 = vpop.f32.mrf.mxu0
        %v4857 = vadd.f32 %v4828, %v4856
        %4858 = vmatmul.bf16.gmra.mxu0 %v4671
        %v4859 = vpop.f32.mrf.mxu0
        %v4860 = vadd.f32 %v4831, %v4859
        %v4861 = vpop.f32.mrf.mxu0
        %v4862 = vadd.f32 %v4833, %v4861
        %4863 = vdwg.mxu0
        %v4864 = vadd.f32 %v4510, %v4845
        %v4865 = vadd.f32 %v4511, %v4847
        %v4866 = vadd.f32 %v4512, %v4850
        %v4867 = vadd.f32 %v4513, %v4852
        %v4868 = vadd.f32 %v4514, %v4855
        %v4869 = vadd.f32 %v4515, %v4857
        %v4870 = vadd.f32 %v4516, %v4860
        %v4871 = vadd.f32 %v4517, %v4862
        %s4872 = scalar_lea.vmem %s16, 1
        %v4873 = vld [vmem:[%s4872] sm:$0x1]
        %s4874 = scalar_lea.vmem %s17, 1
        %v4875 = vld [vmem:[%s4874] sm:$0x1]
        %v4876 = vsel %vm880, %v4864, 0.0
        %4877 = vadd.xlane.f32.xlu0 %v4876
        %v4878 = vpop.xlane.xlu0 %4877
        %v4879 = vsel %vm880, %v4865, 0.0
        %4880 = vadd.xlane.f32.xlu0 %v4879
        %v4881 = vpop.xlane.xlu0 %4880
        %v4882 = vsel %vm880, %v4866, 0.0
        %4883 = vadd.xlane.f32.xlu0 %v4882
        %v4884 = vpop.xlane.xlu0 %4883
        %v4885 = vsel %vm880, %v4867, 0.0
        %4886 = vadd.xlane.f32.xlu0 %v4885
        %v4887 = vpop.xlane.xlu0 %4886
        %v4888 = vsel %vm880, %v4868, 0.0
        %4889 = vadd.xlane.f32.xlu0 %v4888
        %v4890 = vpop.xlane.xlu0 %4889
        %v4891 = vsel %vm880, %v4869, 0.0
        %4892 = vadd.xlane.f32.xlu0 %v4891
        %v4893 = vpop.xlane.xlu0 %4892
        %v4894 = vsel %vm880, %v4870, 0.0
        %4895 = vadd.xlane.f32.xlu0 %v4894
        %v4896 = vpop.xlane.xlu0 %4895
        %v4897 = vsel %vm880, %v4871, 0.0
        %4898 = vadd.xlane.f32.xlu0 %v4897
        %v4899 = vpop.xlane.xlu0 %4898
        %v4900 = vmul.f32 %v4878, %v2222
        %v4901 = vmul.f32 %v4881, %v2222
        %v4902 = vmul.f32 %v4884, %v2222
        %v4903 = vmul.f32 %v4887, %v2222
        %v4904 = vmul.f32 %v4890, %v2222
        %v4905 = vmul.f32 %v4893, %v2222
        %v4906 = vmul.f32 %v4896, %v2222
        %v4907 = vmul.f32 %v4899, %v2222
        %v4908 = vsub.f32 %v4864, %v4900
        %v4909 = vsub.f32 %v4865, %v4901
        %v4910 = vsub.f32 %v4866, %v4902
        %v4911 = vsub.f32 %v4867, %v4903
        %v4912 = vsub.f32 %v4868, %v4904
        %v4913 = vsub.f32 %v4869, %v4905
        %v4914 = vsub.f32 %v4870, %v4906
        %v4915 = vsub.f32 %v4871, %v4907
        %v4916 = vmul.f32 %v4908, %v4908
        %v4917 = vmul.f32 %v4909, %v4909
        %v4918 = vmul.f32 %v4910, %v4910
        %v4919 = vmul.f32 %v4911, %v4911
        %v4920 = vmul.f32 %v4912, %v4912
        %v4921 = vmul.f32 %v4913, %v4913
        %v4922 = vmul.f32 %v4914, %v4914
        %v4923 = vmul.f32 %v4915, %v4915
        %v4924 = vsel %vm880, %v4916, 0.0
        %4925 = vadd.xlane.f32.xlu0 %v4924
        %v4926 = vpop.xlane.xlu0 %4925
        %v4927 = vsel %vm880, %v4917, 0.0
        %4928 = vadd.xlane.f32.xlu0 %v4927
        %v4929 = vpop.xlane.xlu0 %4928
        %v4930 = vsel %vm880, %v4918, 0.0
        %4931 = vadd.xlane.f32.xlu0 %v4930
        %v4932 = vpop.xlane.xlu0 %4931
        %v4933 = vsel %vm880, %v4919, 0.0
        %4934 = vadd.xlane.f32.xlu0 %v4933
        %v4935 = vpop.xlane.xlu0 %4934
        %v4936 = vsel %vm880, %v4920, 0.0
        %4937 = vadd.xlane.f32.xlu0 %v4936
        %v4938 = vpop.xlane.xlu0 %4937
        %v4939 = vsel %vm880, %v4921, 0.0
        %4940 = vadd.xlane.f32.xlu0 %v4939
        %v4941 = vpop.xlane.xlu0 %4940
        %v4942 = vsel %vm880, %v4922, 0.0
        %4943 = vadd.xlane.f32.xlu0 %v4942
        %v4944 = vpop.xlane.xlu0 %4943
        %v4945 = vsel %vm880, %v4923, 0.0
        %4946 = vadd.xlane.f32.xlu0 %v4945
        %v4947 = vpop.xlane.xlu0 %4946
        %v4948 = vmul.f32 %v4926, %v2222
        %v4949 = vmul.f32 %v4929, %v2222
        %v4950 = vmul.f32 %v4932, %v2222
        %v4951 = vmul.f32 %v4935, %v2222
        %v4952 = vmul.f32 %v4938, %v2222
        %v4953 = vmul.f32 %v4941, %v2222
        %v4954 = vmul.f32 %v4944, %v2222
        %v4955 = vmul.f32 %v4947, %v2222
        %v4956 = vadd.f32 %v4948, 1e-05
        %v4957 = vadd.f32 %v4949, 1e-05
        %v4958 = vadd.f32 %v4950, 1e-05
        %v4959 = vadd.f32 %v4951, 1e-05
        %v4960 = vadd.f32 %v4952, 1e-05
        %v4961 = vadd.f32 %v4953, 1e-05
        %v4962 = vadd.f32 %v4954, 1e-05
        %v4963 = vadd.f32 %v4955, 1e-05
        %v4964 = vrsqrt.pop %v4956
        %v4965 = vmul.f32 %v4964, %v4956
        %v4966 = vmul.f32 %v4965, %v4964
        %v4967 = vmul.f32 0.5, %v4966
        %v4968 = vsub.f32 1.5, %v4967
        %v4969 = vmul.f32 %v4964, %v4968
        %vm4970 = vweird.f32 %v4956
        %vm4971 = vweird.f32 %v4964
        %vm4972 = vmor %vm4970, %vm4971
        %v4973 = vsel %vm4972, %v4964, %v4969
        %v4974 = vrsqrt.pop %v4957
        %v4975 = vmul.f32 %v4974, %v4957
        %v4976 = vmul.f32 %v4975, %v4974
        %v4977 = vmul.f32 0.5, %v4976
        %v4978 = vsub.f32 1.5, %v4977
        %v4979 = vmul.f32 %v4974, %v4978
        %vm4980 = vweird.f32 %v4957
        %vm4981 = vweird.f32 %v4974
        %vm4982 = vmor %vm4980, %vm4981
        %v4983 = vsel %vm4982, %v4974, %v4979
        %v4984 = vrsqrt.pop %v4958
        %v4985 = vmul.f32 %v4984, %v4958
        %v4986 = vmul.f32 %v4985, %v4984
        %v4987 = vmul.f32 0.5, %v4986
        %v4988 = vsub.f32 1.5, %v4987
        %v4989 = vmul.f32 %v4984, %v4988
        %vm4990 = vweird.f32 %v4958
        %vm4991 = vweird.f32 %v4984
        %vm4992 = vmor %vm4990, %vm4991
        %v4993 = vsel %vm4992, %v4984, %v4989
        %v4994 = vrsqrt.pop %v4959
        %v4995 = vmul.f32 %v4994, %v4959
        %v4996 = vmul.f32 %v4995, %v4994
        %v4997 = vmul.f32 0.5, %v4996
        %v4998 = vsub.f32 1.5, %v4997
        %v4999 = vmul.f32 %v4994, %v4998
        %vm5000 = vweird.f32 %v4959
        %vm5001 = vweird.f32 %v4994
        %vm5002 = vmor %vm5000, %vm5001
        %v5003 = vsel %vm5002, %v4994, %v4999
        %v5004 = vrsqrt.pop %v4960
        %v5005 = vmul.f32 %v5004, %v4960
        %v5006 = vmul.f32 %v5005, %v5004
        %v5007 = vmul.f32 0.5, %v5006
        %v5008 = vsub.f32 1.5, %v5007
        %v5009 = vmul.f32 %v5004, %v5008
        %vm5010 = vweird.f32 %v4960
        %vm5011 = vweird.f32 %v5004
        %vm5012 = vmor %vm5010, %vm5011
        %v5013 = vsel %vm5012, %v5004, %v5009
        %v5014 = vrsqrt.pop %v4961
        %v5015 = vmul.f32 %v5014, %v4961
        %v5016 = vmul.f32 %v5015, %v5014
        %v5017 = vmul.f32 0.5, %v5016
        %v5018 = vsub.f32 1.5, %v5017
        %v5019 = vmul.f32 %v5014, %v5018
        %vm5020 = vweird.f32 %v4961
        %vm5021 = vweird.f32 %v5014
        %vm5022 = vmor %vm5020, %vm5021
        %v5023 = vsel %vm5022, %v5014, %v5019
        %v5024 = vrsqrt.pop %v4962
        %v5025 = vmul.f32 %v5024, %v4962
        %v5026 = vmul.f32 %v5025, %v5024
        %v5027 = vmul.f32 0.5, %v5026
        %v5028 = vsub.f32 1.5, %v5027
        %v5029 = vmul.f32 %v5024, %v5028
        %vm5030 = vweird.f32 %v4962
        %vm5031 = vweird.f32 %v5024
        %vm5032 = vmor %vm5030, %vm5031
        %v5033 = vsel %vm5032, %v5024, %v5029
        %v5034 = vrsqrt.pop %v4963
        %v5035 = vmul.f32 %v5034, %v4963
        %v5036 = vmul.f32 %v5035, %v5034
        %v5037 = vmul.f32 0.5, %v5036
        %v5038 = vsub.f32 1.5, %v5037
        %v5039 = vmul.f32 %v5034, %v5038
        %vm5040 = vweird.f32 %v4963
        %vm5041 = vweird.f32 %v5034
        %vm5042 = vmor %vm5040, %vm5041
        %v5043 = vsel %vm5042, %v5034, %v5039
        %v5044 = vmul.f32 %v4908, %v4973
        %v5045 = vmul.f32 %v4909, %v4983
        %v5046 = vmul.f32 %v4910, %v4993
        %v5047 = vmul.f32 %v4911, %v5003
        %v5048 = vmul.f32 %v4912, %v5013
        %v5049 = vmul.f32 %v4913, %v5023
        %v5050 = vmul.f32 %v4914, %v5033
        %v5051 = vmul.f32 %v4915, %v5043
        %v5053 = vperm.slane %v4873, 0
        %v5055 = vmul.f32 %v5044, %v5053
        %v5056 = vmul.f32 %v5045, %v5053
        %v5057 = vmul.f32 %v5046, %v5053
        %v5058 = vmul.f32 %v5047, %v5053
        %v5059 = vmul.f32 %v5048, %v5053
        %v5060 = vmul.f32 %v5049, %v5053
        %v5061 = vmul.f32 %v5050, %v5053
        %v5062 = vmul.f32 %v5051, %v5053
        %v5064 = vperm.slane %v4875, 0
        %v5066 = vadd.f32 %v5055, %v5064
        %v5067 = vadd.f32 %v5056, %v5064
        %v5068 = vadd.f32 %v5057, %v5064
        %v5069 = vadd.f32 %v5058, %v5064
        %v5070 = vadd.f32 %v5059, %v5064
        %v5071 = vadd.f32 %v5060, %v5064
        %v5072 = vadd.f32 %v5061, %v5064
        %v5073 = vadd.f32 %v5062, %v5064
        %v5074 = vpack.c.bf16 %v5067, %v5066
        %v5075 = vpack.c.bf16 %v5069, %v5068
        %v5076 = vpack.c.bf16 %v5071, %v5070
        %v5077 = vpack.c.bf16 %v5073, %v5072
        %v5078 = vld [vmem:[%s18] sm:$0xff]
        %v5079 = vld [vmem:[%s18 + $0x8] sm:$0xff]
        %v5080 = vld [vmem:[%s18 + $0x10] sm:$0xff]
        %v5081 = vld [vmem:[%s18 + $0x18] sm:$0xff]
        %v5082 = vld [vmem:[%s18 + $0x20] sm:$0xff]
        %v5083 = vld [vmem:[%s18 + $0x28] sm:$0xff]
        %v5084 = vld [vmem:[%s18 + $0x30] sm:$0xff]
        %v5085 = vld [vmem:[%s18 + $0x38] sm:$0xff]
        %v5086 = vld [vmem:[%s18 + $0x40] sm:$0xff]
        %v5087 = vld [vmem:[%s18 + $0x48] sm:$0xff]
        %v5088 = vld [vmem:[%s18 + $0x50] sm:$0xff]
        %v5089 = vld [vmem:[%s18 + $0x58] sm:$0xff]
        %v5090 = vld [vmem:[%s18 + $0x60] sm:$0xff]
        %v5091 = vld [vmem:[%s18 + $0x68] sm:$0xff]
        %v5092 = vld [vmem:[%s18 + $0x70] sm:$0xff]
        %v5093 = vld [vmem:[%s18 + $0x78] sm:$0xff]
        %v5094 = vld [vmem:[%s18 + $0x80] sm:$0xff]
        %v5095 = vld [vmem:[%s18 + $0x88] sm:$0xff]
        %v5096 = vld [vmem:[%s18 + $0x90] sm:$0xff]
        %v5097 = vld [vmem:[%s18 + $0x98] sm:$0xff]
        %v5098 = vld [vmem:[%s18 + $0xa0] sm:$0xff]
        %v5099 = vld [vmem:[%s18 + $0xa8] sm:$0xff]
        %v5100 = vld [vmem:[%s18 + $0xb0] sm:$0xff]
        %v5101 = vld [vmem:[%s18 + $0xb8] sm:$0xff]
        %v5102 = vld [vmem:[%s18 + $0xc0] sm:$0xff]
        %v5103 = vld [vmem:[%s18 + $0xc8] sm:$0xff]
        %v5104 = vld [vmem:[%s18 + $0xd0] sm:$0xff]
        %v5105 = vld [vmem:[%s18 + $0xd8] sm:$0xff]
        %v5106 = vld [vmem:[%s18 + $0xe0] sm:$0xff]
        %v5107 = vld [vmem:[%s18 + $0xe8] sm:$0xff]
        %v5108 = vld [vmem:[%s18 + $0xf0] sm:$0xff]
        %v5109 = vld [vmem:[%s18 + $0xf8] sm:$0xff]
        %v5110 = vld [vmem:[%s19] sm:$0xff]
        %v5112 = vperm.slane %v5110, 0
        %v5113 = vperm.slane %v5110, 1
        %v5114 = vperm.slane %v5110, 2
        %v5115 = vperm.slane %v5110, 3
        %v5116 = vperm.slane %v5110, 4
        %v5117 = vperm.slane %v5110, 5
        %v5118 = vperm.slane %v5110, 6
        %v5119 = vperm.slane %v5110, 7
        %v5160 = vunpack.c.l.b16 %v5078
        %v5161 = vunpack.c.h.b16 %v5078
        %v5162 = vunpack.c.l.b16 %v5079
        %v5163 = vunpack.c.h.b16 %v5079
        %v5164 = vunpack.c.l.b16 %v5080
        %v5165 = vunpack.c.h.b16 %v5080
        %v5166 = vunpack.c.l.b16 %v5081
        %v5167 = vunpack.c.h.b16 %v5081
        %v5168 = vunpack.c.l.b16 %v5082
        %v5169 = vunpack.c.h.b16 %v5082
        %v5170 = vunpack.c.l.b16 %v5083
        %v5171 = vunpack.c.h.b16 %v5083
        %v5172 = vunpack.c.l.b16 %v5084
        %v5173 = vunpack.c.h.b16 %v5084
        %v5174 = vunpack.c.l.b16 %v5085
        %v5175 = vunpack.c.h.b16 %v5085
        %v5176 = vunpack.c.l.b16 %v5086
        %v5177 = vunpack.c.h.b16 %v5086
        %v5178 = vunpack.c.l.b16 %v5087
        %v5179 = vunpack.c.h.b16 %v5087
        %v5180 = vunpack.c.l.b16 %v5088
        %v5181 = vunpack.c.h.b16 %v5088
        %v5182 = vunpack.c.l.b16 %v5089
        %v5183 = vunpack.c.h.b16 %v5089
        %v5184 = vunpack.c.l.b16 %v5090
        %v5185 = vunpack.c.h.b16 %v5090
        %v5186 = vunpack.c.l.b16 %v5091
        %v5187 = vunpack.c.h.b16 %v5091
        %v5188 = vunpack.c.l.b16 %v5092
        %v5189 = vunpack.c.h.b16 %v5092
        %v5190 = vunpack.c.l.b16 %v5093
        %v5191 = vunpack.c.h.b16 %v5093
        %v5192 = vunpack.c.l.b16 %v5094
        %v5193 = vunpack.c.h.b16 %v5094
        %v5194 = vunpack.c.l.b16 %v5095
        %v5195 = vunpack.c.h.b16 %v5095
        %v5196 = vunpack.c.l.b16 %v5096
        %v5197 = vunpack.c.h.b16 %v5096
        %v5198 = vunpack.c.l.b16 %v5097
        %v5199 = vunpack.c.h.b16 %v5097
        %v5200 = vunpack.c.l.b16 %v5098
        %v5201 = vunpack.c.h.b16 %v5098
        %v5202 = vunpack.c.l.b16 %v5099
        %v5203 = vunpack.c.h.b16 %v5099
        %v5204 = vunpack.c.l.b16 %v5100
        %v5205 = vunpack.c.h.b16 %v5100
        %v5206 = vunpack.c.l.b16 %v5101
        %v5207 = vunpack.c.h.b16 %v5101
        %v5208 = vunpack.c.l.b16 %v5102
        %v5209 = vunpack.c.h.b16 %v5102
        %v5210 = vunpack.c.l.b16 %v5103
        %v5211 = vunpack.c.h.b16 %v5103
        %v5212 = vunpack.c.l.b16 %v5104
        %v5213 = vunpack.c.h.b16 %v5104
        %v5214 = vunpack.c.l.b16 %v5105
        %v5215 = vunpack.c.h.b16 %v5105
        %v5216 = vunpack.c.l.b16 %v5106
        %v5217 = vunpack.c.h.b16 %v5106
        %v5218 = vunpack.c.l.b16 %v5107
        %v5219 = vunpack.c.h.b16 %v5107
        %v5220 = vunpack.c.l.b16 %v5108
        %v5221 = vunpack.c.h.b16 %v5108
        %v5222 = vunpack.c.l.b16 %v5109
        %v5223 = vunpack.c.h.b16 %v5109
        %v5224 = vpack.c.b16 %v5168, %v5160
        %v5225 = vpack.c.b16 %v5169, %v5161
        %v5226 = vpack.c.b16 %v5170, %v5162
        %v5227 = vpack.c.b16 %v5171, %v5163
        %v5228 = vpack.c.b16 %v5172, %v5164
        %v5229 = vpack.c.b16 %v5173, %v5165
        %v5230 = vpack.c.b16 %v5174, %v5166
        %v5231 = vpack.c.b16 %v5175, %v5167
        %v5232 = vpack.c.b16 %v5184, %v5176
        %v5233 = vpack.c.b16 %v5185, %v5177
        %v5234 = vpack.c.b16 %v5186, %v5178
        %v5235 = vpack.c.b16 %v5187, %v5179
        %v5236 = vpack.c.b16 %v5188, %v5180
        %v5237 = vpack.c.b16 %v5189, %v5181
        %v5238 = vpack.c.b16 %v5190, %v5182
        %v5239 = vpack.c.b16 %v5191, %v5183
        %v5240 = vpack.c.b16 %v5200, %v5192
        %v5241 = vpack.c.b16 %v5201, %v5193
        %v5242 = vpack.c.b16 %v5202, %v5194
        %v5243 = vpack.c.b16 %v5203, %v5195
        %v5244 = vpack.c.b16 %v5204, %v5196
        %v5245 = vpack.c.b16 %v5205, %v5197
        %v5246 = vpack.c.b16 %v5206, %v5198
        %v5247 = vpack.c.b16 %v5207, %v5199
        %v5248 = vpack.c.b16 %v5216, %v5208
        %v5249 = vpack.c.b16 %v5217, %v5209
        %v5250 = vpack.c.b16 %v5218, %v5210
        %v5251 = vpack.c.b16 %v5219, %v5211
        %v5252 = vpack.c.b16 %v5220, %v5212
        %v5253 = vpack.c.b16 %v5221, %v5213
        %v5254 = vpack.c.b16 %v5222, %v5214
        %v5255 = vpack.c.b16 %v5223, %v5215
        %v5289 = vsel %vm880, %v5074, 0
        %v5292 = vsel %vm880, %v5075, 0
        %v5295 = vsel %vm880, %v5076, 0
        %v5298 = vsel %vm880, %v5077, 0
        %5300 = vmatpush.bf16.msra.mxu0 0
        %5301 = vmatpush.bf16.msra.mxu0 0
        %5302 = vmatpush.bf16.msra.mxu0 0
        %5303 = vmatpush.bf16.msra.mxu0 0
        %5304 = vmatpush.bf16.msra.mxu0 %v5248
        %5305 = vmatpush.bf16.msra.mxu0 %v5240
        %5306 = vmatpush.bf16.msra.mxu0 %v5232
        %5307 = vmatpush.bf16.msra.mxu0 %v5224
        %5308 = vmatmul.bf16.gmra.mxu0 %v5289
        %v5309 = vpop.f32.mrf.mxu0
        %v5310 = vadd.f32 %v5112, %v5309
        %v5311 = vpop.f32.mrf.mxu0
        %v5312 = vadd.f32 %v5112, %v5311
        %5313 = vmatmul.bf16.gmra.mxu0 %v5292
        %v5314 = vpop.f32.mrf.mxu0
        %v5315 = vadd.f32 %v5112, %v5314
        %v5316 = vpop.f32.mrf.mxu0
        %v5317 = vadd.f32 %v5112, %v5316
        %5318 = vmatmul.bf16.gmra.mxu0 %v5295
        %v5319 = vpop.f32.mrf.mxu0
        %v5320 = vadd.f32 %v5112, %v5319
        %v5321 = vpop.f32.mrf.mxu0
        %v5322 = vadd.f32 %v5112, %v5321
        %5323 = vmatmul.bf16.gmra.mxu0 %v5298
        %v5324 = vpop.f32.mrf.mxu0
        %v5325 = vadd.f32 %v5112, %v5324
        %v5326 = vpop.f32.mrf.mxu0
        %v5327 = vadd.f32 %v5112, %v5326
        %5328 = vdwg.mxu0
        %5329 = vmatpush.bf16.msra.mxu0 0
        %5330 = vmatpush.bf16.msra.mxu0 0
        %5331 = vmatpush.bf16.msra.mxu0 0
        %5332 = vmatpush.bf16.msra.mxu0 0
        %5333 = vmatpush.bf16.msra.mxu0 %v5249
        %5334 = vmatpush.bf16.msra.mxu0 %v5241
        %5335 = vmatpush.bf16.msra.mxu0 %v5233
        %5336 = vmatpush.bf16.msra.mxu0 %v5225
        %5337 = vmatmul.bf16.gmra.mxu0 %v5289
        %v5338 = vpop.f32.mrf.mxu0
        %v5339 = vadd.f32 %v5113, %v5338
        %v5340 = vpop.f32.mrf.mxu0
        %v5341 = vadd.f32 %v5113, %v5340
        %5342 = vmatmul.bf16.gmra.mxu0 %v5292
        %v5343 = vpop.f32.mrf.mxu0
        %v5344 = vadd.f32 %v5113, %v5343
        %v5345 = vpop.f32.mrf.mxu0
        %v5346 = vadd.f32 %v5113, %v5345
        %5347 = vmatmul.bf16.gmra.mxu0 %v5295
        %v5348 = vpop.f32.mrf.mxu0
        %v5349 = vadd.f32 %v5113, %v5348
        %v5350 = vpop.f32.mrf.mxu0
        %v5351 = vadd.f32 %v5113, %v5350
        %5352 = vmatmul.bf16.gmra.mxu0 %v5298
        %v5353 = vpop.f32.mrf.mxu0
        %v5354 = vadd.f32 %v5113, %v5353
        %v5355 = vpop.f32.mrf.mxu0
        %v5356 = vadd.f32 %v5113, %v5355
        %5357 = vdwg.mxu0
        %5358 = vmatpush.bf16.msra.mxu0 0
        %5359 = vmatpush.bf16.msra.mxu0 0
        %5360 = vmatpush.bf16.msra.mxu0 0
        %5361 = vmatpush.bf16.msra.mxu0 0
        %5362 = vmatpush.bf16.msra.mxu0 %v5250
        %5363 = vmatpush.bf16.msra.mxu0 %v5242
        %5364 = vmatpush.bf16.msra.mxu0 %v5234
        %5365 = vmatpush.bf16.msra.mxu0 %v5226
        %5366 = vmatmul.bf16.gmra.mxu0 %v5289
        %v5367 = vpop.f32.mrf.mxu0
        %v5368 = vadd.f32 %v5114, %v5367
        %v5369 = vpop.f32.mrf.mxu0
        %v5370 = vadd.f32 %v5114, %v5369
        %5371 = vmatmul.bf16.gmra.mxu0 %v5292
        %v5372 = vpop.f32.mrf.mxu0
        %v5373 = vadd.f32 %v5114, %v5372
        %v5374 = vpop.f32.mrf.mxu0
        %v5375 = vadd.f32 %v5114, %v5374
        %5376 = vmatmul.bf16.gmra.mxu0 %v5295
        %v5377 = vpop.f32.mrf.mxu0
        %v5378 = vadd.f32 %v5114, %v5377
        %v5379 = vpop.f32.mrf.mxu0
        %v5380 = vadd.f32 %v5114, %v5379
        %5381 = vmatmul.bf16.gmra.mxu0 %v5298
        %v5382 = vpop.f32.mrf.mxu0
        %v5383 = vadd.f32 %v5114, %v5382
        %v5384 = vpop.f32.mrf.mxu0
        %v5385 = vadd.f32 %v5114, %v5384
        %5386 = vdwg.mxu0
        %5387 = vmatpush.bf16.msra.mxu0 0
        %5388 = vmatpush.bf16.msra.mxu0 0
        %5389 = vmatpush.bf16.msra.mxu0 0
        %5390 = vmatpush.bf16.msra.mxu0 0
        %5391 = vmatpush.bf16.msra.mxu0 %v5251
        %5392 = vmatpush.bf16.msra.mxu0 %v5243
        %5393 = vmatpush.bf16.msra.mxu0 %v5235
        %5394 = vmatpush.bf16.msra.mxu0 %v5227
        %5395 = vmatmul.bf16.gmra.mxu0 %v5289
        %v5396 = vpop.f32.mrf.mxu0
        %v5397 = vadd.f32 %v5115, %v5396
        %v5398 = vpop.f32.mrf.mxu0
        %v5399 = vadd.f32 %v5115, %v5398
        %5400 = vmatmul.bf16.gmra.mxu0 %v5292
        %v5401 = vpop.f32.mrf.mxu0
        %v5402 = vadd.f32 %v5115, %v5401
        %v5403 = vpop.f32.mrf.mxu0
        %v5404 = vadd.f32 %v5115, %v5403
        %5405 = vmatmul.bf16.gmra.mxu0 %v5295
        %v5406 = vpop.f32.mrf.mxu0
        %v5407 = vadd.f32 %v5115, %v5406
        %v5408 = vpop.f32.mrf.mxu0
        %v5409 = vadd.f32 %v5115, %v5408
        %5410 = vmatmul.bf16.gmra.mxu0 %v5298
        %v5411 = vpop.f32.mrf.mxu0
        %v5412 = vadd.f32 %v5115, %v5411
        %v5413 = vpop.f32.mrf.mxu0
        %v5414 = vadd.f32 %v5115, %v5413
        %5415 = vdwg.mxu0
        %5416 = vmatpush.bf16.msra.mxu0 0
        %5417 = vmatpush.bf16.msra.mxu0 0
        %5418 = vmatpush.bf16.msra.mxu0 0
        %5419 = vmatpush.bf16.msra.mxu0 0
        %5420 = vmatpush.bf16.msra.mxu0 %v5252
        %5421 = vmatpush.bf16.msra.mxu0 %v5244
        %5422 = vmatpush.bf16.msra.mxu0 %v5236
        %5423 = vmatpush.bf16.msra.mxu0 %v5228
        %5424 = vmatmul.bf16.gmra.mxu0 %v5289
        %v5425 = vpop.f32.mrf.mxu0
        %v5426 = vadd.f32 %v5116, %v5425
        %v5427 = vpop.f32.mrf.mxu0
        %v5428 = vadd.f32 %v5116, %v5427
        %5429 = vmatmul.bf16.gmra.mxu0 %v5292
        %v5430 = vpop.f32.mrf.mxu0
        %v5431 = vadd.f32 %v5116, %v5430
        %v5432 = vpop.f32.mrf.mxu0
        %v5433 = vadd.f32 %v5116, %v5432
        %5434 = vmatmul.bf16.gmra.mxu0 %v5295
        %v5435 = vpop.f32.mrf.mxu0
        %v5436 = vadd.f32 %v5116, %v5435
        %v5437 = vpop.f32.mrf.mxu0
        %v5438 = vadd.f32 %v5116, %v5437
        %5439 = vmatmul.bf16.gmra.mxu0 %v5298
        %v5440 = vpop.f32.mrf.mxu0
        %v5441 = vadd.f32 %v5116, %v5440
        %v5442 = vpop.f32.mrf.mxu0
        %v5443 = vadd.f32 %v5116, %v5442
        %5444 = vdwg.mxu0
        %5445 = vmatpush.bf16.msra.mxu0 0
        %5446 = vmatpush.bf16.msra.mxu0 0
        %5447 = vmatpush.bf16.msra.mxu0 0
        %5448 = vmatpush.bf16.msra.mxu0 0
        %5449 = vmatpush.bf16.msra.mxu0 %v5253
        %5450 = vmatpush.bf16.msra.mxu0 %v5245
        %5451 = vmatpush.bf16.msra.mxu0 %v5237
        %5452 = vmatpush.bf16.msra.mxu0 %v5229
        %5453 = vmatmul.bf16.gmra.mxu0 %v5289
        %v5454 = vpop.f32.mrf.mxu0
        %v5455 = vadd.f32 %v5117, %v5454
        %v5456 = vpop.f32.mrf.mxu0
        %v5457 = vadd.f32 %v5117, %v5456
        %5458 = vmatmul.bf16.gmra.mxu0 %v5292
        %v5459 = vpop.f32.mrf.mxu0
        %v5460 = vadd.f32 %v5117, %v5459
        %v5461 = vpop.f32.mrf.mxu0
        %v5462 = vadd.f32 %v5117, %v5461
        %5463 = vmatmul.bf16.gmra.mxu0 %v5295
        %v5464 = vpop.f32.mrf.mxu0
        %v5465 = vadd.f32 %v5117, %v5464
        %v5466 = vpop.f32.mrf.mxu0
        %v5467 = vadd.f32 %v5117, %v5466
        %5468 = vmatmul.bf16.gmra.mxu0 %v5298
        %v5469 = vpop.f32.mrf.mxu0
        %v5470 = vadd.f32 %v5117, %v5469
        %v5471 = vpop.f32.mrf.mxu0
        %v5472 = vadd.f32 %v5117, %v5471
        %5473 = vdwg.mxu0
        %5474 = vmatpush.bf16.msra.mxu0 0
        %5475 = vmatpush.bf16.msra.mxu0 0
        %5476 = vmatpush.bf16.msra.mxu0 0
        %5477 = vmatpush.bf16.msra.mxu0 0
        %5478 = vmatpush.bf16.msra.mxu0 %v5254
        %5479 = vmatpush.bf16.msra.mxu0 %v5246
        %5480 = vmatpush.bf16.msra.mxu0 %v5238
        %5481 = vmatpush.bf16.msra.mxu0 %v5230
        %5482 = vmatmul.bf16.gmra.mxu0 %v5289
        %v5483 = vpop.f32.mrf.mxu0
        %v5484 = vadd.f32 %v5118, %v5483
        %v5485 = vpop.f32.mrf.mxu0
        %v5486 = vadd.f32 %v5118, %v5485
        %5487 = vmatmul.bf16.gmra.mxu0 %v5292
        %v5488 = vpop.f32.mrf.mxu0
        %v5489 = vadd.f32 %v5118, %v5488
        %v5490 = vpop.f32.mrf.mxu0
        %v5491 = vadd.f32 %v5118, %v5490
        %5492 = vmatmul.bf16.gmra.mxu0 %v5295
        %v5493 = vpop.f32.mrf.mxu0
        %v5494 = vadd.f32 %v5118, %v5493
        %v5495 = vpop.f32.mrf.mxu0
        %v5496 = vadd.f32 %v5118, %v5495
        %5497 = vmatmul.bf16.gmra.mxu0 %v5298
        %v5498 = vpop.f32.mrf.mxu0
        %v5499 = vadd.f32 %v5118, %v5498
        %v5500 = vpop.f32.mrf.mxu0
        %v5501 = vadd.f32 %v5118, %v5500
        %5502 = vdwg.mxu0
        %5503 = vmatpush.bf16.msra.mxu0 0
        %5504 = vmatpush.bf16.msra.mxu0 0
        %5505 = vmatpush.bf16.msra.mxu0 0
        %5506 = vmatpush.bf16.msra.mxu0 0
        %5507 = vmatpush.bf16.msra.mxu0 %v5255
        %5508 = vmatpush.bf16.msra.mxu0 %v5247
        %5509 = vmatpush.bf16.msra.mxu0 %v5239
        %5510 = vmatpush.bf16.msra.mxu0 %v5231
        %5511 = vmatmul.bf16.gmra.mxu0 %v5289
        %v5512 = vpop.f32.mrf.mxu0
        %v5513 = vadd.f32 %v5119, %v5512
        %v5514 = vpop.f32.mrf.mxu0
        %v5515 = vadd.f32 %v5119, %v5514
        %5516 = vmatmul.bf16.gmra.mxu0 %v5292
        %v5517 = vpop.f32.mrf.mxu0
        %v5518 = vadd.f32 %v5119, %v5517
        %v5519 = vpop.f32.mrf.mxu0
        %v5520 = vadd.f32 %v5119, %v5519
        %5521 = vmatmul.bf16.gmra.mxu0 %v5295
        %v5522 = vpop.f32.mrf.mxu0
        %v5523 = vadd.f32 %v5119, %v5522
        %v5524 = vpop.f32.mrf.mxu0
        %v5525 = vadd.f32 %v5119, %v5524
        %5526 = vmatmul.bf16.gmra.mxu0 %v5298
        %v5527 = vpop.f32.mrf.mxu0
        %v5528 = vadd.f32 %v5119, %v5527
        %v5529 = vpop.f32.mrf.mxu0
        %v5530 = vadd.f32 %v5119, %v5529
        %5531 = vdwg.mxu0
        %v5532 = vmax.f32 %v5310, 0.0
        %v5533 = vmax.f32 %v5339, 0.0
        %v5534 = vmax.f32 %v5368, 0.0
        %v5535 = vmax.f32 %v5397, 0.0
        %v5536 = vmax.f32 %v5426, 0.0
        %v5537 = vmax.f32 %v5455, 0.0
        %v5538 = vmax.f32 %v5484, 0.0
        %v5539 = vmax.f32 %v5513, 0.0
        %v5540 = vmax.f32 %v5312, 0.0
        %v5541 = vmax.f32 %v5341, 0.0
        %v5542 = vmax.f32 %v5370, 0.0
        %v5543 = vmax.f32 %v5399, 0.0
        %v5544 = vmax.f32 %v5428, 0.0
        %v5545 = vmax.f32 %v5457, 0.0
        %v5546 = vmax.f32 %v5486, 0.0
        %v5547 = vmax.f32 %v5515, 0.0
        %v5548 = vmax.f32 %v5315, 0.0
        %v5549 = vmax.f32 %v5344, 0.0
        %v5550 = vmax.f32 %v5373, 0.0
        %v5551 = vmax.f32 %v5402, 0.0
        %v5552 = vmax.f32 %v5431, 0.0
        %v5553 = vmax.f32 %v5460, 0.0
        %v5554 = vmax.f32 %v5489, 0.0
        %v5555 = vmax.f32 %v5518, 0.0
        %v5556 = vmax.f32 %v5317, 0.0
        %v5557 = vmax.f32 %v5346, 0.0
        %v5558 = vmax.f32 %v5375, 0.0
        %v5559 = vmax.f32 %v5404, 0.0
        %v5560 = vmax.f32 %v5433, 0.0
        %v5561 = vmax.f32 %v5462, 0.0
        %v5562 = vmax.f32 %v5491, 0.0
        %v5563 = vmax.f32 %v5520, 0.0
        %v5564 = vmax.f32 %v5320, 0.0
        %v5565 = vmax.f32 %v5349, 0.0
        %v5566 = vmax.f32 %v5378, 0.0
        %v5567 = vmax.f32 %v5407, 0.0
        %v5568 = vmax.f32 %v5436, 0.0
        %v5569 = vmax.f32 %v5465, 0.0
        %v5570 = vmax.f32 %v5494, 0.0
        %v5571 = vmax.f32 %v5523, 0.0
        %v5572 = vmax.f32 %v5322, 0.0
        %v5573 = vmax.f32 %v5351, 0.0
        %v5574 = vmax.f32 %v5380, 0.0
        %v5575 = vmax.f32 %v5409, 0.0
        %v5576 = vmax.f32 %v5438, 0.0
        %v5577 = vmax.f32 %v5467, 0.0
        %v5578 = vmax.f32 %v5496, 0.0
        %v5579 = vmax.f32 %v5525, 0.0
        %v5580 = vmax.f32 %v5325, 0.0
        %v5581 = vmax.f32 %v5354, 0.0
        %v5582 = vmax.f32 %v5383, 0.0
        %v5583 = vmax.f32 %v5412, 0.0
        %v5584 = vmax.f32 %v5441, 0.0
        %v5585 = vmax.f32 %v5470, 0.0
        %v5586 = vmax.f32 %v5499, 0.0
        %v5587 = vmax.f32 %v5528, 0.0
        %v5588 = vmax.f32 %v5327, 0.0
        %v5589 = vmax.f32 %v5356, 0.0
        %v5590 = vmax.f32 %v5385, 0.0
        %v5591 = vmax.f32 %v5414, 0.0
        %v5592 = vmax.f32 %v5443, 0.0
        %v5593 = vmax.f32 %v5472, 0.0
        %v5594 = vmax.f32 %v5501, 0.0
        %v5595 = vmax.f32 %v5530, 0.0
        %v5596 = vpack.c.bf16 %v5540, %v5532
        %v5597 = vpack.c.bf16 %v5541, %v5533
        %v5598 = vpack.c.bf16 %v5542, %v5534
        %v5599 = vpack.c.bf16 %v5543, %v5535
        %v5600 = vpack.c.bf16 %v5544, %v5536
        %v5601 = vpack.c.bf16 %v5545, %v5537
        %v5602 = vpack.c.bf16 %v5546, %v5538
        %v5603 = vpack.c.bf16 %v5547, %v5539
        %v5604 = vpack.c.bf16 %v5556, %v5548
        %v5605 = vpack.c.bf16 %v5557, %v5549
        %v5606 = vpack.c.bf16 %v5558, %v5550
        %v5607 = vpack.c.bf16 %v5559, %v5551
        %v5608 = vpack.c.bf16 %v5560, %v5552
        %v5609 = vpack.c.bf16 %v5561, %v5553
        %v5610 = vpack.c.bf16 %v5562, %v5554
        %v5611 = vpack.c.bf16 %v5563, %v5555
        %v5612 = vpack.c.bf16 %v5572, %v5564
        %v5613 = vpack.c.bf16 %v5573, %v5565
        %v5614 = vpack.c.bf16 %v5574, %v5566
        %v5615 = vpack.c.bf16 %v5575, %v5567
        %v5616 = vpack.c.bf16 %v5576, %v5568
        %v5617 = vpack.c.bf16 %v5577, %v5569
        %v5618 = vpack.c.bf16 %v5578, %v5570
        %v5619 = vpack.c.bf16 %v5579, %v5571
        %v5620 = vpack.c.bf16 %v5588, %v5580
        %v5621 = vpack.c.bf16 %v5589, %v5581
        %v5622 = vpack.c.bf16 %v5590, %v5582
        %v5623 = vpack.c.bf16 %v5591, %v5583
        %v5624 = vpack.c.bf16 %v5592, %v5584
        %v5625 = vpack.c.bf16 %v5593, %v5585
        %v5626 = vpack.c.bf16 %v5594, %v5586
        %v5627 = vpack.c.bf16 %v5595, %v5587
        %v5628 = vld [vmem:[%s20] sm:$0xf]
        %v5629 = vld [vmem:[%s20 + $0x4] sm:$0xf]
        %v5630 = vld [vmem:[%s20 + $0x8] sm:$0xf]
        %v5631 = vld [vmem:[%s20 + $0xc] sm:$0xf]
        %v5632 = vld [vmem:[%s20 + $0x10] sm:$0xf]
        %v5633 = vld [vmem:[%s20 + $0x14] sm:$0xf]
        %v5634 = vld [vmem:[%s20 + $0x18] sm:$0xf]
        %v5635 = vld [vmem:[%s20 + $0x1c] sm:$0xf]
        %v5636 = vld [vmem:[%s20 + $0x20] sm:$0xf]
        %v5637 = vld [vmem:[%s20 + $0x24] sm:$0xf]
        %v5638 = vld [vmem:[%s20 + $0x28] sm:$0xf]
        %v5639 = vld [vmem:[%s20 + $0x2c] sm:$0xf]
        %v5640 = vld [vmem:[%s20 + $0x30] sm:$0xf]
        %v5641 = vld [vmem:[%s20 + $0x34] sm:$0xf]
        %v5642 = vld [vmem:[%s20 + $0x38] sm:$0xf]
        %v5643 = vld [vmem:[%s20 + $0x3c] sm:$0xf]
        %v5644 = vld [vmem:[%s20 + $0x40] sm:$0xf]
        %v5645 = vld [vmem:[%s20 + $0x44] sm:$0xf]
        %v5646 = vld [vmem:[%s20 + $0x48] sm:$0xf]
        %v5647 = vld [vmem:[%s20 + $0x4c] sm:$0xf]
        %v5648 = vld [vmem:[%s20 + $0x50] sm:$0xf]
        %v5649 = vld [vmem:[%s20 + $0x54] sm:$0xf]
        %v5650 = vld [vmem:[%s20 + $0x58] sm:$0xf]
        %v5651 = vld [vmem:[%s20 + $0x5c] sm:$0xf]
        %v5652 = vld [vmem:[%s20 + $0x60] sm:$0xf]
        %v5653 = vld [vmem:[%s20 + $0x64] sm:$0xf]
        %v5654 = vld [vmem:[%s20 + $0x68] sm:$0xf]
        %v5655 = vld [vmem:[%s20 + $0x6c] sm:$0xf]
        %v5656 = vld [vmem:[%s20 + $0x70] sm:$0xf]
        %v5657 = vld [vmem:[%s20 + $0x74] sm:$0xf]
        %v5658 = vld [vmem:[%s20 + $0x78] sm:$0xf]
        %v5659 = vld [vmem:[%s20 + $0x7c] sm:$0xf]
        %v5660 = vld [vmem:[%s20 + $0x80] sm:$0xf]
        %v5661 = vld [vmem:[%s20 + $0x84] sm:$0xf]
        %v5662 = vld [vmem:[%s20 + $0x88] sm:$0xf]
        %v5663 = vld [vmem:[%s20 + $0x8c] sm:$0xf]
        %v5664 = vld [vmem:[%s20 + $0x90] sm:$0xf]
        %v5665 = vld [vmem:[%s20 + $0x94] sm:$0xf]
        %v5666 = vld [vmem:[%s20 + $0x98] sm:$0xf]
        %v5667 = vld [vmem:[%s20 + $0x9c] sm:$0xf]
        %v5668 = vld [vmem:[%s20 + $0xa0] sm:$0xf]
        %v5669 = vld [vmem:[%s20 + $0xa4] sm:$0xf]
        %v5670 = vld [vmem:[%s20 + $0xa8] sm:$0xf]
        %v5671 = vld [vmem:[%s20 + $0xac] sm:$0xf]
        %v5672 = vld [vmem:[%s20 + $0xb0] sm:$0xf]
        %v5673 = vld [vmem:[%s20 + $0xb4] sm:$0xf]
        %v5674 = vld [vmem:[%s20 + $0xb8] sm:$0xf]
        %v5675 = vld [vmem:[%s20 + $0xbc] sm:$0xf]
        %v5676 = vld [vmem:[%s20 + $0xc0] sm:$0xf]
        %v5677 = vld [vmem:[%s20 + $0xc4] sm:$0xf]
        %v5678 = vld [vmem:[%s20 + $0xc8] sm:$0xf]
        %v5679 = vld [vmem:[%s20 + $0xcc] sm:$0xf]
        %v5680 = vld [vmem:[%s20 + $0xd0] sm:$0xf]
        %v5681 = vld [vmem:[%s20 + $0xd4] sm:$0xf]
        %v5682 = vld [vmem:[%s20 + $0xd8] sm:$0xf]
        %v5683 = vld [vmem:[%s20 + $0xdc] sm:$0xf]
        %v5684 = vld [vmem:[%s20 + $0xe0] sm:$0xf]
        %v5685 = vld [vmem:[%s20 + $0xe4] sm:$0xf]
        %v5686 = vld [vmem:[%s20 + $0xe8] sm:$0xf]
        %v5687 = vld [vmem:[%s20 + $0xec] sm:$0xf]
        %v5688 = vld [vmem:[%s20 + $0xf0] sm:$0xf]
        %v5689 = vld [vmem:[%s20 + $0xf4] sm:$0xf]
        %v5690 = vld [vmem:[%s20 + $0xf8] sm:$0xf]
        %v5691 = vld [vmem:[%s20 + $0xfc] sm:$0xf]
        %v5692 = vld [vmem:[%s20 + $0x100] sm:$0xf]
        %v5693 = vld [vmem:[%s20 + $0x104] sm:$0xf]
        %v5694 = vld [vmem:[%s20 + $0x108] sm:$0xf]
        %v5695 = vld [vmem:[%s20 + $0x10c] sm:$0xf]
        %v5696 = vld [vmem:[%s20 + $0x110] sm:$0xf]
        %v5697 = vld [vmem:[%s20 + $0x114] sm:$0xf]
        %v5698 = vld [vmem:[%s20 + $0x118] sm:$0xf]
        %v5699 = vld [vmem:[%s20 + $0x11c] sm:$0xf]
        %v5700 = vld [vmem:[%s20 + $0x120] sm:$0xf]
        %v5701 = vld [vmem:[%s20 + $0x124] sm:$0xf]
        %v5702 = vld [vmem:[%s20 + $0x128] sm:$0xf]
        %v5703 = vld [vmem:[%s20 + $0x12c] sm:$0xf]
        %v5704 = vld [vmem:[%s20 + $0x130] sm:$0xf]
        %v5705 = vld [vmem:[%s20 + $0x134] sm:$0xf]
        %v5706 = vld [vmem:[%s20 + $0x138] sm:$0xf]
        %v5707 = vld [vmem:[%s20 + $0x13c] sm:$0xf]
        %v5708 = vld [vmem:[%s20 + $0x140] sm:$0xf]
        %v5709 = vld [vmem:[%s20 + $0x144] sm:$0xf]
        %v5710 = vld [vmem:[%s20 + $0x148] sm:$0xf]
        %v5711 = vld [vmem:[%s20 + $0x14c] sm:$0xf]
        %v5712 = vld [vmem:[%s20 + $0x150] sm:$0xf]
        %v5713 = vld [vmem:[%s20 + $0x154] sm:$0xf]
        %v5714 = vld [vmem:[%s20 + $0x158] sm:$0xf]
        %v5715 = vld [vmem:[%s20 + $0x15c] sm:$0xf]
        %v5716 = vld [vmem:[%s20 + $0x160] sm:$0xf]
        %v5717 = vld [vmem:[%s20 + $0x164] sm:$0xf]
        %v5718 = vld [vmem:[%s20 + $0x168] sm:$0xf]
        %v5719 = vld [vmem:[%s20 + $0x16c] sm:$0xf]
        %v5720 = vld [vmem:[%s20 + $0x170] sm:$0xf]
        %v5721 = vld [vmem:[%s20 + $0x174] sm:$0xf]
        %v5722 = vld [vmem:[%s20 + $0x178] sm:$0xf]
        %v5723 = vld [vmem:[%s20 + $0x17c] sm:$0xf]
        %v5724 = vld [vmem:[%s20 + $0x180] sm:$0xf]
        %v5725 = vld [vmem:[%s20 + $0x184] sm:$0xf]
        %v5726 = vld [vmem:[%s20 + $0x188] sm:$0xf]
        %v5727 = vld [vmem:[%s20 + $0x18c] sm:$0xf]
        %v5728 = vld [vmem:[%s20 + $0x190] sm:$0xf]
        %v5729 = vld [vmem:[%s20 + $0x194] sm:$0xf]
        %v5730 = vld [vmem:[%s20 + $0x198] sm:$0xf]
        %v5731 = vld [vmem:[%s20 + $0x19c] sm:$0xf]
        %v5732 = vld [vmem:[%s20 + $0x1a0] sm:$0xf]
        %v5733 = vld [vmem:[%s20 + $0x1a4] sm:$0xf]
        %v5734 = vld [vmem:[%s20 + $0x1a8] sm:$0xf]
        %v5735 = vld [vmem:[%s20 + $0x1ac] sm:$0xf]
        %v5736 = vld [vmem:[%s20 + $0x1b0] sm:$0xf]
        %v5737 = vld [vmem:[%s20 + $0x1b4] sm:$0xf]
        %v5738 = vld [vmem:[%s20 + $0x1b8] sm:$0xf]
        %v5739 = vld [vmem:[%s20 + $0x1bc] sm:$0xf]
        %v5740 = vld [vmem:[%s20 + $0x1c0] sm:$0xf]
        %v5741 = vld [vmem:[%s20 + $0x1c4] sm:$0xf]
        %v5742 = vld [vmem:[%s20 + $0x1c8] sm:$0xf]
        %v5743 = vld [vmem:[%s20 + $0x1cc] sm:$0xf]
        %v5744 = vld [vmem:[%s20 + $0x1d0] sm:$0xf]
        %v5745 = vld [vmem:[%s20 + $0x1d4] sm:$0xf]
        %v5746 = vld [vmem:[%s20 + $0x1d8] sm:$0xf]
        %v5747 = vld [vmem:[%s20 + $0x1dc] sm:$0xf]
        %v5748 = vld [vmem:[%s20 + $0x1e0] sm:$0xf]
        %v5749 = vld [vmem:[%s20 + $0x1e4] sm:$0xf]
        %v5750 = vld [vmem:[%s20 + $0x1e8] sm:$0xf]
        %v5751 = vld [vmem:[%s20 + $0x1ec] sm:$0xf]
        %v5752 = vld [vmem:[%s20 + $0x1f0] sm:$0xf]
        %v5753 = vld [vmem:[%s20 + $0x1f4] sm:$0xf]
        %v5754 = vld [vmem:[%s20 + $0x1f8] sm:$0xf]
        %v5755 = vld [vmem:[%s20 + $0x1fc] sm:$0xf]
        %v5756 = vld [vmem:[%s21] sm:$0x1]
        %v5758 = vperm.slane %v5756, 0
        %v5888 = vunpack.c.l.b16 %v5628
        %v5889 = vunpack.c.l.b16 %v5629
        %v5890 = vunpack.c.l.b16 %v5630
        %v5891 = vunpack.c.l.b16 %v5631
        %v5892 = vunpack.c.l.b16 %v5632
        %v5893 = vunpack.c.l.b16 %v5633
        %v5894 = vunpack.c.l.b16 %v5634
        %v5895 = vunpack.c.l.b16 %v5635
        %v5896 = vunpack.c.l.b16 %v5636
        %v5897 = vunpack.c.l.b16 %v5637
        %v5898 = vunpack.c.l.b16 %v5638
        %v5899 = vunpack.c.l.b16 %v5639
        %v5900 = vunpack.c.l.b16 %v5640
        %v5901 = vunpack.c.l.b16 %v5641
        %v5902 = vunpack.c.l.b16 %v5642
        %v5903 = vunpack.c.l.b16 %v5643
        %v5904 = vunpack.c.l.b16 %v5644
        %v5905 = vunpack.c.l.b16 %v5645
        %v5906 = vunpack.c.l.b16 %v5646
        %v5907 = vunpack.c.l.b16 %v5647
        %v5908 = vunpack.c.l.b16 %v5648
        %v5909 = vunpack.c.l.b16 %v5649
        %v5910 = vunpack.c.l.b16 %v5650
        %v5911 = vunpack.c.l.b16 %v5651
        %v5912 = vunpack.c.l.b16 %v5652
        %v5913 = vunpack.c.l.b16 %v5653
        %v5914 = vunpack.c.l.b16 %v5654
        %v5915 = vunpack.c.l.b16 %v5655
        %v5916 = vunpack.c.l.b16 %v5656
        %v5917 = vunpack.c.l.b16 %v5657
        %v5918 = vunpack.c.l.b16 %v5658
        %v5919 = vunpack.c.l.b16 %v5659
        %v5920 = vunpack.c.l.b16 %v5660
        %v5921 = vunpack.c.l.b16 %v5661
        %v5922 = vunpack.c.l.b16 %v5662
        %v5923 = vunpack.c.l.b16 %v5663
        %v5924 = vunpack.c.l.b16 %v5664
        %v5925 = vunpack.c.l.b16 %v5665
        %v5926 = vunpack.c.l.b16 %v5666
        %v5927 = vunpack.c.l.b16 %v5667
        %v5928 = vunpack.c.l.b16 %v5668
        %v5929 = vunpack.c.l.b16 %v5669
        %v5930 = vunpack.c.l.b16 %v5670
        %v5931 = vunpack.c.l.b16 %v5671
        %v5932 = vunpack.c.l.b16 %v5672
        %v5933 = vunpack.c.l.b16 %v5673
        %v5934 = vunpack.c.l.b16 %v5674
        %v5935 = vunpack.c.l.b16 %v5675
        %v5936 = vunpack.c.l.b16 %v5676
        %v5937 = vunpack.c.l.b16 %v5677
        %v5938 = vunpack.c.l.b16 %v5678
        %v5939 = vunpack.c.l.b16 %v5679
        %v5940 = vunpack.c.l.b16 %v5680
        %v5941 = vunpack.c.l.b16 %v5681
        %v5942 = vunpack.c.l.b16 %v5682
        %v5943 = vunpack.c.l.b16 %v5683
        %v5944 = vunpack.c.l.b16 %v5684
        %v5945 = vunpack.c.l.b16 %v5685
        %v5946 = vunpack.c.l.b16 %v5686
        %v5947 = vunpack.c.l.b16 %v5687
        %v5948 = vunpack.c.l.b16 %v5688
        %v5949 = vunpack.c.l.b16 %v5689
        %v5950 = vunpack.c.l.b16 %v5690
        %v5951 = vunpack.c.l.b16 %v5691
        %v5952 = vunpack.c.l.b16 %v5692
        %v5953 = vunpack.c.l.b16 %v5693
        %v5954 = vunpack.c.l.b16 %v5694
        %v5955 = vunpack.c.l.b16 %v5695
        %v5956 = vunpack.c.l.b16 %v5696
        %v5957 = vunpack.c.l.b16 %v5697
        %v5958 = vunpack.c.l.b16 %v5698
        %v5959 = vunpack.c.l.b16 %v5699
        %v5960 = vunpack.c.l.b16 %v5700
        %v5961 = vunpack.c.l.b16 %v5701
        %v5962 = vunpack.c.l.b16 %v5702
        %v5963 = vunpack.c.l.b16 %v5703
        %v5964 = vunpack.c.l.b16 %v5704
        %v5965 = vunpack.c.l.b16 %v5705
        %v5966 = vunpack.c.l.b16 %v5706
        %v5967 = vunpack.c.l.b16 %v5707
        %v5968 = vunpack.c.l.b16 %v5708
        %v5969 = vunpack.c.l.b16 %v5709
        %v5970 = vunpack.c.l.b16 %v5710
        %v5971 = vunpack.c.l.b16 %v5711
        %v5972 = vunpack.c.l.b16 %v5712
        %v5973 = vunpack.c.l.b16 %v5713
        %v5974 = vunpack.c.l.b16 %v5714
        %v5975 = vunpack.c.l.b16 %v5715
        %v5976 = vunpack.c.l.b16 %v5716
        %v5977 = vunpack.c.l.b16 %v5717
        %v5978 = vunpack.c.l.b16 %v5718
        %v5979 = vunpack.c.l.b16 %v5719
        %v5980 = vunpack.c.l.b16 %v5720
        %v5981 = vunpack.c.l.b16 %v5721
        %v5982 = vunpack.c.l.b16 %v5722
        %v5983 = vunpack.c.l.b16 %v5723
        %v5984 = vunpack.c.l.b16 %v5724
        %v5985 = vunpack.c.l.b16 %v5725
        %v5986 = vunpack.c.l.b16 %v5726
        %v5987 = vunpack.c.l.b16 %v5727
        %v5988 = vunpack.c.l.b16 %v5728
        %v5989 = vunpack.c.l.b16 %v5729
        %v5990 = vunpack.c.l.b16 %v5730
        %v5991 = vunpack.c.l.b16 %v5731
        %v5992 = vunpack.c.l.b16 %v5732
        %v5993 = vunpack.c.l.b16 %v5733
        %v5994 = vunpack.c.l.b16 %v5734
        %v5995 = vunpack.c.l.b16 %v5735
        %v5996 = vunpack.c.l.b16 %v5736
        %v5997 = vunpack.c.l.b16 %v5737
        %v5998 = vunpack.c.l.b16 %v5738
        %v5999 = vunpack.c.l.b16 %v5739
        %v6000 = vunpack.c.l.b16 %v5740
        %v6001 = vunpack.c.l.b16 %v5741
        %v6002 = vunpack.c.l.b16 %v5742
        %v6003 = vunpack.c.l.b16 %v5743
        %v6004 = vunpack.c.l.b16 %v5744
        %v6005 = vunpack.c.l.b16 %v5745
        %v6006 = vunpack.c.l.b16 %v5746
        %v6007 = vunpack.c.l.b16 %v5747
        %v6008 = vunpack.c.l.b16 %v5748
        %v6009 = vunpack.c.l.b16 %v5749
        %v6010 = vunpack.c.l.b16 %v5750
        %v6011 = vunpack.c.l.b16 %v5751
        %v6012 = vunpack.c.l.b16 %v5752
        %v6013 = vunpack.c.l.b16 %v5753
        %v6014 = vunpack.c.l.b16 %v5754
        %v6015 = vunpack.c.l.b16 %v5755
        %v6016 = vpack.c.b16 %v5889, %v5888
        %v6017 = vpack.c.b16 %v5891, %v5890
        %v6018 = vpack.c.b16 %v5893, %v5892
        %v6019 = vpack.c.b16 %v5895, %v5894
        %v6020 = vpack.c.b16 %v5897, %v5896
        %v6021 = vpack.c.b16 %v5899, %v5898
        %v6022 = vpack.c.b16 %v5901, %v5900
        %v6023 = vpack.c.b16 %v5903, %v5902
        %v6024 = vpack.c.b16 %v5905, %v5904
        %v6025 = vpack.c.b16 %v5907, %v5906
        %v6026 = vpack.c.b16 %v5909, %v5908
        %v6027 = vpack.c.b16 %v5911, %v5910
        %v6028 = vpack.c.b16 %v5913, %v5912
        %v6029 = vpack.c.b16 %v5915, %v5914
        %v6030 = vpack.c.b16 %v5917, %v5916
        %v6031 = vpack.c.b16 %v5919, %v5918
        %v6032 = vpack.c.b16 %v5921, %v5920
        %v6033 = vpack.c.b16 %v5923, %v5922
        %v6034 = vpack.c.b16 %v5925, %v5924
        %v6035 = vpack.c.b16 %v5927, %v5926
        %v6036 = vpack.c.b16 %v5929, %v5928
        %v6037 = vpack.c.b16 %v5931, %v5930
        %v6038 = vpack.c.b16 %v5933, %v5932
        %v6039 = vpack.c.b16 %v5935, %v5934
        %v6040 = vpack.c.b16 %v5937, %v5936
        %v6041 = vpack.c.b16 %v5939, %v5938
        %v6042 = vpack.c.b16 %v5941, %v5940
        %v6043 = vpack.c.b16 %v5943, %v5942
        %v6044 = vpack.c.b16 %v5945, %v5944
        %v6045 = vpack.c.b16 %v5947, %v5946
        %v6046 = vpack.c.b16 %v5949, %v5948
        %v6047 = vpack.c.b16 %v5951, %v5950
        %v6048 = vpack.c.b16 %v5953, %v5952
        %v6049 = vpack.c.b16 %v5955, %v5954
        %v6050 = vpack.c.b16 %v5957, %v5956
        %v6051 = vpack.c.b16 %v5959, %v5958
        %v6052 = vpack.c.b16 %v5961, %v5960
        %v6053 = vpack.c.b16 %v5963, %v5962
        %v6054 = vpack.c.b16 %v5965, %v5964
        %v6055 = vpack.c.b16 %v5967, %v5966
        %v6056 = vpack.c.b16 %v5969, %v5968
        %v6057 = vpack.c.b16 %v5971, %v5970
        %v6058 = vpack.c.b16 %v5973, %v5972
        %v6059 = vpack.c.b16 %v5975, %v5974
        %v6060 = vpack.c.b16 %v5977, %v5976
        %v6061 = vpack.c.b16 %v5979, %v5978
        %v6062 = vpack.c.b16 %v5981, %v5980
        %v6063 = vpack.c.b16 %v5983, %v5982
        %v6064 = vpack.c.b16 %v5985, %v5984
        %v6065 = vpack.c.b16 %v5987, %v5986
        %v6066 = vpack.c.b16 %v5989, %v5988
        %v6067 = vpack.c.b16 %v5991, %v5990
        %v6068 = vpack.c.b16 %v5993, %v5992
        %v6069 = vpack.c.b16 %v5995, %v5994
        %v6070 = vpack.c.b16 %v5997, %v5996
        %v6071 = vpack.c.b16 %v5999, %v5998
        %v6072 = vpack.c.b16 %v6001, %v6000
        %v6073 = vpack.c.b16 %v6003, %v6002
        %v6074 = vpack.c.b16 %v6005, %v6004
        %v6075 = vpack.c.b16 %v6007, %v6006
        %v6076 = vpack.c.b16 %v6009, %v6008
        %v6077 = vpack.c.b16 %v6011, %v6010
        %v6078 = vpack.c.b16 %v6013, %v6012
        %v6079 = vpack.c.b16 %v6015, %v6014
        %6144 = vmatpush.bf16.msra.mxu0 %v6023
        %6145 = vmatpush.bf16.msra.mxu0 %v6022
        %6146 = vmatpush.bf16.msra.mxu0 %v6021
        %6147 = vmatpush.bf16.msra.mxu0 %v6020
        %6148 = vmatpush.bf16.msra.mxu0 %v6019
        %6149 = vmatpush.bf16.msra.mxu0 %v6018
        %6150 = vmatpush.bf16.msra.mxu0 %v6017
        %6151 = vmatpush.bf16.msra.mxu0 %v6016
        %6152 = vmatmul.bf16.gmra.mxu0 %v5596
        %v6153 = vpop.f32.mrf.mxu0
        %v6154 = vadd.f32 %v5758, %v6153
        %v6155 = vpop.f32.mrf.mxu0
        %v6156 = vadd.f32 %v5758, %v6155
        %6157 = vmatmul.bf16.gmra.mxu0 %v5604
        %v6158 = vpop.f32.mrf.mxu0
        %v6159 = vadd.f32 %v5758, %v6158
        %v6160 = vpop.f32.mrf.mxu0
        %v6161 = vadd.f32 %v5758, %v6160
        %6162 = vmatmul.bf16.gmra.mxu0 %v5612
        %v6163 = vpop.f32.mrf.mxu0
        %v6164 = vadd.f32 %v5758, %v6163
        %v6165 = vpop.f32.mrf.mxu0
        %v6166 = vadd.f32 %v5758, %v6165
        %6167 = vmatmul.bf16.gmra.mxu0 %v5620
        %v6168 = vpop.f32.mrf.mxu0
        %v6169 = vadd.f32 %v5758, %v6168
        %v6170 = vpop.f32.mrf.mxu0
        %v6171 = vadd.f32 %v5758, %v6170
        %6172 = vdwg.mxu0
        %6173 = vmatpush.bf16.msra.mxu0 %v6031
        %6174 = vmatpush.bf16.msra.mxu0 %v6030
        %6175 = vmatpush.bf16.msra.mxu0 %v6029
        %6176 = vmatpush.bf16.msra.mxu0 %v6028
        %6177 = vmatpush.bf16.msra.mxu0 %v6027
        %6178 = vmatpush.bf16.msra.mxu0 %v6026
        %6179 = vmatpush.bf16.msra.mxu0 %v6025
        %6180 = vmatpush.bf16.msra.mxu0 %v6024
        %6181 = vmatmul.bf16.gmra.mxu0 %v5597
        %v6182 = vpop.f32.mrf.mxu0
        %v6183 = vadd.f32 %v6154, %v6182
        %v6184 = vpop.f32.mrf.mxu0
        %v6185 = vadd.f32 %v6156, %v6184
        %6186 = vmatmul.bf16.gmra.mxu0 %v5605
        %v6187 = vpop.f32.mrf.mxu0
        %v6188 = vadd.f32 %v6159, %v6187
        %v6189 = vpop.f32.mrf.mxu0
        %v6190 = vadd.f32 %v6161, %v6189
        %6191 = vmatmul.bf16.gmra.mxu0 %v5613
        %v6192 = vpop.f32.mrf.mxu0
        %v6193 = vadd.f32 %v6164, %v6192
        %v6194 = vpop.f32.mrf.mxu0
        %v6195 = vadd.f32 %v6166, %v6194
        %6196 = vmatmul.bf16.gmra.mxu0 %v5621
        %v6197 = vpop.f32.mrf.mxu0
        %v6198 = vadd.f32 %v6169, %v6197
        %v6199 = vpop.f32.mrf.mxu0
        %v6200 = vadd.f32 %v6171, %v6199
        %6201 = vdwg.mxu0
        %6202 = vmatpush.bf16.msra.mxu0 %v6039
        %6203 = vmatpush.bf16.msra.mxu0 %v6038
        %6204 = vmatpush.bf16.msra.mxu0 %v6037
        %6205 = vmatpush.bf16.msra.mxu0 %v6036
        %6206 = vmatpush.bf16.msra.mxu0 %v6035
        %6207 = vmatpush.bf16.msra.mxu0 %v6034
        %6208 = vmatpush.bf16.msra.mxu0 %v6033
        %6209 = vmatpush.bf16.msra.mxu0 %v6032
        %6210 = vmatmul.bf16.gmra.mxu0 %v5598
        %v6211 = vpop.f32.mrf.mxu0
        %v6212 = vadd.f32 %v6183, %v6211
        %v6213 = vpop.f32.mrf.mxu0
        %v6214 = vadd.f32 %v6185, %v6213
        %6215 = vmatmul.bf16.gmra.mxu0 %v5606
        %v6216 = vpop.f32.mrf.mxu0
        %v6217 = vadd.f32 %v6188, %v6216
        %v6218 = vpop.f32.mrf.mxu0
        %v6219 = vadd.f32 %v6190, %v6218
        %6220 = vmatmul.bf16.gmra.mxu0 %v5614
        %v6221 = vpop.f32.mrf.mxu0
        %v6222 = vadd.f32 %v6193, %v6221
        %v6223 = vpop.f32.mrf.mxu0
        %v6224 = vadd.f32 %v6195, %v6223
        %6225 = vmatmul.bf16.gmra.mxu0 %v5622
        %v6226 = vpop.f32.mrf.mxu0
        %v6227 = vadd.f32 %v6198, %v6226
        %v6228 = vpop.f32.mrf.mxu0
        %v6229 = vadd.f32 %v6200, %v6228
        %6230 = vdwg.mxu0
        %6231 = vmatpush.bf16.msra.mxu0 %v6047
        %6232 = vmatpush.bf16.msra.mxu0 %v6046
        %6233 = vmatpush.bf16.msra.mxu0 %v6045
        %6234 = vmatpush.bf16.msra.mxu0 %v6044
        %6235 = vmatpush.bf16.msra.mxu0 %v6043
        %6236 = vmatpush.bf16.msra.mxu0 %v6042
        %6237 = vmatpush.bf16.msra.mxu0 %v6041
        %6238 = vmatpush.bf16.msra.mxu0 %v6040
        %6239 = vmatmul.bf16.gmra.mxu0 %v5599
        %v6240 = vpop.f32.mrf.mxu0
        %v6241 = vadd.f32 %v6212, %v6240
        %v6242 = vpop.f32.mrf.mxu0
        %v6243 = vadd.f32 %v6214, %v6242
        %6244 = vmatmul.bf16.gmra.mxu0 %v5607
        %v6245 = vpop.f32.mrf.mxu0
        %v6246 = vadd.f32 %v6217, %v6245
        %v6247 = vpop.f32.mrf.mxu0
        %v6248 = vadd.f32 %v6219, %v6247
        %6249 = vmatmul.bf16.gmra.mxu0 %v5615
        %v6250 = vpop.f32.mrf.mxu0
        %v6251 = vadd.f32 %v6222, %v6250
        %v6252 = vpop.f32.mrf.mxu0
        %v6253 = vadd.f32 %v6224, %v6252
        %6254 = vmatmul.bf16.gmra.mxu0 %v5623
        %v6255 = vpop.f32.mrf.mxu0
        %v6256 = vadd.f32 %v6227, %v6255
        %v6257 = vpop.f32.mrf.mxu0
        %v6258 = vadd.f32 %v6229, %v6257
        %6259 = vdwg.mxu0
        %6260 = vmatpush.bf16.msra.mxu0 %v6055
        %6261 = vmatpush.bf16.msra.mxu0 %v6054
        %6262 = vmatpush.bf16.msra.mxu0 %v6053
        %6263 = vmatpush.bf16.msra.mxu0 %v6052
        %6264 = vmatpush.bf16.msra.mxu0 %v6051
        %6265 = vmatpush.bf16.msra.mxu0 %v6050
        %6266 = vmatpush.bf16.msra.mxu0 %v6049
        %6267 = vmatpush.bf16.msra.mxu0 %v6048
        %6268 = vmatmul.bf16.gmra.mxu0 %v5600
        %v6269 = vpop.f32.mrf.mxu0
        %v6270 = vadd.f32 %v6241, %v6269
        %v6271 = vpop.f32.mrf.mxu0
        %v6272 = vadd.f32 %v6243, %v6271
        %6273 = vmatmul.bf16.gmra.mxu0 %v5608
        %v6274 = vpop.f32.mrf.mxu0
        %v6275 = vadd.f32 %v6246, %v6274
        %v6276 = vpop.f32.mrf.mxu0
        %v6277 = vadd.f32 %v6248, %v6276
        %6278 = vmatmul.bf16.gmra.mxu0 %v5616
        %v6279 = vpop.f32.mrf.mxu0
        %v6280 = vadd.f32 %v6251, %v6279
        %v6281 = vpop.f32.mrf.mxu0
        %v6282 = vadd.f32 %v6253, %v6281
        %6283 = vmatmul.bf16.gmra.mxu0 %v5624
        %v6284 = vpop.f32.mrf.mxu0
        %v6285 = vadd.f32 %v6256, %v6284
        %v6286 = vpop.f32.mrf.mxu0
        %v6287 = vadd.f32 %v6258, %v6286
        %6288 = vdwg.mxu0
        %6289 = vmatpush.bf16.msra.mxu0 %v6063
        %6290 = vmatpush.bf16.msra.mxu0 %v6062
        %6291 = vmatpush.bf16.msra.mxu0 %v6061
        %6292 = vmatpush.bf16.msra.mxu0 %v6060
        %6293 = vmatpush.bf16.msra.mxu0 %v6059
        %6294 = vmatpush.bf16.msra.mxu0 %v6058
        %6295 = vmatpush.bf16.msra.mxu0 %v6057
        %6296 = vmatpush.bf16.msra.mxu0 %v6056
        %6297 = vmatmul.bf16.gmra.mxu0 %v5601
        %v6298 = vpop.f32.mrf.mxu0
        %v6299 = vadd.f32 %v6270, %v6298
        %v6300 = vpop.f32.mrf.mxu0
        %v6301 = vadd.f32 %v6272, %v6300
        %6302 = vmatmul.bf16.gmra.mxu0 %v5609
        %v6303 = vpop.f32.mrf.mxu0
        %v6304 = vadd.f32 %v6275, %v6303
        %v6305 = vpop.f32.mrf.mxu0
        %v6306 = vadd.f32 %v6277, %v6305
        %6307 = vmatmul.bf16.gmra.mxu0 %v5617
        %v6308 = vpop.f32.mrf.mxu0
        %v6309 = vadd.f32 %v6280, %v6308
        %v6310 = vpop.f32.mrf.mxu0
        %v6311 = vadd.f32 %v6282, %v6310
        %6312 = vmatmul.bf16.gmra.mxu0 %v5625
        %v6313 = vpop.f32.mrf.mxu0
        %v6314 = vadd.f32 %v6285, %v6313
        %v6315 = vpop.f32.mrf.mxu0
        %v6316 = vadd.f32 %v6287, %v6315
        %6317 = vdwg.mxu0
        %6318 = vmatpush.bf16.msra.mxu0 %v6071
        %6319 = vmatpush.bf16.msra.mxu0 %v6070
        %6320 = vmatpush.bf16.msra.mxu0 %v6069
        %6321 = vmatpush.bf16.msra.mxu0 %v6068
        %6322 = vmatpush.bf16.msra.mxu0 %v6067
        %6323 = vmatpush.bf16.msra.mxu0 %v6066
        %6324 = vmatpush.bf16.msra.mxu0 %v6065
        %6325 = vmatpush.bf16.msra.mxu0 %v6064
        %6326 = vmatmul.bf16.gmra.mxu0 %v5602
        %v6327 = vpop.f32.mrf.mxu0
        %v6328 = vadd.f32 %v6299, %v6327
        %v6329 = vpop.f32.mrf.mxu0
        %v6330 = vadd.f32 %v6301, %v6329
        %6331 = vmatmul.bf16.gmra.mxu0 %v5610
        %v6332 = vpop.f32.mrf.mxu0
        %v6333 = vadd.f32 %v6304, %v6332
        %v6334 = vpop.f32.mrf.mxu0
        %v6335 = vadd.f32 %v6306, %v6334
        %6336 = vmatmul.bf16.gmra.mxu0 %v5618
        %v6337 = vpop.f32.mrf.mxu0
        %v6338 = vadd.f32 %v6309, %v6337
        %v6339 = vpop.f32.mrf.mxu0
        %v6340 = vadd.f32 %v6311, %v6339
        %6341 = vmatmul.bf16.gmra.mxu0 %v5626
        %v6342 = vpop.f32.mrf.mxu0
        %v6343 = vadd.f32 %v6314, %v6342
        %v6344 = vpop.f32.mrf.mxu0
        %v6345 = vadd.f32 %v6316, %v6344
        %6346 = vdwg.mxu0
        %6347 = vmatpush.bf16.msra.mxu0 %v6079
        %6348 = vmatpush.bf16.msra.mxu0 %v6078
        %6349 = vmatpush.bf16.msra.mxu0 %v6077
        %6350 = vmatpush.bf16.msra.mxu0 %v6076
        %6351 = vmatpush.bf16.msra.mxu0 %v6075
        %6352 = vmatpush.bf16.msra.mxu0 %v6074
        %6353 = vmatpush.bf16.msra.mxu0 %v6073
        %6354 = vmatpush.bf16.msra.mxu0 %v6072
        %6355 = vmatmul.bf16.gmra.mxu0 %v5603
        %v6356 = vpop.f32.mrf.mxu0
        %v6357 = vadd.f32 %v6328, %v6356
        %v6358 = vpop.f32.mrf.mxu0
        %v6359 = vadd.f32 %v6330, %v6358
        %6360 = vmatmul.bf16.gmra.mxu0 %v5611
        %v6361 = vpop.f32.mrf.mxu0
        %v6362 = vadd.f32 %v6333, %v6361
        %v6363 = vpop.f32.mrf.mxu0
        %v6364 = vadd.f32 %v6335, %v6363
        %6365 = vmatmul.bf16.gmra.mxu0 %v5619
        %v6366 = vpop.f32.mrf.mxu0
        %v6367 = vadd.f32 %v6338, %v6366
        %v6368 = vpop.f32.mrf.mxu0
        %v6369 = vadd.f32 %v6340, %v6368
        %6370 = vmatmul.bf16.gmra.mxu0 %v5627
        %v6371 = vpop.f32.mrf.mxu0
        %v6372 = vadd.f32 %v6343, %v6371
        %v6373 = vpop.f32.mrf.mxu0
        %v6374 = vadd.f32 %v6345, %v6373
        %6375 = vdwg.mxu0
        %v6384 = vrot.slane %v6359, 7
        %vm6385 = vcmask 1041409
        %v6386 = vsel %vm6385, %v6384, %v6357
        %v6387 = vrot.slane %v6362, 6
        %vm6388 = vcmask 1042434
        %v6389 = vsel %vm6388, %v6387, %v6386
        %v6390 = vrot.slane %v6364, 5
        %vm6391 = vcmask 1043459
        %v6392 = vsel %vm6391, %v6390, %v6389
        %v6393 = vrot.slane %v6367, 4
        %vm6394 = vcmask 1044484
        %v6395 = vsel %vm6394, %v6393, %v6392
        %v6396 = vrot.slane %v6369, 3
        %vm6397 = vcmask 1045509
        %v6398 = vsel %vm6397, %v6396, %v6395
        %v6399 = vrot.slane %v6372, 2
        %vm6400 = vcmask 1046534
        %v6401 = vsel %vm6400, %v6399, %v6398
        %v6402 = vrot.slane %v6374, 1
        %vm6403 = vcmask 1047559
        %v6404 = vsel %vm6403, %v6402, %v6401
        %v6406 = vrot.slane %v6357, 1
        %v6407 = vsel %vm6385, %v6359, %v6406
        %v6408 = vrot.slane %v6362, 7
        %v6409 = vsel %vm6388, %v6408, %v6407
        %v6410 = vrot.slane %v6364, 6
        %v6411 = vsel %vm6391, %v6410, %v6409
        %v6412 = vrot.slane %v6367, 5
        %v6413 = vsel %vm6394, %v6412, %v6411
        %v6414 = vrot.slane %v6369, 4
        %v6415 = vsel %vm6397, %v6414, %v6413
        %v6416 = vrot.slane %v6372, 3
        %v6417 = vsel %vm6400, %v6416, %v6415
        %v6418 = vrot.slane %v6374, 2
        %v6419 = vsel %vm6403, %v6418, %v6417
        %6420 = vrot.lane.b32.xlu0 %v6419, 32
        %v6421 = vpop.permute.xlu0 %6420
        %v6423 = vrot.slane %v6357, 2
        %v6424 = vrot.slane %v6359, 1
        %v6425 = vsel %vm6385, %v6424, %v6423
        %v6426 = vsel %vm6388, %v6362, %v6425
        %v6427 = vrot.slane %v6364, 7
        %v6428 = vsel %vm6391, %v6427, %v6426
        %v6429 = vrot.slane %v6367, 6
        %v6430 = vsel %vm6394, %v6429, %v6428
        %v6431 = vrot.slane %v6369, 5
        %v6432 = vsel %vm6397, %v6431, %v6430
        %v6433 = vrot.slane %v6372, 4
        %v6434 = vsel %vm6400, %v6433, %v6432
        %v6435 = vrot.slane %v6374, 3
        %v6436 = vsel %vm6403, %v6435, %v6434
        %6437 = vrot.lane.b32.xlu0 %v6436, 64
        %v6438 = vpop.permute.xlu0 %6437
        %v6440 = vrot.slane %v6357, 3
        %v6441 = vrot.slane %v6359, 2
        %v6442 = vsel %vm6385, %v6441, %v6440
        %v6443 = vrot.slane %v6362, 1
        %v6444 = vsel %vm6388, %v6443, %v6442
        %v6445 = vsel %vm6391, %v6364, %v6444
        %v6446 = vrot.slane %v6367, 7
        %v6447 = vsel %vm6394, %v6446, %v6445
        %v6448 = vrot.slane %v6369, 6
        %v6449 = vsel %vm6397, %v6448, %v6447
        %v6450 = vrot.slane %v6372, 5
        %v6451 = vsel %vm6400, %v6450, %v6449
        %v6452 = vrot.slane %v6374, 4
        %v6453 = vsel %vm6403, %v6452, %v6451
        %6454 = vrot.lane.b32.xlu0 %v6453, 96
        %v6455 = vpop.permute.xlu0 %6454
        %v6457 = vrot.slane %v6357, 4
        %v6458 = vrot.slane %v6359, 3
        %v6459 = vsel %vm6385, %v6458, %v6457
        %v6460 = vrot.slane %v6362, 2
        %v6461 = vsel %vm6388, %v6460, %v6459
        %v6462 = vrot.slane %v6364, 1
        %v6463 = vsel %vm6391, %v6462, %v6461
        %v6464 = vsel %vm6394, %v6367, %v6463
        %v6465 = vrot.slane %v6369, 7
        %v6466 = vsel %vm6397, %v6465, %v6464
        %v6467 = vrot.slane %v6372, 6
        %v6468 = vsel %vm6400, %v6467, %v6466
        %v6469 = vrot.slane %v6374, 5
        %v6470 = vsel %vm6403, %v6469, %v6468
        %v6472 = vrot.slane %v6357, 5
        %v6473 = vrot.slane %v6359, 4
        %v6474 = vsel %vm6385, %v6473, %v6472
        %v6475 = vrot.slane %v6362, 3
        %v6476 = vsel %vm6388, %v6475, %v6474
        %v6477 = vrot.slane %v6364, 2
        %v6478 = vsel %vm6391, %v6477, %v6476
        %v6479 = vrot.slane %v6367, 1
        %v6480 = vsel %vm6394, %v6479, %v6478
        %v6481 = vsel %vm6397, %v6369, %v6480
        %v6482 = vrot.slane %v6372, 7
        %v6483 = vsel %vm6400, %v6482, %v6481
        %v6484 = vrot.slane %v6374, 6
        %v6485 = vsel %vm6403, %v6484, %v6483
        %6486 = vrot.lane.b32.xlu0 %v6485, 32
        %v6487 = vpop.permute.xlu0 %6486
        %v6489 = vrot.slane %v6357, 6
        %v6490 = vrot.slane %v6359, 5
        %v6491 = vsel %vm6385, %v6490, %v6489
        %v6492 = vrot.slane %v6362, 4
        %v6493 = vsel %vm6388, %v6492, %v6491
        %v6494 = vrot.slane %v6364, 3
        %v6495 = vsel %vm6391, %v6494, %v6493
        %v6496 = vrot.slane %v6367, 2
        %v6497 = vsel %vm6394, %v6496, %v6495
        %v6498 = vrot.slane %v6369, 1
        %v6499 = vsel %vm6397, %v6498, %v6497
        %v6500 = vsel %vm6400, %v6372, %v6499
        %v6501 = vrot.slane %v6374, 7
        %v6502 = vsel %vm6403, %v6501, %v6500
        %6503 = vrot.lane.b32.xlu0 %v6502, 64
        %v6504 = vpop.permute.xlu0 %6503
        %v6506 = vrot.slane %v6357, 7
        %v6507 = vrot.slane %v6359, 6
        %v6508 = vsel %vm6385, %v6507, %v6506
        %v6509 = vrot.slane %v6362, 5
        %v6510 = vsel %vm6388, %v6509, %v6508
        %v6511 = vrot.slane %v6364, 4
        %v6512 = vsel %vm6391, %v6511, %v6510
        %v6513 = vrot.slane %v6367, 3
        %v6514 = vsel %vm6394, %v6513, %v6512
        %v6515 = vrot.slane %v6369, 2
        %v6516 = vsel %vm6397, %v6515, %v6514
        %v6517 = vrot.slane %v6372, 1
        %v6518 = vsel %vm6400, %v6517, %v6516
        %v6519 = vsel %vm6403, %v6374, %v6518
        %6520 = vrot.lane.b32.xlu0 %v6519, 96
        %v6521 = vpop.permute.xlu0 %6520
        %v6523 = vsel %vm763, %v6404, %v6421
        %v6524 = vsel %vm880, %v6523, %v6438
        %vm6525 = vcmask 785408
        %v6526 = vsel %vm6525, %v6524, %v6455
        %v6527 = vsel %vm763, %v6470, %v6487
        %v6528 = vsel %vm880, %v6527, %v6504
        %v6529 = vsel %vm6525, %v6528, %v6521
        %6530 = vst [vmem:[%s693] sm:$0xff] %v6526
        %6531 = vst [vmem:[%s693 + $0x8] sm:$0xff] %v6529
        %s6532 = sand.u32 %s516, 1
        %s6533 = scalar_lea.sflag [#allocation3], %s6532
        %s6534 = sand.u32 %s516, 1
        %s6535 = smul.addr %s6534, 16
        %s6536 = scalar_lea.vmem [#allocation2], %s6535
        // Predicated region
        $region109: #{tpu_custom_call.1} parent=107 // pred_check
          %p6537 = pneg %p526
        $region110: #{tpu_custom_call.1} parent=107 // pred_check_branch
          %6539 = sbr.rel (%p6537) target = $region112
        $region111: #{tpu_custom_call.1} parent=107 // pred_region
          %6541 = vsyncadd %s6533, 0
          %s6542 = smul.addr %s36, 2
          %s6543 = smul.addr %s6542, 8
          %s6544 = scalar_lea.hbm %s22, %s6543
          %s6546 = sshll.u32 %s6536, 4
          %s6547 = int_to_ptr.vmem [resolvable:$true] %s6546
          %s6548 = sshll.u32 %s6544, 4
          %s6549 = int_to_ptr.hbm [resolvable:$true] %s6548
          %6551 = dma.vmem_to_hbm [thread:$0]  %s6547, 256, %s6549, %s6533
        $region112: #{tpu_custom_call.1} parent=107 // pred_fallthru
          _
      $region108: #{tpu_custom_call.1} parent=5 // pred_fallthru
        _
      %p6552 = scmp.le.s32.totalorder 2, %s31
      // Predicated region
      $region113: #{tpu_custom_call.1} parent=5 // pred_check
        %p6553 = pneg %p6552
      $region114: #{tpu_custom_call.1} parent=5 // pred_check_branch
        %6555 = sbr.rel (%p6553) target = $region116
      $region115: #{tpu_custom_call.1} parent=5 // pred_region
        %s6556 = ssub.s32 %s31, 2
        // Predicated region
        $region117: #{tpu_custom_call.1} parent=115 // pred_check
          %p6557 = pneg %p532
        $region118: #{tpu_custom_call.1} parent=115 // pred_check_branch
          %6559 = sbr.rel (%p6557) target = $region120
        $region119: #{tpu_custom_call.1} parent=115 // pred_region
          %s6560 = sand.u32 %s517, 1
          %s6561 = scalar_lea.sflag [#allocation3], %s6560
          %s6562 = sand.u32 %s517, 1
          %s6563 = smul.addr %s6562, 16
          %s6564 = scalar_lea.vmem [#allocation2], %s6563
          %6566 = dma.done %s6561, 256
        $region120: #{tpu_custom_call.1} parent=115 // pred_fallthru
          _
      $region116: #{tpu_custom_call.1} parent=5 // pred_fallthru
        _
    $region6: #{tpu_custom_call.1} parent=1 // loop_footer
      %s35 = sadd.s32 1, %s31
    $region7: #{tpu_custom_call.1} parent=1 // loop_footer_branch
      %30 = sbr.rel target = $region3
    $region8: #{tpu_custom_call.1} parent=1 // loop_exit
      _
    %6567 = vsyncpa [#allocation3], 1
    %s6568 = scalar_lea.sflag [#allocation3], 1
    %6569 = vsyncpa %s6568, 1

</llo_original>
